<compile_context>
chip_gen: v5e
topology: v5e:2x2
jax: 0.10.0
libtpu: 0.0.40
codegen_flags: <defaults>
</compile_context>

<pallas_src>
import functools

import numpy as np

import jax
import jax.numpy as jnp
from jax import lax
from jax.experimental import pallas as pl
from jax.experimental.pallas import tpu as pltpu


# ---------------------------------------------------------------------------
# Fused RRDB kernel (Bt images per grid step, images concatenated along lanes).
# ---------------------------------------------------------------------------
def _rrdb_kernel(x_ref, mask_ref, w0_ref, w1_ref, w2_ref, w3_ref, w4_ref,
                 bgc_ref, bnf_ref, o_ref, stack_ref,
                 *, H, W, bt, nf, gc, mxu_dtype):
    """Refs:
      x_ref    : (nf, L)        L = bt*H*W, channels-first, images along lanes
      mask_ref : (9, 1, L)      f32 0/1 validity mask per 3x3 tap (per image)
      w{j}_ref : (3, M_j, 9*Cin_j)  cout-stacked weights per RDB / dense input j
      bgc_ref  : (12, gc, 1)    biases of convs 1..4 of the 3 RDBs
      bnf_ref  : (3, nf, 1)     biases of conv5 of the 3 RDBs
      o_ref    : (nf, L)
      stack_ref: (9*nf, L) f32  scratch holding the 9 shifted copies of one
                                dense input (tap-major rows), reused 15x.
    """
    HW = H * W
    L = bt * HW
    w_refs = (w0_ref, w1_ref, w2_ref, w3_ref, w4_ref)
    couts = (gc, gc, gc, gc, nf)

    # Hoisted once: tap offsets + one load per off-centre boundary mask,
    # reused by all 3 RDBs x 5 dense inputs (review item: no repeated loads).
    tap_offs, tap_masks = [], []
    k = 0
    for ky in range(3):
        for kx in range(3):
            off = (ky - 1) * W + (kx - 1)
            tap_offs.append(off)
            tap_masks.append(None if off == 0 else mask_ref[k])   # (1, L)
            k += 1

    def fill_stack(t, cin):
        # Write the 9 shifted/masked copies of t (cin, L) into stack_ref rows
        # [k*cin, (k+1)*cin) — tap-major, single explicit copy, no concatenate.
        for kk in range(9):
            off = tap_offs[kk]
            if off == 0:
                s = t
            else:
                s = pltpu.roll(t, shift=(-off) % L, axis=1) * tap_masks[kk]
            stack_ref[kk * cin:(kk + 1) * cin, :] = s

    x0 = x_ref[...].astype(jnp.float32)                  # (nf, L)

    feat = x0
    for r in range(3):                                   # three RDBs
        rdb_in = feat
        accs = [None] * 5                                # per-conv f32 accumulators
        dense_in = rdb_in                                # dense input j (f32)
        for j in range(5):
            cin = nf if j == 0 else gc
            fill_stack(dense_in, cin)
            # One MXU matmul covering EVERY conv that consumes dense input j:
            # rows are the stacked couts of convs j..4, K = 9*cin.
            rhs = stack_ref[0:9 * cin, :].astype(mxu_dtype)
            partial = jnp.dot(w_refs[j][r], rhs,
                              preferred_element_type=jnp.float32)
            row = 0
            for l in range(j, 5):                        # scatter into per-conv accs
                chunk = partial[row:row + couts[l]]
                row += couts[l]
                accs[l] = chunk if accs[l] is None else accs[l] + chunk
            # conv j is now complete: bias + activation.
            bias = bnf_ref[r] if j == 4 else bgc_ref[r * 4 + j]   # (cout, 1)
            conv_out = accs[j] + bias
            if j < 4:
                dense_in = jnp.maximum(conv_out, 0.2 * conv_out)  # LeakyReLU(0.2)
            else:
                feat = conv_out * 0.2 + rdb_in           # RDB residual
    o_ref[...] = (feat * 0.2 + x0).astype(o_ref.dtype)   # RRDB residual


# ---------------------------------------------------------------------------
# Host-side parameter packing & mask construction.
# ---------------------------------------------------------------------------
def _pack_params(rrdb_params, nf, gc, mxu_dtype):
    """PyTorch-layout conv params -> cout-stacked, tap-flattened weight groups.

    For RDB r and dense input j, the operand w_j[r] has shape (M_j, 9*Cin_j):
    rows = stacked couts of convs j..4, columns ordered tap-major /
    channel-minor — matching the tap-major stack built in the kernel.
    """
    couts = [gc, gc, gc, gc, nf]
    w_groups = [[] for _ in range(5)]
    b_gc, b_nf = [], []
    for rdb in rrdb_params:                     # 3 RDBs, each 5 x (w, b)
        for j in range(5):
            cin = nf if j == 0 else gc
            cstart = 0 if j == 0 else nf + (j - 1) * gc
            rows = []
            for l in range(j, 5):
                w = rdb[l][0]                                  # (cout_l, cin_tot, 3, 3)
                piece = w[:, cstart:cstart + cin, :, :]        # (cout_l, cin, 3, 3)
                piece = jnp.transpose(piece, (0, 2, 3, 1))     # (cout_l, 3, 3, cin)
                rows.append(piece.reshape(couts[l], 9 * cin))
            w_groups[j].append(jnp.concatenate(rows, axis=0))  # (M_j, 9*cin)
        for l in range(5):
            b = rdb[l][1].reshape(-1, 1)
            (b_nf if l == 4 else b_gc).append(b)
    w_ops = [jnp.stack(g, axis=0).astype(mxu_dtype) for g in w_groups]
    bgc = jnp.stack(b_gc, axis=0).astype(jnp.float32)          # (12, gc, 1)
    bnf = jnp.stack(b_nf, axis=0).astype(jnp.float32)          # (3, nf, 1)
    return w_ops, bgc, bnf


def _make_tap_masks(H, W, bt):
    """(9, 1, bt*H*W) f32: 1 where the shifted source pixel is inside its own
    image — tiled per image so rolls never leak across image boundaries."""
    yy, xx = np.meshgrid(np.arange(H), np.arange(W), indexing="ij")
    yy = yy.reshape(-1)
    xx = xx.reshape(-1)
    base = np.zeros((9, H * W), np.float32)
    k = 0
    for ky in range(3):
        for kx in range(3):
            dy, dx = ky - 1, kx - 1
            valid = ((yy + dy >= 0) & (yy + dy < H) &
                     (xx + dx >= 0) & (xx + dx < W))
            base[k] = valid.astype(np.float32)
            k += 1
    tiled = np.tile(base, (1, bt))                             # (9, bt*HW)
    return jnp.asarray(tiled.reshape(9, 1, bt * H * W))


# ---------------------------------------------------------------------------
# Public forward pass (NCHW in / NCHW out, like the PyTorch module).
# ---------------------------------------------------------------------------
def rrdb_forward(x, rrdb_params, *, lane_batch=None, mxu_dtype=jnp.bfloat16):
    """x: (N, C, H, W) float32; rrdb_params: 3 x [(w_i, b_i) x 5] PyTorch layout."""
    N, nf, H, W = x.shape
    gc = rrdb_params[0][0][0].shape[0]        # out-channels of conv1
    HW = H * W

    # Pick how many images share one grid step along the lane axis: largest
    # legal divisor of N keeping the live activations modest (<= 2048 lanes).
    if lane_batch is None:
        candidates = [bt for bt in range(1, N + 1)
                      if N % bt == 0 and (bt == N or (bt * HW) % 128 == 0)]
        small = [bt for bt in candidates if bt * HW <= 2048]
        lane_batch = max(small) if small else min(candidates)
    bt = lane_batch
    assert N % bt == 0
    L = bt * HW

    # Channels-first, images concatenated along the lane axis.
    x_cf = jnp.transpose(x.reshape(N, nf, HW), (1, 0, 2)).reshape(nf, N * HW)

    w_ops, bgc, bnf = _pack_params(rrdb_params, nf, gc, mxu_dtype)
    masks = _make_tap_masks(H, W, bt)

    # VMEM budget: operands (double-buffered), stack scratch, live activations.
    mxu_bytes = jnp.dtype(mxu_dtype).itemsize
    w_bytes = sum(int(np.prod(w.shape)) * mxu_bytes for w in w_ops)
    b_bytes = (int(bgc.size) + int(bnf.size)) * 4
    io_bytes = 2 * (2 * nf * L * 4)                 # x & out blocks, dbl-buffered
    mask_bytes = 2 * (9 * L * 4)
    stack_bytes = 9 * nf * L * 4
    live_bytes = (nf + 4 * gc) * L * 4 * 4          # features + accs + temps (rough)
    est = 2 * (w_bytes + b_bytes) + io_bytes + mask_bytes + stack_bytes + live_bytes
    vmem_limit = int(min(max(2 * est, 32 << 20), 64 << 20))

    kernel = functools.partial(_rrdb_kernel, H=H, W=W, bt=bt, nf=nf, gc=gc,
                               mxu_dtype=mxu_dtype)

    in_specs = [pl.BlockSpec((nf, L), lambda n: (0, n)),
                pl.BlockSpec((9, 1, L), lambda n: (0, 0, 0))]
    in_specs += [pl.BlockSpec(w.shape, lambda n: (0, 0, 0)) for w in w_ops]
    in_specs += [pl.BlockSpec(bgc.shape, lambda n: (0, 0, 0)),
                 pl.BlockSpec(bnf.shape, lambda n: (0, 0, 0))]

    out_cf = pl.pallas_call(
        kernel,
        out_shape=jax.ShapeDtypeStruct((nf, N * HW), jnp.float32),
        grid=(N // bt,),
        in_specs=in_specs,
        out_specs=pl.BlockSpec((nf, L), lambda n: (0, n)),
        scratch_shapes=[pltpu.VMEM((9 * nf, L), jnp.float32)],
        compiler_params=pltpu.CompilerParams(
            dimension_semantics=("parallel",),
            vmem_limit_bytes=vmem_limit),
    )(x_cf, masks, *w_ops, bgc, bnf)

    return jnp.transpose(out_cf.reshape(nf, N, HW), (1, 0, 2)).reshape(N, nf, H, W)


# ---------------------------------------------------------------------------
# Pure-JAX reference (for validation) and deterministic parameter init
# mirroring initialize_weights([...], 0.1): kaiming_normal(fan_in)*0.1, bias 0.
# ---------------------------------------------------------------------------
def _rrdb_reference(x, rrdb_params):
    def conv(v, w, b):
        out = lax.conv_general_dilated(v, w, (1, 1), ((1, 1), (1, 1)),
                                       dimension_numbers=("NCHW", "OIHW", "NCHW"))
        return out + b.reshape(1, -1, 1, 1)

    def lrelu(v):
        return jnp.where(v >= 0, v, 0.2 * v)

    feat = x
    for rdb in rrdb_params:
        xin = feat
        feats = [xin]
        for l, (w, b) in enumerate(rdb):
            out = conv(jnp.concatenate(feats, axis=1), w, b)
            if l < 4:
                feats.append(lrelu(out))
            else:
                feat = out * 0.2 + xin
    return feat * 0.2 + x


def init_rdb_params(key, nf, gc):
    shapes = [(gc, nf), (gc, nf + gc), (gc, nf + 2 * gc),
              (gc, nf + 3 * gc), (nf, nf + 4 * gc)]
    params = []
    for cout, cin in shapes:
        key, wk = jax.random.split(key)
        std = (2.0 / (cin * 9)) ** 0.5                 # kaiming_normal_, a=0, fan_in
        w = jax.random.normal(wk, (cout, cin, 3, 3), jnp.float32) * std * 0.1
        b = jnp.zeros((cout,), jnp.float32)
        params.append((w, b))
    return params, key


def init_rrdb_params(key, nf, gc):
    rdbs = []
    for _ in range(3):
        p, key = init_rdb_params(key, nf, gc)
        rdbs.append(p)
    return rdbs, key


if __name__ == "__main__":
    nf, gc = 16, 8
    N, H, W = 2, 16, 16

    key = jax.random.PRNGKey(0)
    key, xk = jax.random.split(key)
    x = jax.random.normal(xk, (N, nf, H, W), jnp.float32)    # NCHW, like PyTorch

    params, key = init_rrdb_params(key, nf, gc)

    out = jax.jit(rrdb_forward)(x, params)
    jax.block_until_ready(out)

    assert out.shape == (N, nf, H, W)
    assert out.dtype == jnp.float32
    assert bool(jnp.isfinite(out).all())

    # Validate against the pure-JAX reference (bf16 MXU operands -> loose tol).
    ref = _rrdb_reference(x, params)
    max_err = float(jnp.max(jnp.abs(out - ref)))
    assert max_err < 3e-2, f"max abs error vs reference: {max_err}"

    print("KERNEL_OK")
</pallas_src>

<mosaic_0001>
module attributes {stable_mosaic.version = 11 : i64} {
  func.func @_rrdb_kernel(%arg0: i32, %arg1: memref<16x512xf32, #tpu.memory_space<vmem>>, %arg2: memref<9x1x512xf32, #tpu.memory_space<vmem>>, %arg3: memref<3x48x144xbf16, #tpu.memory_space<vmem>>, %arg4: memref<3x40x72xbf16, #tpu.memory_space<vmem>>, %arg5: memref<3x32x72xbf16, #tpu.memory_space<vmem>>, %arg6: memref<3x24x72xbf16, #tpu.memory_space<vmem>>, %arg7: memref<3x16x72xbf16, #tpu.memory_space<vmem>>, %arg8: memref<12x8x1xf32, #tpu.memory_space<vmem>>, %arg9: memref<3x16x1xf32, #tpu.memory_space<vmem>>, %arg10: memref<16x512xf32, #tpu.memory_space<vmem>>, %arg11: memref<144x512xf32, #tpu.memory_space<vmem>>) attributes {dimension_semantics = [#tpu.dimension_semantics<parallel>], iteration_bounds = array<i64: 1>, scalar_prefetch = 0 : i64, scratch_operands = 1 : i64, tpu.core_type = #tpu.core_type<tc>, window_params = [{transform_indices = @transform_0, window_bounds = array<i64: 16, 512>}, {pipeline_mode = #tpu.pipeline_mode<synchronous>, transform_indices = @transform_1, window_bounds = array<i64: 9, 1, 512>}, {pipeline_mode = #tpu.pipeline_mode<synchronous>, transform_indices = @transform_2, window_bounds = array<i64: 3, 48, 144>}, {pipeline_mode = #tpu.pipeline_mode<synchronous>, transform_indices = @transform_3, window_bounds = array<i64: 3, 40, 72>}, {pipeline_mode = #tpu.pipeline_mode<synchronous>, transform_indices = @transform_4, window_bounds = array<i64: 3, 32, 72>}, {pipeline_mode = #tpu.pipeline_mode<synchronous>, transform_indices = @transform_5, window_bounds = array<i64: 3, 24, 72>}, {pipeline_mode = #tpu.pipeline_mode<synchronous>, transform_indices = @transform_6, window_bounds = array<i64: 3, 16, 72>}, {pipeline_mode = #tpu.pipeline_mode<synchronous>, transform_indices = @transform_7, window_bounds = array<i64: 12, 8, 1>}, {pipeline_mode = #tpu.pipeline_mode<synchronous>, transform_indices = @transform_8, window_bounds = array<i64: 3, 16, 1>}, {transform_indices = @transform_9, window_bounds = array<i64: 16, 512>}]} {
    %c0 = arith.constant 0 : index
    %c0_0 = arith.constant 0 : index
    %c0_1 = arith.constant 0 : index
    %0 = vector.load %arg2[%c0, %c0_0, %c0_1] : memref<9x1x512xf32, #tpu.memory_space<vmem>>, vector<1x1x512xf32>
    %1 = vector.shape_cast %0 : vector<1x1x512xf32> to vector<1x512xf32>
    %c1 = arith.constant 1 : index
    %c0_2 = arith.constant 0 : index
    %c0_3 = arith.constant 0 : index
    %2 = vector.load %arg2[%c1, %c0_2, %c0_3] : memref<9x1x512xf32, #tpu.memory_space<vmem>>, vector<1x1x512xf32>
    %3 = vector.shape_cast %2 : vector<1x1x512xf32> to vector<1x512xf32>
    %c2 = arith.constant 2 : index
    %c0_4 = arith.constant 0 : index
    %c0_5 = arith.constant 0 : index
    %4 = vector.load %arg2[%c2, %c0_4, %c0_5] : memref<9x1x512xf32, #tpu.memory_space<vmem>>, vector<1x1x512xf32>
    %5 = vector.shape_cast %4 : vector<1x1x512xf32> to vector<1x512xf32>
    %c3 = arith.constant 3 : index
    %c0_6 = arith.constant 0 : index
    %c0_7 = arith.constant 0 : index
    %6 = vector.load %arg2[%c3, %c0_6, %c0_7] : memref<9x1x512xf32, #tpu.memory_space<vmem>>, vector<1x1x512xf32>
    %7 = vector.shape_cast %6 : vector<1x1x512xf32> to vector<1x512xf32>
    %c5 = arith.constant 5 : index
    %c0_8 = arith.constant 0 : index
    %c0_9 = arith.constant 0 : index
    %8 = vector.load %arg2[%c5, %c0_8, %c0_9] : memref<9x1x512xf32, #tpu.memory_space<vmem>>, vector<1x1x512xf32>
    %9 = vector.shape_cast %8 : vector<1x1x512xf32> to vector<1x512xf32>
    %c6 = arith.constant 6 : index
    %c0_10 = arith.constant 0 : index
    %c0_11 = arith.constant 0 : index
    %10 = vector.load %arg2[%c6, %c0_10, %c0_11] : memref<9x1x512xf32, #tpu.memory_space<vmem>>, vector<1x1x512xf32>
    %11 = vector.shape_cast %10 : vector<1x1x512xf32> to vector<1x512xf32>
    %c7 = arith.constant 7 : index
    %c0_12 = arith.constant 0 : index
    %c0_13 = arith.constant 0 : index
    %12 = vector.load %arg2[%c7, %c0_12, %c0_13] : memref<9x1x512xf32, #tpu.memory_space<vmem>>, vector<1x1x512xf32>
    %13 = vector.shape_cast %12 : vector<1x1x512xf32> to vector<1x512xf32>
    %c8 = arith.constant 8 : index
    %c0_14 = arith.constant 0 : index
    %c0_15 = arith.constant 0 : index
    %14 = vector.load %arg2[%c8, %c0_14, %c0_15] : memref<9x1x512xf32, #tpu.memory_space<vmem>>, vector<1x1x512xf32>
    %15 = vector.shape_cast %14 : vector<1x1x512xf32> to vector<1x512xf32>
    %c0_16 = arith.constant 0 : index
    %c0_17 = arith.constant 0 : index
    %16 = vector.load %arg1[%c0_16, %c0_17] : memref<16x512xf32, #tpu.memory_space<vmem>>, vector<16x512xf32>
    %c17_i32 = arith.constant 17 : i32
    %17 = tpu.dynamic_rotate %16 by %c17_i32 dim 1 : vector<16x512xf32>, i32 -> vector<16x512xf32>
    %18 = vector.broadcast %1 : vector<1x512xf32> to vector<16x512xf32>
    %19 = arith.mulf %17, %18 : vector<16x512xf32>
    %c0_18 = arith.constant 0 : index
    %c0_19 = arith.constant 0 : index
    %20 = vector.load %arg11[%c0_18, %c0_19] : memref<144x512xf32, #tpu.memory_space<vmem>>, vector<16x512xf32>
    tpu.vector_store %arg11[%c0_18, %c0_19], %19 {strides = array<i32>} : memref<144x512xf32, #tpu.memory_space<vmem>>, vector<16x512xf32>,
    %c16_i32 = arith.constant 16 : i32
    %21 = tpu.dynamic_rotate %16 by %c16_i32 dim 1 : vector<16x512xf32>, i32 -> vector<16x512xf32>
    %22 = vector.broadcast %3 : vector<1x512xf32> to vector<16x512xf32>
    %23 = arith.mulf %21, %22 : vector<16x512xf32>
    %c16 = arith.constant 16 : index
    %c0_20 = arith.constant 0 : index
    %24 = vector.load %arg11[%c16, %c0_20] : memref<144x512xf32, #tpu.memory_space<vmem>>, vector<16x512xf32>
    tpu.vector_store %arg11[%c16, %c0_20], %23 {strides = array<i32>} : memref<144x512xf32, #tpu.memory_space<vmem>>, vector<16x512xf32>,
    %c15_i32 = arith.constant 15 : i32
    %25 = tpu.dynamic_rotate %16 by %c15_i32 dim 1 : vector<16x512xf32>, i32 -> vector<16x512xf32>
    %26 = vector.broadcast %5 : vector<1x512xf32> to vector<16x512xf32>
    %27 = arith.mulf %25, %26 : vector<16x512xf32>
    %c32 = arith.constant 32 : index
    %c0_21 = arith.constant 0 : index
    %28 = vector.load %arg11[%c32, %c0_21] : memref<144x512xf32, #tpu.memory_space<vmem>>, vector<16x512xf32>
    tpu.vector_store %arg11[%c32, %c0_21], %27 {strides = array<i32>} : memref<144x512xf32, #tpu.memory_space<vmem>>, vector<16x512xf32>,
    %c1_i32 = arith.constant 1 : i32
    %29 = tpu.dynamic_rotate %16 by %c1_i32 dim 1 : vector<16x512xf32>, i32 -> vector<16x512xf32>
    %30 = vector.broadcast %7 : vector<1x512xf32> to vector<16x512xf32>
    %31 = arith.mulf %29, %30 : vector<16x512xf32>
    %c48 = arith.constant 48 : index
    %c0_22 = arith.constant 0 : index
    %32 = vector.load %arg11[%c48, %c0_22] : memref<144x512xf32, #tpu.memory_space<vmem>>, vector<16x512xf32>
    tpu.vector_store %arg11[%c48, %c0_22], %31 {strides = array<i32>} : memref<144x512xf32, #tpu.memory_space<vmem>>, vector<16x512xf32>,
    %c64 = arith.constant 64 : index
    %c0_23 = arith.constant 0 : index
    %33 = vector.load %arg11[%c64, %c0_23] : memref<144x512xf32, #tpu.memory_space<vmem>>, vector<16x512xf32>
    tpu.vector_store %arg11[%c64, %c0_23], %16 {strides = array<i32>} : memref<144x512xf32, #tpu.memory_space<vmem>>, vector<16x512xf32>,
    %c511_i32 = arith.constant 511 : i32
    %34 = tpu.dynamic_rotate %16 by %c511_i32 dim 1 : vector<16x512xf32>, i32 -> vector<16x512xf32>
    %35 = vector.broadcast %9 : vector<1x512xf32> to vector<16x512xf32>
    %36 = arith.mulf %34, %35 : vector<16x512xf32>
    %c80 = arith.constant 80 : index
    %c0_24 = arith.constant 0 : index
    %37 = vector.load %arg11[%c80, %c0_24] : memref<144x512xf32, #tpu.memory_space<vmem>>, vector<16x512xf32>
    tpu.vector_store %arg11[%c80, %c0_24], %36 {strides = array<i32>} : memref<144x512xf32, #tpu.memory_space<vmem>>, vector<16x512xf32>,
    %c497_i32 = arith.constant 497 : i32
    %38 = tpu.dynamic_rotate %16 by %c497_i32 dim 1 : vector<16x512xf32>, i32 -> vector<16x512xf32>
    %39 = vector.broadcast %11 : vector<1x512xf32> to vector<16x512xf32>
    %40 = arith.mulf %38, %39 : vector<16x512xf32>
    %c96 = arith.constant 96 : index
    %c0_25 = arith.constant 0 : index
    %41 = vector.load %arg11[%c96, %c0_25] : memref<144x512xf32, #tpu.memory_space<vmem>>, vector<16x512xf32>
    tpu.vector_store %arg11[%c96, %c0_25], %40 {strides = array<i32>} : memref<144x512xf32, #tpu.memory_space<vmem>>, vector<16x512xf32>,
    %c496_i32 = arith.constant 496 : i32
    %42 = tpu.dynamic_rotate %16 by %c496_i32 dim 1 : vector<16x512xf32>, i32 -> vector<16x512xf32>
    %43 = vector.broadcast %13 : vector<1x512xf32> to vector<16x512xf32>
    %44 = arith.mulf %42, %43 : vector<16x512xf32>
    %c112 = arith.constant 112 : index
    %c0_26 = arith.constant 0 : index
    %45 = vector.load %arg11[%c112, %c0_26] : memref<144x512xf32, #tpu.memory_space<vmem>>, vector<16x512xf32>
    tpu.vector_store %arg11[%c112, %c0_26], %44 {strides = array<i32>} : memref<144x512xf32, #tpu.memory_space<vmem>>, vector<16x512xf32>,
    %c495_i32 = arith.constant 495 : i32
    %46 = tpu.dynamic_rotate %16 by %c495_i32 dim 1 : vector<16x512xf32>, i32 -> vector<16x512xf32>
    %47 = vector.broadcast %15 : vector<1x512xf32> to vector<16x512xf32>
    %48 = arith.mulf %46, %47 : vector<16x512xf32>
    %c128 = arith.constant 128 : index
    %c0_27 = arith.constant 0 : index
    %49 = vector.load %arg11[%c128, %c0_27] : memref<144x512xf32, #tpu.memory_space<vmem>>, vector<16x512xf32>
    tpu.vector_store %arg11[%c128, %c0_27], %48 {strides = array<i32>} : memref<144x512xf32, #tpu.memory_space<vmem>>, vector<16x512xf32>,
    %c0_28 = arith.constant 0 : index
    %c0_29 = arith.constant 0 : index
    %50 = vector.load %arg11[%c0_28, %c0_29] : memref<144x512xf32, #tpu.memory_space<vmem>>, vector<144x512xf32>
    %51 = arith.truncf %50 : vector<144x512xf32> to vector<144x512xbf16>
    %c0_30 = arith.constant 0 : index
    %c0_31 = arith.constant 0 : index
    %c0_32 = arith.constant 0 : index
    %52 = vector.load %arg3[%c0_30, %c0_31, %c0_32] : memref<3x48x144xbf16, #tpu.memory_space<vmem>>, vector<1x48x144xbf16>
    %53 = vector.shape_cast %52 : vector<1x48x144xbf16> to vector<48x144xbf16>
    %cst = arith.constant dense<0.000000e+00> : vector<48x512xf32>
    %54 = tpu.matmul %53, %51, %cst {dimension_numbers = #tpu.dot_dimension_numbers<[1], [0], [0], [1], [0, 0, 1, 1], [], []>} : vector<48x144xbf16>, vector<144x512xbf16>, vector<48x512xf32> -> vector<48x512xf32>
    %55 = vector.extract_strided_slice %54 {offsets = [0, 0], sizes = [8, 512], strides = [1, 1]} : vector<48x512xf32> to vector<8x512xf32>
    %56 = vector.extract_strided_slice %54 {offsets = [8, 0], sizes = [8, 512], strides = [1, 1]} : vector<48x512xf32> to vector<8x512xf32>
    %57 = vector.extract_strided_slice %54 {offsets = [16, 0], sizes = [8, 512], strides = [1, 1]} : vector<48x512xf32> to vector<8x512xf32>
    %58 = vector.extract_strided_slice %54 {offsets = [24, 0], sizes = [8, 512], strides = [1, 1]} : vector<48x512xf32> to vector<8x512xf32>
    %59 = vector.extract_strided_slice %54 {offsets = [32, 0], sizes = [16, 512], strides = [1, 1]} : vector<48x512xf32> to vector<16x512xf32>
    %c0_33 = arith.constant 0 : index
    %c0_34 = arith.constant 0 : index
    %c0_35 = arith.constant 0 : index
    %60 = vector.load %arg8[%c0_33, %c0_34, %c0_35] : memref<12x8x1xf32, #tpu.memory_space<vmem>>, vector<1x8x1xf32>
    %61 = vector.shape_cast %60 : vector<1x8x1xf32> to vector<8x1xf32>
    %62 = vector.broadcast %61 : vector<8x1xf32> to vector<8x512xf32>
    %63 = arith.addf %55, %62 : vector<8x512xf32>
    %cst_36 = arith.constant 2.000000e-01 : f32
    %64 = vector.broadcast %cst_36 : f32 to vector<8x512xf32>
    %65 = arith.mulf %64, %63 : vector<8x512xf32>
    %66 = arith.maximumf %63, %65 : vector<8x512xf32>
    %c17_i32_37 = arith.constant 17 : i32
    %67 = tpu.dynamic_rotate %66 by %c17_i32_37 dim 1 : vector<8x512xf32>, i32 -> vector<8x512xf32>
    %68 = vector.broadcast %1 : vector<1x512xf32> to vector<8x512xf32>
    %69 = arith.mulf %67, %68 : vector<8x512xf32>
    %c0_38 = arith.constant 0 : index
    %c0_39 = arith.constant 0 : index
    %70 = vector.load %arg11[%c0_38, %c0_39] : memref<144x512xf32, #tpu.memory_space<vmem>>, vector<8x512xf32>
    tpu.vector_store %arg11[%c0_38, %c0_39], %69 {strides = array<i32>} : memref<144x512xf32, #tpu.memory_space<vmem>>, vector<8x512xf32>,
    %c16_i32_40 = arith.constant 16 : i32
    %71 = tpu.dynamic_rotate %66 by %c16_i32_40 dim 1 : vector<8x512xf32>, i32 -> vector<8x512xf32>
    %72 = vector.broadcast %3 : vector<1x512xf32> to vector<8x512xf32>
    %73 = arith.mulf %71, %72 : vector<8x512xf32>
    %c8_41 = arith.constant 8 : index
    %c0_42 = arith.constant 0 : index
    %74 = vector.load %arg11[%c8_41, %c0_42] : memref<144x512xf32, #tpu.memory_space<vmem>>, vector<8x512xf32>
    tpu.vector_store %arg11[%c8_41, %c0_42], %73 {strides = array<i32>} : memref<144x512xf32, #tpu.memory_space<vmem>>, vector<8x512xf32>,
    %c15_i32_43 = arith.constant 15 : i32
    %75 = tpu.dynamic_rotate %66 by %c15_i32_43 dim 1 : vector<8x512xf32>, i32 -> vector<8x512xf32>
    %76 = vector.broadcast %5 : vector<1x512xf32> to vector<8x512xf32>
    %77 = arith.mulf %75, %76 : vector<8x512xf32>
    %c16_44 = arith.constant 16 : index
    %c0_45 = arith.constant 0 : index
    %78 = vector.load %arg11[%c16_44, %c0_45] : memref<144x512xf32, #tpu.memory_space<vmem>>, vector<8x512xf32>
    tpu.vector_store %arg11[%c16_44, %c0_45], %77 {strides = array<i32>} : memref<144x512xf32, #tpu.memory_space<vmem>>, vector<8x512xf32>,
    %c1_i32_46 = arith.constant 1 : i32
    %79 = tpu.dynamic_rotate %66 by %c1_i32_46 dim 1 : vector<8x512xf32>, i32 -> vector<8x512xf32>
    %80 = vector.broadcast %7 : vector<1x512xf32> to vector<8x512xf32>
    %81 = arith.mulf %79, %80 : vector<8x512xf32>
    %c24 = arith.constant 24 : index
    %c0_47 = arith.constant 0 : index
    %82 = vector.load %arg11[%c24, %c0_47] : memref<144x512xf32, #tpu.memory_space<vmem>>, vector<8x512xf32>
    tpu.vector_store %arg11[%c24, %c0_47], %81 {strides = array<i32>} : memref<144x512xf32, #tpu.memory_space<vmem>>, vector<8x512xf32>,
    %c32_48 = arith.constant 32 : index
    %c0_49 = arith.constant 0 : index
    %83 = vector.load %arg11[%c32_48, %c0_49] : memref<144x512xf32, #tpu.memory_space<vmem>>, vector<8x512xf32>
    tpu.vector_store %arg11[%c32_48, %c0_49], %66 {strides = array<i32>} : memref<144x512xf32, #tpu.memory_space<vmem>>, vector<8x512xf32>,
    %c511_i32_50 = arith.constant 511 : i32
    %84 = tpu.dynamic_rotate %66 by %c511_i32_50 dim 1 : vector<8x512xf32>, i32 -> vector<8x512xf32>
    %85 = vector.broadcast %9 : vector<1x512xf32> to vector<8x512xf32>
    %86 = arith.mulf %84, %85 : vector<8x512xf32>
    %c40 = arith.constant 40 : index
    %c0_51 = arith.constant 0 : index
    %87 = vector.load %arg11[%c40, %c0_51] : memref<144x512xf32, #tpu.memory_space<vmem>>, vector<8x512xf32>
    tpu.vector_store %arg11[%c40, %c0_51], %86 {strides = array<i32>} : memref<144x512xf32, #tpu.memory_space<vmem>>, vector<8x512xf32>,
    %c497_i32_52 = arith.constant 497 : i32
    %88 = tpu.dynamic_rotate %66 by %c497_i32_52 dim 1 : vector<8x512xf32>, i32 -> vector<8x512xf32>
    %89 = vector.broadcast %11 : vector<1x512xf32> to vector<8x512xf32>
    %90 = arith.mulf %88, %89 : vector<8x512xf32>
    %c48_53 = arith.constant 48 : index
    %c0_54 = arith.constant 0 : index
    %91 = vector.load %arg11[%c48_53, %c0_54] : memref<144x512xf32, #tpu.memory_space<vmem>>, vector<8x512xf32>
    tpu.vector_store %arg11[%c48_53, %c0_54], %90 {strides = array<i32>} : memref<144x512xf32, #tpu.memory_space<vmem>>, vector<8x512xf32>,
    %c496_i32_55 = arith.constant 496 : i32
    %92 = tpu.dynamic_rotate %66 by %c496_i32_55 dim 1 : vector<8x512xf32>, i32 -> vector<8x512xf32>
    %93 = vector.broadcast %13 : vector<1x512xf32> to vector<8x512xf32>
    %94 = arith.mulf %92, %93 : vector<8x512xf32>
    %c56 = arith.constant 56 : index
    %c0_56 = arith.constant 0 : index
    %95 = vector.load %arg11[%c56, %c0_56] : memref<144x512xf32, #tpu.memory_space<vmem>>, vector<8x512xf32>
    tpu.vector_store %arg11[%c56, %c0_56], %94 {strides = array<i32>} : memref<144x512xf32, #tpu.memory_space<vmem>>, vector<8x512xf32>,
    %c495_i32_57 = arith.constant 495 : i32
    %96 = tpu.dynamic_rotate %66 by %c495_i32_57 dim 1 : vector<8x512xf32>, i32 -> vector<8x512xf32>
    %97 = vector.broadcast %15 : vector<1x512xf32> to vector<8x512xf32>
    %98 = arith.mulf %96, %97 : vector<8x512xf32>
    %c64_58 = arith.constant 64 : index
    %c0_59 = arith.constant 0 : index
    %99 = vector.load %arg11[%c64_58, %c0_59] : memref<144x512xf32, #tpu.memory_space<vmem>>, vector<8x512xf32>
    tpu.vector_store %arg11[%c64_58, %c0_59], %98 {strides = array<i32>} : memref<144x512xf32, #tpu.memory_space<vmem>>, vector<8x512xf32>,
    %c0_60 = arith.constant 0 : index
    %c0_61 = arith.constant 0 : index
    %100 = vector.load %arg11[%c0_60, %c0_61] : memref<144x512xf32, #tpu.memory_space<vmem>>, vector<72x512xf32>
    %101 = arith.truncf %100 : vector<72x512xf32> to vector<72x512xbf16>
    %c0_62 = arith.constant 0 : index
    %c0_63 = arith.constant 0 : index
    %c0_64 = arith.constant 0 : index
    %102 = vector.load %arg4[%c0_62, %c0_63, %c0_64] : memref<3x40x72xbf16, #tpu.memory_space<vmem>>, vector<1x40x72xbf16>
    %103 = vector.shape_cast %102 : vector<1x40x72xbf16> to vector<40x72xbf16>
    %cst_65 = arith.constant dense<0.000000e+00> : vector<40x512xf32>
    %104 = tpu.matmul %103, %101, %cst_65 {dimension_numbers = #tpu.dot_dimension_numbers<[1], [0], [0], [1], [0, 0, 1, 1], [], []>} : vector<40x72xbf16>, vector<72x512xbf16>, vector<40x512xf32> -> vector<40x512xf32>
    %105 = vector.extract_strided_slice %104 {offsets = [0, 0], sizes = [8, 512], strides = [1, 1]} : vector<40x512xf32> to vector<8x512xf32>
    %106 = arith.addf %56, %105 : vector<8x512xf32>
    %107 = vector.extract_strided_slice %104 {offsets = [8, 0], sizes = [8, 512], strides = [1, 1]} : vector<40x512xf32> to vector<8x512xf32>
    %108 = arith.addf %57, %107 : vector<8x512xf32>
    %109 = vector.extract_strided_slice %104 {offsets = [16, 0], sizes = [8, 512], strides = [1, 1]} : vector<40x512xf32> to vector<8x512xf32>
    %110 = arith.addf %58, %109 : vector<8x512xf32>
    %111 = vector.extract_strided_slice %104 {offsets = [24, 0], sizes = [16, 512], strides = [1, 1]} : vector<40x512xf32> to vector<16x512xf32>
    %112 = arith.addf %59, %111 : vector<16x512xf32>
    %c1_66 = arith.constant 1 : index
    %c0_67 = arith.constant 0 : index
    %c0_68 = arith.constant 0 : index
    %113 = vector.load %arg8[%c1_66, %c0_67, %c0_68] : memref<12x8x1xf32, #tpu.memory_space<vmem>>, vector<1x8x1xf32>
    %114 = vector.shape_cast %113 : vector<1x8x1xf32> to vector<8x1xf32>
    %115 = vector.broadcast %114 : vector<8x1xf32> to vector<8x512xf32>
    %116 = arith.addf %106, %115 : vector<8x512xf32>
    %cst_69 = arith.constant 2.000000e-01 : f32
    %117 = vector.broadcast %cst_69 : f32 to vector<8x512xf32>
    %118 = arith.mulf %117, %116 : vector<8x512xf32>
    %119 = arith.maximumf %116, %118 : vector<8x512xf32>
    %c17_i32_70 = arith.constant 17 : i32
    %120 = tpu.dynamic_rotate %119 by %c17_i32_70 dim 1 : vector<8x512xf32>, i32 -> vector<8x512xf32>
    %121 = vector.broadcast %1 : vector<1x512xf32> to vector<8x512xf32>
    %122 = arith.mulf %120, %121 : vector<8x512xf32>
    %c0_71 = arith.constant 0 : index
    %c0_72 = arith.constant 0 : index
    %123 = vector.load %arg11[%c0_71, %c0_72] : memref<144x512xf32, #tpu.memory_space<vmem>>, vector<8x512xf32>
    tpu.vector_store %arg11[%c0_71, %c0_72], %122 {strides = array<i32>} : memref<144x512xf32, #tpu.memory_space<vmem>>, vector<8x512xf32>,
    %c16_i32_73 = arith.constant 16 : i32
    %124 = tpu.dynamic_rotate %119 by %c16_i32_73 dim 1 : vector<8x512xf32>, i32 -> vector<8x512xf32>
    %125 = vector.broadcast %3 : vector<1x512xf32> to vector<8x512xf32>
    %126 = arith.mulf %124, %125 : vector<8x512xf32>
    %c8_74 = arith.constant 8 : index
    %c0_75 = arith.constant 0 : index
    %127 = vector.load %arg11[%c8_74, %c0_75] : memref<144x512xf32, #tpu.memory_space<vmem>>, vector<8x512xf32>
    tpu.vector_store %arg11[%c8_74, %c0_75], %126 {strides = array<i32>} : memref<144x512xf32, #tpu.memory_space<vmem>>, vector<8x512xf32>,
    %c15_i32_76 = arith.constant 15 : i32
    %128 = tpu.dynamic_rotate %119 by %c15_i32_76 dim 1 : vector<8x512xf32>, i32 -> vector<8x512xf32>
    %129 = vector.broadcast %5 : vector<1x512xf32> to vector<8x512xf32>
    %130 = arith.mulf %128, %129 : vector<8x512xf32>
    %c16_77 = arith.constant 16 : index
    %c0_78 = arith.constant 0 : index
    %131 = vector.load %arg11[%c16_77, %c0_78] : memref<144x512xf32, #tpu.memory_space<vmem>>, vector<8x512xf32>
    tpu.vector_store %arg11[%c16_77, %c0_78], %130 {strides = array<i32>} : memref<144x512xf32, #tpu.memory_space<vmem>>, vector<8x512xf32>,
    %c1_i32_79 = arith.constant 1 : i32
    %132 = tpu.dynamic_rotate %119 by %c1_i32_79 dim 1 : vector<8x512xf32>, i32 -> vector<8x512xf32>
    %133 = vector.broadcast %7 : vector<1x512xf32> to vector<8x512xf32>
    %134 = arith.mulf %132, %133 : vector<8x512xf32>
    %c24_80 = arith.constant 24 : index
    %c0_81 = arith.constant 0 : index
    %135 = vector.load %arg11[%c24_80, %c0_81] : memref<144x512xf32, #tpu.memory_space<vmem>>, vector<8x512xf32>
    tpu.vector_store %arg11[%c24_80, %c0_81], %134 {strides = array<i32>} : memref<144x512xf32, #tpu.memory_space<vmem>>, vector<8x512xf32>,
    %c32_82 = arith.constant 32 : index
    %c0_83 = arith.constant 0 : index
    %136 = vector.load %arg11[%c32_82, %c0_83] : memref<144x512xf32, #tpu.memory_space<vmem>>, vector<8x512xf32>
    tpu.vector_store %arg11[%c32_82, %c0_83], %119 {strides = array<i32>} : memref<144x512xf32, #tpu.memory_space<vmem>>, vector<8x512xf32>,
    %c511_i32_84 = arith.constant 511 : i32
    %137 = tpu.dynamic_rotate %119 by %c511_i32_84 dim 1 : vector<8x512xf32>, i32 -> vector<8x512xf32>
    %138 = vector.broadcast %9 : vector<1x512xf32> to vector<8x512xf32>
    %139 = arith.mulf %137, %138 : vector<8x512xf32>
    %c40_85 = arith.constant 40 : index
    %c0_86 = arith.constant 0 : index
    %140 = vector.load %arg11[%c40_85, %c0_86] : memref<144x512xf32, #tpu.memory_space<vmem>>, vector<8x512xf32>
    tpu.vector_store %arg11[%c40_85, %c0_86], %139 {strides = array<i32>} : memref<144x512xf32, #tpu.memory_space<vmem>>, vector<8x512xf32>,
    %c497_i32_87 = arith.constant 497 : i32
    %141 = tpu.dynamic_rotate %119 by %c497_i32_87 dim 1 : vector<8x512xf32>, i32 -> vector<8x512xf32>
    %142 = vector.broadcast %11 : vector<1x512xf32> to vector<8x512xf32>
    %143 = arith.mulf %141, %142 : vector<8x512xf32>
    %c48_88 = arith.constant 48 : index
    %c0_89 = arith.constant 0 : index
    %144 = vector.load %arg11[%c48_88, %c0_89] : memref<144x512xf32, #tpu.memory_space<vmem>>, vector<8x512xf32>
    tpu.vector_store %arg11[%c48_88, %c0_89], %143 {strides = array<i32>} : memref<144x512xf32, #tpu.memory_space<vmem>>, vector<8x512xf32>,
    %c496_i32_90 = arith.constant 496 : i32
    %145 = tpu.dynamic_rotate %119 by %c496_i32_90 dim 1 : vector<8x512xf32>, i32 -> vector<8x512xf32>
    %146 = vector.broadcast %13 : vector<1x512xf32> to vector<8x512xf32>
    %147 = arith.mulf %145, %146 : vector<8x512xf32>
    %c56_91 = arith.constant 56 : index
    %c0_92 = arith.constant 0 : index
    %148 = vector.load %arg11[%c56_91, %c0_92] : memref<144x512xf32, #tpu.memory_space<vmem>>, vector<8x512xf32>
    tpu.vector_store %arg11[%c56_91, %c0_92], %147 {strides = array<i32>} : memref<144x512xf32, #tpu.memory_space<vmem>>, vector<8x512xf32>,
    %c495_i32_93 = arith.constant 495 : i32
    %149 = tpu.dynamic_rotate %119 by %c495_i32_93 dim 1 : vector<8x512xf32>, i32 -> vector<8x512xf32>
    %150 = vector.broadcast %15 : vector<1x512xf32> to vector<8x512xf32>
    %151 = arith.mulf %149, %150 : vector<8x512xf32>
    %c64_94 = arith.constant 64 : index
    %c0_95 = arith.constant 0 : index
    %152 = vector.load %arg11[%c64_94, %c0_95] : memref<144x512xf32, #tpu.memory_space<vmem>>, vector<8x512xf32>
    tpu.vector_store %arg11[%c64_94, %c0_95], %151 {strides = array<i32>} : memref<144x512xf32, #tpu.memory_space<vmem>>, vector<8x512xf32>,
    %c0_96 = arith.constant 0 : index
    %c0_97 = arith.constant 0 : index
    %153 = vector.load %arg11[%c0_96, %c0_97] : memref<144x512xf32, #tpu.memory_space<vmem>>, vector<72x512xf32>
    %154 = arith.truncf %153 : vector<72x512xf32> to vector<72x512xbf16>
    %c0_98 = arith.constant 0 : index
    %c0_99 = arith.constant 0 : index
    %c0_100 = arith.constant 0 : index
    %155 = vector.load %arg5[%c0_98, %c0_99, %c0_100] : memref<3x32x72xbf16, #tpu.memory_space<vmem>>, vector<1x32x72xbf16>
    %156 = vector.shape_cast %155 : vector<1x32x72xbf16> to vector<32x72xbf16>
    %cst_101 = arith.constant dense<0.000000e+00> : vector<32x512xf32>
    %157 = tpu.matmul %156, %154, %cst_101 {dimension_numbers = #tpu.dot_dimension_numbers<[1], [0], [0], [1], [0, 0, 1, 1], [], []>} : vector<32x72xbf16>, vector<72x512xbf16>, vector<32x512xf32> -> vector<32x512xf32>
    %158 = vector.extract_strided_slice %157 {offsets = [0, 0], sizes = [8, 512], strides = [1, 1]} : vector<32x512xf32> to vector<8x512xf32>
    %159 = arith.addf %108, %158 : vector<8x512xf32>
    %160 = vector.extract_strided_slice %157 {offsets = [8, 0], sizes = [8, 512], strides = [1, 1]} : vector<32x512xf32> to vector<8x512xf32>
    %161 = arith.addf %110, %160 : vector<8x512xf32>
    %162 = vector.extract_strided_slice %157 {offsets = [16, 0], sizes = [16, 512], strides = [1, 1]} : vector<32x512xf32> to vector<16x512xf32>
    %163 = arith.addf %112, %162 : vector<16x512xf32>
    %c2_102 = arith.constant 2 : index
    %c0_103 = arith.constant 0 : index
    %c0_104 = arith.constant 0 : index
    %164 = vector.load %arg8[%c2_102, %c0_103, %c0_104] : memref<12x8x1xf32, #tpu.memory_space<vmem>>, vector<1x8x1xf32>
    %165 = vector.shape_cast %164 : vector<1x8x1xf32> to vector<8x1xf32>
    %166 = vector.broadcast %165 : vector<8x1xf32> to vector<8x512xf32>
    %167 = arith.addf %159, %166 : vector<8x512xf32>
    %cst_105 = arith.constant 2.000000e-01 : f32
    %168 = vector.broadcast %cst_105 : f32 to vector<8x512xf32>
    %169 = arith.mulf %168, %167 : vector<8x512xf32>
    %170 = arith.maximumf %167, %169 : vector<8x512xf32>
    %c17_i32_106 = arith.constant 17 : i32
    %171 = tpu.dynamic_rotate %170 by %c17_i32_106 dim 1 : vector<8x512xf32>, i32 -> vector<8x512xf32>
    %172 = vector.broadcast %1 : vector<1x512xf32> to vector<8x512xf32>
    %173 = arith.mulf %171, %172 : vector<8x512xf32>
    %c0_107 = arith.constant 0 : index
    %c0_108 = arith.constant 0 : index
    %174 = vector.load %arg11[%c0_107, %c0_108] : memref<144x512xf32, #tpu.memory_space<vmem>>, vector<8x512xf32>
    tpu.vector_store %arg11[%c0_107, %c0_108], %173 {strides = array<i32>} : memref<144x512xf32, #tpu.memory_space<vmem>>, vector<8x512xf32>,
    %c16_i32_109 = arith.constant 16 : i32
    %175 = tpu.dynamic_rotate %170 by %c16_i32_109 dim 1 : vector<8x512xf32>, i32 -> vector<8x512xf32>
    %176 = vector.broadcast %3 : vector<1x512xf32> to vector<8x512xf32>
    %177 = arith.mulf %175, %176 : vector<8x512xf32>
    %c8_110 = arith.constant 8 : index
    %c0_111 = arith.constant 0 : index
    %178 = vector.load %arg11[%c8_110, %c0_111] : memref<144x512xf32, #tpu.memory_space<vmem>>, vector<8x512xf32>
    tpu.vector_store %arg11[%c8_110, %c0_111], %177 {strides = array<i32>} : memref<144x512xf32, #tpu.memory_space<vmem>>, vector<8x512xf32>,
    %c15_i32_112 = arith.constant 15 : i32
    %179 = tpu.dynamic_rotate %170 by %c15_i32_112 dim 1 : vector<8x512xf32>, i32 -> vector<8x512xf32>
    %180 = vector.broadcast %5 : vector<1x512xf32> to vector<8x512xf32>
    %181 = arith.mulf %179, %180 : vector<8x512xf32>
    %c16_113 = arith.constant 16 : index
    %c0_114 = arith.constant 0 : index
    %182 = vector.load %arg11[%c16_113, %c0_114] : memref<144x512xf32, #tpu.memory_space<vmem>>, vector<8x512xf32>
    tpu.vector_store %arg11[%c16_113, %c0_114], %181 {strides = array<i32>} : memref<144x512xf32, #tpu.memory_space<vmem>>, vector<8x512xf32>,
    %c1_i32_115 = arith.constant 1 : i32
    %183 = tpu.dynamic_rotate %170 by %c1_i32_115 dim 1 : vector<8x512xf32>, i32 -> vector<8x512xf32>
    %184 = vector.broadcast %7 : vector<1x512xf32> to vector<8x512xf32>
    %185 = arith.mulf %183, %184 : vector<8x512xf32>
    %c24_116 = arith.constant 24 : index
    %c0_117 = arith.constant 0 : index
    %186 = vector.load %arg11[%c24_116, %c0_117] : memref<144x512xf32, #tpu.memory_space<vmem>>, vector<8x512xf32>
    tpu.vector_store %arg11[%c24_116, %c0_117], %185 {strides = array<i32>} : memref<144x512xf32, #tpu.memory_space<vmem>>, vector<8x512xf32>,
    %c32_118 = arith.constant 32 : index
    %c0_119 = arith.constant 0 : index
    %187 = vector.load %arg11[%c32_118, %c0_119] : memref<144x512xf32, #tpu.memory_space<vmem>>, vector<8x512xf32>
    tpu.vector_store %arg11[%c32_118, %c0_119], %170 {strides = array<i32>} : memref<144x512xf32, #tpu.memory_space<vmem>>, vector<8x512xf32>,
    %c511_i32_120 = arith.constant 511 : i32
    %188 = tpu.dynamic_rotate %170 by %c511_i32_120 dim 1 : vector<8x512xf32>, i32 -> vector<8x512xf32>
    %189 = vector.broadcast %9 : vector<1x512xf32> to vector<8x512xf32>
    %190 = arith.mulf %188, %189 : vector<8x512xf32>
    %c40_121 = arith.constant 40 : index
    %c0_122 = arith.constant 0 : index
    %191 = vector.load %arg11[%c40_121, %c0_122] : memref<144x512xf32, #tpu.memory_space<vmem>>, vector<8x512xf32>
    tpu.vector_store %arg11[%c40_121, %c0_122], %190 {strides = array<i32>} : memref<144x512xf32, #tpu.memory_space<vmem>>, vector<8x512xf32>,
    %c497_i32_123 = arith.constant 497 : i32
    %192 = tpu.dynamic_rotate %170 by %c497_i32_123 dim 1 : vector<8x512xf32>, i32 -> vector<8x512xf32>
    %193 = vector.broadcast %11 : vector<1x512xf32> to vector<8x512xf32>
    %194 = arith.mulf %192, %193 : vector<8x512xf32>
    %c48_124 = arith.constant 48 : index
    %c0_125 = arith.constant 0 : index
    %195 = vector.load %arg11[%c48_124, %c0_125] : memref<144x512xf32, #tpu.memory_space<vmem>>, vector<8x512xf32>
    tpu.vector_store %arg11[%c48_124, %c0_125], %194 {strides = array<i32>} : memref<144x512xf32, #tpu.memory_space<vmem>>, vector<8x512xf32>,
    %c496_i32_126 = arith.constant 496 : i32
    %196 = tpu.dynamic_rotate %170 by %c496_i32_126 dim 1 : vector<8x512xf32>, i32 -> vector<8x512xf32>
    %197 = vector.broadcast %13 : vector<1x512xf32> to vector<8x512xf32>
    %198 = arith.mulf %196, %197 : vector<8x512xf32>
    %c56_127 = arith.constant 56 : index
    %c0_128 = arith.constant 0 : index
    %199 = vector.load %arg11[%c56_127, %c0_128] : memref<144x512xf32, #tpu.memory_space<vmem>>, vector<8x512xf32>
    tpu.vector_store %arg11[%c56_127, %c0_128], %198 {strides = array<i32>} : memref<144x512xf32, #tpu.memory_space<vmem>>, vector<8x512xf32>,
    %c495_i32_129 = arith.constant 495 : i32
    %200 = tpu.dynamic_rotate %170 by %c495_i32_129 dim 1 : vector<8x512xf32>, i32 -> vector<8x512xf32>
    %201 = vector.broadcast %15 : vector<1x512xf32> to vector<8x512xf32>
    %202 = arith.mulf %200, %201 : vector<8x512xf32>
    %c64_130 = arith.constant 64 : index
    %c0_131 = arith.constant 0 : index
    %203 = vector.load %arg11[%c64_130, %c0_131] : memref<144x512xf32, #tpu.memory_space<vmem>>, vector<8x512xf32>
    tpu.vector_store %arg11[%c64_130, %c0_131], %202 {strides = array<i32>} : memref<144x512xf32, #tpu.memory_space<vmem>>, vector<8x512xf32>,
    %c0_132 = arith.constant 0 : index
    %c0_133 = arith.constant 0 : index
    %204 = vector.load %arg11[%c0_132, %c0_133] : memref<144x512xf32, #tpu.memory_space<vmem>>, vector<72x512xf32>
    %205 = arith.truncf %204 : vector<72x512xf32> to vector<72x512xbf16>
    %c0_134 = arith.constant 0 : index
    %c0_135 = arith.constant 0 : index
    %c0_136 = arith.constant 0 : index
    %206 = vector.load %arg6[%c0_134, %c0_135, %c0_136] : memref<3x24x72xbf16, #tpu.memory_space<vmem>>, vector<1x24x72xbf16>
    %207 = vector.shape_cast %206 : vector<1x24x72xbf16> to vector<24x72xbf16>
    %cst_137 = arith.constant dense<0.000000e+00> : vector<24x512xf32>
    %208 = tpu.matmul %207, %205, %cst_137 {dimension_numbers = #tpu.dot_dimension_numbers<[1], [0], [0], [1], [0, 0, 1, 1], [], []>} : vector<24x72xbf16>, vector<72x512xbf16>, vector<24x512xf32> -> vector<24x512xf32>
    %209 = vector.extract_strided_slice %208 {offsets = [0, 0], sizes = [8, 512], strides = [1, 1]} : vector<24x512xf32> to vector<8x512xf32>
    %210 = arith.addf %161, %209 : vector<8x512xf32>
    %211 = vector.extract_strided_slice %208 {offsets = [8, 0], sizes = [16, 512], strides = [1, 1]} : vector<24x512xf32> to vector<16x512xf32>
    %212 = arith.addf %163, %211 : vector<16x512xf32>
    %c3_138 = arith.constant 3 : index
    %c0_139 = arith.constant 0 : index
    %c0_140 = arith.constant 0 : index
    %213 = vector.load %arg8[%c3_138, %c0_139, %c0_140] : memref<12x8x1xf32, #tpu.memory_space<vmem>>, vector<1x8x1xf32>
    %214 = vector.shape_cast %213 : vector<1x8x1xf32> to vector<8x1xf32>
    %215 = vector.broadcast %214 : vector<8x1xf32> to vector<8x512xf32>
    %216 = arith.addf %210, %215 : vector<8x512xf32>
    %cst_141 = arith.constant 2.000000e-01 : f32
    %217 = vector.broadcast %cst_141 : f32 to vector<8x512xf32>
    %218 = arith.mulf %217, %216 : vector<8x512xf32>
    %219 = arith.maximumf %216, %218 : vector<8x512xf32>
    %c17_i32_142 = arith.constant 17 : i32
    %220 = tpu.dynamic_rotate %219 by %c17_i32_142 dim 1 : vector<8x512xf32>, i32 -> vector<8x512xf32>
    %221 = vector.broadcast %1 : vector<1x512xf32> to vector<8x512xf32>
    %222 = arith.mulf %220, %221 : vector<8x512xf32>
    %c0_143 = arith.constant 0 : index
    %c0_144 = arith.constant 0 : index
    %223 = vector.load %arg11[%c0_143, %c0_144] : memref<144x512xf32, #tpu.memory_space<vmem>>, vector<8x512xf32>
    tpu.vector_store %arg11[%c0_143, %c0_144], %222 {strides = array<i32>} : memref<144x512xf32, #tpu.memory_space<vmem>>, vector<8x512xf32>,
    %c16_i32_145 = arith.constant 16 : i32
    %224 = tpu.dynamic_rotate %219 by %c16_i32_145 dim 1 : vector<8x512xf32>, i32 -> vector<8x512xf32>
    %225 = vector.broadcast %3 : vector<1x512xf32> to vector<8x512xf32>
    %226 = arith.mulf %224, %225 : vector<8x512xf32>
    %c8_146 = arith.constant 8 : index
    %c0_147 = arith.constant 0 : index
    %227 = vector.load %arg11[%c8_146, %c0_147] : memref<144x512xf32, #tpu.memory_space<vmem>>, vector<8x512xf32>
    tpu.vector_store %arg11[%c8_146, %c0_147], %226 {strides = array<i32>} : memref<144x512xf32, #tpu.memory_space<vmem>>, vector<8x512xf32>,
    %c15_i32_148 = arith.constant 15 : i32
    %228 = tpu.dynamic_rotate %219 by %c15_i32_148 dim 1 : vector<8x512xf32>, i32 -> vector<8x512xf32>
    %229 = vector.broadcast %5 : vector<1x512xf32> to vector<8x512xf32>
    %230 = arith.mulf %228, %229 : vector<8x512xf32>
    %c16_149 = arith.constant 16 : index
    %c0_150 = arith.constant 0 : index
    %231 = vector.load %arg11[%c16_149, %c0_150] : memref<144x512xf32, #tpu.memory_space<vmem>>, vector<8x512xf32>
    tpu.vector_store %arg11[%c16_149, %c0_150], %230 {strides = array<i32>} : memref<144x512xf32, #tpu.memory_space<vmem>>, vector<8x512xf32>,
    %c1_i32_151 = arith.constant 1 : i32
    %232 = tpu.dynamic_rotate %219 by %c1_i32_151 dim 1 : vector<8x512xf32>, i32 -> vector<8x512xf32>
    %233 = vector.broadcast %7 : vector<1x512xf32> to vector<8x512xf32>
    %234 = arith.mulf %232, %233 : vector<8x512xf32>
    %c24_152 = arith.constant 24 : index
    %c0_153 = arith.constant 0 : index
    %235 = vector.load %arg11[%c24_152, %c0_153] : memref<144x512xf32, #tpu.memory_space<vmem>>, vector<8x512xf32>
    tpu.vector_store %arg11[%c24_152, %c0_153], %234 {strides = array<i32>} : memref<144x512xf32, #tpu.memory_space<vmem>>, vector<8x512xf32>,
    %c32_154 = arith.constant 32 : index
    %c0_155 = arith.constant 0 : index
    %236 = vector.load %arg11[%c32_154, %c0_155] : memref<144x512xf32, #tpu.memory_space<vmem>>, vector<8x512xf32>
    tpu.vector_store %arg11[%c32_154, %c0_155], %219 {strides = array<i32>} : memref<144x512xf32, #tpu.memory_space<vmem>>, vector<8x512xf32>,
    %c511_i32_156 = arith.constant 511 : i32
    %237 = tpu.dynamic_rotate %219 by %c511_i32_156 dim 1 : vector<8x512xf32>, i32 -> vector<8x512xf32>
    %238 = vector.broadcast %9 : vector<1x512xf32> to vector<8x512xf32>
    %239 = arith.mulf %237, %238 : vector<8x512xf32>
    %c40_157 = arith.constant 40 : index
    %c0_158 = arith.constant 0 : index
    %240 = vector.load %arg11[%c40_157, %c0_158] : memref<144x512xf32, #tpu.memory_space<vmem>>, vector<8x512xf32>
    tpu.vector_store %arg11[%c40_157, %c0_158], %239 {strides = array<i32>} : memref<144x512xf32, #tpu.memory_space<vmem>>, vector<8x512xf32>,
    %c497_i32_159 = arith.constant 497 : i32
    %241 = tpu.dynamic_rotate %219 by %c497_i32_159 dim 1 : vector<8x512xf32>, i32 -> vector<8x512xf32>
    %242 = vector.broadcast %11 : vector<1x512xf32> to vector<8x512xf32>
    %243 = arith.mulf %241, %242 : vector<8x512xf32>
    %c48_160 = arith.constant 48 : index
    %c0_161 = arith.constant 0 : index
    %244 = vector.load %arg11[%c48_160, %c0_161] : memref<144x512xf32, #tpu.memory_space<vmem>>, vector<8x512xf32>
    tpu.vector_store %arg11[%c48_160, %c0_161], %243 {strides = array<i32>} : memref<144x512xf32, #tpu.memory_space<vmem>>, vector<8x512xf32>,
    %c496_i32_162 = arith.constant 496 : i32
    %245 = tpu.dynamic_rotate %219 by %c496_i32_162 dim 1 : vector<8x512xf32>, i32 -> vector<8x512xf32>
    %246 = vector.broadcast %13 : vector<1x512xf32> to vector<8x512xf32>
    %247 = arith.mulf %245, %246 : vector<8x512xf32>
    %c56_163 = arith.constant 56 : index
    %c0_164 = arith.constant 0 : index
    %248 = vector.load %arg11[%c56_163, %c0_164] : memref<144x512xf32, #tpu.memory_space<vmem>>, vector<8x512xf32>
    tpu.vector_store %arg11[%c56_163, %c0_164], %247 {strides = array<i32>} : memref<144x512xf32, #tpu.memory_space<vmem>>, vector<8x512xf32>,
    %c495_i32_165 = arith.constant 495 : i32
    %249 = tpu.dynamic_rotate %219 by %c495_i32_165 dim 1 : vector<8x512xf32>, i32 -> vector<8x512xf32>
    %250 = vector.broadcast %15 : vector<1x512xf32> to vector<8x512xf32>
    %251 = arith.mulf %249, %250 : vector<8x512xf32>
    %c64_166 = arith.constant 64 : index
    %c0_167 = arith.constant 0 : index
    %252 = vector.load %arg11[%c64_166, %c0_167] : memref<144x512xf32, #tpu.memory_space<vmem>>, vector<8x512xf32>
    tpu.vector_store %arg11[%c64_166, %c0_167], %251 {strides = array<i32>} : memref<144x512xf32, #tpu.memory_space<vmem>>, vector<8x512xf32>,
    %c0_168 = arith.constant 0 : index
    %c0_169 = arith.constant 0 : index
    %253 = vector.load %arg11[%c0_168, %c0_169] : memref<144x512xf32, #tpu.memory_space<vmem>>, vector<72x512xf32>
    %254 = arith.truncf %253 : vector<72x512xf32> to vector<72x512xbf16>
    %c0_170 = arith.constant 0 : index
    %c0_171 = arith.constant 0 : index
    %c0_172 = arith.constant 0 : index
    %255 = vector.load %arg7[%c0_170, %c0_171, %c0_172] : memref<3x16x72xbf16, #tpu.memory_space<vmem>>, vector<1x16x72xbf16>
    %256 = vector.shape_cast %255 : vector<1x16x72xbf16> to vector<16x72xbf16>
    %cst_173 = arith.constant dense<0.000000e+00> : vector<16x512xf32>
    %257 = tpu.matmul %256, %254, %cst_173 {dimension_numbers = #tpu.dot_dimension_numbers<[1], [0], [0], [1], [0, 0, 1, 1], [], []>} : vector<16x72xbf16>, vector<72x512xbf16>, vector<16x512xf32> -> vector<16x512xf32>
    %258 = arith.addf %212, %257 : vector<16x512xf32>
    %c0_174 = arith.constant 0 : index
    %c0_175 = arith.constant 0 : index
    %c0_176 = arith.constant 0 : index
    %259 = vector.load %arg9[%c0_174, %c0_175, %c0_176] : memref<3x16x1xf32, #tpu.memory_space<vmem>>, vector<1x16x1xf32>
    %260 = vector.shape_cast %259 : vector<1x16x1xf32> to vector<16x1xf32>
    %261 = vector.broadcast %260 : vector<16x1xf32> to vector<16x512xf32>
    %262 = arith.addf %258, %261 : vector<16x512xf32>
    %cst_177 = arith.constant 2.000000e-01 : f32
    %263 = vector.broadcast %cst_177 : f32 to vector<16x512xf32>
    %264 = arith.mulf %262, %263 : vector<16x512xf32>
    %265 = arith.addf %264, %16 : vector<16x512xf32>
    %c17_i32_178 = arith.constant 17 : i32
    %266 = tpu.dynamic_rotate %265 by %c17_i32_178 dim 1 : vector<16x512xf32>, i32 -> vector<16x512xf32>
    %267 = vector.broadcast %1 : vector<1x512xf32> to vector<16x512xf32>
    %268 = arith.mulf %266, %267 : vector<16x512xf32>
    %c0_179 = arith.constant 0 : index
    %c0_180 = arith.constant 0 : index
    %269 = vector.load %arg11[%c0_179, %c0_180] : memref<144x512xf32, #tpu.memory_space<vmem>>, vector<16x512xf32>
    tpu.vector_store %arg11[%c0_179, %c0_180], %268 {strides = array<i32>} : memref<144x512xf32, #tpu.memory_space<vmem>>, vector<16x512xf32>,
    %c16_i32_181 = arith.constant 16 : i32
    %270 = tpu.dynamic_rotate %265 by %c16_i32_181 dim 1 : vector<16x512xf32>, i32 -> vector<16x512xf32>
    %271 = vector.broadcast %3 : vector<1x512xf32> to vector<16x512xf32>
    %272 = arith.mulf %270, %271 : vector<16x512xf32>
    %c16_182 = arith.constant 16 : index
    %c0_183 = arith.constant 0 : index
    %273 = vector.load %arg11[%c16_182, %c0_183] : memref<144x512xf32, #tpu.memory_space<vmem>>, vector<16x512xf32>
    tpu.vector_store %arg11[%c16_182, %c0_183], %272 {strides = array<i32>} : memref<144x512xf32, #tpu.memory_space<vmem>>, vector<16x512xf32>,
    %c15_i32_184 = arith.constant 15 : i32
    %274 = tpu.dynamic_rotate %265 by %c15_i32_184 dim 1 : vector<16x512xf32>, i32 -> vector<16x512xf32>
    %275 = vector.broadcast %5 : vector<1x512xf32> to vector<16x512xf32>
    %276 = arith.mulf %274, %275 : vector<16x512xf32>
    %c32_185 = arith.constant 32 : index
    %c0_186 = arith.constant 0 : index
    %277 = vector.load %arg11[%c32_185, %c0_186] : memref<144x512xf32, #tpu.memory_space<vmem>>, vector<16x512xf32>
    tpu.vector_store %arg11[%c32_185, %c0_186], %276 {strides = array<i32>} : memref<144x512xf32, #tpu.memory_space<vmem>>, vector<16x512xf32>,
    %c1_i32_187 = arith.constant 1 : i32
    %278 = tpu.dynamic_rotate %265 by %c1_i32_187 dim 1 : vector<16x512xf32>, i32 -> vector<16x512xf32>
    %279 = vector.broadcast %7 : vector<1x512xf32> to vector<16x512xf32>
    %280 = arith.mulf %278, %279 : vector<16x512xf32>
    %c48_188 = arith.constant 48 : index
    %c0_189 = arith.constant 0 : index
    %281 = vector.load %arg11[%c48_188, %c0_189] : memref<144x512xf32, #tpu.memory_space<vmem>>, vector<16x512xf32>
    tpu.vector_store %arg11[%c48_188, %c0_189], %280 {strides = array<i32>} : memref<144x512xf32, #tpu.memory_space<vmem>>, vector<16x512xf32>,
    %c64_190 = arith.constant 64 : index
    %c0_191 = arith.constant 0 : index
    %282 = vector.load %arg11[%c64_190, %c0_191] : memref<144x512xf32, #tpu.memory_space<vmem>>, vector<16x512xf32>
    tpu.vector_store %arg11[%c64_190, %c0_191], %265 {strides = array<i32>} : memref<144x512xf32, #tpu.memory_space<vmem>>, vector<16x512xf32>,
    %c511_i32_192 = arith.constant 511 : i32
    %283 = tpu.dynamic_rotate %265 by %c511_i32_192 dim 1 : vector<16x512xf32>, i32 -> vector<16x512xf32>
    %284 = vector.broadcast %9 : vector<1x512xf32> to vector<16x512xf32>
    %285 = arith.mulf %283, %284 : vector<16x512xf32>
    %c80_193 = arith.constant 80 : index
    %c0_194 = arith.constant 0 : index
    %286 = vector.load %arg11[%c80_193, %c0_194] : memref<144x512xf32, #tpu.memory_space<vmem>>, vector<16x512xf32>
    tpu.vector_store %arg11[%c80_193, %c0_194], %285 {strides = array<i32>} : memref<144x512xf32, #tpu.memory_space<vmem>>, vector<16x512xf32>,
    %c497_i32_195 = arith.constant 497 : i32
    %287 = tpu.dynamic_rotate %265 by %c497_i32_195 dim 1 : vector<16x512xf32>, i32 -> vector<16x512xf32>
    %288 = vector.broadcast %11 : vector<1x512xf32> to vector<16x512xf32>
    %289 = arith.mulf %287, %288 : vector<16x512xf32>
    %c96_196 = arith.constant 96 : index
    %c0_197 = arith.constant 0 : index
    %290 = vector.load %arg11[%c96_196, %c0_197] : memref<144x512xf32, #tpu.memory_space<vmem>>, vector<16x512xf32>
    tpu.vector_store %arg11[%c96_196, %c0_197], %289 {strides = array<i32>} : memref<144x512xf32, #tpu.memory_space<vmem>>, vector<16x512xf32>,
    %c496_i32_198 = arith.constant 496 : i32
    %291 = tpu.dynamic_rotate %265 by %c496_i32_198 dim 1 : vector<16x512xf32>, i32 -> vector<16x512xf32>
    %292 = vector.broadcast %13 : vector<1x512xf32> to vector<16x512xf32>
    %293 = arith.mulf %291, %292 : vector<16x512xf32>
    %c112_199 = arith.constant 112 : index
    %c0_200 = arith.constant 0 : index
    %294 = vector.load %arg11[%c112_199, %c0_200] : memref<144x512xf32, #tpu.memory_space<vmem>>, vector<16x512xf32>
    tpu.vector_store %arg11[%c112_199, %c0_200], %293 {strides = array<i32>} : memref<144x512xf32, #tpu.memory_space<vmem>>, vector<16x512xf32>,
    %c495_i32_201 = arith.constant 495 : i32
    %295 = tpu.dynamic_rotate %265 by %c495_i32_201 dim 1 : vector<16x512xf32>, i32 -> vector<16x512xf32>
    %296 = vector.broadcast %15 : vector<1x512xf32> to vector<16x512xf32>
    %297 = arith.mulf %295, %296 : vector<16x512xf32>
    %c128_202 = arith.constant 128 : index
    %c0_203 = arith.constant 0 : index
    %298 = vector.load %arg11[%c128_202, %c0_203] : memref<144x512xf32, #tpu.memory_space<vmem>>, vector<16x512xf32>
    tpu.vector_store %arg11[%c128_202, %c0_203], %297 {strides = array<i32>} : memref<144x512xf32, #tpu.memory_space<vmem>>, vector<16x512xf32>,
    %c0_204 = arith.constant 0 : index
    %c0_205 = arith.constant 0 : index
    %299 = vector.load %arg11[%c0_204, %c0_205] : memref<144x512xf32, #tpu.memory_space<vmem>>, vector<144x512xf32>
    %300 = arith.truncf %299 : vector<144x512xf32> to vector<144x512xbf16>
    %c1_206 = arith.constant 1 : index
    %c0_207 = arith.constant 0 : index
    %c0_208 = arith.constant 0 : index
    %301 = vector.load %arg3[%c1_206, %c0_207, %c0_208] : memref<3x48x144xbf16, #tpu.memory_space<vmem>>, vector<1x48x144xbf16>
    %302 = vector.shape_cast %301 : vector<1x48x144xbf16> to vector<48x144xbf16>
    %cst_209 = arith.constant dense<0.000000e+00> : vector<48x512xf32>
    %303 = tpu.matmul %302, %300, %cst_209 {dimension_numbers = #tpu.dot_dimension_numbers<[1], [0], [0], [1], [0, 0, 1, 1], [], []>} : vector<48x144xbf16>, vector<144x512xbf16>, vector<48x512xf32> -> vector<48x512xf32>
    %304 = vector.extract_strided_slice %303 {offsets = [0, 0], sizes = [8, 512], strides = [1, 1]} : vector<48x512xf32> to vector<8x512xf32>
    %305 = vector.extract_strided_slice %303 {offsets = [8, 0], sizes = [8, 512], strides = [1, 1]} : vector<48x512xf32> to vector<8x512xf32>
    %306 = vector.extract_strided_slice %303 {offsets = [16, 0], sizes = [8, 512], strides = [1, 1]} : vector<48x512xf32> to vector<8x512xf32>
    %307 = vector.extract_strided_slice %303 {offsets = [24, 0], sizes = [8, 512], strides = [1, 1]} : vector<48x512xf32> to vector<8x512xf32>
    %308 = vector.extract_strided_slice %303 {offsets = [32, 0], sizes = [16, 512], strides = [1, 1]} : vector<48x512xf32> to vector<16x512xf32>
    %c4 = arith.constant 4 : index
    %c0_210 = arith.constant 0 : index
    %c0_211 = arith.constant 0 : index
    %309 = vector.load %arg8[%c4, %c0_210, %c0_211] : memref<12x8x1xf32, #tpu.memory_space<vmem>>, vector<1x8x1xf32>
    %310 = vector.shape_cast %309 : vector<1x8x1xf32> to vector<8x1xf32>
    %311 = vector.broadcast %310 : vector<8x1xf32> to vector<8x512xf32>
    %312 = arith.addf %304, %311 : vector<8x512xf32>
    %cst_212 = arith.constant 2.000000e-01 : f32
    %313 = vector.broadcast %cst_212 : f32 to vector<8x512xf32>
    %314 = arith.mulf %313, %312 : vector<8x512xf32>
    %315 = arith.maximumf %312, %314 : vector<8x512xf32>
    %c17_i32_213 = arith.constant 17 : i32
    %316 = tpu.dynamic_rotate %315 by %c17_i32_213 dim 1 : vector<8x512xf32>, i32 -> vector<8x512xf32>
    %317 = vector.broadcast %1 : vector<1x512xf32> to vector<8x512xf32>
    %318 = arith.mulf %316, %317 : vector<8x512xf32>
    %c0_214 = arith.constant 0 : index
    %c0_215 = arith.constant 0 : index
    %319 = vector.load %arg11[%c0_214, %c0_215] : memref<144x512xf32, #tpu.memory_space<vmem>>, vector<8x512xf32>
    tpu.vector_store %arg11[%c0_214, %c0_215], %318 {strides = array<i32>} : memref<144x512xf32, #tpu.memory_space<vmem>>, vector<8x512xf32>,
    %c16_i32_216 = arith.constant 16 : i32
    %320 = tpu.dynamic_rotate %315 by %c16_i32_216 dim 1 : vector<8x512xf32>, i32 -> vector<8x512xf32>
    %321 = vector.broadcast %3 : vector<1x512xf32> to vector<8x512xf32>
    %322 = arith.mulf %320, %321 : vector<8x512xf32>
    %c8_217 = arith.constant 8 : index
    %c0_218 = arith.constant 0 : index
    %323 = vector.load %arg11[%c8_217, %c0_218] : memref<144x512xf32, #tpu.memory_space<vmem>>, vector<8x512xf32>
    tpu.vector_store %arg11[%c8_217, %c0_218], %322 {strides = array<i32>} : memref<144x512xf32, #tpu.memory_space<vmem>>, vector<8x512xf32>,
    %c15_i32_219 = arith.constant 15 : i32
    %324 = tpu.dynamic_rotate %315 by %c15_i32_219 dim 1 : vector<8x512xf32>, i32 -> vector<8x512xf32>
    %325 = vector.broadcast %5 : vector<1x512xf32> to vector<8x512xf32>
    %326 = arith.mulf %324, %325 : vector<8x512xf32>
    %c16_220 = arith.constant 16 : index
    %c0_221 = arith.constant 0 : index
    %327 = vector.load %arg11[%c16_220, %c0_221] : memref<144x512xf32, #tpu.memory_space<vmem>>, vector<8x512xf32>
    tpu.vector_store %arg11[%c16_220, %c0_221], %326 {strides = array<i32>} : memref<144x512xf32, #tpu.memory_space<vmem>>, vector<8x512xf32>,
    %c1_i32_222 = arith.constant 1 : i32
    %328 = tpu.dynamic_rotate %315 by %c1_i32_222 dim 1 : vector<8x512xf32>, i32 -> vector<8x512xf32>
    %329 = vector.broadcast %7 : vector<1x512xf32> to vector<8x512xf32>
    %330 = arith.mulf %328, %329 : vector<8x512xf32>
    %c24_223 = arith.constant 24 : index
    %c0_224 = arith.constant 0 : index
    %331 = vector.load %arg11[%c24_223, %c0_224] : memref<144x512xf32, #tpu.memory_space<vmem>>, vector<8x512xf32>
    tpu.vector_store %arg11[%c24_223, %c0_224], %330 {strides = array<i32>} : memref<144x512xf32, #tpu.memory_space<vmem>>, vector<8x512xf32>,
    %c32_225 = arith.constant 32 : index
    %c0_226 = arith.constant 0 : index
    %332 = vector.load %arg11[%c32_225, %c0_226] : memref<144x512xf32, #tpu.memory_space<vmem>>, vector<8x512xf32>
    tpu.vector_store %arg11[%c32_225, %c0_226], %315 {strides = array<i32>} : memref<144x512xf32, #tpu.memory_space<vmem>>, vector<8x512xf32>,
    %c511_i32_227 = arith.constant 511 : i32
    %333 = tpu.dynamic_rotate %315 by %c511_i32_227 dim 1 : vector<8x512xf32>, i32 -> vector<8x512xf32>
    %334 = vector.broadcast %9 : vector<1x512xf32> to vector<8x512xf32>
    %335 = arith.mulf %333, %334 : vector<8x512xf32>
    %c40_228 = arith.constant 40 : index
    %c0_229 = arith.constant 0 : index
    %336 = vector.load %arg11[%c40_228, %c0_229] : memref<144x512xf32, #tpu.memory_space<vmem>>, vector<8x512xf32>
    tpu.vector_store %arg11[%c40_228, %c0_229], %335 {strides = array<i32>} : memref<144x512xf32, #tpu.memory_space<vmem>>, vector<8x512xf32>,
    %c497_i32_230 = arith.constant 497 : i32
    %337 = tpu.dynamic_rotate %315 by %c497_i32_230 dim 1 : vector<8x512xf32>, i32 -> vector<8x512xf32>
    %338 = vector.broadcast %11 : vector<1x512xf32> to vector<8x512xf32>
    %339 = arith.mulf %337, %338 : vector<8x512xf32>
    %c48_231 = arith.constant 48 : index
    %c0_232 = arith.constant 0 : index
    %340 = vector.load %arg11[%c48_231, %c0_232] : memref<144x512xf32, #tpu.memory_space<vmem>>, vector<8x512xf32>
    tpu.vector_store %arg11[%c48_231, %c0_232], %339 {strides = array<i32>} : memref<144x512xf32, #tpu.memory_space<vmem>>, vector<8x512xf32>,
    %c496_i32_233 = arith.constant 496 : i32
    %341 = tpu.dynamic_rotate %315 by %c496_i32_233 dim 1 : vector<8x512xf32>, i32 -> vector<8x512xf32>
    %342 = vector.broadcast %13 : vector<1x512xf32> to vector<8x512xf32>
    %343 = arith.mulf %341, %342 : vector<8x512xf32>
    %c56_234 = arith.constant 56 : index
    %c0_235 = arith.constant 0 : index
    %344 = vector.load %arg11[%c56_234, %c0_235] : memref<144x512xf32, #tpu.memory_space<vmem>>, vector<8x512xf32>
    tpu.vector_store %arg11[%c56_234, %c0_235], %343 {strides = array<i32>} : memref<144x512xf32, #tpu.memory_space<vmem>>, vector<8x512xf32>,
    %c495_i32_236 = arith.constant 495 : i32
    %345 = tpu.dynamic_rotate %315 by %c495_i32_236 dim 1 : vector<8x512xf32>, i32 -> vector<8x512xf32>
    %346 = vector.broadcast %15 : vector<1x512xf32> to vector<8x512xf32>
    %347 = arith.mulf %345, %346 : vector<8x512xf32>
    %c64_237 = arith.constant 64 : index
    %c0_238 = arith.constant 0 : index
    %348 = vector.load %arg11[%c64_237, %c0_238] : memref<144x512xf32, #tpu.memory_space<vmem>>, vector<8x512xf32>
    tpu.vector_store %arg11[%c64_237, %c0_238], %347 {strides = array<i32>} : memref<144x512xf32, #tpu.memory_space<vmem>>, vector<8x512xf32>,
    %c0_239 = arith.constant 0 : index
    %c0_240 = arith.constant 0 : index
    %349 = vector.load %arg11[%c0_239, %c0_240] : memref<144x512xf32, #tpu.memory_space<vmem>>, vector<72x512xf32>
    %350 = arith.truncf %349 : vector<72x512xf32> to vector<72x512xbf16>
    %c1_241 = arith.constant 1 : index
    %c0_242 = arith.constant 0 : index
    %c0_243 = arith.constant 0 : index
    %351 = vector.load %arg4[%c1_241, %c0_242, %c0_243] : memref<3x40x72xbf16, #tpu.memory_space<vmem>>, vector<1x40x72xbf16>
    %352 = vector.shape_cast %351 : vector<1x40x72xbf16> to vector<40x72xbf16>
    %cst_244 = arith.constant dense<0.000000e+00> : vector<40x512xf32>
    %353 = tpu.matmul %352, %350, %cst_244 {dimension_numbers = #tpu.dot_dimension_numbers<[1], [0], [0], [1], [0, 0, 1, 1], [], []>} : vector<40x72xbf16>, vector<72x512xbf16>, vector<40x512xf32> -> vector<40x512xf32>
    %354 = vector.extract_strided_slice %353 {offsets = [0, 0], sizes = [8, 512], strides = [1, 1]} : vector<40x512xf32> to vector<8x512xf32>
    %355 = arith.addf %305, %354 : vector<8x512xf32>
    %356 = vector.extract_strided_slice %353 {offsets = [8, 0], sizes = [8, 512], strides = [1, 1]} : vector<40x512xf32> to vector<8x512xf32>
    %357 = arith.addf %306, %356 : vector<8x512xf32>
    %358 = vector.extract_strided_slice %353 {offsets = [16, 0], sizes = [8, 512], strides = [1, 1]} : vector<40x512xf32> to vector<8x512xf32>
    %359 = arith.addf %307, %358 : vector<8x512xf32>
    %360 = vector.extract_strided_slice %353 {offsets = [24, 0], sizes = [16, 512], strides = [1, 1]} : vector<40x512xf32> to vector<16x512xf32>
    %361 = arith.addf %308, %360 : vector<16x512xf32>
    %c5_245 = arith.constant 5 : index
    %c0_246 = arith.constant 0 : index
    %c0_247 = arith.constant 0 : index
    %362 = vector.load %arg8[%c5_245, %c0_246, %c0_247] : memref<12x8x1xf32, #tpu.memory_space<vmem>>, vector<1x8x1xf32>
    %363 = vector.shape_cast %362 : vector<1x8x1xf32> to vector<8x1xf32>
    %364 = vector.broadcast %363 : vector<8x1xf32> to vector<8x512xf32>
    %365 = arith.addf %355, %364 : vector<8x512xf32>
    %cst_248 = arith.constant 2.000000e-01 : f32
    %366 = vector.broadcast %cst_248 : f32 to vector<8x512xf32>
    %367 = arith.mulf %366, %365 : vector<8x512xf32>
    %368 = arith.maximumf %365, %367 : vector<8x512xf32>
    %c17_i32_249 = arith.constant 17 : i32
    %369 = tpu.dynamic_rotate %368 by %c17_i32_249 dim 1 : vector<8x512xf32>, i32 -> vector<8x512xf32>
    %370 = vector.broadcast %1 : vector<1x512xf32> to vector<8x512xf32>
    %371 = arith.mulf %369, %370 : vector<8x512xf32>
    %c0_250 = arith.constant 0 : index
    %c0_251 = arith.constant 0 : index
    %372 = vector.load %arg11[%c0_250, %c0_251] : memref<144x512xf32, #tpu.memory_space<vmem>>, vector<8x512xf32>
    tpu.vector_store %arg11[%c0_250, %c0_251], %371 {strides = array<i32>} : memref<144x512xf32, #tpu.memory_space<vmem>>, vector<8x512xf32>,
    %c16_i32_252 = arith.constant 16 : i32
    %373 = tpu.dynamic_rotate %368 by %c16_i32_252 dim 1 : vector<8x512xf32>, i32 -> vector<8x512xf32>
    %374 = vector.broadcast %3 : vector<1x512xf32> to vector<8x512xf32>
    %375 = arith.mulf %373, %374 : vector<8x512xf32>
    %c8_253 = arith.constant 8 : index
    %c0_254 = arith.constant 0 : index
    %376 = vector.load %arg11[%c8_253, %c0_254] : memref<144x512xf32, #tpu.memory_space<vmem>>, vector<8x512xf32>
    tpu.vector_store %arg11[%c8_253, %c0_254], %375 {strides = array<i32>} : memref<144x512xf32, #tpu.memory_space<vmem>>, vector<8x512xf32>,
    %c15_i32_255 = arith.constant 15 : i32
    %377 = tpu.dynamic_rotate %368 by %c15_i32_255 dim 1 : vector<8x512xf32>, i32 -> vector<8x512xf32>
    %378 = vector.broadcast %5 : vector<1x512xf32> to vector<8x512xf32>
    %379 = arith.mulf %377, %378 : vector<8x512xf32>
    %c16_256 = arith.constant 16 : index
    %c0_257 = arith.constant 0 : index
    %380 = vector.load %arg11[%c16_256, %c0_257] : memref<144x512xf32, #tpu.memory_space<vmem>>, vector<8x512xf32>
    tpu.vector_store %arg11[%c16_256, %c0_257], %379 {strides = array<i32>} : memref<144x512xf32, #tpu.memory_space<vmem>>, vector<8x512xf32>,
    %c1_i32_258 = arith.constant 1 : i32
    %381 = tpu.dynamic_rotate %368 by %c1_i32_258 dim 1 : vector<8x512xf32>, i32 -> vector<8x512xf32>
    %382 = vector.broadcast %7 : vector<1x512xf32> to vector<8x512xf32>
    %383 = arith.mulf %381, %382 : vector<8x512xf32>
    %c24_259 = arith.constant 24 : index
    %c0_260 = arith.constant 0 : index
    %384 = vector.load %arg11[%c24_259, %c0_260] : memref<144x512xf32, #tpu.memory_space<vmem>>, vector<8x512xf32>
    tpu.vector_store %arg11[%c24_259, %c0_260], %383 {strides = array<i32>} : memref<144x512xf32, #tpu.memory_space<vmem>>, vector<8x512xf32>,
    %c32_261 = arith.constant 32 : index
    %c0_262 = arith.constant 0 : index
    %385 = vector.load %arg11[%c32_261, %c0_262] : memref<144x512xf32, #tpu.memory_space<vmem>>, vector<8x512xf32>
    tpu.vector_store %arg11[%c32_261, %c0_262], %368 {strides = array<i32>} : memref<144x512xf32, #tpu.memory_space<vmem>>, vector<8x512xf32>,
    %c511_i32_263 = arith.constant 511 : i32
    %386 = tpu.dynamic_rotate %368 by %c511_i32_263 dim 1 : vector<8x512xf32>, i32 -> vector<8x512xf32>
    %387 = vector.broadcast %9 : vector<1x512xf32> to vector<8x512xf32>
    %388 = arith.mulf %386, %387 : vector<8x512xf32>
    %c40_264 = arith.constant 40 : index
    %c0_265 = arith.constant 0 : index
    %389 = vector.load %arg11[%c40_264, %c0_265] : memref<144x512xf32, #tpu.memory_space<vmem>>, vector<8x512xf32>
    tpu.vector_store %arg11[%c40_264, %c0_265], %388 {strides = array<i32>} : memref<144x512xf32, #tpu.memory_space<vmem>>, vector<8x512xf32>,
    %c497_i32_266 = arith.constant 497 : i32
    %390 = tpu.dynamic_rotate %368 by %c497_i32_266 dim 1 : vector<8x512xf32>, i32 -> vector<8x512xf32>
    %391 = vector.broadcast %11 : vector<1x512xf32> to vector<8x512xf32>
    %392 = arith.mulf %390, %391 : vector<8x512xf32>
    %c48_267 = arith.constant 48 : index
    %c0_268 = arith.constant 0 : index
    %393 = vector.load %arg11[%c48_267, %c0_268] : memref<144x512xf32, #tpu.memory_space<vmem>>, vector<8x512xf32>
    tpu.vector_store %arg11[%c48_267, %c0_268], %392 {strides = array<i32>} : memref<144x512xf32, #tpu.memory_space<vmem>>, vector<8x512xf32>,
    %c496_i32_269 = arith.constant 496 : i32
    %394 = tpu.dynamic_rotate %368 by %c496_i32_269 dim 1 : vector<8x512xf32>, i32 -> vector<8x512xf32>
    %395 = vector.broadcast %13 : vector<1x512xf32> to vector<8x512xf32>
    %396 = arith.mulf %394, %395 : vector<8x512xf32>
    %c56_270 = arith.constant 56 : index
    %c0_271 = arith.constant 0 : index
    %397 = vector.load %arg11[%c56_270, %c0_271] : memref<144x512xf32, #tpu.memory_space<vmem>>, vector<8x512xf32>
    tpu.vector_store %arg11[%c56_270, %c0_271], %396 {strides = array<i32>} : memref<144x512xf32, #tpu.memory_space<vmem>>, vector<8x512xf32>,
    %c495_i32_272 = arith.constant 495 : i32
    %398 = tpu.dynamic_rotate %368 by %c495_i32_272 dim 1 : vector<8x512xf32>, i32 -> vector<8x512xf32>
    %399 = vector.broadcast %15 : vector<1x512xf32> to vector<8x512xf32>
    %400 = arith.mulf %398, %399 : vector<8x512xf32>
    %c64_273 = arith.constant 64 : index
    %c0_274 = arith.constant 0 : index
    %401 = vector.load %arg11[%c64_273, %c0_274] : memref<144x512xf32, #tpu.memory_space<vmem>>, vector<8x512xf32>
    tpu.vector_store %arg11[%c64_273, %c0_274], %400 {strides = array<i32>} : memref<144x512xf32, #tpu.memory_space<vmem>>, vector<8x512xf32>,
    %c0_275 = arith.constant 0 : index
    %c0_276 = arith.constant 0 : index
    %402 = vector.load %arg11[%c0_275, %c0_276] : memref<144x512xf32, #tpu.memory_space<vmem>>, vector<72x512xf32>
    %403 = arith.truncf %402 : vector<72x512xf32> to vector<72x512xbf16>
    %c1_277 = arith.constant 1 : index
    %c0_278 = arith.constant 0 : index
    %c0_279 = arith.constant 0 : index
    %404 = vector.load %arg5[%c1_277, %c0_278, %c0_279] : memref<3x32x72xbf16, #tpu.memory_space<vmem>>, vector<1x32x72xbf16>
    %405 = vector.shape_cast %404 : vector<1x32x72xbf16> to vector<32x72xbf16>
    %cst_280 = arith.constant dense<0.000000e+00> : vector<32x512xf32>
    %406 = tpu.matmul %405, %403, %cst_280 {dimension_numbers = #tpu.dot_dimension_numbers<[1], [0], [0], [1], [0, 0, 1, 1], [], []>} : vector<32x72xbf16>, vector<72x512xbf16>, vector<32x512xf32> -> vector<32x512xf32>
    %407 = vector.extract_strided_slice %406 {offsets = [0, 0], sizes = [8, 512], strides = [1, 1]} : vector<32x512xf32> to vector<8x512xf32>
    %408 = arith.addf %357, %407 : vector<8x512xf32>
    %409 = vector.extract_strided_slice %406 {offsets = [8, 0], sizes = [8, 512], strides = [1, 1]} : vector<32x512xf32> to vector<8x512xf32>
    %410 = arith.addf %359, %409 : vector<8x512xf32>
    %411 = vector.extract_strided_slice %406 {offsets = [16, 0], sizes = [16, 512], strides = [1, 1]} : vector<32x512xf32> to vector<16x512xf32>
    %412 = arith.addf %361, %411 : vector<16x512xf32>
    %c6_281 = arith.constant 6 : index
    %c0_282 = arith.constant 0 : index
    %c0_283 = arith.constant 0 : index
    %413 = vector.load %arg8[%c6_281, %c0_282, %c0_283] : memref<12x8x1xf32, #tpu.memory_space<vmem>>, vector<1x8x1xf32>
    %414 = vector.shape_cast %413 : vector<1x8x1xf32> to vector<8x1xf32>
    %415 = vector.broadcast %414 : vector<8x1xf32> to vector<8x512xf32>
    %416 = arith.addf %408, %415 : vector<8x512xf32>
    %cst_284 = arith.constant 2.000000e-01 : f32
    %417 = vector.broadcast %cst_284 : f32 to vector<8x512xf32>
    %418 = arith.mulf %417, %416 : vector<8x512xf32>
    %419 = arith.maximumf %416, %418 : vector<8x512xf32>
    %c17_i32_285 = arith.constant 17 : i32
    %420 = tpu.dynamic_rotate %419 by %c17_i32_285 dim 1 : vector<8x512xf32>, i32 -> vector<8x512xf32>
    %421 = vector.broadcast %1 : vector<1x512xf32> to vector<8x512xf32>
    %422 = arith.mulf %420, %421 : vector<8x512xf32>
    %c0_286 = arith.constant 0 : index
    %c0_287 = arith.constant 0 : index
    %423 = vector.load %arg11[%c0_286, %c0_287] : memref<144x512xf32, #tpu.memory_space<vmem>>, vector<8x512xf32>
    tpu.vector_store %arg11[%c0_286, %c0_287], %422 {strides = array<i32>} : memref<144x512xf32, #tpu.memory_space<vmem>>, vector<8x512xf32>,
    %c16_i32_288 = arith.constant 16 : i32
    %424 = tpu.dynamic_rotate %419 by %c16_i32_288 dim 1 : vector<8x512xf32>, i32 -> vector<8x512xf32>
    %425 = vector.broadcast %3 : vector<1x512xf32> to vector<8x512xf32>
    %426 = arith.mulf %424, %425 : vector<8x512xf32>
    %c8_289 = arith.constant 8 : index
    %c0_290 = arith.constant 0 : index
    %427 = vector.load %arg11[%c8_289, %c0_290] : memref<144x512xf32, #tpu.memory_space<vmem>>, vector<8x512xf32>
    tpu.vector_store %arg11[%c8_289, %c0_290], %426 {strides = array<i32>} : memref<144x512xf32, #tpu.memory_space<vmem>>, vector<8x512xf32>,
    %c15_i32_291 = arith.constant 15 : i32
    %428 = tpu.dynamic_rotate %419 by %c15_i32_291 dim 1 : vector<8x512xf32>, i32 -> vector<8x512xf32>
    %429 = vector.broadcast %5 : vector<1x512xf32> to vector<8x512xf32>
    %430 = arith.mulf %428, %429 : vector<8x512xf32>
    %c16_292 = arith.constant 16 : index
    %c0_293 = arith.constant 0 : index
    %431 = vector.load %arg11[%c16_292, %c0_293] : memref<144x512xf32, #tpu.memory_space<vmem>>, vector<8x512xf32>
    tpu.vector_store %arg11[%c16_292, %c0_293], %430 {strides = array<i32>} : memref<144x512xf32, #tpu.memory_space<vmem>>, vector<8x512xf32>,
    %c1_i32_294 = arith.constant 1 : i32
    %432 = tpu.dynamic_rotate %419 by %c1_i32_294 dim 1 : vector<8x512xf32>, i32 -> vector<8x512xf32>
    %433 = vector.broadcast %7 : vector<1x512xf32> to vector<8x512xf32>
    %434 = arith.mulf %432, %433 : vector<8x512xf32>
    %c24_295 = arith.constant 24 : index
    %c0_296 = arith.constant 0 : index
    %435 = vector.load %arg11[%c24_295, %c0_296] : memref<144x512xf32, #tpu.memory_space<vmem>>, vector<8x512xf32>
    tpu.vector_store %arg11[%c24_295, %c0_296], %434 {strides = array<i32>} : memref<144x512xf32, #tpu.memory_space<vmem>>, vector<8x512xf32>,
    %c32_297 = arith.constant 32 : index
    %c0_298 = arith.constant 0 : index
    %436 = vector.load %arg11[%c32_297, %c0_298] : memref<144x512xf32, #tpu.memory_space<vmem>>, vector<8x512xf32>
    tpu.vector_store %arg11[%c32_297, %c0_298], %419 {strides = array<i32>} : memref<144x512xf32, #tpu.memory_space<vmem>>, vector<8x512xf32>,
    %c511_i32_299 = arith.constant 511 : i32
    %437 = tpu.dynamic_rotate %419 by %c511_i32_299 dim 1 : vector<8x512xf32>, i32 -> vector<8x512xf32>
    %438 = vector.broadcast %9 : vector<1x512xf32> to vector<8x512xf32>
    %439 = arith.mulf %437, %438 : vector<8x512xf32>
    %c40_300 = arith.constant 40 : index
    %c0_301 = arith.constant 0 : index
    %440 = vector.load %arg11[%c40_300, %c0_301] : memref<144x512xf32, #tpu.memory_space<vmem>>, vector<8x512xf32>
    tpu.vector_store %arg11[%c40_300, %c0_301], %439 {strides = array<i32>} : memref<144x512xf32, #tpu.memory_space<vmem>>, vector<8x512xf32>,
    %c497_i32_302 = arith.constant 497 : i32
    %441 = tpu.dynamic_rotate %419 by %c497_i32_302 dim 1 : vector<8x512xf32>, i32 -> vector<8x512xf32>
    %442 = vector.broadcast %11 : vector<1x512xf32> to vector<8x512xf32>
    %443 = arith.mulf %441, %442 : vector<8x512xf32>
    %c48_303 = arith.constant 48 : index
    %c0_304 = arith.constant 0 : index
    %444 = vector.load %arg11[%c48_303, %c0_304] : memref<144x512xf32, #tpu.memory_space<vmem>>, vector<8x512xf32>
    tpu.vector_store %arg11[%c48_303, %c0_304], %443 {strides = array<i32>} : memref<144x512xf32, #tpu.memory_space<vmem>>, vector<8x512xf32>,
    %c496_i32_305 = arith.constant 496 : i32
    %445 = tpu.dynamic_rotate %419 by %c496_i32_305 dim 1 : vector<8x512xf32>, i32 -> vector<8x512xf32>
    %446 = vector.broadcast %13 : vector<1x512xf32> to vector<8x512xf32>
    %447 = arith.mulf %445, %446 : vector<8x512xf32>
    %c56_306 = arith.constant 56 : index
    %c0_307 = arith.constant 0 : index
    %448 = vector.load %arg11[%c56_306, %c0_307] : memref<144x512xf32, #tpu.memory_space<vmem>>, vector<8x512xf32>
    tpu.vector_store %arg11[%c56_306, %c0_307], %447 {strides = array<i32>} : memref<144x512xf32, #tpu.memory_space<vmem>>, vector<8x512xf32>,
    %c495_i32_308 = arith.constant 495 : i32
    %449 = tpu.dynamic_rotate %419 by %c495_i32_308 dim 1 : vector<8x512xf32>, i32 -> vector<8x512xf32>
    %450 = vector.broadcast %15 : vector<1x512xf32> to vector<8x512xf32>
    %451 = arith.mulf %449, %450 : vector<8x512xf32>
    %c64_309 = arith.constant 64 : index
    %c0_310 = arith.constant 0 : index
    %452 = vector.load %arg11[%c64_309, %c0_310] : memref<144x512xf32, #tpu.memory_space<vmem>>, vector<8x512xf32>
    tpu.vector_store %arg11[%c64_309, %c0_310], %451 {strides = array<i32>} : memref<144x512xf32, #tpu.memory_space<vmem>>, vector<8x512xf32>,
    %c0_311 = arith.constant 0 : index
    %c0_312 = arith.constant 0 : index
    %453 = vector.load %arg11[%c0_311, %c0_312] : memref<144x512xf32, #tpu.memory_space<vmem>>, vector<72x512xf32>
    %454 = arith.truncf %453 : vector<72x512xf32> to vector<72x512xbf16>
    %c1_313 = arith.constant 1 : index
    %c0_314 = arith.constant 0 : index
    %c0_315 = arith.constant 0 : index
    %455 = vector.load %arg6[%c1_313, %c0_314, %c0_315] : memref<3x24x72xbf16, #tpu.memory_space<vmem>>, vector<1x24x72xbf16>
    %456 = vector.shape_cast %455 : vector<1x24x72xbf16> to vector<24x72xbf16>
    %cst_316 = arith.constant dense<0.000000e+00> : vector<24x512xf32>
    %457 = tpu.matmul %456, %454, %cst_316 {dimension_numbers = #tpu.dot_dimension_numbers<[1], [0], [0], [1], [0, 0, 1, 1], [], []>} : vector<24x72xbf16>, vector<72x512xbf16>, vector<24x512xf32> -> vector<24x512xf32>
    %458 = vector.extract_strided_slice %457 {offsets = [0, 0], sizes = [8, 512], strides = [1, 1]} : vector<24x512xf32> to vector<8x512xf32>
    %459 = arith.addf %410, %458 : vector<8x512xf32>
    %460 = vector.extract_strided_slice %457 {offsets = [8, 0], sizes = [16, 512], strides = [1, 1]} : vector<24x512xf32> to vector<16x512xf32>
    %461 = arith.addf %412, %460 : vector<16x512xf32>
    %c7_317 = arith.constant 7 : index
    %c0_318 = arith.constant 0 : index
    %c0_319 = arith.constant 0 : index
    %462 = vector.load %arg8[%c7_317, %c0_318, %c0_319] : memref<12x8x1xf32, #tpu.memory_space<vmem>>, vector<1x8x1xf32>
    %463 = vector.shape_cast %462 : vector<1x8x1xf32> to vector<8x1xf32>
    %464 = vector.broadcast %463 : vector<8x1xf32> to vector<8x512xf32>
    %465 = arith.addf %459, %464 : vector<8x512xf32>
    %cst_320 = arith.constant 2.000000e-01 : f32
    %466 = vector.broadcast %cst_320 : f32 to vector<8x512xf32>
    %467 = arith.mulf %466, %465 : vector<8x512xf32>
    %468 = arith.maximumf %465, %467 : vector<8x512xf32>
    %c17_i32_321 = arith.constant 17 : i32
    %469 = tpu.dynamic_rotate %468 by %c17_i32_321 dim 1 : vector<8x512xf32>, i32 -> vector<8x512xf32>
    %470 = vector.broadcast %1 : vector<1x512xf32> to vector<8x512xf32>
    %471 = arith.mulf %469, %470 : vector<8x512xf32>
    %c0_322 = arith.constant 0 : index
    %c0_323 = arith.constant 0 : index
    %472 = vector.load %arg11[%c0_322, %c0_323] : memref<144x512xf32, #tpu.memory_space<vmem>>, vector<8x512xf32>
    tpu.vector_store %arg11[%c0_322, %c0_323], %471 {strides = array<i32>} : memref<144x512xf32, #tpu.memory_space<vmem>>, vector<8x512xf32>,
    %c16_i32_324 = arith.constant 16 : i32
    %473 = tpu.dynamic_rotate %468 by %c16_i32_324 dim 1 : vector<8x512xf32>, i32 -> vector<8x512xf32>
    %474 = vector.broadcast %3 : vector<1x512xf32> to vector<8x512xf32>
    %475 = arith.mulf %473, %474 : vector<8x512xf32>
    %c8_325 = arith.constant 8 : index
    %c0_326 = arith.constant 0 : index
    %476 = vector.load %arg11[%c8_325, %c0_326] : memref<144x512xf32, #tpu.memory_space<vmem>>, vector<8x512xf32>
    tpu.vector_store %arg11[%c8_325, %c0_326], %475 {strides = array<i32>} : memref<144x512xf32, #tpu.memory_space<vmem>>, vector<8x512xf32>,
    %c15_i32_327 = arith.constant 15 : i32
    %477 = tpu.dynamic_rotate %468 by %c15_i32_327 dim 1 : vector<8x512xf32>, i32 -> vector<8x512xf32>
    %478 = vector.broadcast %5 : vector<1x512xf32> to vector<8x512xf32>
    %479 = arith.mulf %477, %478 : vector<8x512xf32>
    %c16_328 = arith.constant 16 : index
    %c0_329 = arith.constant 0 : index
    %480 = vector.load %arg11[%c16_328, %c0_329] : memref<144x512xf32, #tpu.memory_space<vmem>>, vector<8x512xf32>
    tpu.vector_store %arg11[%c16_328, %c0_329], %479 {strides = array<i32>} : memref<144x512xf32, #tpu.memory_space<vmem>>, vector<8x512xf32>,
    %c1_i32_330 = arith.constant 1 : i32
    %481 = tpu.dynamic_rotate %468 by %c1_i32_330 dim 1 : vector<8x512xf32>, i32 -> vector<8x512xf32>
    %482 = vector.broadcast %7 : vector<1x512xf32> to vector<8x512xf32>
    %483 = arith.mulf %481, %482 : vector<8x512xf32>
    %c24_331 = arith.constant 24 : index
    %c0_332 = arith.constant 0 : index
    %484 = vector.load %arg11[%c24_331, %c0_332] : memref<144x512xf32, #tpu.memory_space<vmem>>, vector<8x512xf32>
    tpu.vector_store %arg11[%c24_331, %c0_332], %483 {strides = array<i32>} : memref<144x512xf32, #tpu.memory_space<vmem>>, vector<8x512xf32>,
    %c32_333 = arith.constant 32 : index
    %c0_334 = arith.constant 0 : index
    %485 = vector.load %arg11[%c32_333, %c0_334] : memref<144x512xf32, #tpu.memory_space<vmem>>, vector<8x512xf32>
    tpu.vector_store %arg11[%c32_333, %c0_334], %468 {strides = array<i32>} : memref<144x512xf32, #tpu.memory_space<vmem>>, vector<8x512xf32>,
    %c511_i32_335 = arith.constant 511 : i32
    %486 = tpu.dynamic_rotate %468 by %c511_i32_335 dim 1 : vector<8x512xf32>, i32 -> vector<8x512xf32>
    %487 = vector.broadcast %9 : vector<1x512xf32> to vector<8x512xf32>
    %488 = arith.mulf %486, %487 : vector<8x512xf32>
    %c40_336 = arith.constant 40 : index
    %c0_337 = arith.constant 0 : index
    %489 = vector.load %arg11[%c40_336, %c0_337] : memref<144x512xf32, #tpu.memory_space<vmem>>, vector<8x512xf32>
    tpu.vector_store %arg11[%c40_336, %c0_337], %488 {strides = array<i32>} : memref<144x512xf32, #tpu.memory_space<vmem>>, vector<8x512xf32>,
    %c497_i32_338 = arith.constant 497 : i32
    %490 = tpu.dynamic_rotate %468 by %c497_i32_338 dim 1 : vector<8x512xf32>, i32 -> vector<8x512xf32>
    %491 = vector.broadcast %11 : vector<1x512xf32> to vector<8x512xf32>
    %492 = arith.mulf %490, %491 : vector<8x512xf32>
    %c48_339 = arith.constant 48 : index
    %c0_340 = arith.constant 0 : index
    %493 = vector.load %arg11[%c48_339, %c0_340] : memref<144x512xf32, #tpu.memory_space<vmem>>, vector<8x512xf32>
    tpu.vector_store %arg11[%c48_339, %c0_340], %492 {strides = array<i32>} : memref<144x512xf32, #tpu.memory_space<vmem>>, vector<8x512xf32>,
    %c496_i32_341 = arith.constant 496 : i32
    %494 = tpu.dynamic_rotate %468 by %c496_i32_341 dim 1 : vector<8x512xf32>, i32 -> vector<8x512xf32>
    %495 = vector.broadcast %13 : vector<1x512xf32> to vector<8x512xf32>
    %496 = arith.mulf %494, %495 : vector<8x512xf32>
    %c56_342 = arith.constant 56 : index
    %c0_343 = arith.constant 0 : index
    %497 = vector.load %arg11[%c56_342, %c0_343] : memref<144x512xf32, #tpu.memory_space<vmem>>, vector<8x512xf32>
    tpu.vector_store %arg11[%c56_342, %c0_343], %496 {strides = array<i32>} : memref<144x512xf32, #tpu.memory_space<vmem>>, vector<8x512xf32>,
    %c495_i32_344 = arith.constant 495 : i32
    %498 = tpu.dynamic_rotate %468 by %c495_i32_344 dim 1 : vector<8x512xf32>, i32 -> vector<8x512xf32>
    %499 = vector.broadcast %15 : vector<1x512xf32> to vector<8x512xf32>
    %500 = arith.mulf %498, %499 : vector<8x512xf32>
    %c64_345 = arith.constant 64 : index
    %c0_346 = arith.constant 0 : index
    %501 = vector.load %arg11[%c64_345, %c0_346] : memref<144x512xf32, #tpu.memory_space<vmem>>, vector<8x512xf32>
    tpu.vector_store %arg11[%c64_345, %c0_346], %500 {strides = array<i32>} : memref<144x512xf32, #tpu.memory_space<vmem>>, vector<8x512xf32>,
    %c0_347 = arith.constant 0 : index
    %c0_348 = arith.constant 0 : index
    %502 = vector.load %arg11[%c0_347, %c0_348] : memref<144x512xf32, #tpu.memory_space<vmem>>, vector<72x512xf32>
    %503 = arith.truncf %502 : vector<72x512xf32> to vector<72x512xbf16>
    %c1_349 = arith.constant 1 : index
    %c0_350 = arith.constant 0 : index
    %c0_351 = arith.constant 0 : index
    %504 = vector.load %arg7[%c1_349, %c0_350, %c0_351] : memref<3x16x72xbf16, #tpu.memory_space<vmem>>, vector<1x16x72xbf16>
    %505 = vector.shape_cast %504 : vector<1x16x72xbf16> to vector<16x72xbf16>
    %cst_352 = arith.constant dense<0.000000e+00> : vector<16x512xf32>
    %506 = tpu.matmul %505, %503, %cst_352 {dimension_numbers = #tpu.dot_dimension_numbers<[1], [0], [0], [1], [0, 0, 1, 1], [], []>} : vector<16x72xbf16>, vector<72x512xbf16>, vector<16x512xf32> -> vector<16x512xf32>
    %507 = arith.addf %461, %506 : vector<16x512xf32>
    %c1_353 = arith.constant 1 : index
    %c0_354 = arith.constant 0 : index
    %c0_355 = arith.constant 0 : index
    %508 = vector.load %arg9[%c1_353, %c0_354, %c0_355] : memref<3x16x1xf32, #tpu.memory_space<vmem>>, vector<1x16x1xf32>
    %509 = vector.shape_cast %508 : vector<1x16x1xf32> to vector<16x1xf32>
    %510 = vector.broadcast %509 : vector<16x1xf32> to vector<16x512xf32>
    %511 = arith.addf %507, %510 : vector<16x512xf32>
    %cst_356 = arith.constant 2.000000e-01 : f32
    %512 = vector.broadcast %cst_356 : f32 to vector<16x512xf32>
    %513 = arith.mulf %511, %512 : vector<16x512xf32>
    %514 = arith.addf %513, %265 : vector<16x512xf32>
    %c17_i32_357 = arith.constant 17 : i32
    %515 = tpu.dynamic_rotate %514 by %c17_i32_357 dim 1 : vector<16x512xf32>, i32 -> vector<16x512xf32>
    %516 = vector.broadcast %1 : vector<1x512xf32> to vector<16x512xf32>
    %517 = arith.mulf %515, %516 : vector<16x512xf32>
    %c0_358 = arith.constant 0 : index
    %c0_359 = arith.constant 0 : index
    %518 = vector.load %arg11[%c0_358, %c0_359] : memref<144x512xf32, #tpu.memory_space<vmem>>, vector<16x512xf32>
    tpu.vector_store %arg11[%c0_358, %c0_359], %517 {strides = array<i32>} : memref<144x512xf32, #tpu.memory_space<vmem>>, vector<16x512xf32>,
    %c16_i32_360 = arith.constant 16 : i32
    %519 = tpu.dynamic_rotate %514 by %c16_i32_360 dim 1 : vector<16x512xf32>, i32 -> vector<16x512xf32>
    %520 = vector.broadcast %3 : vector<1x512xf32> to vector<16x512xf32>
    %521 = arith.mulf %519, %520 : vector<16x512xf32>
    %c16_361 = arith.constant 16 : index
    %c0_362 = arith.constant 0 : index
    %522 = vector.load %arg11[%c16_361, %c0_362] : memref<144x512xf32, #tpu.memory_space<vmem>>, vector<16x512xf32>
    tpu.vector_store %arg11[%c16_361, %c0_362], %521 {strides = array<i32>} : memref<144x512xf32, #tpu.memory_space<vmem>>, vector<16x512xf32>,
    %c15_i32_363 = arith.constant 15 : i32
    %523 = tpu.dynamic_rotate %514 by %c15_i32_363 dim 1 : vector<16x512xf32>, i32 -> vector<16x512xf32>
    %524 = vector.broadcast %5 : vector<1x512xf32> to vector<16x512xf32>
    %525 = arith.mulf %523, %524 : vector<16x512xf32>
    %c32_364 = arith.constant 32 : index
    %c0_365 = arith.constant 0 : index
    %526 = vector.load %arg11[%c32_364, %c0_365] : memref<144x512xf32, #tpu.memory_space<vmem>>, vector<16x512xf32>
    tpu.vector_store %arg11[%c32_364, %c0_365], %525 {strides = array<i32>} : memref<144x512xf32, #tpu.memory_space<vmem>>, vector<16x512xf32>,
    %c1_i32_366 = arith.constant 1 : i32
    %527 = tpu.dynamic_rotate %514 by %c1_i32_366 dim 1 : vector<16x512xf32>, i32 -> vector<16x512xf32>
    %528 = vector.broadcast %7 : vector<1x512xf32> to vector<16x512xf32>
    %529 = arith.mulf %527, %528 : vector<16x512xf32>
    %c48_367 = arith.constant 48 : index
    %c0_368 = arith.constant 0 : index
    %530 = vector.load %arg11[%c48_367, %c0_368] : memref<144x512xf32, #tpu.memory_space<vmem>>, vector<16x512xf32>
    tpu.vector_store %arg11[%c48_367, %c0_368], %529 {strides = array<i32>} : memref<144x512xf32, #tpu.memory_space<vmem>>, vector<16x512xf32>,
    %c64_369 = arith.constant 64 : index
    %c0_370 = arith.constant 0 : index
    %531 = vector.load %arg11[%c64_369, %c0_370] : memref<144x512xf32, #tpu.memory_space<vmem>>, vector<16x512xf32>
    tpu.vector_store %arg11[%c64_369, %c0_370], %514 {strides = array<i32>} : memref<144x512xf32, #tpu.memory_space<vmem>>, vector<16x512xf32>,
    %c511_i32_371 = arith.constant 511 : i32
    %532 = tpu.dynamic_rotate %514 by %c511_i32_371 dim 1 : vector<16x512xf32>, i32 -> vector<16x512xf32>
    %533 = vector.broadcast %9 : vector<1x512xf32> to vector<16x512xf32>
    %534 = arith.mulf %532, %533 : vector<16x512xf32>
    %c80_372 = arith.constant 80 : index
    %c0_373 = arith.constant 0 : index
    %535 = vector.load %arg11[%c80_372, %c0_373] : memref<144x512xf32, #tpu.memory_space<vmem>>, vector<16x512xf32>
    tpu.vector_store %arg11[%c80_372, %c0_373], %534 {strides = array<i32>} : memref<144x512xf32, #tpu.memory_space<vmem>>, vector<16x512xf32>,
    %c497_i32_374 = arith.constant 497 : i32
    %536 = tpu.dynamic_rotate %514 by %c497_i32_374 dim 1 : vector<16x512xf32>, i32 -> vector<16x512xf32>
    %537 = vector.broadcast %11 : vector<1x512xf32> to vector<16x512xf32>
    %538 = arith.mulf %536, %537 : vector<16x512xf32>
    %c96_375 = arith.constant 96 : index
    %c0_376 = arith.constant 0 : index
    %539 = vector.load %arg11[%c96_375, %c0_376] : memref<144x512xf32, #tpu.memory_space<vmem>>, vector<16x512xf32>
    tpu.vector_store %arg11[%c96_375, %c0_376], %538 {strides = array<i32>} : memref<144x512xf32, #tpu.memory_space<vmem>>, vector<16x512xf32>,
    %c496_i32_377 = arith.constant 496 : i32
    %540 = tpu.dynamic_rotate %514 by %c496_i32_377 dim 1 : vector<16x512xf32>, i32 -> vector<16x512xf32>
    %541 = vector.broadcast %13 : vector<1x512xf32> to vector<16x512xf32>
    %542 = arith.mulf %540, %541 : vector<16x512xf32>
    %c112_378 = arith.constant 112 : index
    %c0_379 = arith.constant 0 : index
    %543 = vector.load %arg11[%c112_378, %c0_379] : memref<144x512xf32, #tpu.memory_space<vmem>>, vector<16x512xf32>
    tpu.vector_store %arg11[%c112_378, %c0_379], %542 {strides = array<i32>} : memref<144x512xf32, #tpu.memory_space<vmem>>, vector<16x512xf32>,
    %c495_i32_380 = arith.constant 495 : i32
    %544 = tpu.dynamic_rotate %514 by %c495_i32_380 dim 1 : vector<16x512xf32>, i32 -> vector<16x512xf32>
    %545 = vector.broadcast %15 : vector<1x512xf32> to vector<16x512xf32>
    %546 = arith.mulf %544, %545 : vector<16x512xf32>
    %c128_381 = arith.constant 128 : index
    %c0_382 = arith.constant 0 : index
    %547 = vector.load %arg11[%c128_381, %c0_382] : memref<144x512xf32, #tpu.memory_space<vmem>>, vector<16x512xf32>
    tpu.vector_store %arg11[%c128_381, %c0_382], %546 {strides = array<i32>} : memref<144x512xf32, #tpu.memory_space<vmem>>, vector<16x512xf32>,
    %c0_383 = arith.constant 0 : index
    %c0_384 = arith.constant 0 : index
    %548 = vector.load %arg11[%c0_383, %c0_384] : memref<144x512xf32, #tpu.memory_space<vmem>>, vector<144x512xf32>
    %549 = arith.truncf %548 : vector<144x512xf32> to vector<144x512xbf16>
    %c2_385 = arith.constant 2 : index
    %c0_386 = arith.constant 0 : index
    %c0_387 = arith.constant 0 : index
    %550 = vector.load %arg3[%c2_385, %c0_386, %c0_387] : memref<3x48x144xbf16, #tpu.memory_space<vmem>>, vector<1x48x144xbf16>
    %551 = vector.shape_cast %550 : vector<1x48x144xbf16> to vector<48x144xbf16>
    %cst_388 = arith.constant dense<0.000000e+00> : vector<48x512xf32>
    %552 = tpu.matmul %551, %549, %cst_388 {dimension_numbers = #tpu.dot_dimension_numbers<[1], [0], [0], [1], [0, 0, 1, 1], [], []>} : vector<48x144xbf16>, vector<144x512xbf16>, vector<48x512xf32> -> vector<48x512xf32>
    %553 = vector.extract_strided_slice %552 {offsets = [0, 0], sizes = [8, 512], strides = [1, 1]} : vector<48x512xf32> to vector<8x512xf32>
    %554 = vector.extract_strided_slice %552 {offsets = [8, 0], sizes = [8, 512], strides = [1, 1]} : vector<48x512xf32> to vector<8x512xf32>
    %555 = vector.extract_strided_slice %552 {offsets = [16, 0], sizes = [8, 512], strides = [1, 1]} : vector<48x512xf32> to vector<8x512xf32>
    %556 = vector.extract_strided_slice %552 {offsets = [24, 0], sizes = [8, 512], strides = [1, 1]} : vector<48x512xf32> to vector<8x512xf32>
    %557 = vector.extract_strided_slice %552 {offsets = [32, 0], sizes = [16, 512], strides = [1, 1]} : vector<48x512xf32> to vector<16x512xf32>
    %c8_389 = arith.constant 8 : index
    %c0_390 = arith.constant 0 : index
    %c0_391 = arith.constant 0 : index
    %558 = vector.load %arg8[%c8_389, %c0_390, %c0_391] : memref<12x8x1xf32, #tpu.memory_space<vmem>>, vector<1x8x1xf32>
    %559 = vector.shape_cast %558 : vector<1x8x1xf32> to vector<8x1xf32>
    %560 = vector.broadcast %559 : vector<8x1xf32> to vector<8x512xf32>
    %561 = arith.addf %553, %560 : vector<8x512xf32>
    %cst_392 = arith.constant 2.000000e-01 : f32
    %562 = vector.broadcast %cst_392 : f32 to vector<8x512xf32>
    %563 = arith.mulf %562, %561 : vector<8x512xf32>
    %564 = arith.maximumf %561, %563 : vector<8x512xf32>
    %c17_i32_393 = arith.constant 17 : i32
    %565 = tpu.dynamic_rotate %564 by %c17_i32_393 dim 1 : vector<8x512xf32>, i32 -> vector<8x512xf32>
    %566 = vector.broadcast %1 : vector<1x512xf32> to vector<8x512xf32>
    %567 = arith.mulf %565, %566 : vector<8x512xf32>
    %c0_394 = arith.constant 0 : index
    %c0_395 = arith.constant 0 : index
    %568 = vector.load %arg11[%c0_394, %c0_395] : memref<144x512xf32, #tpu.memory_space<vmem>>, vector<8x512xf32>
    tpu.vector_store %arg11[%c0_394, %c0_395], %567 {strides = array<i32>} : memref<144x512xf32, #tpu.memory_space<vmem>>, vector<8x512xf32>,
    %c16_i32_396 = arith.constant 16 : i32
    %569 = tpu.dynamic_rotate %564 by %c16_i32_396 dim 1 : vector<8x512xf32>, i32 -> vector<8x512xf32>
    %570 = vector.broadcast %3 : vector<1x512xf32> to vector<8x512xf32>
    %571 = arith.mulf %569, %570 : vector<8x512xf32>
    %c8_397 = arith.constant 8 : index
    %c0_398 = arith.constant 0 : index
    %572 = vector.load %arg11[%c8_397, %c0_398] : memref<144x512xf32, #tpu.memory_space<vmem>>, vector<8x512xf32>
    tpu.vector_store %arg11[%c8_397, %c0_398], %571 {strides = array<i32>} : memref<144x512xf32, #tpu.memory_space<vmem>>, vector<8x512xf32>,
    %c15_i32_399 = arith.constant 15 : i32
    %573 = tpu.dynamic_rotate %564 by %c15_i32_399 dim 1 : vector<8x512xf32>, i32 -> vector<8x512xf32>
    %574 = vector.broadcast %5 : vector<1x512xf32> to vector<8x512xf32>
    %575 = arith.mulf %573, %574 : vector<8x512xf32>
    %c16_400 = arith.constant 16 : index
    %c0_401 = arith.constant 0 : index
    %576 = vector.load %arg11[%c16_400, %c0_401] : memref<144x512xf32, #tpu.memory_space<vmem>>, vector<8x512xf32>
    tpu.vector_store %arg11[%c16_400, %c0_401], %575 {strides = array<i32>} : memref<144x512xf32, #tpu.memory_space<vmem>>, vector<8x512xf32>,
    %c1_i32_402 = arith.constant 1 : i32
    %577 = tpu.dynamic_rotate %564 by %c1_i32_402 dim 1 : vector<8x512xf32>, i32 -> vector<8x512xf32>
    %578 = vector.broadcast %7 : vector<1x512xf32> to vector<8x512xf32>
    %579 = arith.mulf %577, %578 : vector<8x512xf32>
    %c24_403 = arith.constant 24 : index
    %c0_404 = arith.constant 0 : index
    %580 = vector.load %arg11[%c24_403, %c0_404] : memref<144x512xf32, #tpu.memory_space<vmem>>, vector<8x512xf32>
    tpu.vector_store %arg11[%c24_403, %c0_404], %579 {strides = array<i32>} : memref<144x512xf32, #tpu.memory_space<vmem>>, vector<8x512xf32>,
    %c32_405 = arith.constant 32 : index
    %c0_406 = arith.constant 0 : index
    %581 = vector.load %arg11[%c32_405, %c0_406] : memref<144x512xf32, #tpu.memory_space<vmem>>, vector<8x512xf32>
    tpu.vector_store %arg11[%c32_405, %c0_406], %564 {strides = array<i32>} : memref<144x512xf32, #tpu.memory_space<vmem>>, vector<8x512xf32>,
    %c511_i32_407 = arith.constant 511 : i32
    %582 = tpu.dynamic_rotate %564 by %c511_i32_407 dim 1 : vector<8x512xf32>, i32 -> vector<8x512xf32>
    %583 = vector.broadcast %9 : vector<1x512xf32> to vector<8x512xf32>
    %584 = arith.mulf %582, %583 : vector<8x512xf32>
    %c40_408 = arith.constant 40 : index
    %c0_409 = arith.constant 0 : index
    %585 = vector.load %arg11[%c40_408, %c0_409] : memref<144x512xf32, #tpu.memory_space<vmem>>, vector<8x512xf32>
    tpu.vector_store %arg11[%c40_408, %c0_409], %584 {strides = array<i32>} : memref<144x512xf32, #tpu.memory_space<vmem>>, vector<8x512xf32>,
    %c497_i32_410 = arith.constant 497 : i32
    %586 = tpu.dynamic_rotate %564 by %c497_i32_410 dim 1 : vector<8x512xf32>, i32 -> vector<8x512xf32>
    %587 = vector.broadcast %11 : vector<1x512xf32> to vector<8x512xf32>
    %588 = arith.mulf %586, %587 : vector<8x512xf32>
    %c48_411 = arith.constant 48 : index
    %c0_412 = arith.constant 0 : index
    %589 = vector.load %arg11[%c48_411, %c0_412] : memref<144x512xf32, #tpu.memory_space<vmem>>, vector<8x512xf32>
    tpu.vector_store %arg11[%c48_411, %c0_412], %588 {strides = array<i32>} : memref<144x512xf32, #tpu.memory_space<vmem>>, vector<8x512xf32>,
    %c496_i32_413 = arith.constant 496 : i32
    %590 = tpu.dynamic_rotate %564 by %c496_i32_413 dim 1 : vector<8x512xf32>, i32 -> vector<8x512xf32>
    %591 = vector.broadcast %13 : vector<1x512xf32> to vector<8x512xf32>
    %592 = arith.mulf %590, %591 : vector<8x512xf32>
    %c56_414 = arith.constant 56 : index
    %c0_415 = arith.constant 0 : index
    %593 = vector.load %arg11[%c56_414, %c0_415] : memref<144x512xf32, #tpu.memory_space<vmem>>, vector<8x512xf32>
    tpu.vector_store %arg11[%c56_414, %c0_415], %592 {strides = array<i32>} : memref<144x512xf32, #tpu.memory_space<vmem>>, vector<8x512xf32>,
    %c495_i32_416 = arith.constant 495 : i32
    %594 = tpu.dynamic_rotate %564 by %c495_i32_416 dim 1 : vector<8x512xf32>, i32 -> vector<8x512xf32>
    %595 = vector.broadcast %15 : vector<1x512xf32> to vector<8x512xf32>
    %596 = arith.mulf %594, %595 : vector<8x512xf32>
    %c64_417 = arith.constant 64 : index
    %c0_418 = arith.constant 0 : index
    %597 = vector.load %arg11[%c64_417, %c0_418] : memref<144x512xf32, #tpu.memory_space<vmem>>, vector<8x512xf32>
    tpu.vector_store %arg11[%c64_417, %c0_418], %596 {strides = array<i32>} : memref<144x512xf32, #tpu.memory_space<vmem>>, vector<8x512xf32>,
    %c0_419 = arith.constant 0 : index
    %c0_420 = arith.constant 0 : index
    %598 = vector.load %arg11[%c0_419, %c0_420] : memref<144x512xf32, #tpu.memory_space<vmem>>, vector<72x512xf32>
    %599 = arith.truncf %598 : vector<72x512xf32> to vector<72x512xbf16>
    %c2_421 = arith.constant 2 : index
    %c0_422 = arith.constant 0 : index
    %c0_423 = arith.constant 0 : index
    %600 = vector.load %arg4[%c2_421, %c0_422, %c0_423] : memref<3x40x72xbf16, #tpu.memory_space<vmem>>, vector<1x40x72xbf16>
    %601 = vector.shape_cast %600 : vector<1x40x72xbf16> to vector<40x72xbf16>
    %cst_424 = arith.constant dense<0.000000e+00> : vector<40x512xf32>
    %602 = tpu.matmul %601, %599, %cst_424 {dimension_numbers = #tpu.dot_dimension_numbers<[1], [0], [0], [1], [0, 0, 1, 1], [], []>} : vector<40x72xbf16>, vector<72x512xbf16>, vector<40x512xf32> -> vector<40x512xf32>
    %603 = vector.extract_strided_slice %602 {offsets = [0, 0], sizes = [8, 512], strides = [1, 1]} : vector<40x512xf32> to vector<8x512xf32>
    %604 = arith.addf %554, %603 : vector<8x512xf32>
    %605 = vector.extract_strided_slice %602 {offsets = [8, 0], sizes = [8, 512], strides = [1, 1]} : vector<40x512xf32> to vector<8x512xf32>
    %606 = arith.addf %555, %605 : vector<8x512xf32>
    %607 = vector.extract_strided_slice %602 {offsets = [16, 0], sizes = [8, 512], strides = [1, 1]} : vector<40x512xf32> to vector<8x512xf32>
    %608 = arith.addf %556, %607 : vector<8x512xf32>
    %609 = vector.extract_strided_slice %602 {offsets = [24, 0], sizes = [16, 512], strides = [1, 1]} : vector<40x512xf32> to vector<16x512xf32>
    %610 = arith.addf %557, %609 : vector<16x512xf32>
    %c9 = arith.constant 9 : index
    %c0_425 = arith.constant 0 : index
    %c0_426 = arith.constant 0 : index
    %611 = vector.load %arg8[%c9, %c0_425, %c0_426] : memref<12x8x1xf32, #tpu.memory_space<vmem>>, vector<1x8x1xf32>
    %612 = vector.shape_cast %611 : vector<1x8x1xf32> to vector<8x1xf32>
    %613 = vector.broadcast %612 : vector<8x1xf32> to vector<8x512xf32>
    %614 = arith.addf %604, %613 : vector<8x512xf32>
    %cst_427 = arith.constant 2.000000e-01 : f32
    %615 = vector.broadcast %cst_427 : f32 to vector<8x512xf32>
    %616 = arith.mulf %615, %614 : vector<8x512xf32>
    %617 = arith.maximumf %614, %616 : vector<8x512xf32>
    %c17_i32_428 = arith.constant 17 : i32
    %618 = tpu.dynamic_rotate %617 by %c17_i32_428 dim 1 : vector<8x512xf32>, i32 -> vector<8x512xf32>
    %619 = vector.broadcast %1 : vector<1x512xf32> to vector<8x512xf32>
    %620 = arith.mulf %618, %619 : vector<8x512xf32>
    %c0_429 = arith.constant 0 : index
    %c0_430 = arith.constant 0 : index
    %621 = vector.load %arg11[%c0_429, %c0_430] : memref<144x512xf32, #tpu.memory_space<vmem>>, vector<8x512xf32>
    tpu.vector_store %arg11[%c0_429, %c0_430], %620 {strides = array<i32>} : memref<144x512xf32, #tpu.memory_space<vmem>>, vector<8x512xf32>,
    %c16_i32_431 = arith.constant 16 : i32
    %622 = tpu.dynamic_rotate %617 by %c16_i32_431 dim 1 : vector<8x512xf32>, i32 -> vector<8x512xf32>
    %623 = vector.broadcast %3 : vector<1x512xf32> to vector<8x512xf32>
    %624 = arith.mulf %622, %623 : vector<8x512xf32>
    %c8_432 = arith.constant 8 : index
    %c0_433 = arith.constant 0 : index
    %625 = vector.load %arg11[%c8_432, %c0_433] : memref<144x512xf32, #tpu.memory_space<vmem>>, vector<8x512xf32>
    tpu.vector_store %arg11[%c8_432, %c0_433], %624 {strides = array<i32>} : memref<144x512xf32, #tpu.memory_space<vmem>>, vector<8x512xf32>,
    %c15_i32_434 = arith.constant 15 : i32
    %626 = tpu.dynamic_rotate %617 by %c15_i32_434 dim 1 : vector<8x512xf32>, i32 -> vector<8x512xf32>
    %627 = vector.broadcast %5 : vector<1x512xf32> to vector<8x512xf32>
    %628 = arith.mulf %626, %627 : vector<8x512xf32>
    %c16_435 = arith.constant 16 : index
    %c0_436 = arith.constant 0 : index
    %629 = vector.load %arg11[%c16_435, %c0_436] : memref<144x512xf32, #tpu.memory_space<vmem>>, vector<8x512xf32>
    tpu.vector_store %arg11[%c16_435, %c0_436], %628 {strides = array<i32>} : memref<144x512xf32, #tpu.memory_space<vmem>>, vector<8x512xf32>,
    %c1_i32_437 = arith.constant 1 : i32
    %630 = tpu.dynamic_rotate %617 by %c1_i32_437 dim 1 : vector<8x512xf32>, i32 -> vector<8x512xf32>
    %631 = vector.broadcast %7 : vector<1x512xf32> to vector<8x512xf32>
    %632 = arith.mulf %630, %631 : vector<8x512xf32>
    %c24_438 = arith.constant 24 : index
    %c0_439 = arith.constant 0 : index
    %633 = vector.load %arg11[%c24_438, %c0_439] : memref<144x512xf32, #tpu.memory_space<vmem>>, vector<8x512xf32>
    tpu.vector_store %arg11[%c24_438, %c0_439], %632 {strides = array<i32>} : memref<144x512xf32, #tpu.memory_space<vmem>>, vector<8x512xf32>,
    %c32_440 = arith.constant 32 : index
    %c0_441 = arith.constant 0 : index
    %634 = vector.load %arg11[%c32_440, %c0_441] : memref<144x512xf32, #tpu.memory_space<vmem>>, vector<8x512xf32>
    tpu.vector_store %arg11[%c32_440, %c0_441], %617 {strides = array<i32>} : memref<144x512xf32, #tpu.memory_space<vmem>>, vector<8x512xf32>,
    %c511_i32_442 = arith.constant 511 : i32
    %635 = tpu.dynamic_rotate %617 by %c511_i32_442 dim 1 : vector<8x512xf32>, i32 -> vector<8x512xf32>
    %636 = vector.broadcast %9 : vector<1x512xf32> to vector<8x512xf32>
    %637 = arith.mulf %635, %636 : vector<8x512xf32>
    %c40_443 = arith.constant 40 : index
    %c0_444 = arith.constant 0 : index
    %638 = vector.load %arg11[%c40_443, %c0_444] : memref<144x512xf32, #tpu.memory_space<vmem>>, vector<8x512xf32>
    tpu.vector_store %arg11[%c40_443, %c0_444], %637 {strides = array<i32>} : memref<144x512xf32, #tpu.memory_space<vmem>>, vector<8x512xf32>,
    %c497_i32_445 = arith.constant 497 : i32
    %639 = tpu.dynamic_rotate %617 by %c497_i32_445 dim 1 : vector<8x512xf32>, i32 -> vector<8x512xf32>
    %640 = vector.broadcast %11 : vector<1x512xf32> to vector<8x512xf32>
    %641 = arith.mulf %639, %640 : vector<8x512xf32>
    %c48_446 = arith.constant 48 : index
    %c0_447 = arith.constant 0 : index
    %642 = vector.load %arg11[%c48_446, %c0_447] : memref<144x512xf32, #tpu.memory_space<vmem>>, vector<8x512xf32>
    tpu.vector_store %arg11[%c48_446, %c0_447], %641 {strides = array<i32>} : memref<144x512xf32, #tpu.memory_space<vmem>>, vector<8x512xf32>,
    %c496_i32_448 = arith.constant 496 : i32
    %643 = tpu.dynamic_rotate %617 by %c496_i32_448 dim 1 : vector<8x512xf32>, i32 -> vector<8x512xf32>
    %644 = vector.broadcast %13 : vector<1x512xf32> to vector<8x512xf32>
    %645 = arith.mulf %643, %644 : vector<8x512xf32>
    %c56_449 = arith.constant 56 : index
    %c0_450 = arith.constant 0 : index
    %646 = vector.load %arg11[%c56_449, %c0_450] : memref<144x512xf32, #tpu.memory_space<vmem>>, vector<8x512xf32>
    tpu.vector_store %arg11[%c56_449, %c0_450], %645 {strides = array<i32>} : memref<144x512xf32, #tpu.memory_space<vmem>>, vector<8x512xf32>,
    %c495_i32_451 = arith.constant 495 : i32
    %647 = tpu.dynamic_rotate %617 by %c495_i32_451 dim 1 : vector<8x512xf32>, i32 -> vector<8x512xf32>
    %648 = vector.broadcast %15 : vector<1x512xf32> to vector<8x512xf32>
    %649 = arith.mulf %647, %648 : vector<8x512xf32>
    %c64_452 = arith.constant 64 : index
    %c0_453 = arith.constant 0 : index
    %650 = vector.load %arg11[%c64_452, %c0_453] : memref<144x512xf32, #tpu.memory_space<vmem>>, vector<8x512xf32>
    tpu.vector_store %arg11[%c64_452, %c0_453], %649 {strides = array<i32>} : memref<144x512xf32, #tpu.memory_space<vmem>>, vector<8x512xf32>,
    %c0_454 = arith.constant 0 : index
    %c0_455 = arith.constant 0 : index
    %651 = vector.load %arg11[%c0_454, %c0_455] : memref<144x512xf32, #tpu.memory_space<vmem>>, vector<72x512xf32>
    %652 = arith.truncf %651 : vector<72x512xf32> to vector<72x512xbf16>
    %c2_456 = arith.constant 2 : index
    %c0_457 = arith.constant 0 : index
    %c0_458 = arith.constant 0 : index
    %653 = vector.load %arg5[%c2_456, %c0_457, %c0_458] : memref<3x32x72xbf16, #tpu.memory_space<vmem>>, vector<1x32x72xbf16>
    %654 = vector.shape_cast %653 : vector<1x32x72xbf16> to vector<32x72xbf16>
    %cst_459 = arith.constant dense<0.000000e+00> : vector<32x512xf32>
    %655 = tpu.matmul %654, %652, %cst_459 {dimension_numbers = #tpu.dot_dimension_numbers<[1], [0], [0], [1], [0, 0, 1, 1], [], []>} : vector<32x72xbf16>, vector<72x512xbf16>, vector<32x512xf32> -> vector<32x512xf32>
    %656 = vector.extract_strided_slice %655 {offsets = [0, 0], sizes = [8, 512], strides = [1, 1]} : vector<32x512xf32> to vector<8x512xf32>
    %657 = arith.addf %606, %656 : vector<8x512xf32>
    %658 = vector.extract_strided_slice %655 {offsets = [8, 0], sizes = [8, 512], strides = [1, 1]} : vector<32x512xf32> to vector<8x512xf32>
    %659 = arith.addf %608, %658 : vector<8x512xf32>
    %660 = vector.extract_strided_slice %655 {offsets = [16, 0], sizes = [16, 512], strides = [1, 1]} : vector<32x512xf32> to vector<16x512xf32>
    %661 = arith.addf %610, %660 : vector<16x512xf32>
    %c10 = arith.constant 10 : index
    %c0_460 = arith.constant 0 : index
    %c0_461 = arith.constant 0 : index
    %662 = vector.load %arg8[%c10, %c0_460, %c0_461] : memref<12x8x1xf32, #tpu.memory_space<vmem>>, vector<1x8x1xf32>
    %663 = vector.shape_cast %662 : vector<1x8x1xf32> to vector<8x1xf32>
    %664 = vector.broadcast %663 : vector<8x1xf32> to vector<8x512xf32>
    %665 = arith.addf %657, %664 : vector<8x512xf32>
    %cst_462 = arith.constant 2.000000e-01 : f32
    %666 = vector.broadcast %cst_462 : f32 to vector<8x512xf32>
    %667 = arith.mulf %666, %665 : vector<8x512xf32>
    %668 = arith.maximumf %665, %667 : vector<8x512xf32>
    %c17_i32_463 = arith.constant 17 : i32
    %669 = tpu.dynamic_rotate %668 by %c17_i32_463 dim 1 : vector<8x512xf32>, i32 -> vector<8x512xf32>
    %670 = vector.broadcast %1 : vector<1x512xf32> to vector<8x512xf32>
    %671 = arith.mulf %669, %670 : vector<8x512xf32>
    %c0_464 = arith.constant 0 : index
    %c0_465 = arith.constant 0 : index
    %672 = vector.load %arg11[%c0_464, %c0_465] : memref<144x512xf32, #tpu.memory_space<vmem>>, vector<8x512xf32>
    tpu.vector_store %arg11[%c0_464, %c0_465], %671 {strides = array<i32>} : memref<144x512xf32, #tpu.memory_space<vmem>>, vector<8x512xf32>,
    %c16_i32_466 = arith.constant 16 : i32
    %673 = tpu.dynamic_rotate %668 by %c16_i32_466 dim 1 : vector<8x512xf32>, i32 -> vector<8x512xf32>
    %674 = vector.broadcast %3 : vector<1x512xf32> to vector<8x512xf32>
    %675 = arith.mulf %673, %674 : vector<8x512xf32>
    %c8_467 = arith.constant 8 : index
    %c0_468 = arith.constant 0 : index
    %676 = vector.load %arg11[%c8_467, %c0_468] : memref<144x512xf32, #tpu.memory_space<vmem>>, vector<8x512xf32>
    tpu.vector_store %arg11[%c8_467, %c0_468], %675 {strides = array<i32>} : memref<144x512xf32, #tpu.memory_space<vmem>>, vector<8x512xf32>,
    %c15_i32_469 = arith.constant 15 : i32
    %677 = tpu.dynamic_rotate %668 by %c15_i32_469 dim 1 : vector<8x512xf32>, i32 -> vector<8x512xf32>
    %678 = vector.broadcast %5 : vector<1x512xf32> to vector<8x512xf32>
    %679 = arith.mulf %677, %678 : vector<8x512xf32>
    %c16_470 = arith.constant 16 : index
    %c0_471 = arith.constant 0 : index
    %680 = vector.load %arg11[%c16_470, %c0_471] : memref<144x512xf32, #tpu.memory_space<vmem>>, vector<8x512xf32>
    tpu.vector_store %arg11[%c16_470, %c0_471], %679 {strides = array<i32>} : memref<144x512xf32, #tpu.memory_space<vmem>>, vector<8x512xf32>,
    %c1_i32_472 = arith.constant 1 : i32
    %681 = tpu.dynamic_rotate %668 by %c1_i32_472 dim 1 : vector<8x512xf32>, i32 -> vector<8x512xf32>
    %682 = vector.broadcast %7 : vector<1x512xf32> to vector<8x512xf32>
    %683 = arith.mulf %681, %682 : vector<8x512xf32>
    %c24_473 = arith.constant 24 : index
    %c0_474 = arith.constant 0 : index
    %684 = vector.load %arg11[%c24_473, %c0_474] : memref<144x512xf32, #tpu.memory_space<vmem>>, vector<8x512xf32>
    tpu.vector_store %arg11[%c24_473, %c0_474], %683 {strides = array<i32>} : memref<144x512xf32, #tpu.memory_space<vmem>>, vector<8x512xf32>,
    %c32_475 = arith.constant 32 : index
    %c0_476 = arith.constant 0 : index
    %685 = vector.load %arg11[%c32_475, %c0_476] : memref<144x512xf32, #tpu.memory_space<vmem>>, vector<8x512xf32>
    tpu.vector_store %arg11[%c32_475, %c0_476], %668 {strides = array<i32>} : memref<144x512xf32, #tpu.memory_space<vmem>>, vector<8x512xf32>,
    %c511_i32_477 = arith.constant 511 : i32
    %686 = tpu.dynamic_rotate %668 by %c511_i32_477 dim 1 : vector<8x512xf32>, i32 -> vector<8x512xf32>
    %687 = vector.broadcast %9 : vector<1x512xf32> to vector<8x512xf32>
    %688 = arith.mulf %686, %687 : vector<8x512xf32>
    %c40_478 = arith.constant 40 : index
    %c0_479 = arith.constant 0 : index
    %689 = vector.load %arg11[%c40_478, %c0_479] : memref<144x512xf32, #tpu.memory_space<vmem>>, vector<8x512xf32>
    tpu.vector_store %arg11[%c40_478, %c0_479], %688 {strides = array<i32>} : memref<144x512xf32, #tpu.memory_space<vmem>>, vector<8x512xf32>,
    %c497_i32_480 = arith.constant 497 : i32
    %690 = tpu.dynamic_rotate %668 by %c497_i32_480 dim 1 : vector<8x512xf32>, i32 -> vector<8x512xf32>
    %691 = vector.broadcast %11 : vector<1x512xf32> to vector<8x512xf32>
    %692 = arith.mulf %690, %691 : vector<8x512xf32>
    %c48_481 = arith.constant 48 : index
    %c0_482 = arith.constant 0 : index
    %693 = vector.load %arg11[%c48_481, %c0_482] : memref<144x512xf32, #tpu.memory_space<vmem>>, vector<8x512xf32>
    tpu.vector_store %arg11[%c48_481, %c0_482], %692 {strides = array<i32>} : memref<144x512xf32, #tpu.memory_space<vmem>>, vector<8x512xf32>,
    %c496_i32_483 = arith.constant 496 : i32
    %694 = tpu.dynamic_rotate %668 by %c496_i32_483 dim 1 : vector<8x512xf32>, i32 -> vector<8x512xf32>
    %695 = vector.broadcast %13 : vector<1x512xf32> to vector<8x512xf32>
    %696 = arith.mulf %694, %695 : vector<8x512xf32>
    %c56_484 = arith.constant 56 : index
    %c0_485 = arith.constant 0 : index
    %697 = vector.load %arg11[%c56_484, %c0_485] : memref<144x512xf32, #tpu.memory_space<vmem>>, vector<8x512xf32>
    tpu.vector_store %arg11[%c56_484, %c0_485], %696 {strides = array<i32>} : memref<144x512xf32, #tpu.memory_space<vmem>>, vector<8x512xf32>,
    %c495_i32_486 = arith.constant 495 : i32
    %698 = tpu.dynamic_rotate %668 by %c495_i32_486 dim 1 : vector<8x512xf32>, i32 -> vector<8x512xf32>
    %699 = vector.broadcast %15 : vector<1x512xf32> to vector<8x512xf32>
    %700 = arith.mulf %698, %699 : vector<8x512xf32>
    %c64_487 = arith.constant 64 : index
    %c0_488 = arith.constant 0 : index
    %701 = vector.load %arg11[%c64_487, %c0_488] : memref<144x512xf32, #tpu.memory_space<vmem>>, vector<8x512xf32>
    tpu.vector_store %arg11[%c64_487, %c0_488], %700 {strides = array<i32>} : memref<144x512xf32, #tpu.memory_space<vmem>>, vector<8x512xf32>,
    %c0_489 = arith.constant 0 : index
    %c0_490 = arith.constant 0 : index
    %702 = vector.load %arg11[%c0_489, %c0_490] : memref<144x512xf32, #tpu.memory_space<vmem>>, vector<72x512xf32>
    %703 = arith.truncf %702 : vector<72x512xf32> to vector<72x512xbf16>
    %c2_491 = arith.constant 2 : index
    %c0_492 = arith.constant 0 : index
    %c0_493 = arith.constant 0 : index
    %704 = vector.load %arg6[%c2_491, %c0_492, %c0_493] : memref<3x24x72xbf16, #tpu.memory_space<vmem>>, vector<1x24x72xbf16>
    %705 = vector.shape_cast %704 : vector<1x24x72xbf16> to vector<24x72xbf16>
    %cst_494 = arith.constant dense<0.000000e+00> : vector<24x512xf32>
    %706 = tpu.matmul %705, %703, %cst_494 {dimension_numbers = #tpu.dot_dimension_numbers<[1], [0], [0], [1], [0, 0, 1, 1], [], []>} : vector<24x72xbf16>, vector<72x512xbf16>, vector<24x512xf32> -> vector<24x512xf32>
    %707 = vector.extract_strided_slice %706 {offsets = [0, 0], sizes = [8, 512], strides = [1, 1]} : vector<24x512xf32> to vector<8x512xf32>
    %708 = arith.addf %659, %707 : vector<8x512xf32>
    %709 = vector.extract_strided_slice %706 {offsets = [8, 0], sizes = [16, 512], strides = [1, 1]} : vector<24x512xf32> to vector<16x512xf32>
    %710 = arith.addf %661, %709 : vector<16x512xf32>
    %c11 = arith.constant 11 : index
    %c0_495 = arith.constant 0 : index
    %c0_496 = arith.constant 0 : index
    %711 = vector.load %arg8[%c11, %c0_495, %c0_496] : memref<12x8x1xf32, #tpu.memory_space<vmem>>, vector<1x8x1xf32>
    %712 = vector.shape_cast %711 : vector<1x8x1xf32> to vector<8x1xf32>
    %713 = vector.broadcast %712 : vector<8x1xf32> to vector<8x512xf32>
    %714 = arith.addf %708, %713 : vector<8x512xf32>
    %cst_497 = arith.constant 2.000000e-01 : f32
    %715 = vector.broadcast %cst_497 : f32 to vector<8x512xf32>
    %716 = arith.mulf %715, %714 : vector<8x512xf32>
    %717 = arith.maximumf %714, %716 : vector<8x512xf32>
    %c17_i32_498 = arith.constant 17 : i32
    %718 = tpu.dynamic_rotate %717 by %c17_i32_498 dim 1 : vector<8x512xf32>, i32 -> vector<8x512xf32>
    %719 = vector.broadcast %1 : vector<1x512xf32> to vector<8x512xf32>
    %720 = arith.mulf %718, %719 : vector<8x512xf32>
    %c0_499 = arith.constant 0 : index
    %c0_500 = arith.constant 0 : index
    %721 = vector.load %arg11[%c0_499, %c0_500] : memref<144x512xf32, #tpu.memory_space<vmem>>, vector<8x512xf32>
    tpu.vector_store %arg11[%c0_499, %c0_500], %720 {strides = array<i32>} : memref<144x512xf32, #tpu.memory_space<vmem>>, vector<8x512xf32>,
    %c16_i32_501 = arith.constant 16 : i32
    %722 = tpu.dynamic_rotate %717 by %c16_i32_501 dim 1 : vector<8x512xf32>, i32 -> vector<8x512xf32>
    %723 = vector.broadcast %3 : vector<1x512xf32> to vector<8x512xf32>
    %724 = arith.mulf %722, %723 : vector<8x512xf32>
    %c8_502 = arith.constant 8 : index
    %c0_503 = arith.constant 0 : index
    %725 = vector.load %arg11[%c8_502, %c0_503] : memref<144x512xf32, #tpu.memory_space<vmem>>, vector<8x512xf32>
    tpu.vector_store %arg11[%c8_502, %c0_503], %724 {strides = array<i32>} : memref<144x512xf32, #tpu.memory_space<vmem>>, vector<8x512xf32>,
    %c15_i32_504 = arith.constant 15 : i32
    %726 = tpu.dynamic_rotate %717 by %c15_i32_504 dim 1 : vector<8x512xf32>, i32 -> vector<8x512xf32>
    %727 = vector.broadcast %5 : vector<1x512xf32> to vector<8x512xf32>
    %728 = arith.mulf %726, %727 : vector<8x512xf32>
    %c16_505 = arith.constant 16 : index
    %c0_506 = arith.constant 0 : index
    %729 = vector.load %arg11[%c16_505, %c0_506] : memref<144x512xf32, #tpu.memory_space<vmem>>, vector<8x512xf32>
    tpu.vector_store %arg11[%c16_505, %c0_506], %728 {strides = array<i32>} : memref<144x512xf32, #tpu.memory_space<vmem>>, vector<8x512xf32>,
    %c1_i32_507 = arith.constant 1 : i32
    %730 = tpu.dynamic_rotate %717 by %c1_i32_507 dim 1 : vector<8x512xf32>, i32 -> vector<8x512xf32>
    %731 = vector.broadcast %7 : vector<1x512xf32> to vector<8x512xf32>
    %732 = arith.mulf %730, %731 : vector<8x512xf32>
    %c24_508 = arith.constant 24 : index
    %c0_509 = arith.constant 0 : index
    %733 = vector.load %arg11[%c24_508, %c0_509] : memref<144x512xf32, #tpu.memory_space<vmem>>, vector<8x512xf32>
    tpu.vector_store %arg11[%c24_508, %c0_509], %732 {strides = array<i32>} : memref<144x512xf32, #tpu.memory_space<vmem>>, vector<8x512xf32>,
    %c32_510 = arith.constant 32 : index
    %c0_511 = arith.constant 0 : index
    %734 = vector.load %arg11[%c32_510, %c0_511] : memref<144x512xf32, #tpu.memory_space<vmem>>, vector<8x512xf32>
    tpu.vector_store %arg11[%c32_510, %c0_511], %717 {strides = array<i32>} : memref<144x512xf32, #tpu.memory_space<vmem>>, vector<8x512xf32>,
    %c511_i32_512 = arith.constant 511 : i32
    %735 = tpu.dynamic_rotate %717 by %c511_i32_512 dim 1 : vector<8x512xf32>, i32 -> vector<8x512xf32>
    %736 = vector.broadcast %9 : vector<1x512xf32> to vector<8x512xf32>
    %737 = arith.mulf %735, %736 : vector<8x512xf32>
    %c40_513 = arith.constant 40 : index
    %c0_514 = arith.constant 0 : index
    %738 = vector.load %arg11[%c40_513, %c0_514] : memref<144x512xf32, #tpu.memory_space<vmem>>, vector<8x512xf32>
    tpu.vector_store %arg11[%c40_513, %c0_514], %737 {strides = array<i32>} : memref<144x512xf32, #tpu.memory_space<vmem>>, vector<8x512xf32>,
    %c497_i32_515 = arith.constant 497 : i32
    %739 = tpu.dynamic_rotate %717 by %c497_i32_515 dim 1 : vector<8x512xf32>, i32 -> vector<8x512xf32>
    %740 = vector.broadcast %11 : vector<1x512xf32> to vector<8x512xf32>
    %741 = arith.mulf %739, %740 : vector<8x512xf32>
    %c48_516 = arith.constant 48 : index
    %c0_517 = arith.constant 0 : index
    %742 = vector.load %arg11[%c48_516, %c0_517] : memref<144x512xf32, #tpu.memory_space<vmem>>, vector<8x512xf32>
    tpu.vector_store %arg11[%c48_516, %c0_517], %741 {strides = array<i32>} : memref<144x512xf32, #tpu.memory_space<vmem>>, vector<8x512xf32>,
    %c496_i32_518 = arith.constant 496 : i32
    %743 = tpu.dynamic_rotate %717 by %c496_i32_518 dim 1 : vector<8x512xf32>, i32 -> vector<8x512xf32>
    %744 = vector.broadcast %13 : vector<1x512xf32> to vector<8x512xf32>
    %745 = arith.mulf %743, %744 : vector<8x512xf32>
    %c56_519 = arith.constant 56 : index
    %c0_520 = arith.constant 0 : index
    %746 = vector.load %arg11[%c56_519, %c0_520] : memref<144x512xf32, #tpu.memory_space<vmem>>, vector<8x512xf32>
    tpu.vector_store %arg11[%c56_519, %c0_520], %745 {strides = array<i32>} : memref<144x512xf32, #tpu.memory_space<vmem>>, vector<8x512xf32>,
    %c495_i32_521 = arith.constant 495 : i32
    %747 = tpu.dynamic_rotate %717 by %c495_i32_521 dim 1 : vector<8x512xf32>, i32 -> vector<8x512xf32>
    %748 = vector.broadcast %15 : vector<1x512xf32> to vector<8x512xf32>
    %749 = arith.mulf %747, %748 : vector<8x512xf32>
    %c64_522 = arith.constant 64 : index
    %c0_523 = arith.constant 0 : index
    %750 = vector.load %arg11[%c64_522, %c0_523] : memref<144x512xf32, #tpu.memory_space<vmem>>, vector<8x512xf32>
    tpu.vector_store %arg11[%c64_522, %c0_523], %749 {strides = array<i32>} : memref<144x512xf32, #tpu.memory_space<vmem>>, vector<8x512xf32>,
    %c0_524 = arith.constant 0 : index
    %c0_525 = arith.constant 0 : index
    %751 = vector.load %arg11[%c0_524, %c0_525] : memref<144x512xf32, #tpu.memory_space<vmem>>, vector<72x512xf32>
    %752 = arith.truncf %751 : vector<72x512xf32> to vector<72x512xbf16>
    %c2_526 = arith.constant 2 : index
    %c0_527 = arith.constant 0 : index
    %c0_528 = arith.constant 0 : index
    %753 = vector.load %arg7[%c2_526, %c0_527, %c0_528] : memref<3x16x72xbf16, #tpu.memory_space<vmem>>, vector<1x16x72xbf16>
    %754 = vector.shape_cast %753 : vector<1x16x72xbf16> to vector<16x72xbf16>
    %cst_529 = arith.constant dense<0.000000e+00> : vector<16x512xf32>
    %755 = tpu.matmul %754, %752, %cst_529 {dimension_numbers = #tpu.dot_dimension_numbers<[1], [0], [0], [1], [0, 0, 1, 1], [], []>} : vector<16x72xbf16>, vector<72x512xbf16>, vector<16x512xf32> -> vector<16x512xf32>
    %756 = arith.addf %710, %755 : vector<16x512xf32>
    %c2_530 = arith.constant 2 : index
    %c0_531 = arith.constant 0 : index
    %c0_532 = arith.constant 0 : index
    %757 = vector.load %arg9[%c2_530, %c0_531, %c0_532] : memref<3x16x1xf32, #tpu.memory_space<vmem>>, vector<1x16x1xf32>
    %758 = vector.shape_cast %757 : vector<1x16x1xf32> to vector<16x1xf32>
    %759 = vector.broadcast %758 : vector<16x1xf32> to vector<16x512xf32>
    %760 = arith.addf %756, %759 : vector<16x512xf32>
    %cst_533 = arith.constant 2.000000e-01 : f32
    %761 = vector.broadcast %cst_533 : f32 to vector<16x512xf32>
    %762 = arith.mulf %760, %761 : vector<16x512xf32>
    %763 = arith.addf %762, %514 : vector<16x512xf32>
    %cst_534 = arith.constant 2.000000e-01 : f32
    %764 = vector.broadcast %cst_534 : f32 to vector<16x512xf32>
    %765 = arith.mulf %763, %764 : vector<16x512xf32>
    %766 = arith.addf %765, %16 : vector<16x512xf32>
    %c0_535 = arith.constant 0 : index
    %c0_536 = arith.constant 0 : index
    %767 = vector.load %arg10[%c0_535, %c0_536] : memref<16x512xf32, #tpu.memory_space<vmem>>, vector<16x512xf32>
    tpu.vector_store %arg10[%c0_535, %c0_536], %766 {strides = array<i32>} : memref<16x512xf32, #tpu.memory_space<vmem>>, vector<16x512xf32>,
    return
  }
  func.func @transform_0(%arg0: i32) -> (i32, i32) {
    %c0_i32 = arith.constant 0 : i32
    %c0_i32_0 = arith.constant 0 : i32
    return %c0_i32, %arg0 : i32, i32
  }
  func.func @transform_1(%arg0: i32) -> (i32, i32, i32) {
    %c0_i32 = arith.constant 0 : i32
    %c0_i32_0 = arith.constant 0 : i32
    %c0_i32_1 = arith.constant 0 : i32
    %c0_i32_2 = arith.constant 0 : i32
    return %c0_i32, %c0_i32_0, %c0_i32_1 : i32, i32, i32
  }
  func.func @transform_2(%arg0: i32) -> (i32, i32, i32) {
    %c0_i32 = arith.constant 0 : i32
    %c0_i32_0 = arith.constant 0 : i32
    %c0_i32_1 = arith.constant 0 : i32
    %c0_i32_2 = arith.constant 0 : i32
    return %c0_i32, %c0_i32_0, %c0_i32_1 : i32, i32, i32
  }
  func.func @transform_3(%arg0: i32) -> (i32, i32, i32) {
    %c0_i32 = arith.constant 0 : i32
    %c0_i32_0 = arith.constant 0 : i32
    %c0_i32_1 = arith.constant 0 : i32
    %c0_i32_2 = arith.constant 0 : i32
    return %c0_i32, %c0_i32_0, %c0_i32_1 : i32, i32, i32
  }
  func.func @transform_4(%arg0: i32) -> (i32, i32, i32) {
    %c0_i32 = arith.constant 0 : i32
    %c0_i32_0 = arith.constant 0 : i32
    %c0_i32_1 = arith.constant 0 : i32
    %c0_i32_2 = arith.constant 0 : i32
    return %c0_i32, %c0_i32_0, %c0_i32_1 : i32, i32, i32
  }
  func.func @transform_5(%arg0: i32) -> (i32, i32, i32) {
    %c0_i32 = arith.constant 0 : i32
    %c0_i32_0 = arith.constant 0 : i32
    %c0_i32_1 = arith.constant 0 : i32
    %c0_i32_2 = arith.constant 0 : i32
    return %c0_i32, %c0_i32_0, %c0_i32_1 : i32, i32, i32
  }
  func.func @transform_6(%arg0: i32) -> (i32, i32, i32) {
    %c0_i32 = arith.constant 0 : i32
    %c0_i32_0 = arith.constant 0 : i32
    %c0_i32_1 = arith.constant 0 : i32
    %c0_i32_2 = arith.constant 0 : i32
    return %c0_i32, %c0_i32_0, %c0_i32_1 : i32, i32, i32
  }
  func.func @transform_7(%arg0: i32) -> (i32, i32, i32) {
    %c0_i32 = arith.constant 0 : i32
    %c0_i32_0 = arith.constant 0 : i32
    %c0_i32_1 = arith.constant 0 : i32
    %c0_i32_2 = arith.constant 0 : i32
    return %c0_i32, %c0_i32_0, %c0_i32_1 : i32, i32, i32
  }
  func.func @transform_8(%arg0: i32) -> (i32, i32, i32) {
    %c0_i32 = arith.constant 0 : i32
    %c0_i32_0 = arith.constant 0 : i32
    %c0_i32_1 = arith.constant 0 : i32
    %c0_i32_2 = arith.constant 0 : i32
    return %c0_i32, %c0_i32_0, %c0_i32_1 : i32, i32, i32
  }
  func.func @transform_9(%arg0: i32) -> (i32, i32) {
    %c0_i32 = arith.constant 0 : i32
    %c0_i32_0 = arith.constant 0 : i32
    return %c0_i32, %arg0 : i32, i32
  }
}

</mosaic_0001>

<llo_original>
// kernel: rrdb_forward.1
$region0: #{rrdb_forward.1}
  #allocation0 [shape = 'u32[]', space=smem, size = 0x4, offset = 0x4, fixed_abs, tag = 'smem constant byte address 0x4 - core index']
  #allocation1 [shape = 'u32[72,128]{1,0:T(1,128)}', space=vmem, size = 0x9000, scoped, tag = 'internal scratch']
  #allocation2 [shape = 'f32[144,512]{1,0:T(8,128)}', space=vmem, size = 0x48000, scoped, tag = 'scratch operand']
  %s0 = inlined_call_operand.vmem [shape: f32[16,512], index: 0, kind: input, shape index: {}]
  %s1 = inlined_call_operand.vmem [shape: f32[9,1,512], index: 1, kind: input, shape index: {}]
  %s2 = inlined_call_operand.vmem [shape: bf16[3,48,144], index: 2, kind: input, shape index: {}]
  %s3 = inlined_call_operand.vmem [shape: bf16[3,40,72], index: 3, kind: input, shape index: {}]
  %s4 = inlined_call_operand.vmem [shape: bf16[3,32,72], index: 4, kind: input, shape index: {}]
  %s5 = inlined_call_operand.vmem [shape: bf16[3,24,72], index: 5, kind: input, shape index: {}]
  %s6 = inlined_call_operand.vmem [shape: bf16[3,16,72], index: 6, kind: input, shape index: {}]
  %s7 = inlined_call_operand.vmem [shape: f32[12,8,1], index: 7, kind: input, shape index: {}]
  %s8 = inlined_call_operand.vmem [shape: f32[3,16,1], index: 8, kind: input, shape index: {}]
  %s9 = inlined_call_operand.vmem [shape: f32[16,512], index: 9, kind: output, shape index: {}]
  %s10 = sld [smem:[#allocation0]]
  $region46: #{rrdb_forward.1} parent=0
    _
  %s12 = ssub.s32 1, %s10
  %s13 = scalar_select 0, %s12, %s10
  // Predicated region
  $region2: #{rrdb_forward.1} parent=0 // pred_check
    _
  $region3: #{rrdb_forward.1} parent=0 // pred_check_branch
    %15 = sbr.rel (0) target = $region5
  $region4: #{rrdb_forward.1} parent=0 // pred_region
    _
  $region5: #{rrdb_forward.1} parent=0 // pred_fallthru
    _
  // Predicated region
  $region6: #{rrdb_forward.1} parent=0 // pred_check
    _
  $region7: #{rrdb_forward.1} parent=0 // pred_check_branch
    %17 = sbr.rel (0) target = $region9
  $region8: #{rrdb_forward.1} parent=0 // pred_region
    _
  $region9: #{rrdb_forward.1} parent=0 // pred_fallthru
    _
  // Predicated region
  $region10: #{rrdb_forward.1} parent=0 // pred_check
    _
  $region11: #{rrdb_forward.1} parent=0 // pred_check_branch
    %19 = sbr.rel (0) target = $region13
  $region12: #{rrdb_forward.1} parent=0 // pred_region
    _
  $region13: #{rrdb_forward.1} parent=0 // pred_fallthru
    _
  // Predicated region
  $region14: #{rrdb_forward.1} parent=0 // pred_check
    _
  $region15: #{rrdb_forward.1} parent=0 // pred_check_branch
    %21 = sbr.rel (0) target = $region17
  $region16: #{rrdb_forward.1} parent=0 // pred_region
    _
  $region17: #{rrdb_forward.1} parent=0 // pred_fallthru
    _
  // Predicated region
  $region18: #{rrdb_forward.1} parent=0 // pred_check
    _
  $region19: #{rrdb_forward.1} parent=0 // pred_check_branch
    %23 = sbr.rel (0) target = $region21
  $region20: #{rrdb_forward.1} parent=0 // pred_region
    _
  $region21: #{rrdb_forward.1} parent=0 // pred_fallthru
    _
  // Predicated region
  $region22: #{rrdb_forward.1} parent=0 // pred_check
    _
  $region23: #{rrdb_forward.1} parent=0 // pred_check_branch
    %25 = sbr.rel (0) target = $region25
  $region24: #{rrdb_forward.1} parent=0 // pred_region
    _
  $region25: #{rrdb_forward.1} parent=0 // pred_fallthru
    _
  // Predicated region
  $region26: #{rrdb_forward.1} parent=0 // pred_check
    _
  $region27: #{rrdb_forward.1} parent=0 // pred_check_branch
    %27 = sbr.rel (0) target = $region29
  $region28: #{rrdb_forward.1} parent=0 // pred_region
    _
  $region29: #{rrdb_forward.1} parent=0 // pred_fallthru
    _
  // Predicated region
  $region30: #{rrdb_forward.1} parent=0 // pred_check
    _
  $region31: #{rrdb_forward.1} parent=0 // pred_check_branch
    %29 = sbr.rel (0) target = $region33
  $region32: #{rrdb_forward.1} parent=0 // pred_region
    _
  $region33: #{rrdb_forward.1} parent=0 // pred_fallthru
    _
  // Predicated region
  $region34: #{rrdb_forward.1} parent=0 // pred_check
    _
  $region35: #{rrdb_forward.1} parent=0 // pred_check_branch
    %31 = sbr.rel (0) target = $region37
  $region36: #{rrdb_forward.1} parent=0 // pred_region
    _
  $region37: #{rrdb_forward.1} parent=0 // pred_fallthru
    _
  %v33 = vld [vmem:[%s1] sm:$0xf]
  %s34 = scalar_lea.vmem %s1, 4
  %v35 = vld [vmem:[%s34] sm:$0xf]
  %s36 = scalar_lea.vmem %s1, 8
  %v37 = vld [vmem:[%s36] sm:$0xf]
  %s38 = scalar_lea.vmem %s1, 12
  %v39 = vld [vmem:[%s38] sm:$0xf]
  %s40 = scalar_lea.vmem %s1, 20
  %v41 = vld [vmem:[%s40] sm:$0xf]
  %s42 = scalar_lea.vmem %s1, 24
  %v43 = vld [vmem:[%s42] sm:$0xf]
  %s44 = scalar_lea.vmem %s1, 28
  %v45 = vld [vmem:[%s44] sm:$0xf]
  %s46 = scalar_lea.vmem %s1, 32
  %v47 = vld [vmem:[%s46] sm:$0xf]
  %v48 = vld [vmem:[%s0] sm:$0xff]
  %v49 = vld [vmem:[%s0 + $0x8] sm:$0xff]
  %v50 = vld [vmem:[%s0 + $0x10] sm:$0xff]
  %v51 = vld [vmem:[%s0 + $0x18] sm:$0xff]
  %v52 = vld [vmem:[%s0 + $0x20] sm:$0xff]
  %v53 = vld [vmem:[%s0 + $0x28] sm:$0xff]
  %v54 = vld [vmem:[%s0 + $0x30] sm:$0xff]
  %v55 = vld [vmem:[%s0 + $0x38] sm:$0xff]
  %56 = vrot.lane.b32.xlu0 %v48, 17
  %v57 = vpop.permute.xlu0 %56
  %58 = vrot.lane.b32.xlu0 %v52, 17
  %v59 = vpop.permute.xlu0 %58
  %60 = vrot.lane.b32.xlu0 %v49, 17
  %v61 = vpop.permute.xlu0 %60
  %62 = vrot.lane.b32.xlu0 %v53, 17
  %v63 = vpop.permute.xlu0 %62
  %64 = vrot.lane.b32.xlu0 %v50, 17
  %v65 = vpop.permute.xlu0 %64
  %66 = vrot.lane.b32.xlu0 %v54, 17
  %v67 = vpop.permute.xlu0 %66
  %68 = vrot.lane.b32.xlu0 %v51, 17
  %v69 = vpop.permute.xlu0 %68
  %70 = vrot.lane.b32.xlu0 %v55, 17
  %v71 = vpop.permute.xlu0 %70
  %v72 = vlaneseq
  %v73 = vand.u32 %v72, 127
  %vm74 = vcmp.lt.s32.totalorder %v73, 17
  %v75 = vsel %vm74, %v65, %v69
  %v76 = vsel %vm74, %v67, %v71
  %v77 = vsel %vm74, %v61, %v65
  %v78 = vsel %vm74, %v63, %v67
  %v79 = vsel %vm74, %v57, %v61
  %v80 = vsel %vm74, %v59, %v63
  %v81 = vsel %vm74, %v69, %v57
  %v82 = vsel %vm74, %v71, %v59
  %v84 = vperm.slane %v33, 0
  %v85 = vperm.slane %v33, 1
  %v86 = vperm.slane %v33, 2
  %v87 = vperm.slane %v33, 3
  %v92 = vmul.f32 %v81, %v84
  %v93 = vmul.f32 %v79, %v85
  %v94 = vmul.f32 %v77, %v86
  %v95 = vmul.f32 %v75, %v87
  %v96 = vmul.f32 %v82, %v84
  %v97 = vmul.f32 %v80, %v85
  %v98 = vmul.f32 %v78, %v86
  %v99 = vmul.f32 %v76, %v87
  %100 = vst [vmem:[#allocation2] sm:$0xff] %v92
  %101 = vst [vmem:[#allocation2 + $0x8] sm:$0xff] %v93
  %102 = vst [vmem:[#allocation2 + $0x10] sm:$0xff] %v94
  %103 = vst [vmem:[#allocation2 + $0x18] sm:$0xff] %v95
  %104 = vst [vmem:[#allocation2 + $0x20] sm:$0xff] %v96
  %105 = vst [vmem:[#allocation2 + $0x28] sm:$0xff] %v97
  %106 = vst [vmem:[#allocation2 + $0x30] sm:$0xff] %v98
  %107 = vst [vmem:[#allocation2 + $0x38] sm:$0xff] %v99
  %108 = vrot.lane.b32.xlu0 %v48, 16
  %v109 = vpop.permute.xlu0 %108
  %110 = vrot.lane.b32.xlu0 %v52, 16
  %v111 = vpop.permute.xlu0 %110
  %112 = vrot.lane.b32.xlu0 %v49, 16
  %v113 = vpop.permute.xlu0 %112
  %114 = vrot.lane.b32.xlu0 %v53, 16
  %v115 = vpop.permute.xlu0 %114
  %116 = vrot.lane.b32.xlu0 %v50, 16
  %v117 = vpop.permute.xlu0 %116
  %118 = vrot.lane.b32.xlu0 %v54, 16
  %v119 = vpop.permute.xlu0 %118
  %120 = vrot.lane.b32.xlu0 %v51, 16
  %v121 = vpop.permute.xlu0 %120
  %122 = vrot.lane.b32.xlu0 %v55, 16
  %v123 = vpop.permute.xlu0 %122
  %vm124 = vcmp.lt.s32.totalorder %v73, 16
  %v125 = vsel %vm124, %v117, %v121
  %v126 = vsel %vm124, %v119, %v123
  %v127 = vsel %vm124, %v113, %v117
  %v128 = vsel %vm124, %v115, %v119
  %v129 = vsel %vm124, %v109, %v113
  %v130 = vsel %vm124, %v111, %v115
  %v131 = vsel %vm124, %v121, %v109
  %v132 = vsel %vm124, %v123, %v111
  %v134 = vperm.slane %v35, 0
  %v135 = vperm.slane %v35, 1
  %v136 = vperm.slane %v35, 2
  %v137 = vperm.slane %v35, 3
  %v142 = vmul.f32 %v131, %v134
  %v143 = vmul.f32 %v129, %v135
  %v144 = vmul.f32 %v127, %v136
  %v145 = vmul.f32 %v125, %v137
  %v146 = vmul.f32 %v132, %v134
  %v147 = vmul.f32 %v130, %v135
  %v148 = vmul.f32 %v128, %v136
  %v149 = vmul.f32 %v126, %v137
  %150 = vst [vmem:[#allocation2 + $0x40] sm:$0xff] %v142
  %151 = vst [vmem:[#allocation2 + $0x48] sm:$0xff] %v143
  %152 = vst [vmem:[#allocation2 + $0x50] sm:$0xff] %v144
  %153 = vst [vmem:[#allocation2 + $0x58] sm:$0xff] %v145
  %154 = vst [vmem:[#allocation2 + $0x60] sm:$0xff] %v146
  %155 = vst [vmem:[#allocation2 + $0x68] sm:$0xff] %v147
  %156 = vst [vmem:[#allocation2 + $0x70] sm:$0xff] %v148
  %157 = vst [vmem:[#allocation2 + $0x78] sm:$0xff] %v149
  %158 = vrot.lane.b32.xlu0 %v48, 15
  %v159 = vpop.permute.xlu0 %158
  %160 = vrot.lane.b32.xlu0 %v52, 15
  %v161 = vpop.permute.xlu0 %160
  %162 = vrot.lane.b32.xlu0 %v49, 15
  %v163 = vpop.permute.xlu0 %162
  %164 = vrot.lane.b32.xlu0 %v53, 15
  %v165 = vpop.permute.xlu0 %164
  %166 = vrot.lane.b32.xlu0 %v50, 15
  %v167 = vpop.permute.xlu0 %166
  %168 = vrot.lane.b32.xlu0 %v54, 15
  %v169 = vpop.permute.xlu0 %168
  %170 = vrot.lane.b32.xlu0 %v51, 15
  %v171 = vpop.permute.xlu0 %170
  %172 = vrot.lane.b32.xlu0 %v55, 15
  %v173 = vpop.permute.xlu0 %172
  %vm174 = vcmp.lt.s32.totalorder %v73, 15
  %v175 = vsel %vm174, %v167, %v171
  %v176 = vsel %vm174, %v169, %v173
  %v177 = vsel %vm174, %v163, %v167
  %v178 = vsel %vm174, %v165, %v169
  %v179 = vsel %vm174, %v159, %v163
  %v180 = vsel %vm174, %v161, %v165
  %v181 = vsel %vm174, %v171, %v159
  %v182 = vsel %vm174, %v173, %v161
  %v184 = vperm.slane %v37, 0
  %v185 = vperm.slane %v37, 1
  %v186 = vperm.slane %v37, 2
  %v187 = vperm.slane %v37, 3
  %v192 = vmul.f32 %v181, %v184
  %v193 = vmul.f32 %v179, %v185
  %v194 = vmul.f32 %v177, %v186
  %v195 = vmul.f32 %v175, %v187
  %v196 = vmul.f32 %v182, %v184
  %v197 = vmul.f32 %v180, %v185
  %v198 = vmul.f32 %v178, %v186
  %v199 = vmul.f32 %v176, %v187
  %200 = vst [vmem:[#allocation2 + $0x80] sm:$0xff] %v192
  %201 = vst [vmem:[#allocation2 + $0x88] sm:$0xff] %v193
  %202 = vst [vmem:[#allocation2 + $0x90] sm:$0xff] %v194
  %203 = vst [vmem:[#allocation2 + $0x98] sm:$0xff] %v195
  %204 = vst [vmem:[#allocation2 + $0xa0] sm:$0xff] %v196
  %205 = vst [vmem:[#allocation2 + $0xa8] sm:$0xff] %v197
  %206 = vst [vmem:[#allocation2 + $0xb0] sm:$0xff] %v198
  %207 = vst [vmem:[#allocation2 + $0xb8] sm:$0xff] %v199
  %208 = vrot.lane.b32.xlu0 %v48, 1
  %v209 = vpop.permute.xlu0 %208
  %210 = vrot.lane.b32.xlu0 %v52, 1
  %v211 = vpop.permute.xlu0 %210
  %212 = vrot.lane.b32.xlu0 %v49, 1
  %v213 = vpop.permute.xlu0 %212
  %214 = vrot.lane.b32.xlu0 %v53, 1
  %v215 = vpop.permute.xlu0 %214
  %216 = vrot.lane.b32.xlu0 %v50, 1
  %v217 = vpop.permute.xlu0 %216
  %218 = vrot.lane.b32.xlu0 %v54, 1
  %v219 = vpop.permute.xlu0 %218
  %220 = vrot.lane.b32.xlu0 %v51, 1
  %v221 = vpop.permute.xlu0 %220
  %222 = vrot.lane.b32.xlu0 %v55, 1
  %v223 = vpop.permute.xlu0 %222
  %vm224 = vcmp.lt.s32.totalorder %v73, 1
  %v225 = vsel %vm224, %v217, %v221
  %v226 = vsel %vm224, %v219, %v223
  %v227 = vsel %vm224, %v213, %v217
  %v228 = vsel %vm224, %v215, %v219
  %v229 = vsel %vm224, %v209, %v213
  %v230 = vsel %vm224, %v211, %v215
  %v231 = vsel %vm224, %v221, %v209
  %v232 = vsel %vm224, %v223, %v211
  %v234 = vperm.slane %v39, 0
  %v235 = vperm.slane %v39, 1
  %v236 = vperm.slane %v39, 2
  %v237 = vperm.slane %v39, 3
  %v242 = vmul.f32 %v231, %v234
  %v243 = vmul.f32 %v229, %v235
  %v244 = vmul.f32 %v227, %v236
  %v245 = vmul.f32 %v225, %v237
  %v246 = vmul.f32 %v232, %v234
  %v247 = vmul.f32 %v230, %v235
  %v248 = vmul.f32 %v228, %v236
  %v249 = vmul.f32 %v226, %v237
  %250 = vst [vmem:[#allocation2 + $0xc0] sm:$0xff] %v242
  %251 = vst [vmem:[#allocation2 + $0xc8] sm:$0xff] %v243
  %252 = vst [vmem:[#allocation2 + $0xd0] sm:$0xff] %v244
  %253 = vst [vmem:[#allocation2 + $0xd8] sm:$0xff] %v245
  %254 = vst [vmem:[#allocation2 + $0xe0] sm:$0xff] %v246
  %255 = vst [vmem:[#allocation2 + $0xe8] sm:$0xff] %v247
  %256 = vst [vmem:[#allocation2 + $0xf0] sm:$0xff] %v248
  %257 = vst [vmem:[#allocation2 + $0xf8] sm:$0xff] %v249
  %258 = vst [vmem:[#allocation2 + $0x100] sm:$0xff] %v48
  %259 = vst [vmem:[#allocation2 + $0x108] sm:$0xff] %v49
  %260 = vst [vmem:[#allocation2 + $0x110] sm:$0xff] %v50
  %261 = vst [vmem:[#allocation2 + $0x118] sm:$0xff] %v51
  %262 = vst [vmem:[#allocation2 + $0x120] sm:$0xff] %v52
  %263 = vst [vmem:[#allocation2 + $0x128] sm:$0xff] %v53
  %264 = vst [vmem:[#allocation2 + $0x130] sm:$0xff] %v54
  %265 = vst [vmem:[#allocation2 + $0x138] sm:$0xff] %v55
  %266 = vrot.lane.b32.xlu0 %v48, 127
  %v267 = vpop.permute.xlu0 %266
  %268 = vrot.lane.b32.xlu0 %v52, 127
  %v269 = vpop.permute.xlu0 %268
  %270 = vrot.lane.b32.xlu0 %v49, 127
  %v271 = vpop.permute.xlu0 %270
  %272 = vrot.lane.b32.xlu0 %v53, 127
  %v273 = vpop.permute.xlu0 %272
  %274 = vrot.lane.b32.xlu0 %v50, 127
  %v275 = vpop.permute.xlu0 %274
  %276 = vrot.lane.b32.xlu0 %v54, 127
  %v277 = vpop.permute.xlu0 %276
  %278 = vrot.lane.b32.xlu0 %v51, 127
  %v279 = vpop.permute.xlu0 %278
  %280 = vrot.lane.b32.xlu0 %v55, 127
  %v281 = vpop.permute.xlu0 %280
  %vm282 = vcmp.lt.s32.totalorder %v73, 127
  %v283 = vsel %vm282, %v275, %v279
  %v284 = vsel %vm282, %v277, %v281
  %v285 = vsel %vm282, %v271, %v275
  %v286 = vsel %vm282, %v273, %v277
  %v287 = vsel %vm282, %v267, %v271
  %v288 = vsel %vm282, %v269, %v273
  %v289 = vsel %vm282, %v279, %v267
  %v290 = vsel %vm282, %v281, %v269
  %v292 = vperm.slane %v41, 0
  %v293 = vperm.slane %v41, 1
  %v294 = vperm.slane %v41, 2
  %v295 = vperm.slane %v41, 3
  %v300 = vmul.f32 %v287, %v292
  %v301 = vmul.f32 %v285, %v293
  %v302 = vmul.f32 %v283, %v294
  %v303 = vmul.f32 %v289, %v295
  %v304 = vmul.f32 %v288, %v292
  %v305 = vmul.f32 %v286, %v293
  %v306 = vmul.f32 %v284, %v294
  %v307 = vmul.f32 %v290, %v295
  %308 = vst [vmem:[#allocation2 + $0x140] sm:$0xff] %v300
  %309 = vst [vmem:[#allocation2 + $0x148] sm:$0xff] %v301
  %310 = vst [vmem:[#allocation2 + $0x150] sm:$0xff] %v302
  %311 = vst [vmem:[#allocation2 + $0x158] sm:$0xff] %v303
  %312 = vst [vmem:[#allocation2 + $0x160] sm:$0xff] %v304
  %313 = vst [vmem:[#allocation2 + $0x168] sm:$0xff] %v305
  %314 = vst [vmem:[#allocation2 + $0x170] sm:$0xff] %v306
  %315 = vst [vmem:[#allocation2 + $0x178] sm:$0xff] %v307
  %316 = vrot.lane.b32.xlu0 %v48, 113
  %v317 = vpop.permute.xlu0 %316
  %318 = vrot.lane.b32.xlu0 %v52, 113
  %v319 = vpop.permute.xlu0 %318
  %320 = vrot.lane.b32.xlu0 %v49, 113
  %v321 = vpop.permute.xlu0 %320
  %322 = vrot.lane.b32.xlu0 %v53, 113
  %v323 = vpop.permute.xlu0 %322
  %324 = vrot.lane.b32.xlu0 %v50, 113
  %v325 = vpop.permute.xlu0 %324
  %326 = vrot.lane.b32.xlu0 %v54, 113
  %v327 = vpop.permute.xlu0 %326
  %328 = vrot.lane.b32.xlu0 %v51, 113
  %v329 = vpop.permute.xlu0 %328
  %330 = vrot.lane.b32.xlu0 %v55, 113
  %v331 = vpop.permute.xlu0 %330
  %vm332 = vcmp.lt.s32.totalorder %v73, 113
  %v333 = vsel %vm332, %v325, %v329
  %v334 = vsel %vm332, %v327, %v331
  %v335 = vsel %vm332, %v321, %v325
  %v336 = vsel %vm332, %v323, %v327
  %v337 = vsel %vm332, %v317, %v321
  %v338 = vsel %vm332, %v319, %v323
  %v339 = vsel %vm332, %v329, %v317
  %v340 = vsel %vm332, %v331, %v319
  %v342 = vperm.slane %v43, 0
  %v343 = vperm.slane %v43, 1
  %v344 = vperm.slane %v43, 2
  %v345 = vperm.slane %v43, 3
  %v350 = vmul.f32 %v337, %v342
  %v351 = vmul.f32 %v335, %v343
  %v352 = vmul.f32 %v333, %v344
  %v353 = vmul.f32 %v339, %v345
  %v354 = vmul.f32 %v338, %v342
  %v355 = vmul.f32 %v336, %v343
  %v356 = vmul.f32 %v334, %v344
  %v357 = vmul.f32 %v340, %v345
  %358 = vst [vmem:[#allocation2 + $0x180] sm:$0xff] %v350
  %359 = vst [vmem:[#allocation2 + $0x188] sm:$0xff] %v351
  %360 = vst [vmem:[#allocation2 + $0x190] sm:$0xff] %v352
  %361 = vst [vmem:[#allocation2 + $0x198] sm:$0xff] %v353
  %362 = vst [vmem:[#allocation2 + $0x1a0] sm:$0xff] %v354
  %363 = vst [vmem:[#allocation2 + $0x1a8] sm:$0xff] %v355
  %364 = vst [vmem:[#allocation2 + $0x1b0] sm:$0xff] %v356
  %365 = vst [vmem:[#allocation2 + $0x1b8] sm:$0xff] %v357
  %366 = vrot.lane.b32.xlu0 %v48, 112
  %v367 = vpop.permute.xlu0 %366
  %368 = vrot.lane.b32.xlu0 %v52, 112
  %v369 = vpop.permute.xlu0 %368
  %370 = vrot.lane.b32.xlu0 %v49, 112
  %v371 = vpop.permute.xlu0 %370
  %372 = vrot.lane.b32.xlu0 %v53, 112
  %v373 = vpop.permute.xlu0 %372
  %374 = vrot.lane.b32.xlu0 %v50, 112
  %v375 = vpop.permute.xlu0 %374
  %376 = vrot.lane.b32.xlu0 %v54, 112
  %v377 = vpop.permute.xlu0 %376
  %378 = vrot.lane.b32.xlu0 %v51, 112
  %v379 = vpop.permute.xlu0 %378
  %380 = vrot.lane.b32.xlu0 %v55, 112
  %v381 = vpop.permute.xlu0 %380
  %vm382 = vcmp.lt.s32.totalorder %v73, 112
  %v383 = vsel %vm382, %v375, %v379
  %v384 = vsel %vm382, %v377, %v381
  %v385 = vsel %vm382, %v371, %v375
  %v386 = vsel %vm382, %v373, %v377
  %v387 = vsel %vm382, %v367, %v371
  %v388 = vsel %vm382, %v369, %v373
  %v389 = vsel %vm382, %v379, %v367
  %v390 = vsel %vm382, %v381, %v369
  %v392 = vperm.slane %v45, 0
  %v393 = vperm.slane %v45, 1
  %v394 = vperm.slane %v45, 2
  %v395 = vperm.slane %v45, 3
  %v400 = vmul.f32 %v387, %v392
  %v401 = vmul.f32 %v385, %v393
  %v402 = vmul.f32 %v383, %v394
  %v403 = vmul.f32 %v389, %v395
  %v404 = vmul.f32 %v388, %v392
  %v405 = vmul.f32 %v386, %v393
  %v406 = vmul.f32 %v384, %v394
  %v407 = vmul.f32 %v390, %v395
  %408 = vst [vmem:[#allocation2 + $0x1c0] sm:$0xff] %v400
  %409 = vst [vmem:[#allocation2 + $0x1c8] sm:$0xff] %v401
  %410 = vst [vmem:[#allocation2 + $0x1d0] sm:$0xff] %v402
  %411 = vst [vmem:[#allocation2 + $0x1d8] sm:$0xff] %v403
  %412 = vst [vmem:[#allocation2 + $0x1e0] sm:$0xff] %v404
  %413 = vst [vmem:[#allocation2 + $0x1e8] sm:$0xff] %v405
  %414 = vst [vmem:[#allocation2 + $0x1f0] sm:$0xff] %v406
  %415 = vst [vmem:[#allocation2 + $0x1f8] sm:$0xff] %v407
  %416 = vrot.lane.b32.xlu0 %v48, 111
  %v417 = vpop.permute.xlu0 %416
  %418 = vrot.lane.b32.xlu0 %v52, 111
  %v419 = vpop.permute.xlu0 %418
  %420 = vrot.lane.b32.xlu0 %v49, 111
  %v421 = vpop.permute.xlu0 %420
  %422 = vrot.lane.b32.xlu0 %v53, 111
  %v423 = vpop.permute.xlu0 %422
  %424 = vrot.lane.b32.xlu0 %v50, 111
  %v425 = vpop.permute.xlu0 %424
  %426 = vrot.lane.b32.xlu0 %v54, 111
  %v427 = vpop.permute.xlu0 %426
  %428 = vrot.lane.b32.xlu0 %v51, 111
  %v429 = vpop.permute.xlu0 %428
  %430 = vrot.lane.b32.xlu0 %v55, 111
  %v431 = vpop.permute.xlu0 %430
  %vm432 = vcmp.lt.s32.totalorder %v73, 111
  %v433 = vsel %vm432, %v425, %v429
  %v434 = vsel %vm432, %v427, %v431
  %v435 = vsel %vm432, %v421, %v425
  %v436 = vsel %vm432, %v423, %v427
  %v437 = vsel %vm432, %v417, %v421
  %v438 = vsel %vm432, %v419, %v423
  %v439 = vsel %vm432, %v429, %v417
  %v440 = vsel %vm432, %v431, %v419
  %v442 = vperm.slane %v47, 0
  %v443 = vperm.slane %v47, 1
  %v444 = vperm.slane %v47, 2
  %v445 = vperm.slane %v47, 3
  %v450 = vmul.f32 %v437, %v442
  %v451 = vmul.f32 %v435, %v443
  %v452 = vmul.f32 %v433, %v444
  %v453 = vmul.f32 %v439, %v445
  %v454 = vmul.f32 %v438, %v442
  %v455 = vmul.f32 %v436, %v443
  %v456 = vmul.f32 %v434, %v444
  %v457 = vmul.f32 %v440, %v445
  %458 = vst [vmem:[#allocation2 + $0x200] sm:$0xff] %v450
  %459 = vst [vmem:[#allocation2 + $0x208] sm:$0xff] %v451
  %460 = vst [vmem:[#allocation2 + $0x210] sm:$0xff] %v452
  %461 = vst [vmem:[#allocation2 + $0x218] sm:$0xff] %v453
  %462 = vst [vmem:[#allocation2 + $0x220] sm:$0xff] %v454
  %463 = vst [vmem:[#allocation2 + $0x228] sm:$0xff] %v455
  %464 = vst [vmem:[#allocation2 + $0x230] sm:$0xff] %v456
  %465 = vst [vmem:[#allocation2 + $0x238] sm:$0xff] %v457
  %v466 = vld [vmem:[#allocation2] sm:$0xff]
  %v467 = vld [vmem:[#allocation2 + $0x8] sm:$0xff]
  %v468 = vld [vmem:[#allocation2 + $0x10] sm:$0xff]
  %v469 = vld [vmem:[#allocation2 + $0x18] sm:$0xff]
  %v470 = vld [vmem:[#allocation2 + $0x20] sm:$0xff]
  %v471 = vld [vmem:[#allocation2 + $0x28] sm:$0xff]
  %v472 = vld [vmem:[#allocation2 + $0x30] sm:$0xff]
  %v473 = vld [vmem:[#allocation2 + $0x38] sm:$0xff]
  %v474 = vld [vmem:[#allocation2 + $0x40] sm:$0xff]
  %v475 = vld [vmem:[#allocation2 + $0x48] sm:$0xff]
  %v476 = vld [vmem:[#allocation2 + $0x50] sm:$0xff]
  %v477 = vld [vmem:[#allocation2 + $0x58] sm:$0xff]
  %v478 = vld [vmem:[#allocation2 + $0x60] sm:$0xff]
  %v479 = vld [vmem:[#allocation2 + $0x68] sm:$0xff]
  %v480 = vld [vmem:[#allocation2 + $0x70] sm:$0xff]
  %v481 = vld [vmem:[#allocation2 + $0x78] sm:$0xff]
  %v482 = vld [vmem:[#allocation2 + $0x80] sm:$0xff]
  %v483 = vld [vmem:[#allocation2 + $0x88] sm:$0xff]
  %v484 = vld [vmem:[#allocation2 + $0x90] sm:$0xff]
  %v485 = vld [vmem:[#allocation2 + $0x98] sm:$0xff]
  %v486 = vld [vmem:[#allocation2 + $0xa0] sm:$0xff]
  %v487 = vld [vmem:[#allocation2 + $0xa8] sm:$0xff]
  %v488 = vld [vmem:[#allocation2 + $0xb0] sm:$0xff]
  %v489 = vld [vmem:[#allocation2 + $0xb8] sm:$0xff]
  %v490 = vld [vmem:[#allocation2 + $0xc0] sm:$0xff]
  %v491 = vld [vmem:[#allocation2 + $0xc8] sm:$0xff]
  %v492 = vld [vmem:[#allocation2 + $0xd0] sm:$0xff]
  %v493 = vld [vmem:[#allocation2 + $0xd8] sm:$0xff]
  %v494 = vld [vmem:[#allocation2 + $0xe0] sm:$0xff]
  %v495 = vld [vmem:[#allocation2 + $0xe8] sm:$0xff]
  %v496 = vld [vmem:[#allocation2 + $0xf0] sm:$0xff]
  %v497 = vld [vmem:[#allocation2 + $0xf8] sm:$0xff]
  %v498 = vld [vmem:[#allocation2 + $0x100] sm:$0xff]
  %v499 = vld [vmem:[#allocation2 + $0x108] sm:$0xff]
  %v500 = vld [vmem:[#allocation2 + $0x110] sm:$0xff]
  %v501 = vld [vmem:[#allocation2 + $0x118] sm:$0xff]
  %v502 = vld [vmem:[#allocation2 + $0x120] sm:$0xff]
  %v503 = vld [vmem:[#allocation2 + $0x128] sm:$0xff]
  %v504 = vld [vmem:[#allocation2 + $0x130] sm:$0xff]
  %v505 = vld [vmem:[#allocation2 + $0x138] sm:$0xff]
  %v506 = vld [vmem:[#allocation2 + $0x140] sm:$0xff]
  %v507 = vld [vmem:[#allocation2 + $0x148] sm:$0xff]
  %v508 = vld [vmem:[#allocation2 + $0x150] sm:$0xff]
  %v509 = vld [vmem:[#allocation2 + $0x158] sm:$0xff]
  %v510 = vld [vmem:[#allocation2 + $0x160] sm:$0xff]
  %v511 = vld [vmem:[#allocation2 + $0x168] sm:$0xff]
  %v512 = vld [vmem:[#allocation2 + $0x170] sm:$0xff]
  %v513 = vld [vmem:[#allocation2 + $0x178] sm:$0xff]
  %v514 = vld [vmem:[#allocation2 + $0x180] sm:$0xff]
  %v515 = vld [vmem:[#allocation2 + $0x188] sm:$0xff]
  %v516 = vld [vmem:[#allocation2 + $0x190] sm:$0xff]
  %v517 = vld [vmem:[#allocation2 + $0x198] sm:$0xff]
  %v518 = vld [vmem:[#allocation2 + $0x1a0] sm:$0xff]
  %v519 = vld [vmem:[#allocation2 + $0x1a8] sm:$0xff]
  %v520 = vld [vmem:[#allocation2 + $0x1b0] sm:$0xff]
  %v521 = vld [vmem:[#allocation2 + $0x1b8] sm:$0xff]
  %v522 = vld [vmem:[#allocation2 + $0x1c0] sm:$0xff]
  %v523 = vld [vmem:[#allocation2 + $0x1c8] sm:$0xff]
  %v524 = vld [vmem:[#allocation2 + $0x1d0] sm:$0xff]
  %v525 = vld [vmem:[#allocation2 + $0x1d8] sm:$0xff]
  %v526 = vld [vmem:[#allocation2 + $0x1e0] sm:$0xff]
  %v527 = vld [vmem:[#allocation2 + $0x1e8] sm:$0xff]
  %v528 = vld [vmem:[#allocation2 + $0x1f0] sm:$0xff]
  %v529 = vld [vmem:[#allocation2 + $0x1f8] sm:$0xff]
  %v530 = vld [vmem:[#allocation2 + $0x200] sm:$0xff]
  %v531 = vld [vmem:[#allocation2 + $0x208] sm:$0xff]
  %v532 = vld [vmem:[#allocation2 + $0x210] sm:$0xff]
  %v533 = vld [vmem:[#allocation2 + $0x218] sm:$0xff]
  %v534 = vld [vmem:[#allocation2 + $0x220] sm:$0xff]
  %v535 = vld [vmem:[#allocation2 + $0x228] sm:$0xff]
  %v536 = vld [vmem:[#allocation2 + $0x230] sm:$0xff]
  %v537 = vld [vmem:[#allocation2 + $0x238] sm:$0xff]
  %v538 = vpack.c.bf16 %v470, %v466
  %v539 = vpack.c.bf16 %v471, %v467
  %v540 = vpack.c.bf16 %v472, %v468
  %v541 = vpack.c.bf16 %v473, %v469
  %v542 = vpack.c.bf16 %v478, %v474
  %v543 = vpack.c.bf16 %v479, %v475
  %v544 = vpack.c.bf16 %v480, %v476
  %v545 = vpack.c.bf16 %v481, %v477
  %v546 = vpack.c.bf16 %v486, %v482
  %v547 = vpack.c.bf16 %v487, %v483
  %v548 = vpack.c.bf16 %v488, %v484
  %v549 = vpack.c.bf16 %v489, %v485
  %v550 = vpack.c.bf16 %v494, %v490
  %v551 = vpack.c.bf16 %v495, %v491
  %v552 = vpack.c.bf16 %v496, %v492
  %v553 = vpack.c.bf16 %v497, %v493
  %v554 = vpack.c.bf16 %v502, %v498
  %v555 = vpack.c.bf16 %v503, %v499
  %v556 = vpack.c.bf16 %v504, %v500
  %v557 = vpack.c.bf16 %v505, %v501
  %v558 = vpack.c.bf16 %v510, %v506
  %v559 = vpack.c.bf16 %v511, %v507
  %v560 = vpack.c.bf16 %v512, %v508
  %v561 = vpack.c.bf16 %v513, %v509
  %v562 = vpack.c.bf16 %v518, %v514
  %v563 = vpack.c.bf16 %v519, %v515
  %v564 = vpack.c.bf16 %v520, %v516
  %v565 = vpack.c.bf16 %v521, %v517
  %v566 = vpack.c.bf16 %v526, %v522
  %v567 = vpack.c.bf16 %v527, %v523
  %v568 = vpack.c.bf16 %v528, %v524
  %v569 = vpack.c.bf16 %v529, %v525
  %v570 = vpack.c.bf16 %v534, %v530
  %v571 = vpack.c.bf16 %v535, %v531
  %v572 = vpack.c.bf16 %v536, %v532
  %v573 = vpack.c.bf16 %v537, %v533
  %v574 = vld [vmem:[%s2] sm:$0xff]
  %v575 = vld [vmem:[%s2 + $0x8] sm:$0xff]
  %v576 = vld [vmem:[%s2 + $0x10] sm:$0xff]
  %v577 = vld [vmem:[%s2 + $0x18] sm:$0xff]
  %v578 = vld [vmem:[%s2 + $0x20] sm:$0xff]
  %v579 = vld [vmem:[%s2 + $0x28] sm:$0xff]
  %v586 = vunpack.c.l.b16 %v574
  %v587 = vunpack.c.h.b16 %v574
  %v588 = vunpack.c.l.b16 %v575
  %v589 = vunpack.c.h.b16 %v575
  %v590 = vunpack.c.l.b16 %v576
  %v591 = vunpack.c.h.b16 %v576
  %v592 = vunpack.c.l.b16 %v577
  %v593 = vunpack.c.h.b16 %v577
  %v594 = vunpack.c.l.b16 %v578
  %v595 = vunpack.c.h.b16 %v578
  %v596 = vunpack.c.l.b16 %v579
  %v597 = vunpack.c.h.b16 %v579
  %v598 = vpack.c.b16 %v588, %v586
  %v599 = vpack.c.b16 %v589, %v587
  %v600 = vpack.c.b16 %v592, %v590
  %v601 = vpack.c.b16 %v593, %v591
  %v602 = vpack.c.b16 %v596, %v594
  %v603 = vpack.c.b16 %v597, %v595
  %vm607 = vcmask 130048
  %v609 = vsel %vm607, %v599, 0
  %v612 = vsel %vm607, %v601, 0
  %v615 = vsel %vm607, %v603, 0
  %617 = vmatpush.bf16.msra.mxu0 %v566
  %618 = vmatpush.bf16.msra.mxu0 %v562
  %619 = vmatpush.bf16.msra.mxu0 %v558
  %620 = vmatpush.bf16.msra.mxu0 %v554
  %621 = vmatpush.bf16.msra.mxu0 %v550
  %622 = vmatpush.bf16.msra.mxu0 %v546
  %623 = vmatpush.bf16.msra.mxu0 %v542
  %624 = vmatpush.bf16.msra.mxu0 %v538
  %625 = vmatmul.bf16.gmra.mxu0 %v598
  %v626 = vpop.f32.mrf.mxu0
  %v627 = vadd.f32 0.0, %v626
  %v628 = vpop.f32.mrf.mxu0
  %v629 = vadd.f32 0.0, %v628
  %630 = vmatmul.bf16.gmra.mxu0 %v600
  %v631 = vpop.f32.mrf.mxu0
  %v632 = vadd.f32 0.0, %v631
  %v633 = vpop.f32.mrf.mxu0
  %v634 = vadd.f32 0.0, %v633
  %635 = vmatmul.bf16.gmra.mxu0 %v602
  %v636 = vpop.f32.mrf.mxu0
  %v637 = vadd.f32 0.0, %v636
  %v638 = vpop.f32.mrf.mxu0
  %v639 = vadd.f32 0.0, %v638
  %640 = vdwg.mxu0
  %641 = vmatpush.bf16.msra.mxu0 0
  %642 = vmatpush.bf16.msra.mxu0 0
  %643 = vmatpush.bf16.msra.mxu0 0
  %644 = vmatpush.bf16.msra.mxu0 0
  %645 = vmatpush.bf16.msra.mxu0 0
  %646 = vmatpush.bf16.msra.mxu0 0
  %647 = vmatpush.bf16.msra.mxu0 0
  %648 = vmatpush.bf16.msra.mxu0 %v570
  %649 = vmatmul.bf16.gmra.mxu0 %v609
  %v650 = vpop.f32.mrf.mxu0
  %v651 = vadd.f32 %v627, %v650
  %v652 = vpop.f32.mrf.mxu0
  %v653 = vadd.f32 %v629, %v652
  %654 = vmatmul.bf16.gmra.mxu0 %v612
  %v655 = vpop.f32.mrf.mxu0
  %v656 = vadd.f32 %v632, %v655
  %v657 = vpop.f32.mrf.mxu0
  %v658 = vadd.f32 %v634, %v657
  %659 = vmatmul.bf16.gmra.mxu0 %v615
  %v660 = vpop.f32.mrf.mxu0
  %v661 = vadd.f32 %v637, %v660
  %v662 = vpop.f32.mrf.mxu0
  %v663 = vadd.f32 %v639, %v662
  %664 = vdwg.mxu0
  %665 = vmatpush.bf16.msra.mxu0 %v567
  %666 = vmatpush.bf16.msra.mxu0 %v563
  %667 = vmatpush.bf16.msra.mxu0 %v559
  %668 = vmatpush.bf16.msra.mxu0 %v555
  %669 = vmatpush.bf16.msra.mxu0 %v551
  %670 = vmatpush.bf16.msra.mxu0 %v547
  %671 = vmatpush.bf16.msra.mxu0 %v543
  %672 = vmatpush.bf16.msra.mxu0 %v539
  %673 = vmatmul.bf16.gmra.mxu0 %v598
  %v674 = vpop.f32.mrf.mxu0
  %v675 = vadd.f32 0.0, %v674
  %v676 = vpop.f32.mrf.mxu0
  %v677 = vadd.f32 0.0, %v676
  %678 = vmatmul.bf16.gmra.mxu0 %v600
  %v679 = vpop.f32.mrf.mxu0
  %v680 = vadd.f32 0.0, %v679
  %v681 = vpop.f32.mrf.mxu0
  %v682 = vadd.f32 0.0, %v681
  %683 = vmatmul.bf16.gmra.mxu0 %v602
  %v684 = vpop.f32.mrf.mxu0
  %v685 = vadd.f32 0.0, %v684
  %v686 = vpop.f32.mrf.mxu0
  %v687 = vadd.f32 0.0, %v686
  %688 = vdwg.mxu0
  %689 = vmatpush.bf16.msra.mxu0 0
  %690 = vmatpush.bf16.msra.mxu0 0
  %691 = vmatpush.bf16.msra.mxu0 0
  %692 = vmatpush.bf16.msra.mxu0 0
  %693 = vmatpush.bf16.msra.mxu0 0
  %694 = vmatpush.bf16.msra.mxu0 0
  %695 = vmatpush.bf16.msra.mxu0 0
  %696 = vmatpush.bf16.msra.mxu0 %v571
  %697 = vmatmul.bf16.gmra.mxu0 %v609
  %v698 = vpop.f32.mrf.mxu0
  %v699 = vadd.f32 %v675, %v698
  %v700 = vpop.f32.mrf.mxu0
  %v701 = vadd.f32 %v677, %v700
  %702 = vmatmul.bf16.gmra.mxu0 %v612
  %v703 = vpop.f32.mrf.mxu0
  %v704 = vadd.f32 %v680, %v703
  %v705 = vpop.f32.mrf.mxu0
  %v706 = vadd.f32 %v682, %v705
  %707 = vmatmul.bf16.gmra.mxu0 %v615
  %v708 = vpop.f32.mrf.mxu0
  %v709 = vadd.f32 %v685, %v708
  %v710 = vpop.f32.mrf.mxu0
  %v711 = vadd.f32 %v687, %v710
  %712 = vdwg.mxu0
  %713 = vmatpush.bf16.msra.mxu0 %v568
  %714 = vmatpush.bf16.msra.mxu0 %v564
  %715 = vmatpush.bf16.msra.mxu0 %v560
  %716 = vmatpush.bf16.msra.mxu0 %v556
  %717 = vmatpush.bf16.msra.mxu0 %v552
  %718 = vmatpush.bf16.msra.mxu0 %v548
  %719 = vmatpush.bf16.msra.mxu0 %v544
  %720 = vmatpush.bf16.msra.mxu0 %v540
  %721 = vmatmul.bf16.gmra.mxu0 %v598
  %v722 = vpop.f32.mrf.mxu0
  %v723 = vadd.f32 0.0, %v722
  %v724 = vpop.f32.mrf.mxu0
  %v725 = vadd.f32 0.0, %v724
  %726 = vmatmul.bf16.gmra.mxu0 %v600
  %v727 = vpop.f32.mrf.mxu0
  %v728 = vadd.f32 0.0, %v727
  %v729 = vpop.f32.mrf.mxu0
  %v730 = vadd.f32 0.0, %v729
  %731 = vmatmul.bf16.gmra.mxu0 %v602
  %v732 = vpop.f32.mrf.mxu0
  %v733 = vadd.f32 0.0, %v732
  %v734 = vpop.f32.mrf.mxu0
  %v735 = vadd.f32 0.0, %v734
  %736 = vdwg.mxu0
  %737 = vmatpush.bf16.msra.mxu0 0
  %738 = vmatpush.bf16.msra.mxu0 0
  %739 = vmatpush.bf16.msra.mxu0 0
  %740 = vmatpush.bf16.msra.mxu0 0
  %741 = vmatpush.bf16.msra.mxu0 0
  %742 = vmatpush.bf16.msra.mxu0 0
  %743 = vmatpush.bf16.msra.mxu0 0
  %744 = vmatpush.bf16.msra.mxu0 %v572
  %745 = vmatmul.bf16.gmra.mxu0 %v609
  %v746 = vpop.f32.mrf.mxu0
  %v747 = vadd.f32 %v723, %v746
  %v748 = vpop.f32.mrf.mxu0
  %v749 = vadd.f32 %v725, %v748
  %750 = vmatmul.bf16.gmra.mxu0 %v612
  %v751 = vpop.f32.mrf.mxu0
  %v752 = vadd.f32 %v728, %v751
  %v753 = vpop.f32.mrf.mxu0
  %v754 = vadd.f32 %v730, %v753
  %755 = vmatmul.bf16.gmra.mxu0 %v615
  %v756 = vpop.f32.mrf.mxu0
  %v757 = vadd.f32 %v733, %v756
  %v758 = vpop.f32.mrf.mxu0
  %v759 = vadd.f32 %v735, %v758
  %760 = vdwg.mxu0
  %761 = vmatpush.bf16.msra.mxu0 %v569
  %762 = vmatpush.bf16.msra.mxu0 %v565
  %763 = vmatpush.bf16.msra.mxu0 %v561
  %764 = vmatpush.bf16.msra.mxu0 %v557
  %765 = vmatpush.bf16.msra.mxu0 %v553
  %766 = vmatpush.bf16.msra.mxu0 %v549
  %767 = vmatpush.bf16.msra.mxu0 %v545
  %768 = vmatpush.bf16.msra.mxu0 %v541
  %769 = vmatmul.bf16.gmra.mxu0 %v598
  %v770 = vpop.f32.mrf.mxu0
  %v771 = vadd.f32 0.0, %v770
  %v772 = vpop.f32.mrf.mxu0
  %v773 = vadd.f32 0.0, %v772
  %774 = vmatmul.bf16.gmra.mxu0 %v600
  %v775 = vpop.f32.mrf.mxu0
  %v776 = vadd.f32 0.0, %v775
  %v777 = vpop.f32.mrf.mxu0
  %v778 = vadd.f32 0.0, %v777
  %779 = vmatmul.bf16.gmra.mxu0 %v602
  %v780 = vpop.f32.mrf.mxu0
  %v781 = vadd.f32 0.0, %v780
  %v782 = vpop.f32.mrf.mxu0
  %v783 = vadd.f32 0.0, %v782
  %784 = vdwg.mxu0
  %785 = vmatpush.bf16.msra.mxu0 0
  %786 = vmatpush.bf16.msra.mxu0 0
  %787 = vmatpush.bf16.msra.mxu0 0
  %788 = vmatpush.bf16.msra.mxu0 0
  %789 = vmatpush.bf16.msra.mxu0 0
  %790 = vmatpush.bf16.msra.mxu0 0
  %791 = vmatpush.bf16.msra.mxu0 0
  %792 = vmatpush.bf16.msra.mxu0 %v573
  %793 = vmatmul.bf16.gmra.mxu0 %v609
  %v794 = vpop.f32.mrf.mxu0
  %v795 = vadd.f32 %v771, %v794
  %v796 = vpop.f32.mrf.mxu0
  %v797 = vadd.f32 %v773, %v796
  %798 = vmatmul.bf16.gmra.mxu0 %v612
  %v799 = vpop.f32.mrf.mxu0
  %v800 = vadd.f32 %v776, %v799
  %v801 = vpop.f32.mrf.mxu0
  %v802 = vadd.f32 %v778, %v801
  %803 = vmatmul.bf16.gmra.mxu0 %v615
  %v804 = vpop.f32.mrf.mxu0
  %v805 = vadd.f32 %v781, %v804
  %v806 = vpop.f32.mrf.mxu0
  %v807 = vadd.f32 %v783, %v806
  %808 = vdwg.mxu0
  %v809 = vld [vmem:[%s7] sm:$0xff]
  %811 = vset.pattern.permute.xlu0 0
  %812 = vperm.xlu0 %811, %v809
  %v813 = vpop.permute.xlu0 %812
  %v815 = vadd.f32 %v651, %v813
  %v816 = vadd.f32 %v699, %v813
  %v817 = vadd.f32 %v747, %v813
  %v818 = vadd.f32 %v795, %v813
  %v819 = vmul.f32 %v815, 0.2
  %v820 = vmul.f32 %v816, 0.2
  %v821 = vmul.f32 %v817, 0.2
  %v822 = vmul.f32 %v818, 0.2
  %v823 = vmax.f32 %v815, %v819
  %v824 = vmax.f32 %v816, %v820
  %v825 = vmax.f32 %v817, %v821
  %v826 = vmax.f32 %v818, %v822
  %827 = vrot.lane.b32.xlu0 %v823, 17
  %v828 = vpop.permute.xlu0 %827
  %829 = vrot.lane.b32.xlu0 %v824, 17
  %v830 = vpop.permute.xlu0 %829
  %831 = vrot.lane.b32.xlu0 %v825, 17
  %v832 = vpop.permute.xlu0 %831
  %833 = vrot.lane.b32.xlu0 %v826, 17
  %v834 = vpop.permute.xlu0 %833
  %v835 = vsel %vm74, %v832, %v834
  %v836 = vsel %vm74, %v830, %v832
  %v837 = vsel %vm74, %v828, %v830
  %v838 = vsel %vm74, %v834, %v828
  %v839 = vmul.f32 %v838, %v84
  %v840 = vmul.f32 %v837, %v85
  %v841 = vmul.f32 %v836, %v86
  %v842 = vmul.f32 %v835, %v87
  %843 = vst [vmem:[#allocation2] sm:$0xff] %v839
  %844 = vst [vmem:[#allocation2 + $0x8] sm:$0xff] %v840
  %845 = vst [vmem:[#allocation2 + $0x10] sm:$0xff] %v841
  %846 = vst [vmem:[#allocation2 + $0x18] sm:$0xff] %v842
  %847 = vrot.lane.b32.xlu0 %v823, 16
  %v848 = vpop.permute.xlu0 %847
  %849 = vrot.lane.b32.xlu0 %v824, 16
  %v850 = vpop.permute.xlu0 %849
  %851 = vrot.lane.b32.xlu0 %v825, 16
  %v852 = vpop.permute.xlu0 %851
  %853 = vrot.lane.b32.xlu0 %v826, 16
  %v854 = vpop.permute.xlu0 %853
  %v855 = vsel %vm124, %v852, %v854
  %v856 = vsel %vm124, %v850, %v852
  %v857 = vsel %vm124, %v848, %v850
  %v858 = vsel %vm124, %v854, %v848
  %v859 = vmul.f32 %v858, %v134
  %v860 = vmul.f32 %v857, %v135
  %v861 = vmul.f32 %v856, %v136
  %v862 = vmul.f32 %v855, %v137
  %863 = vst [vmem:[#allocation2 + $0x20] sm:$0xff] %v859
  %864 = vst [vmem:[#allocation2 + $0x28] sm:$0xff] %v860
  %865 = vst [vmem:[#allocation2 + $0x30] sm:$0xff] %v861
  %866 = vst [vmem:[#allocation2 + $0x38] sm:$0xff] %v862
  %867 = vrot.lane.b32.xlu0 %v823, 15
  %v868 = vpop.permute.xlu0 %867
  %869 = vrot.lane.b32.xlu0 %v824, 15
  %v870 = vpop.permute.xlu0 %869
  %871 = vrot.lane.b32.xlu0 %v825, 15
  %v872 = vpop.permute.xlu0 %871
  %873 = vrot.lane.b32.xlu0 %v826, 15
  %v874 = vpop.permute.xlu0 %873
  %v875 = vsel %vm174, %v872, %v874
  %v876 = vsel %vm174, %v870, %v872
  %v877 = vsel %vm174, %v868, %v870
  %v878 = vsel %vm174, %v874, %v868
  %v879 = vmul.f32 %v878, %v184
  %v880 = vmul.f32 %v877, %v185
  %v881 = vmul.f32 %v876, %v186
  %v882 = vmul.f32 %v875, %v187
  %883 = vst [vmem:[#allocation2 + $0x40] sm:$0xff] %v879
  %884 = vst [vmem:[#allocation2 + $0x48] sm:$0xff] %v880
  %885 = vst [vmem:[#allocation2 + $0x50] sm:$0xff] %v881
  %886 = vst [vmem:[#allocation2 + $0x58] sm:$0xff] %v882
  %887 = vrot.lane.b32.xlu0 %v823, 1
  %v888 = vpop.permute.xlu0 %887
  %889 = vrot.lane.b32.xlu0 %v824, 1
  %v890 = vpop.permute.xlu0 %889
  %891 = vrot.lane.b32.xlu0 %v825, 1
  %v892 = vpop.permute.xlu0 %891
  %893 = vrot.lane.b32.xlu0 %v826, 1
  %v894 = vpop.permute.xlu0 %893
  %v895 = vsel %vm224, %v892, %v894
  %v896 = vsel %vm224, %v890, %v892
  %v897 = vsel %vm224, %v888, %v890
  %v898 = vsel %vm224, %v894, %v888
  %v899 = vmul.f32 %v898, %v234
  %v900 = vmul.f32 %v897, %v235
  %v901 = vmul.f32 %v896, %v236
  %v902 = vmul.f32 %v895, %v237
  %903 = vst [vmem:[#allocation2 + $0x60] sm:$0xff] %v899
  %904 = vst [vmem:[#allocation2 + $0x68] sm:$0xff] %v900
  %905 = vst [vmem:[#allocation2 + $0x70] sm:$0xff] %v901
  %906 = vst [vmem:[#allocation2 + $0x78] sm:$0xff] %v902
  %907 = vst [vmem:[#allocation2 + $0x80] sm:$0xff] %v823
  %908 = vst [vmem:[#allocation2 + $0x88] sm:$0xff] %v824
  %909 = vst [vmem:[#allocation2 + $0x90] sm:$0xff] %v825
  %910 = vst [vmem:[#allocation2 + $0x98] sm:$0xff] %v826
  %911 = vrot.lane.b32.xlu0 %v823, 127
  %v912 = vpop.permute.xlu0 %911
  %913 = vrot.lane.b32.xlu0 %v824, 127
  %v914 = vpop.permute.xlu0 %913
  %915 = vrot.lane.b32.xlu0 %v825, 127
  %v916 = vpop.permute.xlu0 %915
  %917 = vrot.lane.b32.xlu0 %v826, 127
  %v918 = vpop.permute.xlu0 %917
  %v919 = vsel %vm282, %v916, %v918
  %v920 = vsel %vm282, %v914, %v916
  %v921 = vsel %vm282, %v912, %v914
  %v922 = vsel %vm282, %v918, %v912
  %v923 = vmul.f32 %v921, %v292
  %v924 = vmul.f32 %v920, %v293
  %v925 = vmul.f32 %v919, %v294
  %v926 = vmul.f32 %v922, %v295
  %927 = vst [vmem:[#allocation2 + $0xa0] sm:$0xff] %v923
  %928 = vst [vmem:[#allocation2 + $0xa8] sm:$0xff] %v924
  %929 = vst [vmem:[#allocation2 + $0xb0] sm:$0xff] %v925
  %930 = vst [vmem:[#allocation2 + $0xb8] sm:$0xff] %v926
  %931 = vrot.lane.b32.xlu0 %v823, 113
  %v932 = vpop.permute.xlu0 %931
  %933 = vrot.lane.b32.xlu0 %v824, 113
  %v934 = vpop.permute.xlu0 %933
  %935 = vrot.lane.b32.xlu0 %v825, 113
  %v936 = vpop.permute.xlu0 %935
  %937 = vrot.lane.b32.xlu0 %v826, 113
  %v938 = vpop.permute.xlu0 %937
  %v939 = vsel %vm332, %v936, %v938
  %v940 = vsel %vm332, %v934, %v936
  %v941 = vsel %vm332, %v932, %v934
  %v942 = vsel %vm332, %v938, %v932
  %v943 = vmul.f32 %v941, %v342
  %v944 = vmul.f32 %v940, %v343
  %v945 = vmul.f32 %v939, %v344
  %v946 = vmul.f32 %v942, %v345
  %947 = vst [vmem:[#allocation2 + $0xc0] sm:$0xff] %v943
  %948 = vst [vmem:[#allocation2 + $0xc8] sm:$0xff] %v944
  %949 = vst [vmem:[#allocation2 + $0xd0] sm:$0xff] %v945
  %950 = vst [vmem:[#allocation2 + $0xd8] sm:$0xff] %v946
  %951 = vrot.lane.b32.xlu0 %v823, 112
  %v952 = vpop.permute.xlu0 %951
  %953 = vrot.lane.b32.xlu0 %v824, 112
  %v954 = vpop.permute.xlu0 %953
  %955 = vrot.lane.b32.xlu0 %v825, 112
  %v956 = vpop.permute.xlu0 %955
  %957 = vrot.lane.b32.xlu0 %v826, 112
  %v958 = vpop.permute.xlu0 %957
  %v959 = vsel %vm382, %v956, %v958
  %v960 = vsel %vm382, %v954, %v956
  %v961 = vsel %vm382, %v952, %v954
  %v962 = vsel %vm382, %v958, %v952
  %v963 = vmul.f32 %v961, %v392
  %v964 = vmul.f32 %v960, %v393
  %v965 = vmul.f32 %v959, %v394
  %v966 = vmul.f32 %v962, %v395
  %967 = vst [vmem:[#allocation2 + $0xe0] sm:$0xff] %v963
  %968 = vst [vmem:[#allocation2 + $0xe8] sm:$0xff] %v964
  %969 = vst [vmem:[#allocation2 + $0xf0] sm:$0xff] %v965
  %970 = vst [vmem:[#allocation2 + $0xf8] sm:$0xff] %v966
  %971 = vrot.lane.b32.xlu0 %v823, 111
  %v972 = vpop.permute.xlu0 %971
  %973 = vrot.lane.b32.xlu0 %v824, 111
  %v974 = vpop.permute.xlu0 %973
  %975 = vrot.lane.b32.xlu0 %v825, 111
  %v976 = vpop.permute.xlu0 %975
  %977 = vrot.lane.b32.xlu0 %v826, 111
  %v978 = vpop.permute.xlu0 %977
  %v979 = vsel %vm432, %v976, %v978
  %v980 = vsel %vm432, %v974, %v976
  %v981 = vsel %vm432, %v972, %v974
  %v982 = vsel %vm432, %v978, %v972
  %v983 = vmul.f32 %v981, %v442
  %v984 = vmul.f32 %v980, %v443
  %v985 = vmul.f32 %v979, %v444
  %v986 = vmul.f32 %v982, %v445
  %987 = vst [vmem:[#allocation2 + $0x100] sm:$0xff] %v983
  %988 = vst [vmem:[#allocation2 + $0x108] sm:$0xff] %v984
  %989 = vst [vmem:[#allocation2 + $0x110] sm:$0xff] %v985
  %990 = vst [vmem:[#allocation2 + $0x118] sm:$0xff] %v986
  %v991 = vld [vmem:[#allocation2] sm:$0xff]
  %v992 = vld [vmem:[#allocation2 + $0x8] sm:$0xff]
  %v993 = vld [vmem:[#allocation2 + $0x10] sm:$0xff]
  %v994 = vld [vmem:[#allocation2 + $0x18] sm:$0xff]
  %v995 = vld [vmem:[#allocation2 + $0x20] sm:$0xff]
  %v996 = vld [vmem:[#allocation2 + $0x28] sm:$0xff]
  %v997 = vld [vmem:[#allocation2 + $0x30] sm:$0xff]
  %v998 = vld [vmem:[#allocation2 + $0x38] sm:$0xff]
  %v999 = vld [vmem:[#allocation2 + $0x40] sm:$0xff]
  %v1000 = vld [vmem:[#allocation2 + $0x48] sm:$0xff]
  %v1001 = vld [vmem:[#allocation2 + $0x50] sm:$0xff]
  %v1002 = vld [vmem:[#allocation2 + $0x58] sm:$0xff]
  %v1003 = vld [vmem:[#allocation2 + $0x60] sm:$0xff]
  %v1004 = vld [vmem:[#allocation2 + $0x68] sm:$0xff]
  %v1005 = vld [vmem:[#allocation2 + $0x70] sm:$0xff]
  %v1006 = vld [vmem:[#allocation2 + $0x78] sm:$0xff]
  %v1007 = vld [vmem:[#allocation2 + $0x80] sm:$0xff]
  %v1008 = vld [vmem:[#allocation2 + $0x88] sm:$0xff]
  %v1009 = vld [vmem:[#allocation2 + $0x90] sm:$0xff]
  %v1010 = vld [vmem:[#allocation2 + $0x98] sm:$0xff]
  %v1011 = vld [vmem:[#allocation2 + $0xa0] sm:$0xff]
  %v1012 = vld [vmem:[#allocation2 + $0xa8] sm:$0xff]
  %v1013 = vld [vmem:[#allocation2 + $0xb0] sm:$0xff]
  %v1014 = vld [vmem:[#allocation2 + $0xb8] sm:$0xff]
  %v1015 = vld [vmem:[#allocation2 + $0xc0] sm:$0xff]
  %v1016 = vld [vmem:[#allocation2 + $0xc8] sm:$0xff]
  %v1017 = vld [vmem:[#allocation2 + $0xd0] sm:$0xff]
  %v1018 = vld [vmem:[#allocation2 + $0xd8] sm:$0xff]
  %v1019 = vld [vmem:[#allocation2 + $0xe0] sm:$0xff]
  %v1020 = vld [vmem:[#allocation2 + $0xe8] sm:$0xff]
  %v1021 = vld [vmem:[#allocation2 + $0xf0] sm:$0xff]
  %v1022 = vld [vmem:[#allocation2 + $0xf8] sm:$0xff]
  %v1023 = vld [vmem:[#allocation2 + $0x100] sm:$0xff]
  %v1024 = vld [vmem:[#allocation2 + $0x108] sm:$0xff]
  %v1025 = vld [vmem:[#allocation2 + $0x110] sm:$0xff]
  %v1026 = vld [vmem:[#allocation2 + $0x118] sm:$0xff]
  %v1027 = vpack.c.bf16 %v995, %v991
  %v1028 = vpack.c.bf16 %v996, %v992
  %v1029 = vpack.c.bf16 %v997, %v993
  %v1030 = vpack.c.bf16 %v998, %v994
  %v1031 = vpack.c.bf16 %v1003, %v999
  %v1032 = vpack.c.bf16 %v1004, %v1000
  %v1033 = vpack.c.bf16 %v1005, %v1001
  %v1034 = vpack.c.bf16 %v1006, %v1002
  %v1035 = vpack.c.bf16 %v1011, %v1007
  %v1036 = vpack.c.bf16 %v1012, %v1008
  %v1037 = vpack.c.bf16 %v1013, %v1009
  %v1038 = vpack.c.bf16 %v1014, %v1010
  %v1039 = vpack.c.bf16 %v1019, %v1015
  %v1040 = vpack.c.bf16 %v1020, %v1016
  %v1041 = vpack.c.bf16 %v1021, %v1017
  %v1042 = vpack.c.bf16 %v1022, %v1018
  %v1043 = vpack.c.bf16 %v1023, %v1023
  %v1044 = vpack.c.bf16 %v1024, %v1024
  %v1045 = vpack.c.bf16 %v1025, %v1025
  %v1046 = vpack.c.bf16 %v1026, %v1026
  %v1047 = vld [vmem:[%s3] sm:$0xf]
  %v1048 = vld [vmem:[%s3 + $0x4] sm:$0xf]
  %v1049 = vld [vmem:[%s3 + $0x8] sm:$0xf]
  %v1050 = vld [vmem:[%s3 + $0xc] sm:$0xf]
  %v1051 = vld [vmem:[%s3 + $0x10] sm:$0xf]
  %v1057 = vunpack.c.l.b16 %v1047
  %v1058 = vunpack.c.l.b16 %v1048
  %v1059 = vunpack.c.l.b16 %v1049
  %v1060 = vunpack.c.l.b16 %v1050
  %v1061 = vunpack.c.l.b16 %v1051
  %v1062 = vpack.c.b16 %v1058, %v1057
  %v1063 = vpack.c.b16 %v1060, %v1059
  %v1064 = vpack.c.b16 %v1061, %v1061
  %vm1065 = vcmask 588800
  %v1067 = vsel %vm1065, %v1062, 0
  %v1070 = vsel %vm1065, %v1063, 0
  %v1073 = vsel %vm1065, %v1064, 0
  %vm1075 = vcmask 1043456
  %v1077 = vsel %vm1075, %v1043, 0
  %v1080 = vsel %vm1075, %v1044, 0
  %v1083 = vsel %vm1075, %v1045, 0
  %v1086 = vsel %vm1075, %v1046, 0
  %1088 = vmatpush.bf16.msra.mxu0 0
  %1089 = vmatpush.bf16.msra.mxu0 0
  %1090 = vmatpush.bf16.msra.mxu0 0
  %1091 = vmatpush.bf16.msra.mxu0 %v1077
  %1092 = vmatpush.bf16.msra.mxu0 %v1039
  %1093 = vmatpush.bf16.msra.mxu0 %v1035
  %1094 = vmatpush.bf16.msra.mxu0 %v1031
  %1095 = vmatpush.bf16.msra.mxu0 %v1027
  %1096 = vmatmul.bf16.gmra.mxu0 %v1067
  %v1097 = vpop.f32.mrf.mxu0
  %v1098 = vadd.f32 0.0, %v1097
  %v1099 = vpop.f32.mrf.mxu0
  %v1100 = vadd.f32 0.0, %v1099
  %1101 = vmatmul.bf16.gmra.mxu0 %v1070
  %v1102 = vpop.f32.mrf.mxu0
  %v1103 = vadd.f32 0.0, %v1102
  %v1104 = vpop.f32.mrf.mxu0
  %v1105 = vadd.f32 0.0, %v1104
  %1106 = vmatmul.bf16.gmra.mxu0 %v1073
  %v1107 = vpop.f32.mrf.mxu0
  %v1108 = vadd.f32 0.0, %v1107
  %v1109 = vpop.f32.mrf.mxu0
  %1110 = vdwg.mxu0
  %1111 = vmatpush.bf16.msra.mxu0 0
  %1112 = vmatpush.bf16.msra.mxu0 0
  %1113 = vmatpush.bf16.msra.mxu0 0
  %1114 = vmatpush.bf16.msra.mxu0 %v1080
  %1115 = vmatpush.bf16.msra.mxu0 %v1040
  %1116 = vmatpush.bf16.msra.mxu0 %v1036
  %1117 = vmatpush.bf16.msra.mxu0 %v1032
  %1118 = vmatpush.bf16.msra.mxu0 %v1028
  %1119 = vmatmul.bf16.gmra.mxu0 %v1067
  %v1120 = vpop.f32.mrf.mxu0
  %v1121 = vadd.f32 0.0, %v1120
  %v1122 = vpop.f32.mrf.mxu0
  %v1123 = vadd.f32 0.0, %v1122
  %1124 = vmatmul.bf16.gmra.mxu0 %v1070
  %v1125 = vpop.f32.mrf.mxu0
  %v1126 = vadd.f32 0.0, %v1125
  %v1127 = vpop.f32.mrf.mxu0
  %v1128 = vadd.f32 0.0, %v1127
  %1129 = vmatmul.bf16.gmra.mxu0 %v1073
  %v1130 = vpop.f32.mrf.mxu0
  %v1131 = vadd.f32 0.0, %v1130
  %v1132 = vpop.f32.mrf.mxu0
  %1133 = vdwg.mxu0
  %1134 = vmatpush.bf16.msra.mxu0 0
  %1135 = vmatpush.bf16.msra.mxu0 0
  %1136 = vmatpush.bf16.msra.mxu0 0
  %1137 = vmatpush.bf16.msra.mxu0 %v1083
  %1138 = vmatpush.bf16.msra.mxu0 %v1041
  %1139 = vmatpush.bf16.msra.mxu0 %v1037
  %1140 = vmatpush.bf16.msra.mxu0 %v1033
  %1141 = vmatpush.bf16.msra.mxu0 %v1029
  %1142 = vmatmul.bf16.gmra.mxu0 %v1067
  %v1143 = vpop.f32.mrf.mxu0
  %v1144 = vadd.f32 0.0, %v1143
  %v1145 = vpop.f32.mrf.mxu0
  %v1146 = vadd.f32 0.0, %v1145
  %1147 = vmatmul.bf16.gmra.mxu0 %v1070
  %v1148 = vpop.f32.mrf.mxu0
  %v1149 = vadd.f32 0.0, %v1148
  %v1150 = vpop.f32.mrf.mxu0
  %v1151 = vadd.f32 0.0, %v1150
  %1152 = vmatmul.bf16.gmra.mxu0 %v1073
  %v1153 = vpop.f32.mrf.mxu0
  %v1154 = vadd.f32 0.0, %v1153
  %v1155 = vpop.f32.mrf.mxu0
  %1156 = vdwg.mxu0
  %1157 = vmatpush.bf16.msra.mxu0 0
  %1158 = vmatpush.bf16.msra.mxu0 0
  %1159 = vmatpush.bf16.msra.mxu0 0
  %1160 = vmatpush.bf16.msra.mxu0 %v1086
  %1161 = vmatpush.bf16.msra.mxu0 %v1042
  %1162 = vmatpush.bf16.msra.mxu0 %v1038
  %1163 = vmatpush.bf16.msra.mxu0 %v1034
  %1164 = vmatpush.bf16.msra.mxu0 %v1030
  %1165 = vmatmul.bf16.gmra.mxu0 %v1067
  %v1166 = vpop.f32.mrf.mxu0
  %v1167 = vadd.f32 0.0, %v1166
  %v1168 = vpop.f32.mrf.mxu0
  %v1169 = vadd.f32 0.0, %v1168
  %1170 = vmatmul.bf16.gmra.mxu0 %v1070
  %v1171 = vpop.f32.mrf.mxu0
  %v1172 = vadd.f32 0.0, %v1171
  %v1173 = vpop.f32.mrf.mxu0
  %v1174 = vadd.f32 0.0, %v1173
  %1175 = vmatmul.bf16.gmra.mxu0 %v1073
  %v1176 = vpop.f32.mrf.mxu0
  %v1177 = vadd.f32 0.0, %v1176
  %v1178 = vpop.f32.mrf.mxu0
  %1179 = vdwg.mxu0
  %v1180 = vadd.f32 %v653, %v1098
  %v1181 = vadd.f32 %v701, %v1121
  %v1182 = vadd.f32 %v749, %v1144
  %v1183 = vadd.f32 %v797, %v1167
  %v1184 = vadd.f32 %v656, %v1100
  %v1185 = vadd.f32 %v704, %v1123
  %v1186 = vadd.f32 %v752, %v1146
  %v1187 = vadd.f32 %v800, %v1169
  %v1188 = vadd.f32 %v658, %v1103
  %v1189 = vadd.f32 %v706, %v1126
  %v1190 = vadd.f32 %v754, %v1149
  %v1191 = vadd.f32 %v802, %v1172
  %v1192 = vadd.f32 %v661, %v1105
  %v1193 = vadd.f32 %v709, %v1128
  %v1194 = vadd.f32 %v757, %v1151
  %v1195 = vadd.f32 %v805, %v1174
  %v1196 = vadd.f32 %v663, %v1108
  %v1197 = vadd.f32 %v711, %v1131
  %v1198 = vadd.f32 %v759, %v1154
  %v1199 = vadd.f32 %v807, %v1177
  %s1200 = scalar_lea.vmem %s7, 8
  %v1201 = vld [vmem:[%s1200] sm:$0xff]
  %1203 = vset.pattern.permute.xlu0 0
  %1204 = vperm.xlu0 %1203, %v1201
  %v1205 = vpop.permute.xlu0 %1204
  %v1207 = vadd.f32 %v1180, %v1205
  %v1208 = vadd.f32 %v1181, %v1205
  %v1209 = vadd.f32 %v1182, %v1205
  %v1210 = vadd.f32 %v1183, %v1205
  %v1211 = vmul.f32 %v1207, 0.2
  %v1212 = vmul.f32 %v1208, 0.2
  %v1213 = vmul.f32 %v1209, 0.2
  %v1214 = vmul.f32 %v1210, 0.2
  %v1215 = vmax.f32 %v1207, %v1211
  %v1216 = vmax.f32 %v1208, %v1212
  %v1217 = vmax.f32 %v1209, %v1213
  %v1218 = vmax.f32 %v1210, %v1214
  %1219 = vrot.lane.b32.xlu0 %v1215, 17
  %v1220 = vpop.permute.xlu0 %1219
  %1221 = vrot.lane.b32.xlu0 %v1216, 17
  %v1222 = vpop.permute.xlu0 %1221
  %1223 = vrot.lane.b32.xlu0 %v1217, 17
  %v1224 = vpop.permute.xlu0 %1223
  %1225 = vrot.lane.b32.xlu0 %v1218, 17
  %v1226 = vpop.permute.xlu0 %1225
  %v1227 = vsel %vm74, %v1224, %v1226
  %v1228 = vsel %vm74, %v1222, %v1224
  %v1229 = vsel %vm74, %v1220, %v1222
  %v1230 = vsel %vm74, %v1226, %v1220
  %v1231 = vmul.f32 %v1230, %v84
  %v1232 = vmul.f32 %v1229, %v85
  %v1233 = vmul.f32 %v1228, %v86
  %v1234 = vmul.f32 %v1227, %v87
  %1235 = vst [vmem:[#allocation2] sm:$0xff] %v1231
  %1236 = vst [vmem:[#allocation2 + $0x8] sm:$0xff] %v1232
  %1237 = vst [vmem:[#allocation2 + $0x10] sm:$0xff] %v1233
  %1238 = vst [vmem:[#allocation2 + $0x18] sm:$0xff] %v1234
  %1239 = vrot.lane.b32.xlu0 %v1215, 16
  %v1240 = vpop.permute.xlu0 %1239
  %1241 = vrot.lane.b32.xlu0 %v1216, 16
  %v1242 = vpop.permute.xlu0 %1241
  %1243 = vrot.lane.b32.xlu0 %v1217, 16
  %v1244 = vpop.permute.xlu0 %1243
  %1245 = vrot.lane.b32.xlu0 %v1218, 16
  %v1246 = vpop.permute.xlu0 %1245
  %v1247 = vsel %vm124, %v1244, %v1246
  %v1248 = vsel %vm124, %v1242, %v1244
  %v1249 = vsel %vm124, %v1240, %v1242
  %v1250 = vsel %vm124, %v1246, %v1240
  %v1251 = vmul.f32 %v1250, %v134
  %v1252 = vmul.f32 %v1249, %v135
  %v1253 = vmul.f32 %v1248, %v136
  %v1254 = vmul.f32 %v1247, %v137
  %1255 = vst [vmem:[#allocation2 + $0x20] sm:$0xff] %v1251
  %1256 = vst [vmem:[#allocation2 + $0x28] sm:$0xff] %v1252
  %1257 = vst [vmem:[#allocation2 + $0x30] sm:$0xff] %v1253
  %1258 = vst [vmem:[#allocation2 + $0x38] sm:$0xff] %v1254
  %1259 = vrot.lane.b32.xlu0 %v1215, 15
  %v1260 = vpop.permute.xlu0 %1259
  %1261 = vrot.lane.b32.xlu0 %v1216, 15
  %v1262 = vpop.permute.xlu0 %1261
  %1263 = vrot.lane.b32.xlu0 %v1217, 15
  %v1264 = vpop.permute.xlu0 %1263
  %1265 = vrot.lane.b32.xlu0 %v1218, 15
  %v1266 = vpop.permute.xlu0 %1265
  %v1267 = vsel %vm174, %v1264, %v1266
  %v1268 = vsel %vm174, %v1262, %v1264
  %v1269 = vsel %vm174, %v1260, %v1262
  %v1270 = vsel %vm174, %v1266, %v1260
  %v1271 = vmul.f32 %v1270, %v184
  %v1272 = vmul.f32 %v1269, %v185
  %v1273 = vmul.f32 %v1268, %v186
  %v1274 = vmul.f32 %v1267, %v187
  %1275 = vst [vmem:[#allocation2 + $0x40] sm:$0xff] %v1271
  %1276 = vst [vmem:[#allocation2 + $0x48] sm:$0xff] %v1272
  %1277 = vst [vmem:[#allocation2 + $0x50] sm:$0xff] %v1273
  %1278 = vst [vmem:[#allocation2 + $0x58] sm:$0xff] %v1274
  %1279 = vrot.lane.b32.xlu0 %v1215, 1
  %v1280 = vpop.permute.xlu0 %1279
  %1281 = vrot.lane.b32.xlu0 %v1216, 1
  %v1282 = vpop.permute.xlu0 %1281
  %1283 = vrot.lane.b32.xlu0 %v1217, 1
  %v1284 = vpop.permute.xlu0 %1283
  %1285 = vrot.lane.b32.xlu0 %v1218, 1
  %v1286 = vpop.permute.xlu0 %1285
  %v1287 = vsel %vm224, %v1284, %v1286
  %v1288 = vsel %vm224, %v1282, %v1284
  %v1289 = vsel %vm224, %v1280, %v1282
  %v1290 = vsel %vm224, %v1286, %v1280
  %v1291 = vmul.f32 %v1290, %v234
  %v1292 = vmul.f32 %v1289, %v235
  %v1293 = vmul.f32 %v1288, %v236
  %v1294 = vmul.f32 %v1287, %v237
  %1295 = vst [vmem:[#allocation2 + $0x60] sm:$0xff] %v1291
  %1296 = vst [vmem:[#allocation2 + $0x68] sm:$0xff] %v1292
  %1297 = vst [vmem:[#allocation2 + $0x70] sm:$0xff] %v1293
  %1298 = vst [vmem:[#allocation2 + $0x78] sm:$0xff] %v1294
  %1299 = vst [vmem:[#allocation2 + $0x80] sm:$0xff] %v1215
  %1300 = vst [vmem:[#allocation2 + $0x88] sm:$0xff] %v1216
  %1301 = vst [vmem:[#allocation2 + $0x90] sm:$0xff] %v1217
  %1302 = vst [vmem:[#allocation2 + $0x98] sm:$0xff] %v1218
  %1303 = vrot.lane.b32.xlu0 %v1215, 127
  %v1304 = vpop.permute.xlu0 %1303
  %1305 = vrot.lane.b32.xlu0 %v1216, 127
  %v1306 = vpop.permute.xlu0 %1305
  %1307 = vrot.lane.b32.xlu0 %v1217, 127
  %v1308 = vpop.permute.xlu0 %1307
  %1309 = vrot.lane.b32.xlu0 %v1218, 127
  %v1310 = vpop.permute.xlu0 %1309
  %v1311 = vsel %vm282, %v1308, %v1310
  %v1312 = vsel %vm282, %v1306, %v1308
  %v1313 = vsel %vm282, %v1304, %v1306
  %v1314 = vsel %vm282, %v1310, %v1304
  %v1315 = vmul.f32 %v1313, %v292
  %v1316 = vmul.f32 %v1312, %v293
  %v1317 = vmul.f32 %v1311, %v294
  %v1318 = vmul.f32 %v1314, %v295
  %1319 = vst [vmem:[#allocation2 + $0xa0] sm:$0xff] %v1315
  %1320 = vst [vmem:[#allocation2 + $0xa8] sm:$0xff] %v1316
  %1321 = vst [vmem:[#allocation2 + $0xb0] sm:$0xff] %v1317
  %1322 = vst [vmem:[#allocation2 + $0xb8] sm:$0xff] %v1318
  %1323 = vrot.lane.b32.xlu0 %v1215, 113
  %v1324 = vpop.permute.xlu0 %1323
  %1325 = vrot.lane.b32.xlu0 %v1216, 113
  %v1326 = vpop.permute.xlu0 %1325
  %1327 = vrot.lane.b32.xlu0 %v1217, 113
  %v1328 = vpop.permute.xlu0 %1327
  %1329 = vrot.lane.b32.xlu0 %v1218, 113
  %v1330 = vpop.permute.xlu0 %1329
  %v1331 = vsel %vm332, %v1328, %v1330
  %v1332 = vsel %vm332, %v1326, %v1328
  %v1333 = vsel %vm332, %v1324, %v1326
  %v1334 = vsel %vm332, %v1330, %v1324
  %v1335 = vmul.f32 %v1333, %v342
  %v1336 = vmul.f32 %v1332, %v343
  %v1337 = vmul.f32 %v1331, %v344
  %v1338 = vmul.f32 %v1334, %v345
  %1339 = vst [vmem:[#allocation2 + $0xc0] sm:$0xff] %v1335
  %1340 = vst [vmem:[#allocation2 + $0xc8] sm:$0xff] %v1336
  %1341 = vst [vmem:[#allocation2 + $0xd0] sm:$0xff] %v1337
  %1342 = vst [vmem:[#allocation2 + $0xd8] sm:$0xff] %v1338
  %1343 = vrot.lane.b32.xlu0 %v1215, 112
  %v1344 = vpop.permute.xlu0 %1343
  %1345 = vrot.lane.b32.xlu0 %v1216, 112
  %v1346 = vpop.permute.xlu0 %1345
  %1347 = vrot.lane.b32.xlu0 %v1217, 112
  %v1348 = vpop.permute.xlu0 %1347
  %1349 = vrot.lane.b32.xlu0 %v1218, 112
  %v1350 = vpop.permute.xlu0 %1349
  %v1351 = vsel %vm382, %v1348, %v1350
  %v1352 = vsel %vm382, %v1346, %v1348
  %v1353 = vsel %vm382, %v1344, %v1346
  %v1354 = vsel %vm382, %v1350, %v1344
  %v1355 = vmul.f32 %v1353, %v392
  %v1356 = vmul.f32 %v1352, %v393
  %v1357 = vmul.f32 %v1351, %v394
  %v1358 = vmul.f32 %v1354, %v395
  %1359 = vst [vmem:[#allocation2 + $0xe0] sm:$0xff] %v1355
  %1360 = vst [vmem:[#allocation2 + $0xe8] sm:$0xff] %v1356
  %1361 = vst [vmem:[#allocation2 + $0xf0] sm:$0xff] %v1357
  %1362 = vst [vmem:[#allocation2 + $0xf8] sm:$0xff] %v1358
  %1363 = vrot.lane.b32.xlu0 %v1215, 111
  %v1364 = vpop.permute.xlu0 %1363
  %1365 = vrot.lane.b32.xlu0 %v1216, 111
  %v1366 = vpop.permute.xlu0 %1365
  %1367 = vrot.lane.b32.xlu0 %v1217, 111
  %v1368 = vpop.permute.xlu0 %1367
  %1369 = vrot.lane.b32.xlu0 %v1218, 111
  %v1370 = vpop.permute.xlu0 %1369
  %v1371 = vsel %vm432, %v1368, %v1370
  %v1372 = vsel %vm432, %v1366, %v1368
  %v1373 = vsel %vm432, %v1364, %v1366
  %v1374 = vsel %vm432, %v1370, %v1364
  %v1375 = vmul.f32 %v1373, %v442
  %v1376 = vmul.f32 %v1372, %v443
  %v1377 = vmul.f32 %v1371, %v444
  %v1378 = vmul.f32 %v1374, %v445
  %1379 = vst [vmem:[#allocation2 + $0x100] sm:$0xff] %v1375
  %1380 = vst [vmem:[#allocation2 + $0x108] sm:$0xff] %v1376
  %1381 = vst [vmem:[#allocation2 + $0x110] sm:$0xff] %v1377
  %1382 = vst [vmem:[#allocation2 + $0x118] sm:$0xff] %v1378
  %v1383 = vld [vmem:[#allocation2] sm:$0xff]
  %v1384 = vld [vmem:[#allocation2 + $0x8] sm:$0xff]
  %v1385 = vld [vmem:[#allocation2 + $0x10] sm:$0xff]
  %v1386 = vld [vmem:[#allocation2 + $0x18] sm:$0xff]
  %v1387 = vld [vmem:[#allocation2 + $0x20] sm:$0xff]
  %v1388 = vld [vmem:[#allocation2 + $0x28] sm:$0xff]
  %v1389 = vld [vmem:[#allocation2 + $0x30] sm:$0xff]
  %v1390 = vld [vmem:[#allocation2 + $0x38] sm:$0xff]
  %v1391 = vld [vmem:[#allocation2 + $0x40] sm:$0xff]
  %v1392 = vld [vmem:[#allocation2 + $0x48] sm:$0xff]
  %v1393 = vld [vmem:[#allocation2 + $0x50] sm:$0xff]
  %v1394 = vld [vmem:[#allocation2 + $0x58] sm:$0xff]
  %v1395 = vld [vmem:[#allocation2 + $0x60] sm:$0xff]
  %v1396 = vld [vmem:[#allocation2 + $0x68] sm:$0xff]
  %v1397 = vld [vmem:[#allocation2 + $0x70] sm:$0xff]
  %v1398 = vld [vmem:[#allocation2 + $0x78] sm:$0xff]
  %v1399 = vld [vmem:[#allocation2 + $0x80] sm:$0xff]
  %v1400 = vld [vmem:[#allocation2 + $0x88] sm:$0xff]
  %v1401 = vld [vmem:[#allocation2 + $0x90] sm:$0xff]
  %v1402 = vld [vmem:[#allocation2 + $0x98] sm:$0xff]
  %v1403 = vld [vmem:[#allocation2 + $0xa0] sm:$0xff]
  %v1404 = vld [vmem:[#allocation2 + $0xa8] sm:$0xff]
  %v1405 = vld [vmem:[#allocation2 + $0xb0] sm:$0xff]
  %v1406 = vld [vmem:[#allocation2 + $0xb8] sm:$0xff]
  %v1407 = vld [vmem:[#allocation2 + $0xc0] sm:$0xff]
  %v1408 = vld [vmem:[#allocation2 + $0xc8] sm:$0xff]
  %v1409 = vld [vmem:[#allocation2 + $0xd0] sm:$0xff]
  %v1410 = vld [vmem:[#allocation2 + $0xd8] sm:$0xff]
  %v1411 = vld [vmem:[#allocation2 + $0xe0] sm:$0xff]
  %v1412 = vld [vmem:[#allocation2 + $0xe8] sm:$0xff]
  %v1413 = vld [vmem:[#allocation2 + $0xf0] sm:$0xff]
  %v1414 = vld [vmem:[#allocation2 + $0xf8] sm:$0xff]
  %v1415 = vld [vmem:[#allocation2 + $0x100] sm:$0xff]
  %v1416 = vld [vmem:[#allocation2 + $0x108] sm:$0xff]
  %v1417 = vld [vmem:[#allocation2 + $0x110] sm:$0xff]
  %v1418 = vld [vmem:[#allocation2 + $0x118] sm:$0xff]
  %v1419 = vpack.c.bf16 %v1387, %v1383
  %v1420 = vpack.c.bf16 %v1388, %v1384
  %v1421 = vpack.c.bf16 %v1389, %v1385
  %v1422 = vpack.c.bf16 %v1390, %v1386
  %v1423 = vpack.c.bf16 %v1395, %v1391
  %v1424 = vpack.c.bf16 %v1396, %v1392
  %v1425 = vpack.c.bf16 %v1397, %v1393
  %v1426 = vpack.c.bf16 %v1398, %v1394
  %v1427 = vpack.c.bf16 %v1403, %v1399
  %v1428 = vpack.c.bf16 %v1404, %v1400
  %v1429 = vpack.c.bf16 %v1405, %v1401
  %v1430 = vpack.c.bf16 %v1406, %v1402
  %v1431 = vpack.c.bf16 %v1411, %v1407
  %v1432 = vpack.c.bf16 %v1412, %v1408
  %v1433 = vpack.c.bf16 %v1413, %v1409
  %v1434 = vpack.c.bf16 %v1414, %v1410
  %v1435 = vpack.c.bf16 %v1415, %v1415
  %v1436 = vpack.c.bf16 %v1416, %v1416
  %v1437 = vpack.c.bf16 %v1417, %v1417
  %v1438 = vpack.c.bf16 %v1418, %v1418
  %v1439 = vld [vmem:[%s4] sm:$0xf]
  %v1440 = vld [vmem:[%s4 + $0x4] sm:$0xf]
  %v1441 = vld [vmem:[%s4 + $0x8] sm:$0xf]
  %v1442 = vld [vmem:[%s4 + $0xc] sm:$0xf]
  %v1447 = vunpack.c.l.b16 %v1439
  %v1448 = vunpack.c.l.b16 %v1440
  %v1449 = vunpack.c.l.b16 %v1441
  %v1450 = vunpack.c.l.b16 %v1442
  %v1451 = vpack.c.b16 %v1448, %v1447
  %v1452 = vpack.c.b16 %v1450, %v1449
  %v1454 = vsel %vm1065, %v1451, 0
  %v1457 = vsel %vm1065, %v1452, 0
  %v1460 = vsel %vm1075, %v1435, 0
  %v1463 = vsel %vm1075, %v1436, 0
  %v1466 = vsel %vm1075, %v1437, 0
  %v1469 = vsel %vm1075, %v1438, 0
  %1471 = vmatpush.bf16.msra.mxu0 0
  %1472 = vmatpush.bf16.msra.mxu0 0
  %1473 = vmatpush.bf16.msra.mxu0 0
  %1474 = vmatpush.bf16.msra.mxu0 %v1460
  %1475 = vmatpush.bf16.msra.mxu0 %v1431
  %1476 = vmatpush.bf16.msra.mxu0 %v1427
  %1477 = vmatpush.bf16.msra.mxu0 %v1423
  %1478 = vmatpush.bf16.msra.mxu0 %v1419
  %1479 = vmatmul.bf16.gmra.mxu0 %v1454
  %v1480 = vpop.f32.mrf.mxu0
  %v1481 = vadd.f32 0.0, %v1480
  %v1482 = vpop.f32.mrf.mxu0
  %v1483 = vadd.f32 0.0, %v1482
  %1484 = vmatmul.bf16.gmra.mxu0 %v1457
  %v1485 = vpop.f32.mrf.mxu0
  %v1486 = vadd.f32 0.0, %v1485
  %v1487 = vpop.f32.mrf.mxu0
  %v1488 = vadd.f32 0.0, %v1487
  %1489 = vdwg.mxu0
  %1490 = vmatpush.bf16.msra.mxu0 0
  %1491 = vmatpush.bf16.msra.mxu0 0
  %1492 = vmatpush.bf16.msra.mxu0 0
  %1493 = vmatpush.bf16.msra.mxu0 %v1463
  %1494 = vmatpush.bf16.msra.mxu0 %v1432
  %1495 = vmatpush.bf16.msra.mxu0 %v1428
  %1496 = vmatpush.bf16.msra.mxu0 %v1424
  %1497 = vmatpush.bf16.msra.mxu0 %v1420
  %1498 = vmatmul.bf16.gmra.mxu0 %v1454
  %v1499 = vpop.f32.mrf.mxu0
  %v1500 = vadd.f32 0.0, %v1499
  %v1501 = vpop.f32.mrf.mxu0
  %v1502 = vadd.f32 0.0, %v1501
  %1503 = vmatmul.bf16.gmra.mxu0 %v1457
  %v1504 = vpop.f32.mrf.mxu0
  %v1505 = vadd.f32 0.0, %v1504
  %v1506 = vpop.f32.mrf.mxu0
  %v1507 = vadd.f32 0.0, %v1506
  %1508 = vdwg.mxu0
  %1509 = vmatpush.bf16.msra.mxu0 0
  %1510 = vmatpush.bf16.msra.mxu0 0
  %1511 = vmatpush.bf16.msra.mxu0 0
  %1512 = vmatpush.bf16.msra.mxu0 %v1466
  %1513 = vmatpush.bf16.msra.mxu0 %v1433
  %1514 = vmatpush.bf16.msra.mxu0 %v1429
  %1515 = vmatpush.bf16.msra.mxu0 %v1425
  %1516 = vmatpush.bf16.msra.mxu0 %v1421
  %1517 = vmatmul.bf16.gmra.mxu0 %v1454
  %v1518 = vpop.f32.mrf.mxu0
  %v1519 = vadd.f32 0.0, %v1518
  %v1520 = vpop.f32.mrf.mxu0
  %v1521 = vadd.f32 0.0, %v1520
  %1522 = vmatmul.bf16.gmra.mxu0 %v1457
  %v1523 = vpop.f32.mrf.mxu0
  %v1524 = vadd.f32 0.0, %v1523
  %v1525 = vpop.f32.mrf.mxu0
  %v1526 = vadd.f32 0.0, %v1525
  %1527 = vdwg.mxu0
  %1528 = vmatpush.bf16.msra.mxu0 0
  %1529 = vmatpush.bf16.msra.mxu0 0
  %1530 = vmatpush.bf16.msra.mxu0 0
  %1531 = vmatpush.bf16.msra.mxu0 %v1469
  %1532 = vmatpush.bf16.msra.mxu0 %v1434
  %1533 = vmatpush.bf16.msra.mxu0 %v1430
  %1534 = vmatpush.bf16.msra.mxu0 %v1426
  %1535 = vmatpush.bf16.msra.mxu0 %v1422
  %1536 = vmatmul.bf16.gmra.mxu0 %v1454
  %v1537 = vpop.f32.mrf.mxu0
  %v1538 = vadd.f32 0.0, %v1537
  %v1539 = vpop.f32.mrf.mxu0
  %v1540 = vadd.f32 0.0, %v1539
  %1541 = vmatmul.bf16.gmra.mxu0 %v1457
  %v1542 = vpop.f32.mrf.mxu0
  %v1543 = vadd.f32 0.0, %v1542
  %v1544 = vpop.f32.mrf.mxu0
  %v1545 = vadd.f32 0.0, %v1544
  %1546 = vdwg.mxu0
  %v1547 = vadd.f32 %v1184, %v1481
  %v1548 = vadd.f32 %v1185, %v1500
  %v1549 = vadd.f32 %v1186, %v1519
  %v1550 = vadd.f32 %v1187, %v1538
  %v1551 = vadd.f32 %v1188, %v1483
  %v1552 = vadd.f32 %v1189, %v1502
  %v1553 = vadd.f32 %v1190, %v1521
  %v1554 = vadd.f32 %v1191, %v1540
  %v1555 = vadd.f32 %v1192, %v1486
  %v1556 = vadd.f32 %v1193, %v1505
  %v1557 = vadd.f32 %v1194, %v1524
  %v1558 = vadd.f32 %v1195, %v1543
  %v1559 = vadd.f32 %v1196, %v1488
  %v1560 = vadd.f32 %v1197, %v1507
  %v1561 = vadd.f32 %v1198, %v1526
  %v1562 = vadd.f32 %v1199, %v1545
  %s1563 = scalar_lea.vmem %s7, 16
  %v1564 = vld [vmem:[%s1563] sm:$0xff]
  %1566 = vset.pattern.permute.xlu0 0
  %1567 = vperm.xlu0 %1566, %v1564
  %v1568 = vpop.permute.xlu0 %1567
  %v1570 = vadd.f32 %v1547, %v1568
  %v1571 = vadd.f32 %v1548, %v1568
  %v1572 = vadd.f32 %v1549, %v1568
  %v1573 = vadd.f32 %v1550, %v1568
  %v1574 = vmul.f32 %v1570, 0.2
  %v1575 = vmul.f32 %v1571, 0.2
  %v1576 = vmul.f32 %v1572, 0.2
  %v1577 = vmul.f32 %v1573, 0.2
  %v1578 = vmax.f32 %v1570, %v1574
  %v1579 = vmax.f32 %v1571, %v1575
  %v1580 = vmax.f32 %v1572, %v1576
  %v1581 = vmax.f32 %v1573, %v1577
  %1582 = vrot.lane.b32.xlu0 %v1578, 17
  %v1583 = vpop.permute.xlu0 %1582
  %1584 = vrot.lane.b32.xlu0 %v1579, 17
  %v1585 = vpop.permute.xlu0 %1584
  %1586 = vrot.lane.b32.xlu0 %v1580, 17
  %v1587 = vpop.permute.xlu0 %1586
  %1588 = vrot.lane.b32.xlu0 %v1581, 17
  %v1589 = vpop.permute.xlu0 %1588
  %v1590 = vsel %vm74, %v1587, %v1589
  %v1591 = vsel %vm74, %v1585, %v1587
  %v1592 = vsel %vm74, %v1583, %v1585
  %v1593 = vsel %vm74, %v1589, %v1583
  %v1594 = vmul.f32 %v1593, %v84
  %v1595 = vmul.f32 %v1592, %v85
  %v1596 = vmul.f32 %v1591, %v86
  %v1597 = vmul.f32 %v1590, %v87
  %1598 = vst [vmem:[#allocation2] sm:$0xff] %v1594
  %1599 = vst [vmem:[#allocation2 + $0x8] sm:$0xff] %v1595
  %1600 = vst [vmem:[#allocation2 + $0x10] sm:$0xff] %v1596
  %1601 = vst [vmem:[#allocation2 + $0x18] sm:$0xff] %v1597
  %1602 = vrot.lane.b32.xlu0 %v1578, 16
  %v1603 = vpop.permute.xlu0 %1602
  %1604 = vrot.lane.b32.xlu0 %v1579, 16
  %v1605 = vpop.permute.xlu0 %1604
  %1606 = vrot.lane.b32.xlu0 %v1580, 16
  %v1607 = vpop.permute.xlu0 %1606
  %1608 = vrot.lane.b32.xlu0 %v1581, 16
  %v1609 = vpop.permute.xlu0 %1608
  %v1610 = vsel %vm124, %v1607, %v1609
  %v1611 = vsel %vm124, %v1605, %v1607
  %v1612 = vsel %vm124, %v1603, %v1605
  %v1613 = vsel %vm124, %v1609, %v1603
  %v1614 = vmul.f32 %v1613, %v134
  %v1615 = vmul.f32 %v1612, %v135
  %v1616 = vmul.f32 %v1611, %v136
  %v1617 = vmul.f32 %v1610, %v137
  %1618 = vst [vmem:[#allocation2 + $0x20] sm:$0xff] %v1614
  %1619 = vst [vmem:[#allocation2 + $0x28] sm:$0xff] %v1615
  %1620 = vst [vmem:[#allocation2 + $0x30] sm:$0xff] %v1616
  %1621 = vst [vmem:[#allocation2 + $0x38] sm:$0xff] %v1617
  %1622 = vrot.lane.b32.xlu0 %v1578, 15
  %v1623 = vpop.permute.xlu0 %1622
  %1624 = vrot.lane.b32.xlu0 %v1579, 15
  %v1625 = vpop.permute.xlu0 %1624
  %1626 = vrot.lane.b32.xlu0 %v1580, 15
  %v1627 = vpop.permute.xlu0 %1626
  %1628 = vrot.lane.b32.xlu0 %v1581, 15
  %v1629 = vpop.permute.xlu0 %1628
  %v1630 = vsel %vm174, %v1627, %v1629
  %v1631 = vsel %vm174, %v1625, %v1627
  %v1632 = vsel %vm174, %v1623, %v1625
  %v1633 = vsel %vm174, %v1629, %v1623
  %v1634 = vmul.f32 %v1633, %v184
  %v1635 = vmul.f32 %v1632, %v185
  %v1636 = vmul.f32 %v1631, %v186
  %v1637 = vmul.f32 %v1630, %v187
  %1638 = vst [vmem:[#allocation2 + $0x40] sm:$0xff] %v1634
  %1639 = vst [vmem:[#allocation2 + $0x48] sm:$0xff] %v1635
  %1640 = vst [vmem:[#allocation2 + $0x50] sm:$0xff] %v1636
  %1641 = vst [vmem:[#allocation2 + $0x58] sm:$0xff] %v1637
  %1642 = vrot.lane.b32.xlu0 %v1578, 1
  %v1643 = vpop.permute.xlu0 %1642
  %1644 = vrot.lane.b32.xlu0 %v1579, 1
  %v1645 = vpop.permute.xlu0 %1644
  %1646 = vrot.lane.b32.xlu0 %v1580, 1
  %v1647 = vpop.permute.xlu0 %1646
  %1648 = vrot.lane.b32.xlu0 %v1581, 1
  %v1649 = vpop.permute.xlu0 %1648
  %v1650 = vsel %vm224, %v1647, %v1649
  %v1651 = vsel %vm224, %v1645, %v1647
  %v1652 = vsel %vm224, %v1643, %v1645
  %v1653 = vsel %vm224, %v1649, %v1643
  %v1654 = vmul.f32 %v1653, %v234
  %v1655 = vmul.f32 %v1652, %v235
  %v1656 = vmul.f32 %v1651, %v236
  %v1657 = vmul.f32 %v1650, %v237
  %1658 = vst [vmem:[#allocation2 + $0x60] sm:$0xff] %v1654
  %1659 = vst [vmem:[#allocation2 + $0x68] sm:$0xff] %v1655
  %1660 = vst [vmem:[#allocation2 + $0x70] sm:$0xff] %v1656
  %1661 = vst [vmem:[#allocation2 + $0x78] sm:$0xff] %v1657
  %1662 = vst [vmem:[#allocation2 + $0x80] sm:$0xff] %v1578
  %1663 = vst [vmem:[#allocation2 + $0x88] sm:$0xff] %v1579
  %1664 = vst [vmem:[#allocation2 + $0x90] sm:$0xff] %v1580
  %1665 = vst [vmem:[#allocation2 + $0x98] sm:$0xff] %v1581
  %1666 = vrot.lane.b32.xlu0 %v1578, 127
  %v1667 = vpop.permute.xlu0 %1666
  %1668 = vrot.lane.b32.xlu0 %v1579, 127
  %v1669 = vpop.permute.xlu0 %1668
  %1670 = vrot.lane.b32.xlu0 %v1580, 127
  %v1671 = vpop.permute.xlu0 %1670
  %1672 = vrot.lane.b32.xlu0 %v1581, 127
  %v1673 = vpop.permute.xlu0 %1672
  %v1674 = vsel %vm282, %v1671, %v1673
  %v1675 = vsel %vm282, %v1669, %v1671
  %v1676 = vsel %vm282, %v1667, %v1669
  %v1677 = vsel %vm282, %v1673, %v1667
  %v1678 = vmul.f32 %v1676, %v292
  %v1679 = vmul.f32 %v1675, %v293
  %v1680 = vmul.f32 %v1674, %v294
  %v1681 = vmul.f32 %v1677, %v295
  %1682 = vst [vmem:[#allocation2 + $0xa0] sm:$0xff] %v1678
  %1683 = vst [vmem:[#allocation2 + $0xa8] sm:$0xff] %v1679
  %1684 = vst [vmem:[#allocation2 + $0xb0] sm:$0xff] %v1680
  %1685 = vst [vmem:[#allocation2 + $0xb8] sm:$0xff] %v1681
  %1686 = vrot.lane.b32.xlu0 %v1578, 113
  %v1687 = vpop.permute.xlu0 %1686
  %1688 = vrot.lane.b32.xlu0 %v1579, 113
  %v1689 = vpop.permute.xlu0 %1688
  %1690 = vrot.lane.b32.xlu0 %v1580, 113
  %v1691 = vpop.permute.xlu0 %1690
  %1692 = vrot.lane.b32.xlu0 %v1581, 113
  %v1693 = vpop.permute.xlu0 %1692
  %v1694 = vsel %vm332, %v1691, %v1693
  %v1695 = vsel %vm332, %v1689, %v1691
  %v1696 = vsel %vm332, %v1687, %v1689
  %v1697 = vsel %vm332, %v1693, %v1687
  %v1698 = vmul.f32 %v1696, %v342
  %v1699 = vmul.f32 %v1695, %v343
  %v1700 = vmul.f32 %v1694, %v344
  %v1701 = vmul.f32 %v1697, %v345
  %1702 = vst [vmem:[#allocation2 + $0xc0] sm:$0xff] %v1698
  %1703 = vst [vmem:[#allocation2 + $0xc8] sm:$0xff] %v1699
  %1704 = vst [vmem:[#allocation2 + $0xd0] sm:$0xff] %v1700
  %1705 = vst [vmem:[#allocation2 + $0xd8] sm:$0xff] %v1701
  %1706 = vrot.lane.b32.xlu0 %v1578, 112
  %v1707 = vpop.permute.xlu0 %1706
  %1708 = vrot.lane.b32.xlu0 %v1579, 112
  %v1709 = vpop.permute.xlu0 %1708
  %1710 = vrot.lane.b32.xlu0 %v1580, 112
  %v1711 = vpop.permute.xlu0 %1710
  %1712 = vrot.lane.b32.xlu0 %v1581, 112
  %v1713 = vpop.permute.xlu0 %1712
  %v1714 = vsel %vm382, %v1711, %v1713
  %v1715 = vsel %vm382, %v1709, %v1711
  %v1716 = vsel %vm382, %v1707, %v1709
  %v1717 = vsel %vm382, %v1713, %v1707
  %v1718 = vmul.f32 %v1716, %v392
  %v1719 = vmul.f32 %v1715, %v393
  %v1720 = vmul.f32 %v1714, %v394
  %v1721 = vmul.f32 %v1717, %v395
  %1722 = vst [vmem:[#allocation2 + $0xe0] sm:$0xff] %v1718
  %1723 = vst [vmem:[#allocation2 + $0xe8] sm:$0xff] %v1719
  %1724 = vst [vmem:[#allocation2 + $0xf0] sm:$0xff] %v1720
  %1725 = vst [vmem:[#allocation2 + $0xf8] sm:$0xff] %v1721
  %1726 = vrot.lane.b32.xlu0 %v1578, 111
  %v1727 = vpop.permute.xlu0 %1726
  %1728 = vrot.lane.b32.xlu0 %v1579, 111
  %v1729 = vpop.permute.xlu0 %1728
  %1730 = vrot.lane.b32.xlu0 %v1580, 111
  %v1731 = vpop.permute.xlu0 %1730
  %1732 = vrot.lane.b32.xlu0 %v1581, 111
  %v1733 = vpop.permute.xlu0 %1732
  %v1734 = vsel %vm432, %v1731, %v1733
  %v1735 = vsel %vm432, %v1729, %v1731
  %v1736 = vsel %vm432, %v1727, %v1729
  %v1737 = vsel %vm432, %v1733, %v1727
  %v1738 = vmul.f32 %v1736, %v442
  %v1739 = vmul.f32 %v1735, %v443
  %v1740 = vmul.f32 %v1734, %v444
  %v1741 = vmul.f32 %v1737, %v445
  %1742 = vst [vmem:[#allocation2 + $0x100] sm:$0xff] %v1738
  %1743 = vst [vmem:[#allocation2 + $0x108] sm:$0xff] %v1739
  %1744 = vst [vmem:[#allocation2 + $0x110] sm:$0xff] %v1740
  %1745 = vst [vmem:[#allocation2 + $0x118] sm:$0xff] %v1741
  %v1746 = vld [vmem:[#allocation2] sm:$0xff]
  %v1747 = vld [vmem:[#allocation2 + $0x8] sm:$0xff]
  %v1748 = vld [vmem:[#allocation2 + $0x10] sm:$0xff]
  %v1749 = vld [vmem:[#allocation2 + $0x18] sm:$0xff]
  %v1750 = vld [vmem:[#allocation2 + $0x20] sm:$0xff]
  %v1751 = vld [vmem:[#allocation2 + $0x28] sm:$0xff]
  %v1752 = vld [vmem:[#allocation2 + $0x30] sm:$0xff]
  %v1753 = vld [vmem:[#allocation2 + $0x38] sm:$0xff]
  %v1754 = vld [vmem:[#allocation2 + $0x40] sm:$0xff]
  %v1755 = vld [vmem:[#allocation2 + $0x48] sm:$0xff]
  %v1756 = vld [vmem:[#allocation2 + $0x50] sm:$0xff]
  %v1757 = vld [vmem:[#allocation2 + $0x58] sm:$0xff]
  %v1758 = vld [vmem:[#allocation2 + $0x60] sm:$0xff]
  %v1759 = vld [vmem:[#allocation2 + $0x68] sm:$0xff]
  %v1760 = vld [vmem:[#allocation2 + $0x70] sm:$0xff]
  %v1761 = vld [vmem:[#allocation2 + $0x78] sm:$0xff]
  %v1762 = vld [vmem:[#allocation2 + $0x80] sm:$0xff]
  %v1763 = vld [vmem:[#allocation2 + $0x88] sm:$0xff]
  %v1764 = vld [vmem:[#allocation2 + $0x90] sm:$0xff]
  %v1765 = vld [vmem:[#allocation2 + $0x98] sm:$0xff]
  %v1766 = vld [vmem:[#allocation2 + $0xa0] sm:$0xff]
  %v1767 = vld [vmem:[#allocation2 + $0xa8] sm:$0xff]
  %v1768 = vld [vmem:[#allocation2 + $0xb0] sm:$0xff]
  %v1769 = vld [vmem:[#allocation2 + $0xb8] sm:$0xff]
  %v1770 = vld [vmem:[#allocation2 + $0xc0] sm:$0xff]
  %v1771 = vld [vmem:[#allocation2 + $0xc8] sm:$0xff]
  %v1772 = vld [vmem:[#allocation2 + $0xd0] sm:$0xff]
  %v1773 = vld [vmem:[#allocation2 + $0xd8] sm:$0xff]
  %v1774 = vld [vmem:[#allocation2 + $0xe0] sm:$0xff]
  %v1775 = vld [vmem:[#allocation2 + $0xe8] sm:$0xff]
  %v1776 = vld [vmem:[#allocation2 + $0xf0] sm:$0xff]
  %v1777 = vld [vmem:[#allocation2 + $0xf8] sm:$0xff]
  %v1778 = vld [vmem:[#allocation2 + $0x100] sm:$0xff]
  %v1779 = vld [vmem:[#allocation2 + $0x108] sm:$0xff]
  %v1780 = vld [vmem:[#allocation2 + $0x110] sm:$0xff]
  %v1781 = vld [vmem:[#allocation2 + $0x118] sm:$0xff]
  %v1782 = vpack.c.bf16 %v1750, %v1746
  %v1783 = vpack.c.bf16 %v1751, %v1747
  %v1784 = vpack.c.bf16 %v1752, %v1748
  %v1785 = vpack.c.bf16 %v1753, %v1749
  %v1786 = vpack.c.bf16 %v1758, %v1754
  %v1787 = vpack.c.bf16 %v1759, %v1755
  %v1788 = vpack.c.bf16 %v1760, %v1756
  %v1789 = vpack.c.bf16 %v1761, %v1757
  %v1790 = vpack.c.bf16 %v1766, %v1762
  %v1791 = vpack.c.bf16 %v1767, %v1763
  %v1792 = vpack.c.bf16 %v1768, %v1764
  %v1793 = vpack.c.bf16 %v1769, %v1765
  %v1794 = vpack.c.bf16 %v1774, %v1770
  %v1795 = vpack.c.bf16 %v1775, %v1771
  %v1796 = vpack.c.bf16 %v1776, %v1772
  %v1797 = vpack.c.bf16 %v1777, %v1773
  %v1798 = vpack.c.bf16 %v1778, %v1778
  %v1799 = vpack.c.bf16 %v1779, %v1779
  %v1800 = vpack.c.bf16 %v1780, %v1780
  %v1801 = vpack.c.bf16 %v1781, %v1781
  %v1802 = vld [vmem:[%s5] sm:$0xf]
  %v1803 = vld [vmem:[%s5 + $0x4] sm:$0xf]
  %v1804 = vld [vmem:[%s5 + $0x8] sm:$0xf]
  %v1808 = vunpack.c.l.b16 %v1802
  %v1809 = vunpack.c.l.b16 %v1803
  %v1810 = vunpack.c.l.b16 %v1804
  %v1811 = vpack.c.b16 %v1809, %v1808
  %v1812 = vpack.c.b16 %v1810, %v1810
  %v1814 = vsel %vm1065, %v1811, 0
  %v1817 = vsel %vm1065, %v1812, 0
  %v1820 = vsel %vm1075, %v1798, 0
  %v1823 = vsel %vm1075, %v1799, 0
  %v1826 = vsel %vm1075, %v1800, 0
  %v1829 = vsel %vm1075, %v1801, 0
  %1831 = vmatpush.bf16.msra.mxu0 0
  %1832 = vmatpush.bf16.msra.mxu0 0
  %1833 = vmatpush.bf16.msra.mxu0 0
  %1834 = vmatpush.bf16.msra.mxu0 %v1820
  %1835 = vmatpush.bf16.msra.mxu0 %v1794
  %1836 = vmatpush.bf16.msra.mxu0 %v1790
  %1837 = vmatpush.bf16.msra.mxu0 %v1786
  %1838 = vmatpush.bf16.msra.mxu0 %v1782
  %1839 = vmatmul.bf16.gmra.mxu0 %v1814
  %v1840 = vpop.f32.mrf.mxu0
  %v1841 = vadd.f32 0.0, %v1840
  %v1842 = vpop.f32.mrf.mxu0
  %v1843 = vadd.f32 0.0, %v1842
  %1844 = vmatmul.bf16.gmra.mxu0 %v1817
  %v1845 = vpop.f32.mrf.mxu0
  %v1846 = vadd.f32 0.0, %v1845
  %v1847 = vpop.f32.mrf.mxu0
  %1848 = vdwg.mxu0
  %1849 = vmatpush.bf16.msra.mxu0 0
  %1850 = vmatpush.bf16.msra.mxu0 0
  %1851 = vmatpush.bf16.msra.mxu0 0
  %1852 = vmatpush.bf16.msra.mxu0 %v1823
  %1853 = vmatpush.bf16.msra.mxu0 %v1795
  %1854 = vmatpush.bf16.msra.mxu0 %v1791
  %1855 = vmatpush.bf16.msra.mxu0 %v1787
  %1856 = vmatpush.bf16.msra.mxu0 %v1783
  %1857 = vmatmul.bf16.gmra.mxu0 %v1814
  %v1858 = vpop.f32.mrf.mxu0
  %v1859 = vadd.f32 0.0, %v1858
  %v1860 = vpop.f32.mrf.mxu0
  %v1861 = vadd.f32 0.0, %v1860
  %1862 = vmatmul.bf16.gmra.mxu0 %v1817
  %v1863 = vpop.f32.mrf.mxu0
  %v1864 = vadd.f32 0.0, %v1863
  %v1865 = vpop.f32.mrf.mxu0
  %1866 = vdwg.mxu0
  %1867 = vmatpush.bf16.msra.mxu0 0
  %1868 = vmatpush.bf16.msra.mxu0 0
  %1869 = vmatpush.bf16.msra.mxu0 0
  %1870 = vmatpush.bf16.msra.mxu0 %v1826
  %1871 = vmatpush.bf16.msra.mxu0 %v1796
  %1872 = vmatpush.bf16.msra.mxu0 %v1792
  %1873 = vmatpush.bf16.msra.mxu0 %v1788
  %1874 = vmatpush.bf16.msra.mxu0 %v1784
  %1875 = vmatmul.bf16.gmra.mxu0 %v1814
  %v1876 = vpop.f32.mrf.mxu0
  %v1877 = vadd.f32 0.0, %v1876
  %v1878 = vpop.f32.mrf.mxu0
  %v1879 = vadd.f32 0.0, %v1878
  %1880 = vmatmul.bf16.gmra.mxu0 %v1817
  %v1881 = vpop.f32.mrf.mxu0
  %v1882 = vadd.f32 0.0, %v1881
  %v1883 = vpop.f32.mrf.mxu0
  %1884 = vdwg.mxu0
  %1885 = vmatpush.bf16.msra.mxu0 0
  %1886 = vmatpush.bf16.msra.mxu0 0
  %1887 = vmatpush.bf16.msra.mxu0 0
  %1888 = vmatpush.bf16.msra.mxu0 %v1829
  %1889 = vmatpush.bf16.msra.mxu0 %v1797
  %1890 = vmatpush.bf16.msra.mxu0 %v1793
  %1891 = vmatpush.bf16.msra.mxu0 %v1789
  %1892 = vmatpush.bf16.msra.mxu0 %v1785
  %1893 = vmatmul.bf16.gmra.mxu0 %v1814
  %v1894 = vpop.f32.mrf.mxu0
  %v1895 = vadd.f32 0.0, %v1894
  %v1896 = vpop.f32.mrf.mxu0
  %v1897 = vadd.f32 0.0, %v1896
  %1898 = vmatmul.bf16.gmra.mxu0 %v1817
  %v1899 = vpop.f32.mrf.mxu0
  %v1900 = vadd.f32 0.0, %v1899
  %v1901 = vpop.f32.mrf.mxu0
  %1902 = vdwg.mxu0
  %v1903 = vadd.f32 %v1551, %v1841
  %v1904 = vadd.f32 %v1552, %v1859
  %v1905 = vadd.f32 %v1553, %v1877
  %v1906 = vadd.f32 %v1554, %v1895
  %v1907 = vadd.f32 %v1555, %v1843
  %v1908 = vadd.f32 %v1556, %v1861
  %v1909 = vadd.f32 %v1557, %v1879
  %v1910 = vadd.f32 %v1558, %v1897
  %v1911 = vadd.f32 %v1559, %v1846
  %v1912 = vadd.f32 %v1560, %v1864
  %v1913 = vadd.f32 %v1561, %v1882
  %v1914 = vadd.f32 %v1562, %v1900
  %s1915 = scalar_lea.vmem %s7, 24
  %v1916 = vld [vmem:[%s1915] sm:$0xff]
  %1918 = vset.pattern.permute.xlu0 0
  %1919 = vperm.xlu0 %1918, %v1916
  %v1920 = vpop.permute.xlu0 %1919
  %v1922 = vadd.f32 %v1903, %v1920
  %v1923 = vadd.f32 %v1904, %v1920
  %v1924 = vadd.f32 %v1905, %v1920
  %v1925 = vadd.f32 %v1906, %v1920
  %v1926 = vmul.f32 %v1922, 0.2
  %v1927 = vmul.f32 %v1923, 0.2
  %v1928 = vmul.f32 %v1924, 0.2
  %v1929 = vmul.f32 %v1925, 0.2
  %v1930 = vmax.f32 %v1922, %v1926
  %v1931 = vmax.f32 %v1923, %v1927
  %v1932 = vmax.f32 %v1924, %v1928
  %v1933 = vmax.f32 %v1925, %v1929
  %1934 = vrot.lane.b32.xlu0 %v1930, 17
  %v1935 = vpop.permute.xlu0 %1934
  %1936 = vrot.lane.b32.xlu0 %v1931, 17
  %v1937 = vpop.permute.xlu0 %1936
  %1938 = vrot.lane.b32.xlu0 %v1932, 17
  %v1939 = vpop.permute.xlu0 %1938
  %1940 = vrot.lane.b32.xlu0 %v1933, 17
  %v1941 = vpop.permute.xlu0 %1940
  %v1942 = vsel %vm74, %v1939, %v1941
  %v1943 = vsel %vm74, %v1937, %v1939
  %v1944 = vsel %vm74, %v1935, %v1937
  %v1945 = vsel %vm74, %v1941, %v1935
  %v1946 = vmul.f32 %v1945, %v84
  %v1947 = vmul.f32 %v1944, %v85
  %v1948 = vmul.f32 %v1943, %v86
  %v1949 = vmul.f32 %v1942, %v87
  %1950 = vst [vmem:[#allocation2] sm:$0xff] %v1946
  %1951 = vst [vmem:[#allocation2 + $0x8] sm:$0xff] %v1947
  %1952 = vst [vmem:[#allocation2 + $0x10] sm:$0xff] %v1948
  %1953 = vst [vmem:[#allocation2 + $0x18] sm:$0xff] %v1949
  %1954 = vrot.lane.b32.xlu0 %v1930, 16
  %v1955 = vpop.permute.xlu0 %1954
  %1956 = vrot.lane.b32.xlu0 %v1931, 16
  %v1957 = vpop.permute.xlu0 %1956
  %1958 = vrot.lane.b32.xlu0 %v1932, 16
  %v1959 = vpop.permute.xlu0 %1958
  %1960 = vrot.lane.b32.xlu0 %v1933, 16
  %v1961 = vpop.permute.xlu0 %1960
  %v1962 = vsel %vm124, %v1959, %v1961
  %v1963 = vsel %vm124, %v1957, %v1959
  %v1964 = vsel %vm124, %v1955, %v1957
  %v1965 = vsel %vm124, %v1961, %v1955
  %v1966 = vmul.f32 %v1965, %v134
  %v1967 = vmul.f32 %v1964, %v135
  %v1968 = vmul.f32 %v1963, %v136
  %v1969 = vmul.f32 %v1962, %v137
  %1970 = vst [vmem:[#allocation2 + $0x20] sm:$0xff] %v1966
  %1971 = vst [vmem:[#allocation2 + $0x28] sm:$0xff] %v1967
  %1972 = vst [vmem:[#allocation2 + $0x30] sm:$0xff] %v1968
  %1973 = vst [vmem:[#allocation2 + $0x38] sm:$0xff] %v1969
  %1974 = vrot.lane.b32.xlu0 %v1930, 15
  %v1975 = vpop.permute.xlu0 %1974
  %1976 = vrot.lane.b32.xlu0 %v1931, 15
  %v1977 = vpop.permute.xlu0 %1976
  %1978 = vrot.lane.b32.xlu0 %v1932, 15
  %v1979 = vpop.permute.xlu0 %1978
  %1980 = vrot.lane.b32.xlu0 %v1933, 15
  %v1981 = vpop.permute.xlu0 %1980
  %v1982 = vsel %vm174, %v1979, %v1981
  %v1983 = vsel %vm174, %v1977, %v1979
  %v1984 = vsel %vm174, %v1975, %v1977
  %v1985 = vsel %vm174, %v1981, %v1975
  %v1986 = vmul.f32 %v1985, %v184
  %v1987 = vmul.f32 %v1984, %v185
  %v1988 = vmul.f32 %v1983, %v186
  %v1989 = vmul.f32 %v1982, %v187
  %1990 = vst [vmem:[#allocation2 + $0x40] sm:$0xff] %v1986
  %1991 = vst [vmem:[#allocation2 + $0x48] sm:$0xff] %v1987
  %1992 = vst [vmem:[#allocation2 + $0x50] sm:$0xff] %v1988
  %1993 = vst [vmem:[#allocation2 + $0x58] sm:$0xff] %v1989
  %1994 = vrot.lane.b32.xlu0 %v1930, 1
  %v1995 = vpop.permute.xlu0 %1994
  %1996 = vrot.lane.b32.xlu0 %v1931, 1
  %v1997 = vpop.permute.xlu0 %1996
  %1998 = vrot.lane.b32.xlu0 %v1932, 1
  %v1999 = vpop.permute.xlu0 %1998
  %2000 = vrot.lane.b32.xlu0 %v1933, 1
  %v2001 = vpop.permute.xlu0 %2000
  %v2002 = vsel %vm224, %v1999, %v2001
  %v2003 = vsel %vm224, %v1997, %v1999
  %v2004 = vsel %vm224, %v1995, %v1997
  %v2005 = vsel %vm224, %v2001, %v1995
  %v2006 = vmul.f32 %v2005, %v234
  %v2007 = vmul.f32 %v2004, %v235
  %v2008 = vmul.f32 %v2003, %v236
  %v2009 = vmul.f32 %v2002, %v237
  %2010 = vst [vmem:[#allocation2 + $0x60] sm:$0xff] %v2006
  %2011 = vst [vmem:[#allocation2 + $0x68] sm:$0xff] %v2007
  %2012 = vst [vmem:[#allocation2 + $0x70] sm:$0xff] %v2008
  %2013 = vst [vmem:[#allocation2 + $0x78] sm:$0xff] %v2009
  %2014 = vst [vmem:[#allocation2 + $0x80] sm:$0xff] %v1930
  %2015 = vst [vmem:[#allocation2 + $0x88] sm:$0xff] %v1931
  %2016 = vst [vmem:[#allocation2 + $0x90] sm:$0xff] %v1932
  %2017 = vst [vmem:[#allocation2 + $0x98] sm:$0xff] %v1933
  %2018 = vrot.lane.b32.xlu0 %v1930, 127
  %v2019 = vpop.permute.xlu0 %2018
  %2020 = vrot.lane.b32.xlu0 %v1931, 127
  %v2021 = vpop.permute.xlu0 %2020
  %2022 = vrot.lane.b32.xlu0 %v1932, 127
  %v2023 = vpop.permute.xlu0 %2022
  %2024 = vrot.lane.b32.xlu0 %v1933, 127
  %v2025 = vpop.permute.xlu0 %2024
  %v2026 = vsel %vm282, %v2023, %v2025
  %v2027 = vsel %vm282, %v2021, %v2023
  %v2028 = vsel %vm282, %v2019, %v2021
  %v2029 = vsel %vm282, %v2025, %v2019
  %v2030 = vmul.f32 %v2028, %v292
  %v2031 = vmul.f32 %v2027, %v293
  %v2032 = vmul.f32 %v2026, %v294
  %v2033 = vmul.f32 %v2029, %v295
  %2034 = vst [vmem:[#allocation2 + $0xa0] sm:$0xff] %v2030
  %2035 = vst [vmem:[#allocation2 + $0xa8] sm:$0xff] %v2031
  %2036 = vst [vmem:[#allocation2 + $0xb0] sm:$0xff] %v2032
  %2037 = vst [vmem:[#allocation2 + $0xb8] sm:$0xff] %v2033
  %2038 = vrot.lane.b32.xlu0 %v1930, 113
  %v2039 = vpop.permute.xlu0 %2038
  %2040 = vrot.lane.b32.xlu0 %v1931, 113
  %v2041 = vpop.permute.xlu0 %2040
  %2042 = vrot.lane.b32.xlu0 %v1932, 113
  %v2043 = vpop.permute.xlu0 %2042
  %2044 = vrot.lane.b32.xlu0 %v1933, 113
  %v2045 = vpop.permute.xlu0 %2044
  %v2046 = vsel %vm332, %v2043, %v2045
  %v2047 = vsel %vm332, %v2041, %v2043
  %v2048 = vsel %vm332, %v2039, %v2041
  %v2049 = vsel %vm332, %v2045, %v2039
  %v2050 = vmul.f32 %v2048, %v342
  %v2051 = vmul.f32 %v2047, %v343
  %v2052 = vmul.f32 %v2046, %v344
  %v2053 = vmul.f32 %v2049, %v345
  %2054 = vst [vmem:[#allocation2 + $0xc0] sm:$0xff] %v2050
  %2055 = vst [vmem:[#allocation2 + $0xc8] sm:$0xff] %v2051
  %2056 = vst [vmem:[#allocation2 + $0xd0] sm:$0xff] %v2052
  %2057 = vst [vmem:[#allocation2 + $0xd8] sm:$0xff] %v2053
  %2058 = vrot.lane.b32.xlu0 %v1930, 112
  %v2059 = vpop.permute.xlu0 %2058
  %2060 = vrot.lane.b32.xlu0 %v1931, 112
  %v2061 = vpop.permute.xlu0 %2060
  %2062 = vrot.lane.b32.xlu0 %v1932, 112
  %v2063 = vpop.permute.xlu0 %2062
  %2064 = vrot.lane.b32.xlu0 %v1933, 112
  %v2065 = vpop.permute.xlu0 %2064
  %v2066 = vsel %vm382, %v2063, %v2065
  %v2067 = vsel %vm382, %v2061, %v2063
  %v2068 = vsel %vm382, %v2059, %v2061
  %v2069 = vsel %vm382, %v2065, %v2059
  %v2070 = vmul.f32 %v2068, %v392
  %v2071 = vmul.f32 %v2067, %v393
  %v2072 = vmul.f32 %v2066, %v394
  %v2073 = vmul.f32 %v2069, %v395
  %2074 = vst [vmem:[#allocation2 + $0xe0] sm:$0xff] %v2070
  %2075 = vst [vmem:[#allocation2 + $0xe8] sm:$0xff] %v2071
  %2076 = vst [vmem:[#allocation2 + $0xf0] sm:$0xff] %v2072
  %2077 = vst [vmem:[#allocation2 + $0xf8] sm:$0xff] %v2073
  %2078 = vrot.lane.b32.xlu0 %v1930, 111
  %v2079 = vpop.permute.xlu0 %2078
  %2080 = vrot.lane.b32.xlu0 %v1931, 111
  %v2081 = vpop.permute.xlu0 %2080
  %2082 = vrot.lane.b32.xlu0 %v1932, 111
  %v2083 = vpop.permute.xlu0 %2082
  %2084 = vrot.lane.b32.xlu0 %v1933, 111
  %v2085 = vpop.permute.xlu0 %2084
  %v2086 = vsel %vm432, %v2083, %v2085
  %v2087 = vsel %vm432, %v2081, %v2083
  %v2088 = vsel %vm432, %v2079, %v2081
  %v2089 = vsel %vm432, %v2085, %v2079
  %v2090 = vmul.f32 %v2088, %v442
  %v2091 = vmul.f32 %v2087, %v443
  %v2092 = vmul.f32 %v2086, %v444
  %v2093 = vmul.f32 %v2089, %v445
  %2094 = vst [vmem:[#allocation2 + $0x100] sm:$0xff] %v2090
  %2095 = vst [vmem:[#allocation2 + $0x108] sm:$0xff] %v2091
  %2096 = vst [vmem:[#allocation2 + $0x110] sm:$0xff] %v2092
  %2097 = vst [vmem:[#allocation2 + $0x118] sm:$0xff] %v2093
  %v2098 = vld [vmem:[#allocation2] sm:$0xff]
  %v2099 = vld [vmem:[#allocation2 + $0x8] sm:$0xff]
  %v2100 = vld [vmem:[#allocation2 + $0x10] sm:$0xff]
  %v2101 = vld [vmem:[#allocation2 + $0x18] sm:$0xff]
  %v2102 = vld [vmem:[#allocation2 + $0x20] sm:$0xff]
  %v2103 = vld [vmem:[#allocation2 + $0x28] sm:$0xff]
  %v2104 = vld [vmem:[#allocation2 + $0x30] sm:$0xff]
  %v2105 = vld [vmem:[#allocation2 + $0x38] sm:$0xff]
  %v2106 = vld [vmem:[#allocation2 + $0x40] sm:$0xff]
  %v2107 = vld [vmem:[#allocation2 + $0x48] sm:$0xff]
  %v2108 = vld [vmem:[#allocation2 + $0x50] sm:$0xff]
  %v2109 = vld [vmem:[#allocation2 + $0x58] sm:$0xff]
  %v2110 = vld [vmem:[#allocation2 + $0x60] sm:$0xff]
  %v2111 = vld [vmem:[#allocation2 + $0x68] sm:$0xff]
  %v2112 = vld [vmem:[#allocation2 + $0x70] sm:$0xff]
  %v2113 = vld [vmem:[#allocation2 + $0x78] sm:$0xff]
  %v2114 = vld [vmem:[#allocation2 + $0x80] sm:$0xff]
  %v2115 = vld [vmem:[#allocation2 + $0x88] sm:$0xff]
  %v2116 = vld [vmem:[#allocation2 + $0x90] sm:$0xff]
  %v2117 = vld [vmem:[#allocation2 + $0x98] sm:$0xff]
  %v2118 = vld [vmem:[#allocation2 + $0xa0] sm:$0xff]
  %v2119 = vld [vmem:[#allocation2 + $0xa8] sm:$0xff]
  %v2120 = vld [vmem:[#allocation2 + $0xb0] sm:$0xff]
  %v2121 = vld [vmem:[#allocation2 + $0xb8] sm:$0xff]
  %v2122 = vld [vmem:[#allocation2 + $0xc0] sm:$0xff]
  %v2123 = vld [vmem:[#allocation2 + $0xc8] sm:$0xff]
  %v2124 = vld [vmem:[#allocation2 + $0xd0] sm:$0xff]
  %v2125 = vld [vmem:[#allocation2 + $0xd8] sm:$0xff]
  %v2126 = vld [vmem:[#allocation2 + $0xe0] sm:$0xff]
  %v2127 = vld [vmem:[#allocation2 + $0xe8] sm:$0xff]
  %v2128 = vld [vmem:[#allocation2 + $0xf0] sm:$0xff]
  %v2129 = vld [vmem:[#allocation2 + $0xf8] sm:$0xff]
  %v2130 = vld [vmem:[#allocation2 + $0x100] sm:$0xff]
  %v2131 = vld [vmem:[#allocation2 + $0x108] sm:$0xff]
  %v2132 = vld [vmem:[#allocation2 + $0x110] sm:$0xff]
  %v2133 = vld [vmem:[#allocation2 + $0x118] sm:$0xff]
  %v2134 = vpack.c.bf16 %v2102, %v2098
  %v2135 = vpack.c.bf16 %v2103, %v2099
  %v2136 = vpack.c.bf16 %v2104, %v2100
  %v2137 = vpack.c.bf16 %v2105, %v2101
  %v2138 = vpack.c.bf16 %v2110, %v2106
  %v2139 = vpack.c.bf16 %v2111, %v2107
  %v2140 = vpack.c.bf16 %v2112, %v2108
  %v2141 = vpack.c.bf16 %v2113, %v2109
  %v2142 = vpack.c.bf16 %v2118, %v2114
  %v2143 = vpack.c.bf16 %v2119, %v2115
  %v2144 = vpack.c.bf16 %v2120, %v2116
  %v2145 = vpack.c.bf16 %v2121, %v2117
  %v2146 = vpack.c.bf16 %v2126, %v2122
  %v2147 = vpack.c.bf16 %v2127, %v2123
  %v2148 = vpack.c.bf16 %v2128, %v2124
  %v2149 = vpack.c.bf16 %v2129, %v2125
  %v2150 = vpack.c.bf16 %v2130, %v2130
  %v2151 = vpack.c.bf16 %v2131, %v2131
  %v2152 = vpack.c.bf16 %v2132, %v2132
  %v2153 = vpack.c.bf16 %v2133, %v2133
  %v2154 = vld [vmem:[%s6] sm:$0xf]
  %v2155 = vld [vmem:[%s6 + $0x4] sm:$0xf]
  %v2158 = vunpack.c.l.b16 %v2154
  %v2159 = vunpack.c.l.b16 %v2155
  %v2160 = vpack.c.b16 %v2159, %v2158
  %v2162 = vsel %vm1065, %v2160, 0
  %v2165 = vsel %vm1075, %v2150, 0
  %v2168 = vsel %vm1075, %v2151, 0
  %v2171 = vsel %vm1075, %v2152, 0
  %v2174 = vsel %vm1075, %v2153, 0
  %2176 = vmatpush.bf16.msra.mxu0 0
  %2177 = vmatpush.bf16.msra.mxu0 0
  %2178 = vmatpush.bf16.msra.mxu0 0
  %2179 = vmatpush.bf16.msra.mxu0 %v2165
  %2180 = vmatpush.bf16.msra.mxu0 %v2146
  %2181 = vmatpush.bf16.msra.mxu0 %v2142
  %2182 = vmatpush.bf16.msra.mxu0 %v2138
  %2183 = vmatpush.bf16.msra.mxu0 %v2134
  %2184 = vmatmul.bf16.gmra.mxu0 %v2162
  %v2185 = vpop.f32.mrf.mxu0
  %v2186 = vadd.f32 0.0, %v2185
  %v2187 = vpop.f32.mrf.mxu0
  %v2188 = vadd.f32 0.0, %v2187
  %2189 = vdwg.mxu0
  %2190 = vmatpush.bf16.msra.mxu0 0
  %2191 = vmatpush.bf16.msra.mxu0 0
  %2192 = vmatpush.bf16.msra.mxu0 0
  %2193 = vmatpush.bf16.msra.mxu0 %v2168
  %2194 = vmatpush.bf16.msra.mxu0 %v2147
  %2195 = vmatpush.bf16.msra.mxu0 %v2143
  %2196 = vmatpush.bf16.msra.mxu0 %v2139
  %2197 = vmatpush.bf16.msra.mxu0 %v2135
  %2198 = vmatmul.bf16.gmra.mxu0 %v2162
  %v2199 = vpop.f32.mrf.mxu0
  %v2200 = vadd.f32 0.0, %v2199
  %v2201 = vpop.f32.mrf.mxu0
  %v2202 = vadd.f32 0.0, %v2201
  %2203 = vdwg.mxu0
  %2204 = vmatpush.bf16.msra.mxu0 0
  %2205 = vmatpush.bf16.msra.mxu0 0
  %2206 = vmatpush.bf16.msra.mxu0 0
  %2207 = vmatpush.bf16.msra.mxu0 %v2171
  %2208 = vmatpush.bf16.msra.mxu0 %v2148
  %2209 = vmatpush.bf16.msra.mxu0 %v2144
  %2210 = vmatpush.bf16.msra.mxu0 %v2140
  %2211 = vmatpush.bf16.msra.mxu0 %v2136
  %2212 = vmatmul.bf16.gmra.mxu0 %v2162
  %v2213 = vpop.f32.mrf.mxu0
  %v2214 = vadd.f32 0.0, %v2213
  %v2215 = vpop.f32.mrf.mxu0
  %v2216 = vadd.f32 0.0, %v2215
  %2217 = vdwg.mxu0
  %2218 = vmatpush.bf16.msra.mxu0 0
  %2219 = vmatpush.bf16.msra.mxu0 0
  %2220 = vmatpush.bf16.msra.mxu0 0
  %2221 = vmatpush.bf16.msra.mxu0 %v2174
  %2222 = vmatpush.bf16.msra.mxu0 %v2149
  %2223 = vmatpush.bf16.msra.mxu0 %v2145
  %2224 = vmatpush.bf16.msra.mxu0 %v2141
  %2225 = vmatpush.bf16.msra.mxu0 %v2137
  %2226 = vmatmul.bf16.gmra.mxu0 %v2162
  %v2227 = vpop.f32.mrf.mxu0
  %v2228 = vadd.f32 0.0, %v2227
  %v2229 = vpop.f32.mrf.mxu0
  %v2230 = vadd.f32 0.0, %v2229
  %2231 = vdwg.mxu0
  %v2232 = vadd.f32 %v1907, %v2186
  %v2233 = vadd.f32 %v1908, %v2200
  %v2234 = vadd.f32 %v1909, %v2214
  %v2235 = vadd.f32 %v1910, %v2228
  %v2236 = vadd.f32 %v1911, %v2188
  %v2237 = vadd.f32 %v1912, %v2202
  %v2238 = vadd.f32 %v1913, %v2216
  %v2239 = vadd.f32 %v1914, %v2230
  %v2240 = vld [vmem:[%s8] sm:$0xff]
  %v2241 = vld [vmem:[%s8 + $0x8] sm:$0xff]
  %2243 = vset.pattern.permute.xlu0 0
  %2244 = vperm.xlu0 %2243, %v2240
  %v2245 = vpop.permute.xlu0 %2244
  %2248 = vset.pattern.permute.xlu0 0
  %2249 = vperm.xlu0 %2248, %v2241
  %v2250 = vpop.permute.xlu0 %2249
  %v2252 = vadd.f32 %v2232, %v2245
  %v2253 = vadd.f32 %v2233, %v2245
  %v2254 = vadd.f32 %v2234, %v2245
  %v2255 = vadd.f32 %v2235, %v2245
  %v2256 = vadd.f32 %v2236, %v2250
  %v2257 = vadd.f32 %v2237, %v2250
  %v2258 = vadd.f32 %v2238, %v2250
  %v2259 = vadd.f32 %v2239, %v2250
  %v2260 = vmul.f32 %v2252, 0.2
  %v2261 = vmul.f32 %v2253, 0.2
  %v2262 = vmul.f32 %v2254, 0.2
  %v2263 = vmul.f32 %v2255, 0.2
  %v2264 = vmul.f32 %v2256, 0.2
  %v2265 = vmul.f32 %v2257, 0.2
  %v2266 = vmul.f32 %v2258, 0.2
  %v2267 = vmul.f32 %v2259, 0.2
  %v2268 = vadd.f32 %v2260, %v48
  %v2269 = vadd.f32 %v2261, %v49
  %v2270 = vadd.f32 %v2262, %v50
  %v2271 = vadd.f32 %v2263, %v51
  %v2272 = vadd.f32 %v2264, %v52
  %v2273 = vadd.f32 %v2265, %v53
  %v2274 = vadd.f32 %v2266, %v54
  %v2275 = vadd.f32 %v2267, %v55
  %2276 = vrot.lane.b32.xlu0 %v2268, 17
  %v2277 = vpop.permute.xlu0 %2276
  %2278 = vrot.lane.b32.xlu0 %v2272, 17
  %v2279 = vpop.permute.xlu0 %2278
  %2280 = vrot.lane.b32.xlu0 %v2269, 17
  %v2281 = vpop.permute.xlu0 %2280
  %2282 = vrot.lane.b32.xlu0 %v2273, 17
  %v2283 = vpop.permute.xlu0 %2282
  %2284 = vrot.lane.b32.xlu0 %v2270, 17
  %v2285 = vpop.permute.xlu0 %2284
  %2286 = vrot.lane.b32.xlu0 %v2274, 17
  %v2287 = vpop.permute.xlu0 %2286
  %2288 = vrot.lane.b32.xlu0 %v2271, 17
  %v2289 = vpop.permute.xlu0 %2288
  %2290 = vrot.lane.b32.xlu0 %v2275, 17
  %v2291 = vpop.permute.xlu0 %2290
  %v2292 = vsel %vm74, %v2285, %v2289
  %v2293 = vsel %vm74, %v2287, %v2291
  %v2294 = vsel %vm74, %v2281, %v2285
  %v2295 = vsel %vm74, %v2283, %v2287
  %v2296 = vsel %vm74, %v2277, %v2281
  %v2297 = vsel %vm74, %v2279, %v2283
  %v2298 = vsel %vm74, %v2289, %v2277
  %v2299 = vsel %vm74, %v2291, %v2279
  %v2300 = vmul.f32 %v2298, %v84
  %v2301 = vmul.f32 %v2296, %v85
  %v2302 = vmul.f32 %v2294, %v86
  %v2303 = vmul.f32 %v2292, %v87
  %v2304 = vmul.f32 %v2299, %v84
  %v2305 = vmul.f32 %v2297, %v85
  %v2306 = vmul.f32 %v2295, %v86
  %v2307 = vmul.f32 %v2293, %v87
  %2308 = vst [vmem:[#allocation2] sm:$0xff] %v2300
  %2309 = vst [vmem:[#allocation2 + $0x8] sm:$0xff] %v2301
  %2310 = vst [vmem:[#allocation2 + $0x10] sm:$0xff] %v2302
  %2311 = vst [vmem:[#allocation2 + $0x18] sm:$0xff] %v2303
  %2312 = vst [vmem:[#allocation2 + $0x20] sm:$0xff] %v2304
  %2313 = vst [vmem:[#allocation2 + $0x28] sm:$0xff] %v2305
  %2314 = vst [vmem:[#allocation2 + $0x30] sm:$0xff] %v2306
  %2315 = vst [vmem:[#allocation2 + $0x38] sm:$0xff] %v2307
  %2316 = vrot.lane.b32.xlu0 %v2268, 16
  %v2317 = vpop.permute.xlu0 %2316
  %2318 = vrot.lane.b32.xlu0 %v2272, 16
  %v2319 = vpop.permute.xlu0 %2318
  %2320 = vrot.lane.b32.xlu0 %v2269, 16
  %v2321 = vpop.permute.xlu0 %2320
  %2322 = vrot.lane.b32.xlu0 %v2273, 16
  %v2323 = vpop.permute.xlu0 %2322
  %2324 = vrot.lane.b32.xlu0 %v2270, 16
  %v2325 = vpop.permute.xlu0 %2324
  %2326 = vrot.lane.b32.xlu0 %v2274, 16
  %v2327 = vpop.permute.xlu0 %2326
  %2328 = vrot.lane.b32.xlu0 %v2271, 16
  %v2329 = vpop.permute.xlu0 %2328
  %2330 = vrot.lane.b32.xlu0 %v2275, 16
  %v2331 = vpop.permute.xlu0 %2330
  %v2332 = vsel %vm124, %v2325, %v2329
  %v2333 = vsel %vm124, %v2327, %v2331
  %v2334 = vsel %vm124, %v2321, %v2325
  %v2335 = vsel %vm124, %v2323, %v2327
  %v2336 = vsel %vm124, %v2317, %v2321
  %v2337 = vsel %vm124, %v2319, %v2323
  %v2338 = vsel %vm124, %v2329, %v2317
  %v2339 = vsel %vm124, %v2331, %v2319
  %v2340 = vmul.f32 %v2338, %v134
  %v2341 = vmul.f32 %v2336, %v135
  %v2342 = vmul.f32 %v2334, %v136
  %v2343 = vmul.f32 %v2332, %v137
  %v2344 = vmul.f32 %v2339, %v134
  %v2345 = vmul.f32 %v2337, %v135
  %v2346 = vmul.f32 %v2335, %v136
  %v2347 = vmul.f32 %v2333, %v137
  %2348 = vst [vmem:[#allocation2 + $0x40] sm:$0xff] %v2340
  %2349 = vst [vmem:[#allocation2 + $0x48] sm:$0xff] %v2341
  %2350 = vst [vmem:[#allocation2 + $0x50] sm:$0xff] %v2342
  %2351 = vst [vmem:[#allocation2 + $0x58] sm:$0xff] %v2343
  %2352 = vst [vmem:[#allocation2 + $0x60] sm:$0xff] %v2344
  %2353 = vst [vmem:[#allocation2 + $0x68] sm:$0xff] %v2345
  %2354 = vst [vmem:[#allocation2 + $0x70] sm:$0xff] %v2346
  %2355 = vst [vmem:[#allocation2 + $0x78] sm:$0xff] %v2347
  %2356 = vrot.lane.b32.xlu0 %v2268, 15
  %v2357 = vpop.permute.xlu0 %2356
  %2358 = vrot.lane.b32.xlu0 %v2272, 15
  %v2359 = vpop.permute.xlu0 %2358
  %2360 = vrot.lane.b32.xlu0 %v2269, 15
  %v2361 = vpop.permute.xlu0 %2360
  %2362 = vrot.lane.b32.xlu0 %v2273, 15
  %v2363 = vpop.permute.xlu0 %2362
  %2364 = vrot.lane.b32.xlu0 %v2270, 15
  %v2365 = vpop.permute.xlu0 %2364
  %2366 = vrot.lane.b32.xlu0 %v2274, 15
  %v2367 = vpop.permute.xlu0 %2366
  %2368 = vrot.lane.b32.xlu0 %v2271, 15
  %v2369 = vpop.permute.xlu0 %2368
  %2370 = vrot.lane.b32.xlu0 %v2275, 15
  %v2371 = vpop.permute.xlu0 %2370
  %v2372 = vsel %vm174, %v2365, %v2369
  %v2373 = vsel %vm174, %v2367, %v2371
  %v2374 = vsel %vm174, %v2361, %v2365
  %v2375 = vsel %vm174, %v2363, %v2367
  %v2376 = vsel %vm174, %v2357, %v2361
  %v2377 = vsel %vm174, %v2359, %v2363
  %v2378 = vsel %vm174, %v2369, %v2357
  %v2379 = vsel %vm174, %v2371, %v2359
  %v2380 = vmul.f32 %v2378, %v184
  %v2381 = vmul.f32 %v2376, %v185
  %v2382 = vmul.f32 %v2374, %v186
  %v2383 = vmul.f32 %v2372, %v187
  %v2384 = vmul.f32 %v2379, %v184
  %v2385 = vmul.f32 %v2377, %v185
  %v2386 = vmul.f32 %v2375, %v186
  %v2387 = vmul.f32 %v2373, %v187
  %2388 = vst [vmem:[#allocation2 + $0x80] sm:$0xff] %v2380
  %2389 = vst [vmem:[#allocation2 + $0x88] sm:$0xff] %v2381
  %2390 = vst [vmem:[#allocation2 + $0x90] sm:$0xff] %v2382
  %2391 = vst [vmem:[#allocation2 + $0x98] sm:$0xff] %v2383
  %2392 = vst [vmem:[#allocation2 + $0xa0] sm:$0xff] %v2384
  %2393 = vst [vmem:[#allocation2 + $0xa8] sm:$0xff] %v2385
  %2394 = vst [vmem:[#allocation2 + $0xb0] sm:$0xff] %v2386
  %2395 = vst [vmem:[#allocation2 + $0xb8] sm:$0xff] %v2387
  %2396 = vrot.lane.b32.xlu0 %v2268, 1
  %v2397 = vpop.permute.xlu0 %2396
  %2398 = vrot.lane.b32.xlu0 %v2272, 1
  %v2399 = vpop.permute.xlu0 %2398
  %2400 = vrot.lane.b32.xlu0 %v2269, 1
  %v2401 = vpop.permute.xlu0 %2400
  %2402 = vrot.lane.b32.xlu0 %v2273, 1
  %v2403 = vpop.permute.xlu0 %2402
  %2404 = vrot.lane.b32.xlu0 %v2270, 1
  %v2405 = vpop.permute.xlu0 %2404
  %2406 = vrot.lane.b32.xlu0 %v2274, 1
  %v2407 = vpop.permute.xlu0 %2406
  %2408 = vrot.lane.b32.xlu0 %v2271, 1
  %v2409 = vpop.permute.xlu0 %2408
  %2410 = vrot.lane.b32.xlu0 %v2275, 1
  %v2411 = vpop.permute.xlu0 %2410
  %v2412 = vsel %vm224, %v2405, %v2409
  %v2413 = vsel %vm224, %v2407, %v2411
  %v2414 = vsel %vm224, %v2401, %v2405
  %v2415 = vsel %vm224, %v2403, %v2407
  %v2416 = vsel %vm224, %v2397, %v2401
  %v2417 = vsel %vm224, %v2399, %v2403
  %v2418 = vsel %vm224, %v2409, %v2397
  %v2419 = vsel %vm224, %v2411, %v2399
  %v2420 = vmul.f32 %v2418, %v234
  %v2421 = vmul.f32 %v2416, %v235
  %v2422 = vmul.f32 %v2414, %v236
  %v2423 = vmul.f32 %v2412, %v237
  %v2424 = vmul.f32 %v2419, %v234
  %v2425 = vmul.f32 %v2417, %v235
  %v2426 = vmul.f32 %v2415, %v236
  %v2427 = vmul.f32 %v2413, %v237
  %2428 = vst [vmem:[#allocation2 + $0xc0] sm:$0xff] %v2420
  %2429 = vst [vmem:[#allocation2 + $0xc8] sm:$0xff] %v2421
  %2430 = vst [vmem:[#allocation2 + $0xd0] sm:$0xff] %v2422
  %2431 = vst [vmem:[#allocation2 + $0xd8] sm:$0xff] %v2423
  %2432 = vst [vmem:[#allocation2 + $0xe0] sm:$0xff] %v2424
  %2433 = vst [vmem:[#allocation2 + $0xe8] sm:$0xff] %v2425
  %2434 = vst [vmem:[#allocation2 + $0xf0] sm:$0xff] %v2426
  %2435 = vst [vmem:[#allocation2 + $0xf8] sm:$0xff] %v2427
  %2436 = vst [vmem:[#allocation2 + $0x100] sm:$0xff] %v2268
  %2437 = vst [vmem:[#allocation2 + $0x108] sm:$0xff] %v2269
  %2438 = vst [vmem:[#allocation2 + $0x110] sm:$0xff] %v2270
  %2439 = vst [vmem:[#allocation2 + $0x118] sm:$0xff] %v2271
  %2440 = vst [vmem:[#allocation2 + $0x120] sm:$0xff] %v2272
  %2441 = vst [vmem:[#allocation2 + $0x128] sm:$0xff] %v2273
  %2442 = vst [vmem:[#allocation2 + $0x130] sm:$0xff] %v2274
  %2443 = vst [vmem:[#allocation2 + $0x138] sm:$0xff] %v2275
  %2444 = vrot.lane.b32.xlu0 %v2268, 127
  %v2445 = vpop.permute.xlu0 %2444
  %2446 = vrot.lane.b32.xlu0 %v2272, 127
  %v2447 = vpop.permute.xlu0 %2446
  %2448 = vrot.lane.b32.xlu0 %v2269, 127
  %v2449 = vpop.permute.xlu0 %2448
  %2450 = vrot.lane.b32.xlu0 %v2273, 127
  %v2451 = vpop.permute.xlu0 %2450
  %2452 = vrot.lane.b32.xlu0 %v2270, 127
  %v2453 = vpop.permute.xlu0 %2452
  %2454 = vrot.lane.b32.xlu0 %v2274, 127
  %v2455 = vpop.permute.xlu0 %2454
  %2456 = vrot.lane.b32.xlu0 %v2271, 127
  %v2457 = vpop.permute.xlu0 %2456
  %2458 = vrot.lane.b32.xlu0 %v2275, 127
  %v2459 = vpop.permute.xlu0 %2458
  %v2460 = vsel %vm282, %v2453, %v2457
  %v2461 = vsel %vm282, %v2455, %v2459
  %v2462 = vsel %vm282, %v2449, %v2453
  %v2463 = vsel %vm282, %v2451, %v2455
  %v2464 = vsel %vm282, %v2445, %v2449
  %v2465 = vsel %vm282, %v2447, %v2451
  %v2466 = vsel %vm282, %v2457, %v2445
  %v2467 = vsel %vm282, %v2459, %v2447
  %v2468 = vmul.f32 %v2464, %v292
  %v2469 = vmul.f32 %v2462, %v293
  %v2470 = vmul.f32 %v2460, %v294
  %v2471 = vmul.f32 %v2466, %v295
  %v2472 = vmul.f32 %v2465, %v292
  %v2473 = vmul.f32 %v2463, %v293
  %v2474 = vmul.f32 %v2461, %v294
  %v2475 = vmul.f32 %v2467, %v295
  %2476 = vst [vmem:[#allocation2 + $0x140] sm:$0xff] %v2468
  %2477 = vst [vmem:[#allocation2 + $0x148] sm:$0xff] %v2469
  %2478 = vst [vmem:[#allocation2 + $0x150] sm:$0xff] %v2470
  %2479 = vst [vmem:[#allocation2 + $0x158] sm:$0xff] %v2471
  %2480 = vst [vmem:[#allocation2 + $0x160] sm:$0xff] %v2472
  %2481 = vst [vmem:[#allocation2 + $0x168] sm:$0xff] %v2473
  %2482 = vst [vmem:[#allocation2 + $0x170] sm:$0xff] %v2474
  %2483 = vst [vmem:[#allocation2 + $0x178] sm:$0xff] %v2475
  %2484 = vrot.lane.b32.xlu0 %v2268, 113
  %v2485 = vpop.permute.xlu0 %2484
  %2486 = vrot.lane.b32.xlu0 %v2272, 113
  %v2487 = vpop.permute.xlu0 %2486
  %2488 = vrot.lane.b32.xlu0 %v2269, 113
  %v2489 = vpop.permute.xlu0 %2488
  %2490 = vrot.lane.b32.xlu0 %v2273, 113
  %v2491 = vpop.permute.xlu0 %2490
  %2492 = vrot.lane.b32.xlu0 %v2270, 113
  %v2493 = vpop.permute.xlu0 %2492
  %2494 = vrot.lane.b32.xlu0 %v2274, 113
  %v2495 = vpop.permute.xlu0 %2494
  %2496 = vrot.lane.b32.xlu0 %v2271, 113
  %v2497 = vpop.permute.xlu0 %2496
  %2498 = vrot.lane.b32.xlu0 %v2275, 113
  %v2499 = vpop.permute.xlu0 %2498
  %v2500 = vsel %vm332, %v2493, %v2497
  %v2501 = vsel %vm332, %v2495, %v2499
  %v2502 = vsel %vm332, %v2489, %v2493
  %v2503 = vsel %vm332, %v2491, %v2495
  %v2504 = vsel %vm332, %v2485, %v2489
  %v2505 = vsel %vm332, %v2487, %v2491
  %v2506 = vsel %vm332, %v2497, %v2485
  %v2507 = vsel %vm332, %v2499, %v2487
  %v2508 = vmul.f32 %v2504, %v342
  %v2509 = vmul.f32 %v2502, %v343
  %v2510 = vmul.f32 %v2500, %v344
  %v2511 = vmul.f32 %v2506, %v345
  %v2512 = vmul.f32 %v2505, %v342
  %v2513 = vmul.f32 %v2503, %v343
  %v2514 = vmul.f32 %v2501, %v344
  %v2515 = vmul.f32 %v2507, %v345
  %2516 = vst [vmem:[#allocation2 + $0x180] sm:$0xff] %v2508
  %2517 = vst [vmem:[#allocation2 + $0x188] sm:$0xff] %v2509
  %2518 = vst [vmem:[#allocation2 + $0x190] sm:$0xff] %v2510
  %2519 = vst [vmem:[#allocation2 + $0x198] sm:$0xff] %v2511
  %2520 = vst [vmem:[#allocation2 + $0x1a0] sm:$0xff] %v2512
  %2521 = vst [vmem:[#allocation2 + $0x1a8] sm:$0xff] %v2513
  %2522 = vst [vmem:[#allocation2 + $0x1b0] sm:$0xff] %v2514
  %2523 = vst [vmem:[#allocation2 + $0x1b8] sm:$0xff] %v2515
  %2524 = vrot.lane.b32.xlu0 %v2268, 112
  %v2525 = vpop.permute.xlu0 %2524
  %2526 = vrot.lane.b32.xlu0 %v2272, 112
  %v2527 = vpop.permute.xlu0 %2526
  %2528 = vrot.lane.b32.xlu0 %v2269, 112
  %v2529 = vpop.permute.xlu0 %2528
  %2530 = vrot.lane.b32.xlu0 %v2273, 112
  %v2531 = vpop.permute.xlu0 %2530
  %2532 = vrot.lane.b32.xlu0 %v2270, 112
  %v2533 = vpop.permute.xlu0 %2532
  %2534 = vrot.lane.b32.xlu0 %v2274, 112
  %v2535 = vpop.permute.xlu0 %2534
  %2536 = vrot.lane.b32.xlu0 %v2271, 112
  %v2537 = vpop.permute.xlu0 %2536
  %2538 = vrot.lane.b32.xlu0 %v2275, 112
  %v2539 = vpop.permute.xlu0 %2538
  %v2540 = vsel %vm382, %v2533, %v2537
  %v2541 = vsel %vm382, %v2535, %v2539
  %v2542 = vsel %vm382, %v2529, %v2533
  %v2543 = vsel %vm382, %v2531, %v2535
  %v2544 = vsel %vm382, %v2525, %v2529
  %v2545 = vsel %vm382, %v2527, %v2531
  %v2546 = vsel %vm382, %v2537, %v2525
  %v2547 = vsel %vm382, %v2539, %v2527
  %v2548 = vmul.f32 %v2544, %v392
  %v2549 = vmul.f32 %v2542, %v393
  %v2550 = vmul.f32 %v2540, %v394
  %v2551 = vmul.f32 %v2546, %v395
  %v2552 = vmul.f32 %v2545, %v392
  %v2553 = vmul.f32 %v2543, %v393
  %v2554 = vmul.f32 %v2541, %v394
  %v2555 = vmul.f32 %v2547, %v395
  %2556 = vst [vmem:[#allocation2 + $0x1c0] sm:$0xff] %v2548
  %2557 = vst [vmem:[#allocation2 + $0x1c8] sm:$0xff] %v2549
  %2558 = vst [vmem:[#allocation2 + $0x1d0] sm:$0xff] %v2550
  %2559 = vst [vmem:[#allocation2 + $0x1d8] sm:$0xff] %v2551
  %2560 = vst [vmem:[#allocation2 + $0x1e0] sm:$0xff] %v2552
  %2561 = vst [vmem:[#allocation2 + $0x1e8] sm:$0xff] %v2553
  %2562 = vst [vmem:[#allocation2 + $0x1f0] sm:$0xff] %v2554
  %2563 = vst [vmem:[#allocation2 + $0x1f8] sm:$0xff] %v2555
  %2564 = vrot.lane.b32.xlu0 %v2268, 111
  %v2565 = vpop.permute.xlu0 %2564
  %2566 = vrot.lane.b32.xlu0 %v2272, 111
  %v2567 = vpop.permute.xlu0 %2566
  %2568 = vrot.lane.b32.xlu0 %v2269, 111
  %v2569 = vpop.permute.xlu0 %2568
  %2570 = vrot.lane.b32.xlu0 %v2273, 111
  %v2571 = vpop.permute.xlu0 %2570
  %2572 = vrot.lane.b32.xlu0 %v2270, 111
  %v2573 = vpop.permute.xlu0 %2572
  %2574 = vrot.lane.b32.xlu0 %v2274, 111
  %v2575 = vpop.permute.xlu0 %2574
  %2576 = vrot.lane.b32.xlu0 %v2271, 111
  %v2577 = vpop.permute.xlu0 %2576
  %2578 = vrot.lane.b32.xlu0 %v2275, 111
  %v2579 = vpop.permute.xlu0 %2578
  %v2580 = vsel %vm432, %v2573, %v2577
  %v2581 = vsel %vm432, %v2575, %v2579
  %v2582 = vsel %vm432, %v2569, %v2573
  %v2583 = vsel %vm432, %v2571, %v2575
  %v2584 = vsel %vm432, %v2565, %v2569
  %v2585 = vsel %vm432, %v2567, %v2571
  %v2586 = vsel %vm432, %v2577, %v2565
  %v2587 = vsel %vm432, %v2579, %v2567
  %v2588 = vmul.f32 %v2584, %v442
  %v2589 = vmul.f32 %v2582, %v443
  %v2590 = vmul.f32 %v2580, %v444
  %v2591 = vmul.f32 %v2586, %v445
  %v2592 = vmul.f32 %v2585, %v442
  %v2593 = vmul.f32 %v2583, %v443
  %v2594 = vmul.f32 %v2581, %v444
  %v2595 = vmul.f32 %v2587, %v445
  %2596 = vst [vmem:[#allocation2 + $0x200] sm:$0xff] %v2588
  %2597 = vst [vmem:[#allocation2 + $0x208] sm:$0xff] %v2589
  %2598 = vst [vmem:[#allocation2 + $0x210] sm:$0xff] %v2590
  %2599 = vst [vmem:[#allocation2 + $0x218] sm:$0xff] %v2591
  %2600 = vst [vmem:[#allocation2 + $0x220] sm:$0xff] %v2592
  %2601 = vst [vmem:[#allocation2 + $0x228] sm:$0xff] %v2593
  %2602 = vst [vmem:[#allocation2 + $0x230] sm:$0xff] %v2594
  %2603 = vst [vmem:[#allocation2 + $0x238] sm:$0xff] %v2595
  %v2604 = vld [vmem:[#allocation2] sm:$0xff]
  %v2605 = vld [vmem:[#allocation2 + $0x8] sm:$0xff]
  %v2606 = vld [vmem:[#allocation2 + $0x10] sm:$0xff]
  %v2607 = vld [vmem:[#allocation2 + $0x18] sm:$0xff]
  %v2608 = vld [vmem:[#allocation2 + $0x20] sm:$0xff]
  %v2609 = vld [vmem:[#allocation2 + $0x28] sm:$0xff]
  %v2610 = vld [vmem:[#allocation2 + $0x30] sm:$0xff]
  %v2611 = vld [vmem:[#allocation2 + $0x38] sm:$0xff]
  %v2612 = vld [vmem:[#allocation2 + $0x40] sm:$0xff]
  %v2613 = vld [vmem:[#allocation2 + $0x48] sm:$0xff]
  %v2614 = vld [vmem:[#allocation2 + $0x50] sm:$0xff]
  %v2615 = vld [vmem:[#allocation2 + $0x58] sm:$0xff]
  %v2616 = vld [vmem:[#allocation2 + $0x60] sm:$0xff]
  %v2617 = vld [vmem:[#allocation2 + $0x68] sm:$0xff]
  %v2618 = vld [vmem:[#allocation2 + $0x70] sm:$0xff]
  %v2619 = vld [vmem:[#allocation2 + $0x78] sm:$0xff]
  %v2620 = vld [vmem:[#allocation2 + $0x80] sm:$0xff]
  %v2621 = vld [vmem:[#allocation2 + $0x88] sm:$0xff]
  %v2622 = vld [vmem:[#allocation2 + $0x90] sm:$0xff]
  %v2623 = vld [vmem:[#allocation2 + $0x98] sm:$0xff]
  %v2624 = vld [vmem:[#allocation2 + $0xa0] sm:$0xff]
  %v2625 = vld [vmem:[#allocation2 + $0xa8] sm:$0xff]
  %v2626 = vld [vmem:[#allocation2 + $0xb0] sm:$0xff]
  %v2627 = vld [vmem:[#allocation2 + $0xb8] sm:$0xff]
  %v2628 = vld [vmem:[#allocation2 + $0xc0] sm:$0xff]
  %v2629 = vld [vmem:[#allocation2 + $0xc8] sm:$0xff]
  %v2630 = vld [vmem:[#allocation2 + $0xd0] sm:$0xff]
  %v2631 = vld [vmem:[#allocation2 + $0xd8] sm:$0xff]
  %v2632 = vld [vmem:[#allocation2 + $0xe0] sm:$0xff]
  %v2633 = vld [vmem:[#allocation2 + $0xe8] sm:$0xff]
  %v2634 = vld [vmem:[#allocation2 + $0xf0] sm:$0xff]
  %v2635 = vld [vmem:[#allocation2 + $0xf8] sm:$0xff]
  %v2636 = vld [vmem:[#allocation2 + $0x100] sm:$0xff]
  %v2637 = vld [vmem:[#allocation2 + $0x108] sm:$0xff]
  %v2638 = vld [vmem:[#allocation2 + $0x110] sm:$0xff]
  %v2639 = vld [vmem:[#allocation2 + $0x118] sm:$0xff]
  %v2640 = vld [vmem:[#allocation2 + $0x120] sm:$0xff]
  %v2641 = vld [vmem:[#allocation2 + $0x128] sm:$0xff]
  %v2642 = vld [vmem:[#allocation2 + $0x130] sm:$0xff]
  %v2643 = vld [vmem:[#allocation2 + $0x138] sm:$0xff]
  %v2644 = vld [vmem:[#allocation2 + $0x140] sm:$0xff]
  %v2645 = vld [vmem:[#allocation2 + $0x148] sm:$0xff]
  %v2646 = vld [vmem:[#allocation2 + $0x150] sm:$0xff]
  %v2647 = vld [vmem:[#allocation2 + $0x158] sm:$0xff]
  %v2648 = vld [vmem:[#allocation2 + $0x160] sm:$0xff]
  %v2649 = vld [vmem:[#allocation2 + $0x168] sm:$0xff]
  %v2650 = vld [vmem:[#allocation2 + $0x170] sm:$0xff]
  %v2651 = vld [vmem:[#allocation2 + $0x178] sm:$0xff]
  %v2652 = vld [vmem:[#allocation2 + $0x180] sm:$0xff]
  %v2653 = vld [vmem:[#allocation2 + $0x188] sm:$0xff]
  %v2654 = vld [vmem:[#allocation2 + $0x190] sm:$0xff]
  %v2655 = vld [vmem:[#allocation2 + $0x198] sm:$0xff]
  %v2656 = vld [vmem:[#allocation2 + $0x1a0] sm:$0xff]
  %v2657 = vld [vmem:[#allocation2 + $0x1a8] sm:$0xff]
  %v2658 = vld [vmem:[#allocation2 + $0x1b0] sm:$0xff]
  %v2659 = vld [vmem:[#allocation2 + $0x1b8] sm:$0xff]
  %v2660 = vld [vmem:[#allocation2 + $0x1c0] sm:$0xff]
  %v2661 = vld [vmem:[#allocation2 + $0x1c8] sm:$0xff]
  %v2662 = vld [vmem:[#allocation2 + $0x1d0] sm:$0xff]
  %v2663 = vld [vmem:[#allocation2 + $0x1d8] sm:$0xff]
  %v2664 = vld [vmem:[#allocation2 + $0x1e0] sm:$0xff]
  %v2665 = vld [vmem:[#allocation2 + $0x1e8] sm:$0xff]
  %v2666 = vld [vmem:[#allocation2 + $0x1f0] sm:$0xff]
  %v2667 = vld [vmem:[#allocation2 + $0x1f8] sm:$0xff]
  %v2668 = vld [vmem:[#allocation2 + $0x200] sm:$0xff]
  %v2669 = vld [vmem:[#allocation2 + $0x208] sm:$0xff]
  %v2670 = vld [vmem:[#allocation2 + $0x210] sm:$0xff]
  %v2671 = vld [vmem:[#allocation2 + $0x218] sm:$0xff]
  %v2672 = vld [vmem:[#allocation2 + $0x220] sm:$0xff]
  %v2673 = vld [vmem:[#allocation2 + $0x228] sm:$0xff]
  %v2674 = vld [vmem:[#allocation2 + $0x230] sm:$0xff]
  %v2675 = vld [vmem:[#allocation2 + $0x238] sm:$0xff]
  %v2676 = vpack.c.bf16 %v2608, %v2604
  %v2677 = vpack.c.bf16 %v2609, %v2605
  %v2678 = vpack.c.bf16 %v2610, %v2606
  %v2679 = vpack.c.bf16 %v2611, %v2607
  %v2680 = vpack.c.bf16 %v2616, %v2612
  %v2681 = vpack.c.bf16 %v2617, %v2613
  %v2682 = vpack.c.bf16 %v2618, %v2614
  %v2683 = vpack.c.bf16 %v2619, %v2615
  %v2684 = vpack.c.bf16 %v2624, %v2620
  %v2685 = vpack.c.bf16 %v2625, %v2621
  %v2686 = vpack.c.bf16 %v2626, %v2622
  %v2687 = vpack.c.bf16 %v2627, %v2623
  %v2688 = vpack.c.bf16 %v2632, %v2628
  %v2689 = vpack.c.bf16 %v2633, %v2629
  %v2690 = vpack.c.bf16 %v2634, %v2630
  %v2691 = vpack.c.bf16 %v2635, %v2631
  %v2692 = vpack.c.bf16 %v2640, %v2636
  %v2693 = vpack.c.bf16 %v2641, %v2637
  %v2694 = vpack.c.bf16 %v2642, %v2638
  %v2695 = vpack.c.bf16 %v2643, %v2639
  %v2696 = vpack.c.bf16 %v2648, %v2644
  %v2697 = vpack.c.bf16 %v2649, %v2645
  %v2698 = vpack.c.bf16 %v2650, %v2646
  %v2699 = vpack.c.bf16 %v2651, %v2647
  %v2700 = vpack.c.bf16 %v2656, %v2652
  %v2701 = vpack.c.bf16 %v2657, %v2653
  %v2702 = vpack.c.bf16 %v2658, %v2654
  %v2703 = vpack.c.bf16 %v2659, %v2655
  %v2704 = vpack.c.bf16 %v2664, %v2660
  %v2705 = vpack.c.bf16 %v2665, %v2661
  %v2706 = vpack.c.bf16 %v2666, %v2662
  %v2707 = vpack.c.bf16 %v2667, %v2663
  %v2708 = vpack.c.bf16 %v2672, %v2668
  %v2709 = vpack.c.bf16 %v2673, %v2669
  %v2710 = vpack.c.bf16 %v2674, %v2670
  %v2711 = vpack.c.bf16 %v2675, %v2671
  %s2712 = scalar_lea.vmem %s2, 48
  %v2713 = vld [vmem:[%s2712] sm:$0xff]
  %v2714 = vld [vmem:[%s2712 + $0x8] sm:$0xff]
  %v2715 = vld [vmem:[%s2712 + $0x10] sm:$0xff]
  %v2716 = vld [vmem:[%s2712 + $0x18] sm:$0xff]
  %v2717 = vld [vmem:[%s2712 + $0x20] sm:$0xff]
  %v2718 = vld [vmem:[%s2712 + $0x28] sm:$0xff]
  %v2725 = vunpack.c.l.b16 %v2713
  %v2726 = vunpack.c.h.b16 %v2713
  %v2727 = vunpack.c.l.b16 %v2714
  %v2728 = vunpack.c.h.b16 %v2714
  %v2729 = vunpack.c.l.b16 %v2715
  %v2730 = vunpack.c.h.b16 %v2715
  %v2731 = vunpack.c.l.b16 %v2716
  %v2732 = vunpack.c.h.b16 %v2716
  %v2733 = vunpack.c.l.b16 %v2717
  %v2734 = vunpack.c.h.b16 %v2717
  %v2735 = vunpack.c.l.b16 %v2718
  %v2736 = vunpack.c.h.b16 %v2718
  %v2737 = vpack.c.b16 %v2727, %v2725
  %v2738 = vpack.c.b16 %v2728, %v2726
  %v2739 = vpack.c.b16 %v2731, %v2729
  %v2740 = vpack.c.b16 %v2732, %v2730
  %v2741 = vpack.c.b16 %v2735, %v2733
  %v2742 = vpack.c.b16 %v2736, %v2734
  %v2747 = vsel %vm607, %v2738, 0
  %v2750 = vsel %vm607, %v2740, 0
  %v2753 = vsel %vm607, %v2742, 0
  %2755 = vmatpush.bf16.msra.mxu0 %v2704
  %2756 = vmatpush.bf16.msra.mxu0 %v2700
  %2757 = vmatpush.bf16.msra.mxu0 %v2696
  %2758 = vmatpush.bf16.msra.mxu0 %v2692
  %2759 = vmatpush.bf16.msra.mxu0 %v2688
  %2760 = vmatpush.bf16.msra.mxu0 %v2684
  %2761 = vmatpush.bf16.msra.mxu0 %v2680
  %2762 = vmatpush.bf16.msra.mxu0 %v2676
  %2763 = vmatmul.bf16.gmra.mxu0 %v2737
  %v2764 = vpop.f32.mrf.mxu0
  %v2765 = vadd.f32 0.0, %v2764
  %v2766 = vpop.f32.mrf.mxu0
  %v2767 = vadd.f32 0.0, %v2766
  %2768 = vmatmul.bf16.gmra.mxu0 %v2739
  %v2769 = vpop.f32.mrf.mxu0
  %v2770 = vadd.f32 0.0, %v2769
  %v2771 = vpop.f32.mrf.mxu0
  %v2772 = vadd.f32 0.0, %v2771
  %2773 = vmatmul.bf16.gmra.mxu0 %v2741
  %v2774 = vpop.f32.mrf.mxu0
  %v2775 = vadd.f32 0.0, %v2774
  %v2776 = vpop.f32.mrf.mxu0
  %v2777 = vadd.f32 0.0, %v2776
  %2778 = vdwg.mxu0
  %2779 = vmatpush.bf16.msra.mxu0 0
  %2780 = vmatpush.bf16.msra.mxu0 0
  %2781 = vmatpush.bf16.msra.mxu0 0
  %2782 = vmatpush.bf16.msra.mxu0 0
  %2783 = vmatpush.bf16.msra.mxu0 0
  %2784 = vmatpush.bf16.msra.mxu0 0
  %2785 = vmatpush.bf16.msra.mxu0 0
  %2786 = vmatpush.bf16.msra.mxu0 %v2708
  %2787 = vmatmul.bf16.gmra.mxu0 %v2747
  %v2788 = vpop.f32.mrf.mxu0
  %v2789 = vadd.f32 %v2765, %v2788
  %v2790 = vpop.f32.mrf.mxu0
  %v2791 = vadd.f32 %v2767, %v2790
  %2792 = vmatmul.bf16.gmra.mxu0 %v2750
  %v2793 = vpop.f32.mrf.mxu0
  %v2794 = vadd.f32 %v2770, %v2793
  %v2795 = vpop.f32.mrf.mxu0
  %v2796 = vadd.f32 %v2772, %v2795
  %2797 = vmatmul.bf16.gmra.mxu0 %v2753
  %v2798 = vpop.f32.mrf.mxu0
  %v2799 = vadd.f32 %v2775, %v2798
  %v2800 = vpop.f32.mrf.mxu0
  %v2801 = vadd.f32 %v2777, %v2800
  %2802 = vdwg.mxu0
  %2803 = vmatpush.bf16.msra.mxu0 %v2705
  %2804 = vmatpush.bf16.msra.mxu0 %v2701
  %2805 = vmatpush.bf16.msra.mxu0 %v2697
  %2806 = vmatpush.bf16.msra.mxu0 %v2693
  %2807 = vmatpush.bf16.msra.mxu0 %v2689
  %2808 = vmatpush.bf16.msra.mxu0 %v2685
  %2809 = vmatpush.bf16.msra.mxu0 %v2681
  %2810 = vmatpush.bf16.msra.mxu0 %v2677
  %2811 = vmatmul.bf16.gmra.mxu0 %v2737
  %v2812 = vpop.f32.mrf.mxu0
  %v2813 = vadd.f32 0.0, %v2812
  %v2814 = vpop.f32.mrf.mxu0
  %v2815 = vadd.f32 0.0, %v2814
  %2816 = vmatmul.bf16.gmra.mxu0 %v2739
  %v2817 = vpop.f32.mrf.mxu0
  %v2818 = vadd.f32 0.0, %v2817
  %v2819 = vpop.f32.mrf.mxu0
  %v2820 = vadd.f32 0.0, %v2819
  %2821 = vmatmul.bf16.gmra.mxu0 %v2741
  %v2822 = vpop.f32.mrf.mxu0
  %v2823 = vadd.f32 0.0, %v2822
  %v2824 = vpop.f32.mrf.mxu0
  %v2825 = vadd.f32 0.0, %v2824
  %2826 = vdwg.mxu0
  %2827 = vmatpush.bf16.msra.mxu0 0
  %2828 = vmatpush.bf16.msra.mxu0 0
  %2829 = vmatpush.bf16.msra.mxu0 0
  %2830 = vmatpush.bf16.msra.mxu0 0
  %2831 = vmatpush.bf16.msra.mxu0 0
  %2832 = vmatpush.bf16.msra.mxu0 0
  %2833 = vmatpush.bf16.msra.mxu0 0
  %2834 = vmatpush.bf16.msra.mxu0 %v2709
  %2835 = vmatmul.bf16.gmra.mxu0 %v2747
  %v2836 = vpop.f32.mrf.mxu0
  %v2837 = vadd.f32 %v2813, %v2836
  %v2838 = vpop.f32.mrf.mxu0
  %v2839 = vadd.f32 %v2815, %v2838
  %2840 = vmatmul.bf16.gmra.mxu0 %v2750
  %v2841 = vpop.f32.mrf.mxu0
  %v2842 = vadd.f32 %v2818, %v2841
  %v2843 = vpop.f32.mrf.mxu0
  %v2844 = vadd.f32 %v2820, %v2843
  %2845 = vmatmul.bf16.gmra.mxu0 %v2753
  %v2846 = vpop.f32.mrf.mxu0
  %v2847 = vadd.f32 %v2823, %v2846
  %v2848 = vpop.f32.mrf.mxu0
  %v2849 = vadd.f32 %v2825, %v2848
  %2850 = vdwg.mxu0
  %2851 = vmatpush.bf16.msra.mxu0 %v2706
  %2852 = vmatpush.bf16.msra.mxu0 %v2702
  %2853 = vmatpush.bf16.msra.mxu0 %v2698
  %2854 = vmatpush.bf16.msra.mxu0 %v2694
  %2855 = vmatpush.bf16.msra.mxu0 %v2690
  %2856 = vmatpush.bf16.msra.mxu0 %v2686
  %2857 = vmatpush.bf16.msra.mxu0 %v2682
  %2858 = vmatpush.bf16.msra.mxu0 %v2678
  %2859 = vmatmul.bf16.gmra.mxu0 %v2737
  %v2860 = vpop.f32.mrf.mxu0
  %v2861 = vadd.f32 0.0, %v2860
  %v2862 = vpop.f32.mrf.mxu0
  %v2863 = vadd.f32 0.0, %v2862
  %2864 = vmatmul.bf16.gmra.mxu0 %v2739
  %v2865 = vpop.f32.mrf.mxu0
  %v2866 = vadd.f32 0.0, %v2865
  %v2867 = vpop.f32.mrf.mxu0
  %v2868 = vadd.f32 0.0, %v2867
  %2869 = vmatmul.bf16.gmra.mxu0 %v2741
  %v2870 = vpop.f32.mrf.mxu0
  %v2871 = vadd.f32 0.0, %v2870
  %v2872 = vpop.f32.mrf.mxu0
  %v2873 = vadd.f32 0.0, %v2872
  %2874 = vdwg.mxu0
  %2875 = vmatpush.bf16.msra.mxu0 0
  %2876 = vmatpush.bf16.msra.mxu0 0
  %2877 = vmatpush.bf16.msra.mxu0 0
  %2878 = vmatpush.bf16.msra.mxu0 0
  %2879 = vmatpush.bf16.msra.mxu0 0
  %2880 = vmatpush.bf16.msra.mxu0 0
  %2881 = vmatpush.bf16.msra.mxu0 0
  %2882 = vmatpush.bf16.msra.mxu0 %v2710
  %2883 = vmatmul.bf16.gmra.mxu0 %v2747
  %v2884 = vpop.f32.mrf.mxu0
  %v2885 = vadd.f32 %v2861, %v2884
  %v2886 = vpop.f32.mrf.mxu0
  %v2887 = vadd.f32 %v2863, %v2886
  %2888 = vmatmul.bf16.gmra.mxu0 %v2750
  %v2889 = vpop.f32.mrf.mxu0
  %v2890 = vadd.f32 %v2866, %v2889
  %v2891 = vpop.f32.mrf.mxu0
  %v2892 = vadd.f32 %v2868, %v2891
  %2893 = vmatmul.bf16.gmra.mxu0 %v2753
  %v2894 = vpop.f32.mrf.mxu0
  %v2895 = vadd.f32 %v2871, %v2894
  %v2896 = vpop.f32.mrf.mxu0
  %v2897 = vadd.f32 %v2873, %v2896
  %2898 = vdwg.mxu0
  %2899 = vmatpush.bf16.msra.mxu0 %v2707
  %2900 = vmatpush.bf16.msra.mxu0 %v2703
  %2901 = vmatpush.bf16.msra.mxu0 %v2699
  %2902 = vmatpush.bf16.msra.mxu0 %v2695
  %2903 = vmatpush.bf16.msra.mxu0 %v2691
  %2904 = vmatpush.bf16.msra.mxu0 %v2687
  %2905 = vmatpush.bf16.msra.mxu0 %v2683
  %2906 = vmatpush.bf16.msra.mxu0 %v2679
  %2907 = vmatmul.bf16.gmra.mxu0 %v2737
  %v2908 = vpop.f32.mrf.mxu0
  %v2909 = vadd.f32 0.0, %v2908
  %v2910 = vpop.f32.mrf.mxu0
  %v2911 = vadd.f32 0.0, %v2910
  %2912 = vmatmul.bf16.gmra.mxu0 %v2739
  %v2913 = vpop.f32.mrf.mxu0
  %v2914 = vadd.f32 0.0, %v2913
  %v2915 = vpop.f32.mrf.mxu0
  %v2916 = vadd.f32 0.0, %v2915
  %2917 = vmatmul.bf16.gmra.mxu0 %v2741
  %v2918 = vpop.f32.mrf.mxu0
  %v2919 = vadd.f32 0.0, %v2918
  %v2920 = vpop.f32.mrf.mxu0
  %v2921 = vadd.f32 0.0, %v2920
  %2922 = vdwg.mxu0
  %2923 = vmatpush.bf16.msra.mxu0 0
  %2924 = vmatpush.bf16.msra.mxu0 0
  %2925 = vmatpush.bf16.msra.mxu0 0
  %2926 = vmatpush.bf16.msra.mxu0 0
  %2927 = vmatpush.bf16.msra.mxu0 0
  %2928 = vmatpush.bf16.msra.mxu0 0
  %2929 = vmatpush.bf16.msra.mxu0 0
  %2930 = vmatpush.bf16.msra.mxu0 %v2711
  %2931 = vmatmul.bf16.gmra.mxu0 %v2747
  %v2932 = vpop.f32.mrf.mxu0
  %v2933 = vadd.f32 %v2909, %v2932
  %v2934 = vpop.f32.mrf.mxu0
  %v2935 = vadd.f32 %v2911, %v2934
  %2936 = vmatmul.bf16.gmra.mxu0 %v2750
  %v2937 = vpop.f32.mrf.mxu0
  %v2938 = vadd.f32 %v2914, %v2937
  %v2939 = vpop.f32.mrf.mxu0
  %v2940 = vadd.f32 %v2916, %v2939
  %2941 = vmatmul.bf16.gmra.mxu0 %v2753
  %v2942 = vpop.f32.mrf.mxu0
  %v2943 = vadd.f32 %v2919, %v2942
  %v2944 = vpop.f32.mrf.mxu0
  %v2945 = vadd.f32 %v2921, %v2944
  %2946 = vdwg.mxu0
  %s2947 = scalar_lea.vmem %s7, 32
  %v2948 = vld [vmem:[%s2947] sm:$0xff]
  %2950 = vset.pattern.permute.xlu0 0
  %2951 = vperm.xlu0 %2950, %v2948
  %v2952 = vpop.permute.xlu0 %2951
  %v2954 = vadd.f32 %v2789, %v2952
  %v2955 = vadd.f32 %v2837, %v2952
  %v2956 = vadd.f32 %v2885, %v2952
  %v2957 = vadd.f32 %v2933, %v2952
  %v2958 = vmul.f32 %v2954, 0.2
  %v2959 = vmul.f32 %v2955, 0.2
  %v2960 = vmul.f32 %v2956, 0.2
  %v2961 = vmul.f32 %v2957, 0.2
  %v2962 = vmax.f32 %v2954, %v2958
  %v2963 = vmax.f32 %v2955, %v2959
  %v2964 = vmax.f32 %v2956, %v2960
  %v2965 = vmax.f32 %v2957, %v2961
  %2966 = vrot.lane.b32.xlu0 %v2962, 17
  %v2967 = vpop.permute.xlu0 %2966
  %2968 = vrot.lane.b32.xlu0 %v2963, 17
  %v2969 = vpop.permute.xlu0 %2968
  %2970 = vrot.lane.b32.xlu0 %v2964, 17
  %v2971 = vpop.permute.xlu0 %2970
  %2972 = vrot.lane.b32.xlu0 %v2965, 17
  %v2973 = vpop.permute.xlu0 %2972
  %v2974 = vsel %vm74, %v2971, %v2973
  %v2975 = vsel %vm74, %v2969, %v2971
  %v2976 = vsel %vm74, %v2967, %v2969
  %v2977 = vsel %vm74, %v2973, %v2967
  %v2978 = vmul.f32 %v2977, %v84
  %v2979 = vmul.f32 %v2976, %v85
  %v2980 = vmul.f32 %v2975, %v86
  %v2981 = vmul.f32 %v2974, %v87
  %2982 = vst [vmem:[#allocation2] sm:$0xff] %v2978
  %2983 = vst [vmem:[#allocation2 + $0x8] sm:$0xff] %v2979
  %2984 = vst [vmem:[#allocation2 + $0x10] sm:$0xff] %v2980
  %2985 = vst [vmem:[#allocation2 + $0x18] sm:$0xff] %v2981
  %2986 = vrot.lane.b32.xlu0 %v2962, 16
  %v2987 = vpop.permute.xlu0 %2986
  %2988 = vrot.lane.b32.xlu0 %v2963, 16
  %v2989 = vpop.permute.xlu0 %2988
  %2990 = vrot.lane.b32.xlu0 %v2964, 16
  %v2991 = vpop.permute.xlu0 %2990
  %2992 = vrot.lane.b32.xlu0 %v2965, 16
  %v2993 = vpop.permute.xlu0 %2992
  %v2994 = vsel %vm124, %v2991, %v2993
  %v2995 = vsel %vm124, %v2989, %v2991
  %v2996 = vsel %vm124, %v2987, %v2989
  %v2997 = vsel %vm124, %v2993, %v2987
  %v2998 = vmul.f32 %v2997, %v134
  %v2999 = vmul.f32 %v2996, %v135
  %v3000 = vmul.f32 %v2995, %v136
  %v3001 = vmul.f32 %v2994, %v137
  %3002 = vst [vmem:[#allocation2 + $0x20] sm:$0xff] %v2998
  %3003 = vst [vmem:[#allocation2 + $0x28] sm:$0xff] %v2999
  %3004 = vst [vmem:[#allocation2 + $0x30] sm:$0xff] %v3000
  %3005 = vst [vmem:[#allocation2 + $0x38] sm:$0xff] %v3001
  %3006 = vrot.lane.b32.xlu0 %v2962, 15
  %v3007 = vpop.permute.xlu0 %3006
  %3008 = vrot.lane.b32.xlu0 %v2963, 15
  %v3009 = vpop.permute.xlu0 %3008
  %3010 = vrot.lane.b32.xlu0 %v2964, 15
  %v3011 = vpop.permute.xlu0 %3010
  %3012 = vrot.lane.b32.xlu0 %v2965, 15
  %v3013 = vpop.permute.xlu0 %3012
  %v3014 = vsel %vm174, %v3011, %v3013
  %v3015 = vsel %vm174, %v3009, %v3011
  %v3016 = vsel %vm174, %v3007, %v3009
  %v3017 = vsel %vm174, %v3013, %v3007
  %v3018 = vmul.f32 %v3017, %v184
  %v3019 = vmul.f32 %v3016, %v185
  %v3020 = vmul.f32 %v3015, %v186
  %v3021 = vmul.f32 %v3014, %v187
  %3022 = vst [vmem:[#allocation2 + $0x40] sm:$0xff] %v3018
  %3023 = vst [vmem:[#allocation2 + $0x48] sm:$0xff] %v3019
  %3024 = vst [vmem:[#allocation2 + $0x50] sm:$0xff] %v3020
  %3025 = vst [vmem:[#allocation2 + $0x58] sm:$0xff] %v3021
  %3026 = vrot.lane.b32.xlu0 %v2962, 1
  %v3027 = vpop.permute.xlu0 %3026
  %3028 = vrot.lane.b32.xlu0 %v2963, 1
  %v3029 = vpop.permute.xlu0 %3028
  %3030 = vrot.lane.b32.xlu0 %v2964, 1
  %v3031 = vpop.permute.xlu0 %3030
  %3032 = vrot.lane.b32.xlu0 %v2965, 1
  %v3033 = vpop.permute.xlu0 %3032
  %v3034 = vsel %vm224, %v3031, %v3033
  %v3035 = vsel %vm224, %v3029, %v3031
  %v3036 = vsel %vm224, %v3027, %v3029
  %v3037 = vsel %vm224, %v3033, %v3027
  %v3038 = vmul.f32 %v3037, %v234
  %v3039 = vmul.f32 %v3036, %v235
  %v3040 = vmul.f32 %v3035, %v236
  %v3041 = vmul.f32 %v3034, %v237
  %3042 = vst [vmem:[#allocation2 + $0x60] sm:$0xff] %v3038
  %3043 = vst [vmem:[#allocation2 + $0x68] sm:$0xff] %v3039
  %3044 = vst [vmem:[#allocation2 + $0x70] sm:$0xff] %v3040
  %3045 = vst [vmem:[#allocation2 + $0x78] sm:$0xff] %v3041
  %3046 = vst [vmem:[#allocation2 + $0x80] sm:$0xff] %v2962
  %3047 = vst [vmem:[#allocation2 + $0x88] sm:$0xff] %v2963
  %3048 = vst [vmem:[#allocation2 + $0x90] sm:$0xff] %v2964
  %3049 = vst [vmem:[#allocation2 + $0x98] sm:$0xff] %v2965
  %3050 = vrot.lane.b32.xlu0 %v2962, 127
  %v3051 = vpop.permute.xlu0 %3050
  %3052 = vrot.lane.b32.xlu0 %v2963, 127
  %v3053 = vpop.permute.xlu0 %3052
  %3054 = vrot.lane.b32.xlu0 %v2964, 127
  %v3055 = vpop.permute.xlu0 %3054
  %3056 = vrot.lane.b32.xlu0 %v2965, 127
  %v3057 = vpop.permute.xlu0 %3056
  %v3058 = vsel %vm282, %v3055, %v3057
  %v3059 = vsel %vm282, %v3053, %v3055
  %v3060 = vsel %vm282, %v3051, %v3053
  %v3061 = vsel %vm282, %v3057, %v3051
  %v3062 = vmul.f32 %v3060, %v292
  %v3063 = vmul.f32 %v3059, %v293
  %v3064 = vmul.f32 %v3058, %v294
  %v3065 = vmul.f32 %v3061, %v295
  %3066 = vst [vmem:[#allocation2 + $0xa0] sm:$0xff] %v3062
  %3067 = vst [vmem:[#allocation2 + $0xa8] sm:$0xff] %v3063
  %3068 = vst [vmem:[#allocation2 + $0xb0] sm:$0xff] %v3064
  %3069 = vst [vmem:[#allocation2 + $0xb8] sm:$0xff] %v3065
  %3070 = vrot.lane.b32.xlu0 %v2962, 113
  %v3071 = vpop.permute.xlu0 %3070
  %3072 = vrot.lane.b32.xlu0 %v2963, 113
  %v3073 = vpop.permute.xlu0 %3072
  %3074 = vrot.lane.b32.xlu0 %v2964, 113
  %v3075 = vpop.permute.xlu0 %3074
  %3076 = vrot.lane.b32.xlu0 %v2965, 113
  %v3077 = vpop.permute.xlu0 %3076
  %v3078 = vsel %vm332, %v3075, %v3077
  %v3079 = vsel %vm332, %v3073, %v3075
  %v3080 = vsel %vm332, %v3071, %v3073
  %v3081 = vsel %vm332, %v3077, %v3071
  %v3082 = vmul.f32 %v3080, %v342
  %v3083 = vmul.f32 %v3079, %v343
  %v3084 = vmul.f32 %v3078, %v344
  %v3085 = vmul.f32 %v3081, %v345
  %3086 = vst [vmem:[#allocation2 + $0xc0] sm:$0xff] %v3082
  %3087 = vst [vmem:[#allocation2 + $0xc8] sm:$0xff] %v3083
  %3088 = vst [vmem:[#allocation2 + $0xd0] sm:$0xff] %v3084
  %3089 = vst [vmem:[#allocation2 + $0xd8] sm:$0xff] %v3085
  %3090 = vrot.lane.b32.xlu0 %v2962, 112
  %v3091 = vpop.permute.xlu0 %3090
  %3092 = vrot.lane.b32.xlu0 %v2963, 112
  %v3093 = vpop.permute.xlu0 %3092
  %3094 = vrot.lane.b32.xlu0 %v2964, 112
  %v3095 = vpop.permute.xlu0 %3094
  %3096 = vrot.lane.b32.xlu0 %v2965, 112
  %v3097 = vpop.permute.xlu0 %3096
  %v3098 = vsel %vm382, %v3095, %v3097
  %v3099 = vsel %vm382, %v3093, %v3095
  %v3100 = vsel %vm382, %v3091, %v3093
  %v3101 = vsel %vm382, %v3097, %v3091
  %v3102 = vmul.f32 %v3100, %v392
  %v3103 = vmul.f32 %v3099, %v393
  %v3104 = vmul.f32 %v3098, %v394
  %v3105 = vmul.f32 %v3101, %v395
  %3106 = vst [vmem:[#allocation2 + $0xe0] sm:$0xff] %v3102
  %3107 = vst [vmem:[#allocation2 + $0xe8] sm:$0xff] %v3103
  %3108 = vst [vmem:[#allocation2 + $0xf0] sm:$0xff] %v3104
  %3109 = vst [vmem:[#allocation2 + $0xf8] sm:$0xff] %v3105
  %3110 = vrot.lane.b32.xlu0 %v2962, 111
  %v3111 = vpop.permute.xlu0 %3110
  %3112 = vrot.lane.b32.xlu0 %v2963, 111
  %v3113 = vpop.permute.xlu0 %3112
  %3114 = vrot.lane.b32.xlu0 %v2964, 111
  %v3115 = vpop.permute.xlu0 %3114
  %3116 = vrot.lane.b32.xlu0 %v2965, 111
  %v3117 = vpop.permute.xlu0 %3116
  %v3118 = vsel %vm432, %v3115, %v3117
  %v3119 = vsel %vm432, %v3113, %v3115
  %v3120 = vsel %vm432, %v3111, %v3113
  %v3121 = vsel %vm432, %v3117, %v3111
  %v3122 = vmul.f32 %v3120, %v442
  %v3123 = vmul.f32 %v3119, %v443
  %v3124 = vmul.f32 %v3118, %v444
  %v3125 = vmul.f32 %v3121, %v445
  %3126 = vst [vmem:[#allocation2 + $0x100] sm:$0xff] %v3122
  %3127 = vst [vmem:[#allocation2 + $0x108] sm:$0xff] %v3123
  %3128 = vst [vmem:[#allocation2 + $0x110] sm:$0xff] %v3124
  %3129 = vst [vmem:[#allocation2 + $0x118] sm:$0xff] %v3125
  %v3130 = vld [vmem:[#allocation2] sm:$0xff]
  %v3131 = vld [vmem:[#allocation2 + $0x8] sm:$0xff]
  %v3132 = vld [vmem:[#allocation2 + $0x10] sm:$0xff]
  %v3133 = vld [vmem:[#allocation2 + $0x18] sm:$0xff]
  %v3134 = vld [vmem:[#allocation2 + $0x20] sm:$0xff]
  %v3135 = vld [vmem:[#allocation2 + $0x28] sm:$0xff]
  %v3136 = vld [vmem:[#allocation2 + $0x30] sm:$0xff]
  %v3137 = vld [vmem:[#allocation2 + $0x38] sm:$0xff]
  %v3138 = vld [vmem:[#allocation2 + $0x40] sm:$0xff]
  %v3139 = vld [vmem:[#allocation2 + $0x48] sm:$0xff]
  %v3140 = vld [vmem:[#allocation2 + $0x50] sm:$0xff]
  %v3141 = vld [vmem:[#allocation2 + $0x58] sm:$0xff]
  %v3142 = vld [vmem:[#allocation2 + $0x60] sm:$0xff]
  %v3143 = vld [vmem:[#allocation2 + $0x68] sm:$0xff]
  %v3144 = vld [vmem:[#allocation2 + $0x70] sm:$0xff]
  %v3145 = vld [vmem:[#allocation2 + $0x78] sm:$0xff]
  %v3146 = vld [vmem:[#allocation2 + $0x80] sm:$0xff]
  %v3147 = vld [vmem:[#allocation2 + $0x88] sm:$0xff]
  %v3148 = vld [vmem:[#allocation2 + $0x90] sm:$0xff]
  %v3149 = vld [vmem:[#allocation2 + $0x98] sm:$0xff]
  %v3150 = vld [vmem:[#allocation2 + $0xa0] sm:$0xff]
  %v3151 = vld [vmem:[#allocation2 + $0xa8] sm:$0xff]
  %v3152 = vld [vmem:[#allocation2 + $0xb0] sm:$0xff]
  %v3153 = vld [vmem:[#allocation2 + $0xb8] sm:$0xff]
  %v3154 = vld [vmem:[#allocation2 + $0xc0] sm:$0xff]
  %v3155 = vld [vmem:[#allocation2 + $0xc8] sm:$0xff]
  %v3156 = vld [vmem:[#allocation2 + $0xd0] sm:$0xff]
  %v3157 = vld [vmem:[#allocation2 + $0xd8] sm:$0xff]
  %v3158 = vld [vmem:[#allocation2 + $0xe0] sm:$0xff]
  %v3159 = vld [vmem:[#allocation2 + $0xe8] sm:$0xff]
  %v3160 = vld [vmem:[#allocation2 + $0xf0] sm:$0xff]
  %v3161 = vld [vmem:[#allocation2 + $0xf8] sm:$0xff]
  %v3162 = vld [vmem:[#allocation2 + $0x100] sm:$0xff]
  %v3163 = vld [vmem:[#allocation2 + $0x108] sm:$0xff]
  %v3164 = vld [vmem:[#allocation2 + $0x110] sm:$0xff]
  %v3165 = vld [vmem:[#allocation2 + $0x118] sm:$0xff]
  %v3166 = vpack.c.bf16 %v3134, %v3130
  %v3167 = vpack.c.bf16 %v3135, %v3131
  %v3168 = vpack.c.bf16 %v3136, %v3132
  %v3169 = vpack.c.bf16 %v3137, %v3133
  %v3170 = vpack.c.bf16 %v3142, %v3138
  %v3171 = vpack.c.bf16 %v3143, %v3139
  %v3172 = vpack.c.bf16 %v3144, %v3140
  %v3173 = vpack.c.bf16 %v3145, %v3141
  %v3174 = vpack.c.bf16 %v3150, %v3146
  %v3175 = vpack.c.bf16 %v3151, %v3147
  %v3176 = vpack.c.bf16 %v3152, %v3148
  %v3177 = vpack.c.bf16 %v3153, %v3149
  %v3178 = vpack.c.bf16 %v3158, %v3154
  %v3179 = vpack.c.bf16 %v3159, %v3155
  %v3180 = vpack.c.bf16 %v3160, %v3156
  %v3181 = vpack.c.bf16 %v3161, %v3157
  %v3182 = vpack.c.bf16 %v3162, %v3162
  %v3183 = vpack.c.bf16 %v3163, %v3163
  %v3184 = vpack.c.bf16 %v3164, %v3164
  %v3185 = vpack.c.bf16 %v3165, %v3165
  %s3186 = scalar_lea.vmem %s3, 20
  %v3187 = vld [vmem:[%s3186] sm:$0xf]
  %v3188 = vld [vmem:[%s3186 + $0x4] sm:$0xf]
  %v3189 = vld [vmem:[%s3186 + $0x8] sm:$0xf]
  %v3190 = vld [vmem:[%s3186 + $0xc] sm:$0xf]
  %v3191 = vld [vmem:[%s3186 + $0x10] sm:$0xf]
  %v3197 = vunpack.c.l.b16 %v3187
  %v3198 = vunpack.c.l.b16 %v3188
  %v3199 = vunpack.c.l.b16 %v3189
  %v3200 = vunpack.c.l.b16 %v3190
  %v3201 = vunpack.c.l.b16 %v3191
  %v3202 = vpack.c.b16 %v3198, %v3197
  %v3203 = vpack.c.b16 %v3200, %v3199
  %v3204 = vpack.c.b16 %v3201, %v3201
  %v3206 = vsel %vm1065, %v3202, 0
  %v3209 = vsel %vm1065, %v3203, 0
  %v3212 = vsel %vm1065, %v3204, 0
  %v3215 = vsel %vm1075, %v3182, 0
  %v3218 = vsel %vm1075, %v3183, 0
  %v3221 = vsel %vm1075, %v3184, 0
  %v3224 = vsel %vm1075, %v3185, 0
  %3226 = vmatpush.bf16.msra.mxu0 0
  %3227 = vmatpush.bf16.msra.mxu0 0
  %3228 = vmatpush.bf16.msra.mxu0 0
  %3229 = vmatpush.bf16.msra.mxu0 %v3215
  %3230 = vmatpush.bf16.msra.mxu0 %v3178
  %3231 = vmatpush.bf16.msra.mxu0 %v3174
  %3232 = vmatpush.bf16.msra.mxu0 %v3170
  %3233 = vmatpush.bf16.msra.mxu0 %v3166
  %3234 = vmatmul.bf16.gmra.mxu0 %v3206
  %v3235 = vpop.f32.mrf.mxu0
  %v3236 = vadd.f32 0.0, %v3235
  %v3237 = vpop.f32.mrf.mxu0
  %v3238 = vadd.f32 0.0, %v3237
  %3239 = vmatmul.bf16.gmra.mxu0 %v3209
  %v3240 = vpop.f32.mrf.mxu0
  %v3241 = vadd.f32 0.0, %v3240
  %v3242 = vpop.f32.mrf.mxu0
  %v3243 = vadd.f32 0.0, %v3242
  %3244 = vmatmul.bf16.gmra.mxu0 %v3212
  %v3245 = vpop.f32.mrf.mxu0
  %v3246 = vadd.f32 0.0, %v3245
  %v3247 = vpop.f32.mrf.mxu0
  %3248 = vdwg.mxu0
  %3249 = vmatpush.bf16.msra.mxu0 0
  %3250 = vmatpush.bf16.msra.mxu0 0
  %3251 = vmatpush.bf16.msra.mxu0 0
  %3252 = vmatpush.bf16.msra.mxu0 %v3218
  %3253 = vmatpush.bf16.msra.mxu0 %v3179
  %3254 = vmatpush.bf16.msra.mxu0 %v3175
  %3255 = vmatpush.bf16.msra.mxu0 %v3171
  %3256 = vmatpush.bf16.msra.mxu0 %v3167
  %3257 = vmatmul.bf16.gmra.mxu0 %v3206
  %v3258 = vpop.f32.mrf.mxu0
  %v3259 = vadd.f32 0.0, %v3258
  %v3260 = vpop.f32.mrf.mxu0
  %v3261 = vadd.f32 0.0, %v3260
  %3262 = vmatmul.bf16.gmra.mxu0 %v3209
  %v3263 = vpop.f32.mrf.mxu0
  %v3264 = vadd.f32 0.0, %v3263
  %v3265 = vpop.f32.mrf.mxu0
  %v3266 = vadd.f32 0.0, %v3265
  %3267 = vmatmul.bf16.gmra.mxu0 %v3212
  %v3268 = vpop.f32.mrf.mxu0
  %v3269 = vadd.f32 0.0, %v3268
  %v3270 = vpop.f32.mrf.mxu0
  %3271 = vdwg.mxu0
  %3272 = vmatpush.bf16.msra.mxu0 0
  %3273 = vmatpush.bf16.msra.mxu0 0
  %3274 = vmatpush.bf16.msra.mxu0 0
  %3275 = vmatpush.bf16.msra.mxu0 %v3221
  %3276 = vmatpush.bf16.msra.mxu0 %v3180
  %3277 = vmatpush.bf16.msra.mxu0 %v3176
  %3278 = vmatpush.bf16.msra.mxu0 %v3172
  %3279 = vmatpush.bf16.msra.mxu0 %v3168
  %3280 = vmatmul.bf16.gmra.mxu0 %v3206
  %v3281 = vpop.f32.mrf.mxu0
  %v3282 = vadd.f32 0.0, %v3281
  %v3283 = vpop.f32.mrf.mxu0
  %v3284 = vadd.f32 0.0, %v3283
  %3285 = vmatmul.bf16.gmra.mxu0 %v3209
  %v3286 = vpop.f32.mrf.mxu0
  %v3287 = vadd.f32 0.0, %v3286
  %v3288 = vpop.f32.mrf.mxu0
  %v3289 = vadd.f32 0.0, %v3288
  %3290 = vmatmul.bf16.gmra.mxu0 %v3212
  %v3291 = vpop.f32.mrf.mxu0
  %v3292 = vadd.f32 0.0, %v3291
  %v3293 = vpop.f32.mrf.mxu0
  %3294 = vdwg.mxu0
  %3295 = vmatpush.bf16.msra.mxu0 0
  %3296 = vmatpush.bf16.msra.mxu0 0
  %3297 = vmatpush.bf16.msra.mxu0 0
  %3298 = vmatpush.bf16.msra.mxu0 %v3224
  %3299 = vmatpush.bf16.msra.mxu0 %v3181
  %3300 = vmatpush.bf16.msra.mxu0 %v3177
  %3301 = vmatpush.bf16.msra.mxu0 %v3173
  %3302 = vmatpush.bf16.msra.mxu0 %v3169
  %3303 = vmatmul.bf16.gmra.mxu0 %v3206
  %v3304 = vpop.f32.mrf.mxu0
  %v3305 = vadd.f32 0.0, %v3304
  %v3306 = vpop.f32.mrf.mxu0
  %v3307 = vadd.f32 0.0, %v3306
  %3308 = vmatmul.bf16.gmra.mxu0 %v3209
  %v3309 = vpop.f32.mrf.mxu0
  %v3310 = vadd.f32 0.0, %v3309
  %v3311 = vpop.f32.mrf.mxu0
  %v3312 = vadd.f32 0.0, %v3311
  %3313 = vmatmul.bf16.gmra.mxu0 %v3212
  %v3314 = vpop.f32.mrf.mxu0
  %v3315 = vadd.f32 0.0, %v3314
  %v3316 = vpop.f32.mrf.mxu0
  %3317 = vdwg.mxu0
  %v3318 = vadd.f32 %v2791, %v3236
  %v3319 = vadd.f32 %v2839, %v3259
  %v3320 = vadd.f32 %v2887, %v3282
  %v3321 = vadd.f32 %v2935, %v3305
  %v3322 = vadd.f32 %v2794, %v3238
  %v3323 = vadd.f32 %v2842, %v3261
  %v3324 = vadd.f32 %v2890, %v3284
  %v3325 = vadd.f32 %v2938, %v3307
  %v3326 = vadd.f32 %v2796, %v3241
  %v3327 = vadd.f32 %v2844, %v3264
  %v3328 = vadd.f32 %v2892, %v3287
  %v3329 = vadd.f32 %v2940, %v3310
  %v3330 = vadd.f32 %v2799, %v3243
  %v3331 = vadd.f32 %v2847, %v3266
  %v3332 = vadd.f32 %v2895, %v3289
  %v3333 = vadd.f32 %v2943, %v3312
  %v3334 = vadd.f32 %v2801, %v3246
  %v3335 = vadd.f32 %v2849, %v3269
  %v3336 = vadd.f32 %v2897, %v3292
  %v3337 = vadd.f32 %v2945, %v3315
  %s3338 = scalar_lea.vmem %s7, 40
  %v3339 = vld [vmem:[%s3338] sm:$0xff]
  %3341 = vset.pattern.permute.xlu0 0
  %3342 = vperm.xlu0 %3341, %v3339
  %v3343 = vpop.permute.xlu0 %3342
  %v3345 = vadd.f32 %v3318, %v3343
  %v3346 = vadd.f32 %v3319, %v3343
  %v3347 = vadd.f32 %v3320, %v3343
  %v3348 = vadd.f32 %v3321, %v3343
  %v3349 = vmul.f32 %v3345, 0.2
  %v3350 = vmul.f32 %v3346, 0.2
  %v3351 = vmul.f32 %v3347, 0.2
  %v3352 = vmul.f32 %v3348, 0.2
  %v3353 = vmax.f32 %v3345, %v3349
  %v3354 = vmax.f32 %v3346, %v3350
  %v3355 = vmax.f32 %v3347, %v3351
  %v3356 = vmax.f32 %v3348, %v3352
  %3357 = vrot.lane.b32.xlu0 %v3353, 17
  %v3358 = vpop.permute.xlu0 %3357
  %3359 = vrot.lane.b32.xlu0 %v3354, 17
  %v3360 = vpop.permute.xlu0 %3359
  %3361 = vrot.lane.b32.xlu0 %v3355, 17
  %v3362 = vpop.permute.xlu0 %3361
  %3363 = vrot.lane.b32.xlu0 %v3356, 17
  %v3364 = vpop.permute.xlu0 %3363
  %v3365 = vsel %vm74, %v3362, %v3364
  %v3366 = vsel %vm74, %v3360, %v3362
  %v3367 = vsel %vm74, %v3358, %v3360
  %v3368 = vsel %vm74, %v3364, %v3358
  %v3369 = vmul.f32 %v3368, %v84
  %v3370 = vmul.f32 %v3367, %v85
  %v3371 = vmul.f32 %v3366, %v86
  %v3372 = vmul.f32 %v3365, %v87
  %3373 = vst [vmem:[#allocation2] sm:$0xff] %v3369
  %3374 = vst [vmem:[#allocation2 + $0x8] sm:$0xff] %v3370
  %3375 = vst [vmem:[#allocation2 + $0x10] sm:$0xff] %v3371
  %3376 = vst [vmem:[#allocation2 + $0x18] sm:$0xff] %v3372
  %3377 = vrot.lane.b32.xlu0 %v3353, 16
  %v3378 = vpop.permute.xlu0 %3377
  %3379 = vrot.lane.b32.xlu0 %v3354, 16
  %v3380 = vpop.permute.xlu0 %3379
  %3381 = vrot.lane.b32.xlu0 %v3355, 16
  %v3382 = vpop.permute.xlu0 %3381
  %3383 = vrot.lane.b32.xlu0 %v3356, 16
  %v3384 = vpop.permute.xlu0 %3383
  %v3385 = vsel %vm124, %v3382, %v3384
  %v3386 = vsel %vm124, %v3380, %v3382
  %v3387 = vsel %vm124, %v3378, %v3380
  %v3388 = vsel %vm124, %v3384, %v3378
  %v3389 = vmul.f32 %v3388, %v134
  %v3390 = vmul.f32 %v3387, %v135
  %v3391 = vmul.f32 %v3386, %v136
  %v3392 = vmul.f32 %v3385, %v137
  %3393 = vst [vmem:[#allocation2 + $0x20] sm:$0xff] %v3389
  %3394 = vst [vmem:[#allocation2 + $0x28] sm:$0xff] %v3390
  %3395 = vst [vmem:[#allocation2 + $0x30] sm:$0xff] %v3391
  %3396 = vst [vmem:[#allocation2 + $0x38] sm:$0xff] %v3392
  %3397 = vrot.lane.b32.xlu0 %v3353, 15
  %v3398 = vpop.permute.xlu0 %3397
  %3399 = vrot.lane.b32.xlu0 %v3354, 15
  %v3400 = vpop.permute.xlu0 %3399
  %3401 = vrot.lane.b32.xlu0 %v3355, 15
  %v3402 = vpop.permute.xlu0 %3401
  %3403 = vrot.lane.b32.xlu0 %v3356, 15
  %v3404 = vpop.permute.xlu0 %3403
  %v3405 = vsel %vm174, %v3402, %v3404
  %v3406 = vsel %vm174, %v3400, %v3402
  %v3407 = vsel %vm174, %v3398, %v3400
  %v3408 = vsel %vm174, %v3404, %v3398
  %v3409 = vmul.f32 %v3408, %v184
  %v3410 = vmul.f32 %v3407, %v185
  %v3411 = vmul.f32 %v3406, %v186
  %v3412 = vmul.f32 %v3405, %v187
  %3413 = vst [vmem:[#allocation2 + $0x40] sm:$0xff] %v3409
  %3414 = vst [vmem:[#allocation2 + $0x48] sm:$0xff] %v3410
  %3415 = vst [vmem:[#allocation2 + $0x50] sm:$0xff] %v3411
  %3416 = vst [vmem:[#allocation2 + $0x58] sm:$0xff] %v3412
  %3417 = vrot.lane.b32.xlu0 %v3353, 1
  %v3418 = vpop.permute.xlu0 %3417
  %3419 = vrot.lane.b32.xlu0 %v3354, 1
  %v3420 = vpop.permute.xlu0 %3419
  %3421 = vrot.lane.b32.xlu0 %v3355, 1
  %v3422 = vpop.permute.xlu0 %3421
  %3423 = vrot.lane.b32.xlu0 %v3356, 1
  %v3424 = vpop.permute.xlu0 %3423
  %v3425 = vsel %vm224, %v3422, %v3424
  %v3426 = vsel %vm224, %v3420, %v3422
  %v3427 = vsel %vm224, %v3418, %v3420
  %v3428 = vsel %vm224, %v3424, %v3418
  %v3429 = vmul.f32 %v3428, %v234
  %v3430 = vmul.f32 %v3427, %v235
  %v3431 = vmul.f32 %v3426, %v236
  %v3432 = vmul.f32 %v3425, %v237
  %3433 = vst [vmem:[#allocation2 + $0x60] sm:$0xff] %v3429
  %3434 = vst [vmem:[#allocation2 + $0x68] sm:$0xff] %v3430
  %3435 = vst [vmem:[#allocation2 + $0x70] sm:$0xff] %v3431
  %3436 = vst [vmem:[#allocation2 + $0x78] sm:$0xff] %v3432
  %3437 = vst [vmem:[#allocation2 + $0x80] sm:$0xff] %v3353
  %3438 = vst [vmem:[#allocation2 + $0x88] sm:$0xff] %v3354
  %3439 = vst [vmem:[#allocation2 + $0x90] sm:$0xff] %v3355
  %3440 = vst [vmem:[#allocation2 + $0x98] sm:$0xff] %v3356
  %3441 = vrot.lane.b32.xlu0 %v3353, 127
  %v3442 = vpop.permute.xlu0 %3441
  %3443 = vrot.lane.b32.xlu0 %v3354, 127
  %v3444 = vpop.permute.xlu0 %3443
  %3445 = vrot.lane.b32.xlu0 %v3355, 127
  %v3446 = vpop.permute.xlu0 %3445
  %3447 = vrot.lane.b32.xlu0 %v3356, 127
  %v3448 = vpop.permute.xlu0 %3447
  %v3449 = vsel %vm282, %v3446, %v3448
  %v3450 = vsel %vm282, %v3444, %v3446
  %v3451 = vsel %vm282, %v3442, %v3444
  %v3452 = vsel %vm282, %v3448, %v3442
  %v3453 = vmul.f32 %v3451, %v292
  %v3454 = vmul.f32 %v3450, %v293
  %v3455 = vmul.f32 %v3449, %v294
  %v3456 = vmul.f32 %v3452, %v295
  %3457 = vst [vmem:[#allocation2 + $0xa0] sm:$0xff] %v3453
  %3458 = vst [vmem:[#allocation2 + $0xa8] sm:$0xff] %v3454
  %3459 = vst [vmem:[#allocation2 + $0xb0] sm:$0xff] %v3455
  %3460 = vst [vmem:[#allocation2 + $0xb8] sm:$0xff] %v3456
  %3461 = vrot.lane.b32.xlu0 %v3353, 113
  %v3462 = vpop.permute.xlu0 %3461
  %3463 = vrot.lane.b32.xlu0 %v3354, 113
  %v3464 = vpop.permute.xlu0 %3463
  %3465 = vrot.lane.b32.xlu0 %v3355, 113
  %v3466 = vpop.permute.xlu0 %3465
  %3467 = vrot.lane.b32.xlu0 %v3356, 113
  %v3468 = vpop.permute.xlu0 %3467
  %v3469 = vsel %vm332, %v3466, %v3468
  %v3470 = vsel %vm332, %v3464, %v3466
  %v3471 = vsel %vm332, %v3462, %v3464
  %v3472 = vsel %vm332, %v3468, %v3462
  %v3473 = vmul.f32 %v3471, %v342
  %v3474 = vmul.f32 %v3470, %v343
  %v3475 = vmul.f32 %v3469, %v344
  %v3476 = vmul.f32 %v3472, %v345
  %3477 = vst [vmem:[#allocation2 + $0xc0] sm:$0xff] %v3473
  %3478 = vst [vmem:[#allocation2 + $0xc8] sm:$0xff] %v3474
  %3479 = vst [vmem:[#allocation2 + $0xd0] sm:$0xff] %v3475
  %3480 = vst [vmem:[#allocation2 + $0xd8] sm:$0xff] %v3476
  %3481 = vrot.lane.b32.xlu0 %v3353, 112
  %v3482 = vpop.permute.xlu0 %3481
  %3483 = vrot.lane.b32.xlu0 %v3354, 112
  %v3484 = vpop.permute.xlu0 %3483
  %3485 = vrot.lane.b32.xlu0 %v3355, 112
  %v3486 = vpop.permute.xlu0 %3485
  %3487 = vrot.lane.b32.xlu0 %v3356, 112
  %v3488 = vpop.permute.xlu0 %3487
  %v3489 = vsel %vm382, %v3486, %v3488
  %v3490 = vsel %vm382, %v3484, %v3486
  %v3491 = vsel %vm382, %v3482, %v3484
  %v3492 = vsel %vm382, %v3488, %v3482
  %v3493 = vmul.f32 %v3491, %v392
  %v3494 = vmul.f32 %v3490, %v393
  %v3495 = vmul.f32 %v3489, %v394
  %v3496 = vmul.f32 %v3492, %v395
  %3497 = vst [vmem:[#allocation2 + $0xe0] sm:$0xff] %v3493
  %3498 = vst [vmem:[#allocation2 + $0xe8] sm:$0xff] %v3494
  %3499 = vst [vmem:[#allocation2 + $0xf0] sm:$0xff] %v3495
  %3500 = vst [vmem:[#allocation2 + $0xf8] sm:$0xff] %v3496
  %3501 = vrot.lane.b32.xlu0 %v3353, 111
  %v3502 = vpop.permute.xlu0 %3501
  %3503 = vrot.lane.b32.xlu0 %v3354, 111
  %v3504 = vpop.permute.xlu0 %3503
  %3505 = vrot.lane.b32.xlu0 %v3355, 111
  %v3506 = vpop.permute.xlu0 %3505
  %3507 = vrot.lane.b32.xlu0 %v3356, 111
  %v3508 = vpop.permute.xlu0 %3507
  %v3509 = vsel %vm432, %v3506, %v3508
  %v3510 = vsel %vm432, %v3504, %v3506
  %v3511 = vsel %vm432, %v3502, %v3504
  %v3512 = vsel %vm432, %v3508, %v3502
  %v3513 = vmul.f32 %v3511, %v442
  %v3514 = vmul.f32 %v3510, %v443
  %v3515 = vmul.f32 %v3509, %v444
  %v3516 = vmul.f32 %v3512, %v445
  %3517 = vst [vmem:[#allocation2 + $0x100] sm:$0xff] %v3513
  %3518 = vst [vmem:[#allocation2 + $0x108] sm:$0xff] %v3514
  %3519 = vst [vmem:[#allocation2 + $0x110] sm:$0xff] %v3515
  %3520 = vst [vmem:[#allocation2 + $0x118] sm:$0xff] %v3516
  %v3521 = vld [vmem:[#allocation2] sm:$0xff]
  %v3522 = vld [vmem:[#allocation2 + $0x8] sm:$0xff]
  %v3523 = vld [vmem:[#allocation2 + $0x10] sm:$0xff]
  %v3524 = vld [vmem:[#allocation2 + $0x18] sm:$0xff]
  %v3525 = vld [vmem:[#allocation2 + $0x20] sm:$0xff]
  %v3526 = vld [vmem:[#allocation2 + $0x28] sm:$0xff]
  %v3527 = vld [vmem:[#allocation2 + $0x30] sm:$0xff]
  %v3528 = vld [vmem:[#allocation2 + $0x38] sm:$0xff]
  %v3529 = vld [vmem:[#allocation2 + $0x40] sm:$0xff]
  %v3530 = vld [vmem:[#allocation2 + $0x48] sm:$0xff]
  %v3531 = vld [vmem:[#allocation2 + $0x50] sm:$0xff]
  %v3532 = vld [vmem:[#allocation2 + $0x58] sm:$0xff]
  %v3533 = vld [vmem:[#allocation2 + $0x60] sm:$0xff]
  %v3534 = vld [vmem:[#allocation2 + $0x68] sm:$0xff]
  %v3535 = vld [vmem:[#allocation2 + $0x70] sm:$0xff]
  %v3536 = vld [vmem:[#allocation2 + $0x78] sm:$0xff]
  %v3537 = vld [vmem:[#allocation2 + $0x80] sm:$0xff]
  %v3538 = vld [vmem:[#allocation2 + $0x88] sm:$0xff]
  %v3539 = vld [vmem:[#allocation2 + $0x90] sm:$0xff]
  %v3540 = vld [vmem:[#allocation2 + $0x98] sm:$0xff]
  %v3541 = vld [vmem:[#allocation2 + $0xa0] sm:$0xff]
  %v3542 = vld [vmem:[#allocation2 + $0xa8] sm:$0xff]
  %v3543 = vld [vmem:[#allocation2 + $0xb0] sm:$0xff]
  %v3544 = vld [vmem:[#allocation2 + $0xb8] sm:$0xff]
  %v3545 = vld [vmem:[#allocation2 + $0xc0] sm:$0xff]
  %v3546 = vld [vmem:[#allocation2 + $0xc8] sm:$0xff]
  %v3547 = vld [vmem:[#allocation2 + $0xd0] sm:$0xff]
  %v3548 = vld [vmem:[#allocation2 + $0xd8] sm:$0xff]
  %v3549 = vld [vmem:[#allocation2 + $0xe0] sm:$0xff]
  %v3550 = vld [vmem:[#allocation2 + $0xe8] sm:$0xff]
  %v3551 = vld [vmem:[#allocation2 + $0xf0] sm:$0xff]
  %v3552 = vld [vmem:[#allocation2 + $0xf8] sm:$0xff]
  %v3553 = vld [vmem:[#allocation2 + $0x100] sm:$0xff]
  %v3554 = vld [vmem:[#allocation2 + $0x108] sm:$0xff]
  %v3555 = vld [vmem:[#allocation2 + $0x110] sm:$0xff]
  %v3556 = vld [vmem:[#allocation2 + $0x118] sm:$0xff]
  %v3557 = vpack.c.bf16 %v3525, %v3521
  %v3558 = vpack.c.bf16 %v3526, %v3522
  %v3559 = vpack.c.bf16 %v3527, %v3523
  %v3560 = vpack.c.bf16 %v3528, %v3524
  %v3561 = vpack.c.bf16 %v3533, %v3529
  %v3562 = vpack.c.bf16 %v3534, %v3530
  %v3563 = vpack.c.bf16 %v3535, %v3531
  %v3564 = vpack.c.bf16 %v3536, %v3532
  %v3565 = vpack.c.bf16 %v3541, %v3537
  %v3566 = vpack.c.bf16 %v3542, %v3538
  %v3567 = vpack.c.bf16 %v3543, %v3539
  %v3568 = vpack.c.bf16 %v3544, %v3540
  %v3569 = vpack.c.bf16 %v3549, %v3545
  %v3570 = vpack.c.bf16 %v3550, %v3546
  %v3571 = vpack.c.bf16 %v3551, %v3547
  %v3572 = vpack.c.bf16 %v3552, %v3548
  %v3573 = vpack.c.bf16 %v3553, %v3553
  %v3574 = vpack.c.bf16 %v3554, %v3554
  %v3575 = vpack.c.bf16 %v3555, %v3555
  %v3576 = vpack.c.bf16 %v3556, %v3556
  %s3577 = scalar_lea.vmem %s4, 16
  %v3578 = vld [vmem:[%s3577] sm:$0xf]
  %v3579 = vld [vmem:[%s3577 + $0x4] sm:$0xf]
  %v3580 = vld [vmem:[%s3577 + $0x8] sm:$0xf]
  %v3581 = vld [vmem:[%s3577 + $0xc] sm:$0xf]
  %v3586 = vunpack.c.l.b16 %v3578
  %v3587 = vunpack.c.l.b16 %v3579
  %v3588 = vunpack.c.l.b16 %v3580
  %v3589 = vunpack.c.l.b16 %v3581
  %v3590 = vpack.c.b16 %v3587, %v3586
  %v3591 = vpack.c.b16 %v3589, %v3588
  %v3593 = vsel %vm1065, %v3590, 0
  %v3596 = vsel %vm1065, %v3591, 0
  %v3599 = vsel %vm1075, %v3573, 0
  %v3602 = vsel %vm1075, %v3574, 0
  %v3605 = vsel %vm1075, %v3575, 0
  %v3608 = vsel %vm1075, %v3576, 0
  %3610 = vmatpush.bf16.msra.mxu0 0
  %3611 = vmatpush.bf16.msra.mxu0 0
  %3612 = vmatpush.bf16.msra.mxu0 0
  %3613 = vmatpush.bf16.msra.mxu0 %v3599
  %3614 = vmatpush.bf16.msra.mxu0 %v3569
  %3615 = vmatpush.bf16.msra.mxu0 %v3565
  %3616 = vmatpush.bf16.msra.mxu0 %v3561
  %3617 = vmatpush.bf16.msra.mxu0 %v3557
  %3618 = vmatmul.bf16.gmra.mxu0 %v3593
  %v3619 = vpop.f32.mrf.mxu0
  %v3620 = vadd.f32 0.0, %v3619
  %v3621 = vpop.f32.mrf.mxu0
  %v3622 = vadd.f32 0.0, %v3621
  %3623 = vmatmul.bf16.gmra.mxu0 %v3596
  %v3624 = vpop.f32.mrf.mxu0
  %v3625 = vadd.f32 0.0, %v3624
  %v3626 = vpop.f32.mrf.mxu0
  %v3627 = vadd.f32 0.0, %v3626
  %3628 = vdwg.mxu0
  %3629 = vmatpush.bf16.msra.mxu0 0
  %3630 = vmatpush.bf16.msra.mxu0 0
  %3631 = vmatpush.bf16.msra.mxu0 0
  %3632 = vmatpush.bf16.msra.mxu0 %v3602
  %3633 = vmatpush.bf16.msra.mxu0 %v3570
  %3634 = vmatpush.bf16.msra.mxu0 %v3566
  %3635 = vmatpush.bf16.msra.mxu0 %v3562
  %3636 = vmatpush.bf16.msra.mxu0 %v3558
  %3637 = vmatmul.bf16.gmra.mxu0 %v3593
  %v3638 = vpop.f32.mrf.mxu0
  %v3639 = vadd.f32 0.0, %v3638
  %v3640 = vpop.f32.mrf.mxu0
  %v3641 = vadd.f32 0.0, %v3640
  %3642 = vmatmul.bf16.gmra.mxu0 %v3596
  %v3643 = vpop.f32.mrf.mxu0
  %v3644 = vadd.f32 0.0, %v3643
  %v3645 = vpop.f32.mrf.mxu0
  %v3646 = vadd.f32 0.0, %v3645
  %3647 = vdwg.mxu0
  %3648 = vmatpush.bf16.msra.mxu0 0
  %3649 = vmatpush.bf16.msra.mxu0 0
  %3650 = vmatpush.bf16.msra.mxu0 0
  %3651 = vmatpush.bf16.msra.mxu0 %v3605
  %3652 = vmatpush.bf16.msra.mxu0 %v3571
  %3653 = vmatpush.bf16.msra.mxu0 %v3567
  %3654 = vmatpush.bf16.msra.mxu0 %v3563
  %3655 = vmatpush.bf16.msra.mxu0 %v3559
  %3656 = vmatmul.bf16.gmra.mxu0 %v3593
  %v3657 = vpop.f32.mrf.mxu0
  %v3658 = vadd.f32 0.0, %v3657
  %v3659 = vpop.f32.mrf.mxu0
  %v3660 = vadd.f32 0.0, %v3659
  %3661 = vmatmul.bf16.gmra.mxu0 %v3596
  %v3662 = vpop.f32.mrf.mxu0
  %v3663 = vadd.f32 0.0, %v3662
  %v3664 = vpop.f32.mrf.mxu0
  %v3665 = vadd.f32 0.0, %v3664
  %3666 = vdwg.mxu0
  %3667 = vmatpush.bf16.msra.mxu0 0
  %3668 = vmatpush.bf16.msra.mxu0 0
  %3669 = vmatpush.bf16.msra.mxu0 0
  %3670 = vmatpush.bf16.msra.mxu0 %v3608
  %3671 = vmatpush.bf16.msra.mxu0 %v3572
  %3672 = vmatpush.bf16.msra.mxu0 %v3568
  %3673 = vmatpush.bf16.msra.mxu0 %v3564
  %3674 = vmatpush.bf16.msra.mxu0 %v3560
  %3675 = vmatmul.bf16.gmra.mxu0 %v3593
  %v3676 = vpop.f32.mrf.mxu0
  %v3677 = vadd.f32 0.0, %v3676
  %v3678 = vpop.f32.mrf.mxu0
  %v3679 = vadd.f32 0.0, %v3678
  %3680 = vmatmul.bf16.gmra.mxu0 %v3596
  %v3681 = vpop.f32.mrf.mxu0
  %v3682 = vadd.f32 0.0, %v3681
  %v3683 = vpop.f32.mrf.mxu0
  %v3684 = vadd.f32 0.0, %v3683
  %3685 = vdwg.mxu0
  %v3686 = vadd.f32 %v3322, %v3620
  %v3687 = vadd.f32 %v3323, %v3639
  %v3688 = vadd.f32 %v3324, %v3658
  %v3689 = vadd.f32 %v3325, %v3677
  %v3690 = vadd.f32 %v3326, %v3622
  %v3691 = vadd.f32 %v3327, %v3641
  %v3692 = vadd.f32 %v3328, %v3660
  %v3693 = vadd.f32 %v3329, %v3679
  %v3694 = vadd.f32 %v3330, %v3625
  %v3695 = vadd.f32 %v3331, %v3644
  %v3696 = vadd.f32 %v3332, %v3663
  %v3697 = vadd.f32 %v3333, %v3682
  %v3698 = vadd.f32 %v3334, %v3627
  %v3699 = vadd.f32 %v3335, %v3646
  %v3700 = vadd.f32 %v3336, %v3665
  %v3701 = vadd.f32 %v3337, %v3684
  %s3702 = scalar_lea.vmem %s7, 48
  %v3703 = vld [vmem:[%s3702] sm:$0xff]
  %3705 = vset.pattern.permute.xlu0 0
  %3706 = vperm.xlu0 %3705, %v3703
  %v3707 = vpop.permute.xlu0 %3706
  %v3709 = vadd.f32 %v3686, %v3707
  %v3710 = vadd.f32 %v3687, %v3707
  %v3711 = vadd.f32 %v3688, %v3707
  %v3712 = vadd.f32 %v3689, %v3707
  %v3713 = vmul.f32 %v3709, 0.2
  %v3714 = vmul.f32 %v3710, 0.2
  %v3715 = vmul.f32 %v3711, 0.2
  %v3716 = vmul.f32 %v3712, 0.2
  %v3717 = vmax.f32 %v3709, %v3713
  %v3718 = vmax.f32 %v3710, %v3714
  %v3719 = vmax.f32 %v3711, %v3715
  %v3720 = vmax.f32 %v3712, %v3716
  %3721 = vrot.lane.b32.xlu0 %v3717, 17
  %v3722 = vpop.permute.xlu0 %3721
  %3723 = vrot.lane.b32.xlu0 %v3718, 17
  %v3724 = vpop.permute.xlu0 %3723
  %3725 = vrot.lane.b32.xlu0 %v3719, 17
  %v3726 = vpop.permute.xlu0 %3725
  %3727 = vrot.lane.b32.xlu0 %v3720, 17
  %v3728 = vpop.permute.xlu0 %3727
  %v3729 = vsel %vm74, %v3726, %v3728
  %v3730 = vsel %vm74, %v3724, %v3726
  %v3731 = vsel %vm74, %v3722, %v3724
  %v3732 = vsel %vm74, %v3728, %v3722
  %v3733 = vmul.f32 %v3732, %v84
  %v3734 = vmul.f32 %v3731, %v85
  %v3735 = vmul.f32 %v3730, %v86
  %v3736 = vmul.f32 %v3729, %v87
  %3737 = vst [vmem:[#allocation2] sm:$0xff] %v3733
  %3738 = vst [vmem:[#allocation2 + $0x8] sm:$0xff] %v3734
  %3739 = vst [vmem:[#allocation2 + $0x10] sm:$0xff] %v3735
  %3740 = vst [vmem:[#allocation2 + $0x18] sm:$0xff] %v3736
  %3741 = vrot.lane.b32.xlu0 %v3717, 16
  %v3742 = vpop.permute.xlu0 %3741
  %3743 = vrot.lane.b32.xlu0 %v3718, 16
  %v3744 = vpop.permute.xlu0 %3743
  %3745 = vrot.lane.b32.xlu0 %v3719, 16
  %v3746 = vpop.permute.xlu0 %3745
  %3747 = vrot.lane.b32.xlu0 %v3720, 16
  %v3748 = vpop.permute.xlu0 %3747
  %v3749 = vsel %vm124, %v3746, %v3748
  %v3750 = vsel %vm124, %v3744, %v3746
  %v3751 = vsel %vm124, %v3742, %v3744
  %v3752 = vsel %vm124, %v3748, %v3742
  %v3753 = vmul.f32 %v3752, %v134
  %v3754 = vmul.f32 %v3751, %v135
  %v3755 = vmul.f32 %v3750, %v136
  %v3756 = vmul.f32 %v3749, %v137
  %3757 = vst [vmem:[#allocation2 + $0x20] sm:$0xff] %v3753
  %3758 = vst [vmem:[#allocation2 + $0x28] sm:$0xff] %v3754
  %3759 = vst [vmem:[#allocation2 + $0x30] sm:$0xff] %v3755
  %3760 = vst [vmem:[#allocation2 + $0x38] sm:$0xff] %v3756
  %3761 = vrot.lane.b32.xlu0 %v3717, 15
  %v3762 = vpop.permute.xlu0 %3761
  %3763 = vrot.lane.b32.xlu0 %v3718, 15
  %v3764 = vpop.permute.xlu0 %3763
  %3765 = vrot.lane.b32.xlu0 %v3719, 15
  %v3766 = vpop.permute.xlu0 %3765
  %3767 = vrot.lane.b32.xlu0 %v3720, 15
  %v3768 = vpop.permute.xlu0 %3767
  %v3769 = vsel %vm174, %v3766, %v3768
  %v3770 = vsel %vm174, %v3764, %v3766
  %v3771 = vsel %vm174, %v3762, %v3764
  %v3772 = vsel %vm174, %v3768, %v3762
  %v3773 = vmul.f32 %v3772, %v184
  %v3774 = vmul.f32 %v3771, %v185
  %v3775 = vmul.f32 %v3770, %v186
  %v3776 = vmul.f32 %v3769, %v187
  %3777 = vst [vmem:[#allocation2 + $0x40] sm:$0xff] %v3773
  %3778 = vst [vmem:[#allocation2 + $0x48] sm:$0xff] %v3774
  %3779 = vst [vmem:[#allocation2 + $0x50] sm:$0xff] %v3775
  %3780 = vst [vmem:[#allocation2 + $0x58] sm:$0xff] %v3776
  %3781 = vrot.lane.b32.xlu0 %v3717, 1
  %v3782 = vpop.permute.xlu0 %3781
  %3783 = vrot.lane.b32.xlu0 %v3718, 1
  %v3784 = vpop.permute.xlu0 %3783
  %3785 = vrot.lane.b32.xlu0 %v3719, 1
  %v3786 = vpop.permute.xlu0 %3785
  %3787 = vrot.lane.b32.xlu0 %v3720, 1
  %v3788 = vpop.permute.xlu0 %3787
  %v3789 = vsel %vm224, %v3786, %v3788
  %v3790 = vsel %vm224, %v3784, %v3786
  %v3791 = vsel %vm224, %v3782, %v3784
  %v3792 = vsel %vm224, %v3788, %v3782
  %v3793 = vmul.f32 %v3792, %v234
  %v3794 = vmul.f32 %v3791, %v235
  %v3795 = vmul.f32 %v3790, %v236
  %v3796 = vmul.f32 %v3789, %v237
  %3797 = vst [vmem:[#allocation2 + $0x60] sm:$0xff] %v3793
  %3798 = vst [vmem:[#allocation2 + $0x68] sm:$0xff] %v3794
  %3799 = vst [vmem:[#allocation2 + $0x70] sm:$0xff] %v3795
  %3800 = vst [vmem:[#allocation2 + $0x78] sm:$0xff] %v3796
  %3801 = vst [vmem:[#allocation2 + $0x80] sm:$0xff] %v3717
  %3802 = vst [vmem:[#allocation2 + $0x88] sm:$0xff] %v3718
  %3803 = vst [vmem:[#allocation2 + $0x90] sm:$0xff] %v3719
  %3804 = vst [vmem:[#allocation2 + $0x98] sm:$0xff] %v3720
  %3805 = vrot.lane.b32.xlu0 %v3717, 127
  %v3806 = vpop.permute.xlu0 %3805
  %3807 = vrot.lane.b32.xlu0 %v3718, 127
  %v3808 = vpop.permute.xlu0 %3807
  %3809 = vrot.lane.b32.xlu0 %v3719, 127
  %v3810 = vpop.permute.xlu0 %3809
  %3811 = vrot.lane.b32.xlu0 %v3720, 127
  %v3812 = vpop.permute.xlu0 %3811
  %v3813 = vsel %vm282, %v3810, %v3812
  %v3814 = vsel %vm282, %v3808, %v3810
  %v3815 = vsel %vm282, %v3806, %v3808
  %v3816 = vsel %vm282, %v3812, %v3806
  %v3817 = vmul.f32 %v3815, %v292
  %v3818 = vmul.f32 %v3814, %v293
  %v3819 = vmul.f32 %v3813, %v294
  %v3820 = vmul.f32 %v3816, %v295
  %3821 = vst [vmem:[#allocation2 + $0xa0] sm:$0xff] %v3817
  %3822 = vst [vmem:[#allocation2 + $0xa8] sm:$0xff] %v3818
  %3823 = vst [vmem:[#allocation2 + $0xb0] sm:$0xff] %v3819
  %3824 = vst [vmem:[#allocation2 + $0xb8] sm:$0xff] %v3820
  %3825 = vrot.lane.b32.xlu0 %v3717, 113
  %v3826 = vpop.permute.xlu0 %3825
  %3827 = vrot.lane.b32.xlu0 %v3718, 113
  %v3828 = vpop.permute.xlu0 %3827
  %3829 = vrot.lane.b32.xlu0 %v3719, 113
  %v3830 = vpop.permute.xlu0 %3829
  %3831 = vrot.lane.b32.xlu0 %v3720, 113
  %v3832 = vpop.permute.xlu0 %3831
  %v3833 = vsel %vm332, %v3830, %v3832
  %v3834 = vsel %vm332, %v3828, %v3830
  %v3835 = vsel %vm332, %v3826, %v3828
  %v3836 = vsel %vm332, %v3832, %v3826
  %v3837 = vmul.f32 %v3835, %v342
  %v3838 = vmul.f32 %v3834, %v343
  %v3839 = vmul.f32 %v3833, %v344
  %v3840 = vmul.f32 %v3836, %v345
  %3841 = vst [vmem:[#allocation2 + $0xc0] sm:$0xff] %v3837
  %3842 = vst [vmem:[#allocation2 + $0xc8] sm:$0xff] %v3838
  %3843 = vst [vmem:[#allocation2 + $0xd0] sm:$0xff] %v3839
  %3844 = vst [vmem:[#allocation2 + $0xd8] sm:$0xff] %v3840
  %3845 = vrot.lane.b32.xlu0 %v3717, 112
  %v3846 = vpop.permute.xlu0 %3845
  %3847 = vrot.lane.b32.xlu0 %v3718, 112
  %v3848 = vpop.permute.xlu0 %3847
  %3849 = vrot.lane.b32.xlu0 %v3719, 112
  %v3850 = vpop.permute.xlu0 %3849
  %3851 = vrot.lane.b32.xlu0 %v3720, 112
  %v3852 = vpop.permute.xlu0 %3851
  %v3853 = vsel %vm382, %v3850, %v3852
  %v3854 = vsel %vm382, %v3848, %v3850
  %v3855 = vsel %vm382, %v3846, %v3848
  %v3856 = vsel %vm382, %v3852, %v3846
  %v3857 = vmul.f32 %v3855, %v392
  %v3858 = vmul.f32 %v3854, %v393
  %v3859 = vmul.f32 %v3853, %v394
  %v3860 = vmul.f32 %v3856, %v395
  %3861 = vst [vmem:[#allocation2 + $0xe0] sm:$0xff] %v3857
  %3862 = vst [vmem:[#allocation2 + $0xe8] sm:$0xff] %v3858
  %3863 = vst [vmem:[#allocation2 + $0xf0] sm:$0xff] %v3859
  %3864 = vst [vmem:[#allocation2 + $0xf8] sm:$0xff] %v3860
  %3865 = vrot.lane.b32.xlu0 %v3717, 111
  %v3866 = vpop.permute.xlu0 %3865
  %3867 = vrot.lane.b32.xlu0 %v3718, 111
  %v3868 = vpop.permute.xlu0 %3867
  %3869 = vrot.lane.b32.xlu0 %v3719, 111
  %v3870 = vpop.permute.xlu0 %3869
  %3871 = vrot.lane.b32.xlu0 %v3720, 111
  %v3872 = vpop.permute.xlu0 %3871
  %v3873 = vsel %vm432, %v3870, %v3872
  %v3874 = vsel %vm432, %v3868, %v3870
  %v3875 = vsel %vm432, %v3866, %v3868
  %v3876 = vsel %vm432, %v3872, %v3866
  %v3877 = vmul.f32 %v3875, %v442
  %v3878 = vmul.f32 %v3874, %v443
  %v3879 = vmul.f32 %v3873, %v444
  %v3880 = vmul.f32 %v3876, %v445
  %3881 = vst [vmem:[#allocation2 + $0x100] sm:$0xff] %v3877
  %3882 = vst [vmem:[#allocation2 + $0x108] sm:$0xff] %v3878
  %3883 = vst [vmem:[#allocation2 + $0x110] sm:$0xff] %v3879
  %3884 = vst [vmem:[#allocation2 + $0x118] sm:$0xff] %v3880
  %v3885 = vld [vmem:[#allocation2] sm:$0xff]
  %v3886 = vld [vmem:[#allocation2 + $0x8] sm:$0xff]
  %v3887 = vld [vmem:[#allocation2 + $0x10] sm:$0xff]
  %v3888 = vld [vmem:[#allocation2 + $0x18] sm:$0xff]
  %v3889 = vld [vmem:[#allocation2 + $0x20] sm:$0xff]
  %v3890 = vld [vmem:[#allocation2 + $0x28] sm:$0xff]
  %v3891 = vld [vmem:[#allocation2 + $0x30] sm:$0xff]
  %v3892 = vld [vmem:[#allocation2 + $0x38] sm:$0xff]
  %v3893 = vld [vmem:[#allocation2 + $0x40] sm:$0xff]
  %v3894 = vld [vmem:[#allocation2 + $0x48] sm:$0xff]
  %v3895 = vld [vmem:[#allocation2 + $0x50] sm:$0xff]
  %v3896 = vld [vmem:[#allocation2 + $0x58] sm:$0xff]
  %v3897 = vld [vmem:[#allocation2 + $0x60] sm:$0xff]
  %v3898 = vld [vmem:[#allocation2 + $0x68] sm:$0xff]
  %v3899 = vld [vmem:[#allocation2 + $0x70] sm:$0xff]
  %v3900 = vld [vmem:[#allocation2 + $0x78] sm:$0xff]
  %v3901 = vld [vmem:[#allocation2 + $0x80] sm:$0xff]
  %v3902 = vld [vmem:[#allocation2 + $0x88] sm:$0xff]
  %v3903 = vld [vmem:[#allocation2 + $0x90] sm:$0xff]
  %v3904 = vld [vmem:[#allocation2 + $0x98] sm:$0xff]
  %v3905 = vld [vmem:[#allocation2 + $0xa0] sm:$0xff]
  %v3906 = vld [vmem:[#allocation2 + $0xa8] sm:$0xff]
  %v3907 = vld [vmem:[#allocation2 + $0xb0] sm:$0xff]
  %v3908 = vld [vmem:[#allocation2 + $0xb8] sm:$0xff]
  %v3909 = vld [vmem:[#allocation2 + $0xc0] sm:$0xff]
  %v3910 = vld [vmem:[#allocation2 + $0xc8] sm:$0xff]
  %v3911 = vld [vmem:[#allocation2 + $0xd0] sm:$0xff]
  %v3912 = vld [vmem:[#allocation2 + $0xd8] sm:$0xff]
  %v3913 = vld [vmem:[#allocation2 + $0xe0] sm:$0xff]
  %v3914 = vld [vmem:[#allocation2 + $0xe8] sm:$0xff]
  %v3915 = vld [vmem:[#allocation2 + $0xf0] sm:$0xff]
  %v3916 = vld [vmem:[#allocation2 + $0xf8] sm:$0xff]
  %v3917 = vld [vmem:[#allocation2 + $0x100] sm:$0xff]
  %v3918 = vld [vmem:[#allocation2 + $0x108] sm:$0xff]
  %v3919 = vld [vmem:[#allocation2 + $0x110] sm:$0xff]
  %v3920 = vld [vmem:[#allocation2 + $0x118] sm:$0xff]
  %v3921 = vpack.c.bf16 %v3889, %v3885
  %v3922 = vpack.c.bf16 %v3890, %v3886
  %v3923 = vpack.c.bf16 %v3891, %v3887
  %v3924 = vpack.c.bf16 %v3892, %v3888
  %v3925 = vpack.c.bf16 %v3897, %v3893
  %v3926 = vpack.c.bf16 %v3898, %v3894
  %v3927 = vpack.c.bf16 %v3899, %v3895
  %v3928 = vpack.c.bf16 %v3900, %v3896
  %v3929 = vpack.c.bf16 %v3905, %v3901
  %v3930 = vpack.c.bf16 %v3906, %v3902
  %v3931 = vpack.c.bf16 %v3907, %v3903
  %v3932 = vpack.c.bf16 %v3908, %v3904
  %v3933 = vpack.c.bf16 %v3913, %v3909
  %v3934 = vpack.c.bf16 %v3914, %v3910
  %v3935 = vpack.c.bf16 %v3915, %v3911
  %v3936 = vpack.c.bf16 %v3916, %v3912
  %v3937 = vpack.c.bf16 %v3917, %v3917
  %v3938 = vpack.c.bf16 %v3918, %v3918
  %v3939 = vpack.c.bf16 %v3919, %v3919
  %v3940 = vpack.c.bf16 %v3920, %v3920
  %s3941 = scalar_lea.vmem %s5, 12
  %v3942 = vld [vmem:[%s3941] sm:$0xf]
  %v3943 = vld [vmem:[%s3941 + $0x4] sm:$0xf]
  %v3944 = vld [vmem:[%s3941 + $0x8] sm:$0xf]
  %v3948 = vunpack.c.l.b16 %v3942
  %v3949 = vunpack.c.l.b16 %v3943
  %v3950 = vunpack.c.l.b16 %v3944
  %v3951 = vpack.c.b16 %v3949, %v3948
  %v3952 = vpack.c.b16 %v3950, %v3950
  %v3954 = vsel %vm1065, %v3951, 0
  %v3957 = vsel %vm1065, %v3952, 0
  %v3960 = vsel %vm1075, %v3937, 0
  %v3963 = vsel %vm1075, %v3938, 0
  %v3966 = vsel %vm1075, %v3939, 0
  %v3969 = vsel %vm1075, %v3940, 0
  %3971 = vmatpush.bf16.msra.mxu0 0
  %3972 = vmatpush.bf16.msra.mxu0 0
  %3973 = vmatpush.bf16.msra.mxu0 0
  %3974 = vmatpush.bf16.msra.mxu0 %v3960
  %3975 = vmatpush.bf16.msra.mxu0 %v3933
  %3976 = vmatpush.bf16.msra.mxu0 %v3929
  %3977 = vmatpush.bf16.msra.mxu0 %v3925
  %3978 = vmatpush.bf16.msra.mxu0 %v3921
  %3979 = vmatmul.bf16.gmra.mxu0 %v3954
  %v3980 = vpop.f32.mrf.mxu0
  %v3981 = vadd.f32 0.0, %v3980
  %v3982 = vpop.f32.mrf.mxu0
  %v3983 = vadd.f32 0.0, %v3982
  %3984 = vmatmul.bf16.gmra.mxu0 %v3957
  %v3985 = vpop.f32.mrf.mxu0
  %v3986 = vadd.f32 0.0, %v3985
  %v3987 = vpop.f32.mrf.mxu0
  %3988 = vdwg.mxu0
  %3989 = vmatpush.bf16.msra.mxu0 0
  %3990 = vmatpush.bf16.msra.mxu0 0
  %3991 = vmatpush.bf16.msra.mxu0 0
  %3992 = vmatpush.bf16.msra.mxu0 %v3963
  %3993 = vmatpush.bf16.msra.mxu0 %v3934
  %3994 = vmatpush.bf16.msra.mxu0 %v3930
  %3995 = vmatpush.bf16.msra.mxu0 %v3926
  %3996 = vmatpush.bf16.msra.mxu0 %v3922
  %3997 = vmatmul.bf16.gmra.mxu0 %v3954
  %v3998 = vpop.f32.mrf.mxu0
  %v3999 = vadd.f32 0.0, %v3998
  %v4000 = vpop.f32.mrf.mxu0
  %v4001 = vadd.f32 0.0, %v4000
  %4002 = vmatmul.bf16.gmra.mxu0 %v3957
  %v4003 = vpop.f32.mrf.mxu0
  %v4004 = vadd.f32 0.0, %v4003
  %v4005 = vpop.f32.mrf.mxu0
  %4006 = vdwg.mxu0
  %4007 = vmatpush.bf16.msra.mxu0 0
  %4008 = vmatpush.bf16.msra.mxu0 0
  %4009 = vmatpush.bf16.msra.mxu0 0
  %4010 = vmatpush.bf16.msra.mxu0 %v3966
  %4011 = vmatpush.bf16.msra.mxu0 %v3935
  %4012 = vmatpush.bf16.msra.mxu0 %v3931
  %4013 = vmatpush.bf16.msra.mxu0 %v3927
  %4014 = vmatpush.bf16.msra.mxu0 %v3923
  %4015 = vmatmul.bf16.gmra.mxu0 %v3954
  %v4016 = vpop.f32.mrf.mxu0
  %v4017 = vadd.f32 0.0, %v4016
  %v4018 = vpop.f32.mrf.mxu0
  %v4019 = vadd.f32 0.0, %v4018
  %4020 = vmatmul.bf16.gmra.mxu0 %v3957
  %v4021 = vpop.f32.mrf.mxu0
  %v4022 = vadd.f32 0.0, %v4021
  %v4023 = vpop.f32.mrf.mxu0
  %4024 = vdwg.mxu0
  %4025 = vmatpush.bf16.msra.mxu0 0
  %4026 = vmatpush.bf16.msra.mxu0 0
  %4027 = vmatpush.bf16.msra.mxu0 0
  %4028 = vmatpush.bf16.msra.mxu0 %v3969
  %4029 = vmatpush.bf16.msra.mxu0 %v3936
  %4030 = vmatpush.bf16.msra.mxu0 %v3932
  %4031 = vmatpush.bf16.msra.mxu0 %v3928
  %4032 = vmatpush.bf16.msra.mxu0 %v3924
  %4033 = vmatmul.bf16.gmra.mxu0 %v3954
  %v4034 = vpop.f32.mrf.mxu0
  %v4035 = vadd.f32 0.0, %v4034
  %v4036 = vpop.f32.mrf.mxu0
  %v4037 = vadd.f32 0.0, %v4036
  %4038 = vmatmul.bf16.gmra.mxu0 %v3957
  %v4039 = vpop.f32.mrf.mxu0
  %v4040 = vadd.f32 0.0, %v4039
  %v4041 = vpop.f32.mrf.mxu0
  %4042 = vdwg.mxu0
  %v4043 = vadd.f32 %v3690, %v3981
  %v4044 = vadd.f32 %v3691, %v3999
  %v4045 = vadd.f32 %v3692, %v4017
  %v4046 = vadd.f32 %v3693, %v4035
  %v4047 = vadd.f32 %v3694, %v3983
  %v4048 = vadd.f32 %v3695, %v4001
  %v4049 = vadd.f32 %v3696, %v4019
  %v4050 = vadd.f32 %v3697, %v4037
  %v4051 = vadd.f32 %v3698, %v3986
  %v4052 = vadd.f32 %v3699, %v4004
  %v4053 = vadd.f32 %v3700, %v4022
  %v4054 = vadd.f32 %v3701, %v4040
  %s4055 = scalar_lea.vmem %s7, 56
  %v4056 = vld [vmem:[%s4055] sm:$0xff]
  %4058 = vset.pattern.permute.xlu0 0
  %4059 = vperm.xlu0 %4058, %v4056
  %v4060 = vpop.permute.xlu0 %4059
  %v4062 = vadd.f32 %v4043, %v4060
  %v4063 = vadd.f32 %v4044, %v4060
  %v4064 = vadd.f32 %v4045, %v4060
  %v4065 = vadd.f32 %v4046, %v4060
  %v4066 = vmul.f32 %v4062, 0.2
  %v4067 = vmul.f32 %v4063, 0.2
  %v4068 = vmul.f32 %v4064, 0.2
  %v4069 = vmul.f32 %v4065, 0.2
  %v4070 = vmax.f32 %v4062, %v4066
  %v4071 = vmax.f32 %v4063, %v4067
  %v4072 = vmax.f32 %v4064, %v4068
  %v4073 = vmax.f32 %v4065, %v4069
  %4074 = vrot.lane.b32.xlu0 %v4070, 17
  %v4075 = vpop.permute.xlu0 %4074
  %4076 = vrot.lane.b32.xlu0 %v4071, 17
  %v4077 = vpop.permute.xlu0 %4076
  %4078 = vrot.lane.b32.xlu0 %v4072, 17
  %v4079 = vpop.permute.xlu0 %4078
  %4080 = vrot.lane.b32.xlu0 %v4073, 17
  %v4081 = vpop.permute.xlu0 %4080
  %v4082 = vsel %vm74, %v4079, %v4081
  %v4083 = vsel %vm74, %v4077, %v4079
  %v4084 = vsel %vm74, %v4075, %v4077
  %v4085 = vsel %vm74, %v4081, %v4075
  %v4086 = vmul.f32 %v4085, %v84
  %v4087 = vmul.f32 %v4084, %v85
  %v4088 = vmul.f32 %v4083, %v86
  %v4089 = vmul.f32 %v4082, %v87
  %4090 = vst [vmem:[#allocation2] sm:$0xff] %v4086
  %4091 = vst [vmem:[#allocation2 + $0x8] sm:$0xff] %v4087
  %4092 = vst [vmem:[#allocation2 + $0x10] sm:$0xff] %v4088
  %4093 = vst [vmem:[#allocation2 + $0x18] sm:$0xff] %v4089
  %4094 = vrot.lane.b32.xlu0 %v4070, 16
  %v4095 = vpop.permute.xlu0 %4094
  %4096 = vrot.lane.b32.xlu0 %v4071, 16
  %v4097 = vpop.permute.xlu0 %4096
  %4098 = vrot.lane.b32.xlu0 %v4072, 16
  %v4099 = vpop.permute.xlu0 %4098
  %4100 = vrot.lane.b32.xlu0 %v4073, 16
  %v4101 = vpop.permute.xlu0 %4100
  %v4102 = vsel %vm124, %v4099, %v4101
  %v4103 = vsel %vm124, %v4097, %v4099
  %v4104 = vsel %vm124, %v4095, %v4097
  %v4105 = vsel %vm124, %v4101, %v4095
  %v4106 = vmul.f32 %v4105, %v134
  %v4107 = vmul.f32 %v4104, %v135
  %v4108 = vmul.f32 %v4103, %v136
  %v4109 = vmul.f32 %v4102, %v137
  %4110 = vst [vmem:[#allocation2 + $0x20] sm:$0xff] %v4106
  %4111 = vst [vmem:[#allocation2 + $0x28] sm:$0xff] %v4107
  %4112 = vst [vmem:[#allocation2 + $0x30] sm:$0xff] %v4108
  %4113 = vst [vmem:[#allocation2 + $0x38] sm:$0xff] %v4109
  %4114 = vrot.lane.b32.xlu0 %v4070, 15
  %v4115 = vpop.permute.xlu0 %4114
  %4116 = vrot.lane.b32.xlu0 %v4071, 15
  %v4117 = vpop.permute.xlu0 %4116
  %4118 = vrot.lane.b32.xlu0 %v4072, 15
  %v4119 = vpop.permute.xlu0 %4118
  %4120 = vrot.lane.b32.xlu0 %v4073, 15
  %v4121 = vpop.permute.xlu0 %4120
  %v4122 = vsel %vm174, %v4119, %v4121
  %v4123 = vsel %vm174, %v4117, %v4119
  %v4124 = vsel %vm174, %v4115, %v4117
  %v4125 = vsel %vm174, %v4121, %v4115
  %v4126 = vmul.f32 %v4125, %v184
  %v4127 = vmul.f32 %v4124, %v185
  %v4128 = vmul.f32 %v4123, %v186
  %v4129 = vmul.f32 %v4122, %v187
  %4130 = vst [vmem:[#allocation2 + $0x40] sm:$0xff] %v4126
  %4131 = vst [vmem:[#allocation2 + $0x48] sm:$0xff] %v4127
  %4132 = vst [vmem:[#allocation2 + $0x50] sm:$0xff] %v4128
  %4133 = vst [vmem:[#allocation2 + $0x58] sm:$0xff] %v4129
  %4134 = vrot.lane.b32.xlu0 %v4070, 1
  %v4135 = vpop.permute.xlu0 %4134
  %4136 = vrot.lane.b32.xlu0 %v4071, 1
  %v4137 = vpop.permute.xlu0 %4136
  %4138 = vrot.lane.b32.xlu0 %v4072, 1
  %v4139 = vpop.permute.xlu0 %4138
  %4140 = vrot.lane.b32.xlu0 %v4073, 1
  %v4141 = vpop.permute.xlu0 %4140
  %v4142 = vsel %vm224, %v4139, %v4141
  %v4143 = vsel %vm224, %v4137, %v4139
  %v4144 = vsel %vm224, %v4135, %v4137
  %v4145 = vsel %vm224, %v4141, %v4135
  %v4146 = vmul.f32 %v4145, %v234
  %v4147 = vmul.f32 %v4144, %v235
  %v4148 = vmul.f32 %v4143, %v236
  %v4149 = vmul.f32 %v4142, %v237
  %4150 = vst [vmem:[#allocation2 + $0x60] sm:$0xff] %v4146
  %4151 = vst [vmem:[#allocation2 + $0x68] sm:$0xff] %v4147
  %4152 = vst [vmem:[#allocation2 + $0x70] sm:$0xff] %v4148
  %4153 = vst [vmem:[#allocation2 + $0x78] sm:$0xff] %v4149
  %4154 = vst [vmem:[#allocation2 + $0x80] sm:$0xff] %v4070
  %4155 = vst [vmem:[#allocation2 + $0x88] sm:$0xff] %v4071
  %4156 = vst [vmem:[#allocation2 + $0x90] sm:$0xff] %v4072
  %4157 = vst [vmem:[#allocation2 + $0x98] sm:$0xff] %v4073
  %4158 = vrot.lane.b32.xlu0 %v4070, 127
  %v4159 = vpop.permute.xlu0 %4158
  %4160 = vrot.lane.b32.xlu0 %v4071, 127
  %v4161 = vpop.permute.xlu0 %4160
  %4162 = vrot.lane.b32.xlu0 %v4072, 127
  %v4163 = vpop.permute.xlu0 %4162
  %4164 = vrot.lane.b32.xlu0 %v4073, 127
  %v4165 = vpop.permute.xlu0 %4164
  %v4166 = vsel %vm282, %v4163, %v4165
  %v4167 = vsel %vm282, %v4161, %v4163
  %v4168 = vsel %vm282, %v4159, %v4161
  %v4169 = vsel %vm282, %v4165, %v4159
  %v4170 = vmul.f32 %v4168, %v292
  %v4171 = vmul.f32 %v4167, %v293
  %v4172 = vmul.f32 %v4166, %v294
  %v4173 = vmul.f32 %v4169, %v295
  %4174 = vst [vmem:[#allocation2 + $0xa0] sm:$0xff] %v4170
  %4175 = vst [vmem:[#allocation2 + $0xa8] sm:$0xff] %v4171
  %4176 = vst [vmem:[#allocation2 + $0xb0] sm:$0xff] %v4172
  %4177 = vst [vmem:[#allocation2 + $0xb8] sm:$0xff] %v4173
  %4178 = vrot.lane.b32.xlu0 %v4070, 113
  %v4179 = vpop.permute.xlu0 %4178
  %4180 = vrot.lane.b32.xlu0 %v4071, 113
  %v4181 = vpop.permute.xlu0 %4180
  %4182 = vrot.lane.b32.xlu0 %v4072, 113
  %v4183 = vpop.permute.xlu0 %4182
  %4184 = vrot.lane.b32.xlu0 %v4073, 113
  %v4185 = vpop.permute.xlu0 %4184
  %v4186 = vsel %vm332, %v4183, %v4185
  %v4187 = vsel %vm332, %v4181, %v4183
  %v4188 = vsel %vm332, %v4179, %v4181
  %v4189 = vsel %vm332, %v4185, %v4179
  %v4190 = vmul.f32 %v4188, %v342
  %v4191 = vmul.f32 %v4187, %v343
  %v4192 = vmul.f32 %v4186, %v344
  %v4193 = vmul.f32 %v4189, %v345
  %4194 = vst [vmem:[#allocation2 + $0xc0] sm:$0xff] %v4190
  %4195 = vst [vmem:[#allocation2 + $0xc8] sm:$0xff] %v4191
  %4196 = vst [vmem:[#allocation2 + $0xd0] sm:$0xff] %v4192
  %4197 = vst [vmem:[#allocation2 + $0xd8] sm:$0xff] %v4193
  %4198 = vrot.lane.b32.xlu0 %v4070, 112
  %v4199 = vpop.permute.xlu0 %4198
  %4200 = vrot.lane.b32.xlu0 %v4071, 112
  %v4201 = vpop.permute.xlu0 %4200
  %4202 = vrot.lane.b32.xlu0 %v4072, 112
  %v4203 = vpop.permute.xlu0 %4202
  %4204 = vrot.lane.b32.xlu0 %v4073, 112
  %v4205 = vpop.permute.xlu0 %4204
  %v4206 = vsel %vm382, %v4203, %v4205
  %v4207 = vsel %vm382, %v4201, %v4203
  %v4208 = vsel %vm382, %v4199, %v4201
  %v4209 = vsel %vm382, %v4205, %v4199
  %v4210 = vmul.f32 %v4208, %v392
  %v4211 = vmul.f32 %v4207, %v393
  %v4212 = vmul.f32 %v4206, %v394
  %v4213 = vmul.f32 %v4209, %v395
  %4214 = vst [vmem:[#allocation2 + $0xe0] sm:$0xff] %v4210
  %4215 = vst [vmem:[#allocation2 + $0xe8] sm:$0xff] %v4211
  %4216 = vst [vmem:[#allocation2 + $0xf0] sm:$0xff] %v4212
  %4217 = vst [vmem:[#allocation2 + $0xf8] sm:$0xff] %v4213
  %4218 = vrot.lane.b32.xlu0 %v4070, 111
  %v4219 = vpop.permute.xlu0 %4218
  %4220 = vrot.lane.b32.xlu0 %v4071, 111
  %v4221 = vpop.permute.xlu0 %4220
  %4222 = vrot.lane.b32.xlu0 %v4072, 111
  %v4223 = vpop.permute.xlu0 %4222
  %4224 = vrot.lane.b32.xlu0 %v4073, 111
  %v4225 = vpop.permute.xlu0 %4224
  %v4226 = vsel %vm432, %v4223, %v4225
  %v4227 = vsel %vm432, %v4221, %v4223
  %v4228 = vsel %vm432, %v4219, %v4221
  %v4229 = vsel %vm432, %v4225, %v4219
  %v4230 = vmul.f32 %v4228, %v442
  %v4231 = vmul.f32 %v4227, %v443
  %v4232 = vmul.f32 %v4226, %v444
  %v4233 = vmul.f32 %v4229, %v445
  %4234 = vst [vmem:[#allocation2 + $0x100] sm:$0xff] %v4230
  %4235 = vst [vmem:[#allocation2 + $0x108] sm:$0xff] %v4231
  %4236 = vst [vmem:[#allocation2 + $0x110] sm:$0xff] %v4232
  %4237 = vst [vmem:[#allocation2 + $0x118] sm:$0xff] %v4233
  %v4238 = vld [vmem:[#allocation2] sm:$0xff]
  %v4239 = vld [vmem:[#allocation2 + $0x8] sm:$0xff]
  %v4240 = vld [vmem:[#allocation2 + $0x10] sm:$0xff]
  %v4241 = vld [vmem:[#allocation2 + $0x18] sm:$0xff]
  %v4242 = vld [vmem:[#allocation2 + $0x20] sm:$0xff]
  %v4243 = vld [vmem:[#allocation2 + $0x28] sm:$0xff]
  %v4244 = vld [vmem:[#allocation2 + $0x30] sm:$0xff]
  %v4245 = vld [vmem:[#allocation2 + $0x38] sm:$0xff]
  %v4246 = vld [vmem:[#allocation2 + $0x40] sm:$0xff]
  %v4247 = vld [vmem:[#allocation2 + $0x48] sm:$0xff]
  %v4248 = vld [vmem:[#allocation2 + $0x50] sm:$0xff]
  %v4249 = vld [vmem:[#allocation2 + $0x58] sm:$0xff]
  %v4250 = vld [vmem:[#allocation2 + $0x60] sm:$0xff]
  %v4251 = vld [vmem:[#allocation2 + $0x68] sm:$0xff]
  %v4252 = vld [vmem:[#allocation2 + $0x70] sm:$0xff]
  %v4253 = vld [vmem:[#allocation2 + $0x78] sm:$0xff]
  %v4254 = vld [vmem:[#allocation2 + $0x80] sm:$0xff]
  %v4255 = vld [vmem:[#allocation2 + $0x88] sm:$0xff]
  %v4256 = vld [vmem:[#allocation2 + $0x90] sm:$0xff]
  %v4257 = vld [vmem:[#allocation2 + $0x98] sm:$0xff]
  %v4258 = vld [vmem:[#allocation2 + $0xa0] sm:$0xff]
  %v4259 = vld [vmem:[#allocation2 + $0xa8] sm:$0xff]
  %v4260 = vld [vmem:[#allocation2 + $0xb0] sm:$0xff]
  %v4261 = vld [vmem:[#allocation2 + $0xb8] sm:$0xff]
  %v4262 = vld [vmem:[#allocation2 + $0xc0] sm:$0xff]
  %v4263 = vld [vmem:[#allocation2 + $0xc8] sm:$0xff]
  %v4264 = vld [vmem:[#allocation2 + $0xd0] sm:$0xff]
  %v4265 = vld [vmem:[#allocation2 + $0xd8] sm:$0xff]
  %v4266 = vld [vmem:[#allocation2 + $0xe0] sm:$0xff]
  %v4267 = vld [vmem:[#allocation2 + $0xe8] sm:$0xff]
  %v4268 = vld [vmem:[#allocation2 + $0xf0] sm:$0xff]
  %v4269 = vld [vmem:[#allocation2 + $0xf8] sm:$0xff]
  %v4270 = vld [vmem:[#allocation2 + $0x100] sm:$0xff]
  %v4271 = vld [vmem:[#allocation2 + $0x108] sm:$0xff]
  %v4272 = vld [vmem:[#allocation2 + $0x110] sm:$0xff]
  %v4273 = vld [vmem:[#allocation2 + $0x118] sm:$0xff]
  %v4274 = vpack.c.bf16 %v4242, %v4238
  %v4275 = vpack.c.bf16 %v4243, %v4239
  %v4276 = vpack.c.bf16 %v4244, %v4240
  %v4277 = vpack.c.bf16 %v4245, %v4241
  %v4278 = vpack.c.bf16 %v4250, %v4246
  %v4279 = vpack.c.bf16 %v4251, %v4247
  %v4280 = vpack.c.bf16 %v4252, %v4248
  %v4281 = vpack.c.bf16 %v4253, %v4249
  %v4282 = vpack.c.bf16 %v4258, %v4254
  %v4283 = vpack.c.bf16 %v4259, %v4255
  %v4284 = vpack.c.bf16 %v4260, %v4256
  %v4285 = vpack.c.bf16 %v4261, %v4257
  %v4286 = vpack.c.bf16 %v4266, %v4262
  %v4287 = vpack.c.bf16 %v4267, %v4263
  %v4288 = vpack.c.bf16 %v4268, %v4264
  %v4289 = vpack.c.bf16 %v4269, %v4265
  %v4290 = vpack.c.bf16 %v4270, %v4270
  %v4291 = vpack.c.bf16 %v4271, %v4271
  %v4292 = vpack.c.bf16 %v4272, %v4272
  %v4293 = vpack.c.bf16 %v4273, %v4273
  %s4294 = scalar_lea.vmem %s6, 8
  %v4295 = vld [vmem:[%s4294] sm:$0xf]
  %v4296 = vld [vmem:[%s4294 + $0x4] sm:$0xf]
  %v4299 = vunpack.c.l.b16 %v4295
  %v4300 = vunpack.c.l.b16 %v4296
  %v4301 = vpack.c.b16 %v4300, %v4299
  %v4303 = vsel %vm1065, %v4301, 0
  %v4306 = vsel %vm1075, %v4290, 0
  %v4309 = vsel %vm1075, %v4291, 0
  %v4312 = vsel %vm1075, %v4292, 0
  %v4315 = vsel %vm1075, %v4293, 0
  %4317 = vmatpush.bf16.msra.mxu0 0
  %4318 = vmatpush.bf16.msra.mxu0 0
  %4319 = vmatpush.bf16.msra.mxu0 0
  %4320 = vmatpush.bf16.msra.mxu0 %v4306
  %4321 = vmatpush.bf16.msra.mxu0 %v4286
  %4322 = vmatpush.bf16.msra.mxu0 %v4282
  %4323 = vmatpush.bf16.msra.mxu0 %v4278
  %4324 = vmatpush.bf16.msra.mxu0 %v4274
  %4325 = vmatmul.bf16.gmra.mxu0 %v4303
  %v4326 = vpop.f32.mrf.mxu0
  %v4327 = vadd.f32 0.0, %v4326
  %v4328 = vpop.f32.mrf.mxu0
  %v4329 = vadd.f32 0.0, %v4328
  %4330 = vdwg.mxu0
  %4331 = vmatpush.bf16.msra.mxu0 0
  %4332 = vmatpush.bf16.msra.mxu0 0
  %4333 = vmatpush.bf16.msra.mxu0 0
  %4334 = vmatpush.bf16.msra.mxu0 %v4309
  %4335 = vmatpush.bf16.msra.mxu0 %v4287
  %4336 = vmatpush.bf16.msra.mxu0 %v4283
  %4337 = vmatpush.bf16.msra.mxu0 %v4279
  %4338 = vmatpush.bf16.msra.mxu0 %v4275
  %4339 = vmatmul.bf16.gmra.mxu0 %v4303
  %v4340 = vpop.f32.mrf.mxu0
  %v4341 = vadd.f32 0.0, %v4340
  %v4342 = vpop.f32.mrf.mxu0
  %v4343 = vadd.f32 0.0, %v4342
  %4344 = vdwg.mxu0
  %4345 = vmatpush.bf16.msra.mxu0 0
  %4346 = vmatpush.bf16.msra.mxu0 0
  %4347 = vmatpush.bf16.msra.mxu0 0
  %4348 = vmatpush.bf16.msra.mxu0 %v4312
  %4349 = vmatpush.bf16.msra.mxu0 %v4288
  %4350 = vmatpush.bf16.msra.mxu0 %v4284
  %4351 = vmatpush.bf16.msra.mxu0 %v4280
  %4352 = vmatpush.bf16.msra.mxu0 %v4276
  %4353 = vmatmul.bf16.gmra.mxu0 %v4303
  %v4354 = vpop.f32.mrf.mxu0
  %v4355 = vadd.f32 0.0, %v4354
  %v4356 = vpop.f32.mrf.mxu0
  %v4357 = vadd.f32 0.0, %v4356
  %4358 = vdwg.mxu0
  %4359 = vmatpush.bf16.msra.mxu0 0
  %4360 = vmatpush.bf16.msra.mxu0 0
  %4361 = vmatpush.bf16.msra.mxu0 0
  %4362 = vmatpush.bf16.msra.mxu0 %v4315
  %4363 = vmatpush.bf16.msra.mxu0 %v4289
  %4364 = vmatpush.bf16.msra.mxu0 %v4285
  %4365 = vmatpush.bf16.msra.mxu0 %v4281
  %4366 = vmatpush.bf16.msra.mxu0 %v4277
  %4367 = vmatmul.bf16.gmra.mxu0 %v4303
  %v4368 = vpop.f32.mrf.mxu0
  %v4369 = vadd.f32 0.0, %v4368
  %v4370 = vpop.f32.mrf.mxu0
  %v4371 = vadd.f32 0.0, %v4370
  %4372 = vdwg.mxu0
  %v4373 = vadd.f32 %v4047, %v4327
  %v4374 = vadd.f32 %v4048, %v4341
  %v4375 = vadd.f32 %v4049, %v4355
  %v4376 = vadd.f32 %v4050, %v4369
  %v4377 = vadd.f32 %v4051, %v4329
  %v4378 = vadd.f32 %v4052, %v4343
  %v4379 = vadd.f32 %v4053, %v4357
  %v4380 = vadd.f32 %v4054, %v4371
  %s4381 = scalar_lea.vmem %s8, 16
  %v4382 = vld [vmem:[%s4381] sm:$0xff]
  %v4383 = vld [vmem:[%s4381 + $0x8] sm:$0xff]
  %4385 = vset.pattern.permute.xlu0 0
  %4386 = vperm.xlu0 %4385, %v4382
  %v4387 = vpop.permute.xlu0 %4386
  %4390 = vset.pattern.permute.xlu0 0
  %4391 = vperm.xlu0 %4390, %v4383
  %v4392 = vpop.permute.xlu0 %4391
  %v4394 = vadd.f32 %v4373, %v4387
  %v4395 = vadd.f32 %v4374, %v4387
  %v4396 = vadd.f32 %v4375, %v4387
  %v4397 = vadd.f32 %v4376, %v4387
  %v4398 = vadd.f32 %v4377, %v4392
  %v4399 = vadd.f32 %v4378, %v4392
  %v4400 = vadd.f32 %v4379, %v4392
  %v4401 = vadd.f32 %v4380, %v4392
  %v4402 = vmul.f32 %v4394, 0.2
  %v4403 = vmul.f32 %v4395, 0.2
  %v4404 = vmul.f32 %v4396, 0.2
  %v4405 = vmul.f32 %v4397, 0.2
  %v4406 = vmul.f32 %v4398, 0.2
  %v4407 = vmul.f32 %v4399, 0.2
  %v4408 = vmul.f32 %v4400, 0.2
  %v4409 = vmul.f32 %v4401, 0.2
  %v4410 = vadd.f32 %v4402, %v2268
  %v4411 = vadd.f32 %v4403, %v2269
  %v4412 = vadd.f32 %v4404, %v2270
  %v4413 = vadd.f32 %v4405, %v2271
  %v4414 = vadd.f32 %v4406, %v2272
  %v4415 = vadd.f32 %v4407, %v2273
  %v4416 = vadd.f32 %v4408, %v2274
  %v4417 = vadd.f32 %v4409, %v2275
  %4418 = vrot.lane.b32.xlu0 %v4410, 17
  %v4419 = vpop.permute.xlu0 %4418
  %4420 = vrot.lane.b32.xlu0 %v4414, 17
  %v4421 = vpop.permute.xlu0 %4420
  %4422 = vrot.lane.b32.xlu0 %v4411, 17
  %v4423 = vpop.permute.xlu0 %4422
  %4424 = vrot.lane.b32.xlu0 %v4415, 17
  %v4425 = vpop.permute.xlu0 %4424
  %4426 = vrot.lane.b32.xlu0 %v4412, 17
  %v4427 = vpop.permute.xlu0 %4426
  %4428 = vrot.lane.b32.xlu0 %v4416, 17
  %v4429 = vpop.permute.xlu0 %4428
  %4430 = vrot.lane.b32.xlu0 %v4413, 17
  %v4431 = vpop.permute.xlu0 %4430
  %4432 = vrot.lane.b32.xlu0 %v4417, 17
  %v4433 = vpop.permute.xlu0 %4432
  %v4434 = vsel %vm74, %v4427, %v4431
  %v4435 = vsel %vm74, %v4429, %v4433
  %v4436 = vsel %vm74, %v4423, %v4427
  %v4437 = vsel %vm74, %v4425, %v4429
  %v4438 = vsel %vm74, %v4419, %v4423
  %v4439 = vsel %vm74, %v4421, %v4425
  %v4440 = vsel %vm74, %v4431, %v4419
  %v4441 = vsel %vm74, %v4433, %v4421
  %v4442 = vmul.f32 %v4440, %v84
  %v4443 = vmul.f32 %v4438, %v85
  %v4444 = vmul.f32 %v4436, %v86
  %v4445 = vmul.f32 %v4434, %v87
  %v4446 = vmul.f32 %v4441, %v84
  %v4447 = vmul.f32 %v4439, %v85
  %v4448 = vmul.f32 %v4437, %v86
  %v4449 = vmul.f32 %v4435, %v87
  %4450 = vst [vmem:[#allocation2] sm:$0xff] %v4442
  %4451 = vst [vmem:[#allocation2 + $0x8] sm:$0xff] %v4443
  %4452 = vst [vmem:[#allocation2 + $0x10] sm:$0xff] %v4444
  %4453 = vst [vmem:[#allocation2 + $0x18] sm:$0xff] %v4445
  %4454 = vst [vmem:[#allocation2 + $0x20] sm:$0xff] %v4446
  %4455 = vst [vmem:[#allocation2 + $0x28] sm:$0xff] %v4447
  %4456 = vst [vmem:[#allocation2 + $0x30] sm:$0xff] %v4448
  %4457 = vst [vmem:[#allocation2 + $0x38] sm:$0xff] %v4449
  %4458 = vrot.lane.b32.xlu0 %v4410, 16
  %v4459 = vpop.permute.xlu0 %4458
  %4460 = vrot.lane.b32.xlu0 %v4414, 16
  %v4461 = vpop.permute.xlu0 %4460
  %4462 = vrot.lane.b32.xlu0 %v4411, 16
  %v4463 = vpop.permute.xlu0 %4462
  %4464 = vrot.lane.b32.xlu0 %v4415, 16
  %v4465 = vpop.permute.xlu0 %4464
  %4466 = vrot.lane.b32.xlu0 %v4412, 16
  %v4467 = vpop.permute.xlu0 %4466
  %4468 = vrot.lane.b32.xlu0 %v4416, 16
  %v4469 = vpop.permute.xlu0 %4468
  %4470 = vrot.lane.b32.xlu0 %v4413, 16
  %v4471 = vpop.permute.xlu0 %4470
  %4472 = vrot.lane.b32.xlu0 %v4417, 16
  %v4473 = vpop.permute.xlu0 %4472
  %v4474 = vsel %vm124, %v4467, %v4471
  %v4475 = vsel %vm124, %v4469, %v4473
  %v4476 = vsel %vm124, %v4463, %v4467
  %v4477 = vsel %vm124, %v4465, %v4469
  %v4478 = vsel %vm124, %v4459, %v4463
  %v4479 = vsel %vm124, %v4461, %v4465
  %v4480 = vsel %vm124, %v4471, %v4459
  %v4481 = vsel %vm124, %v4473, %v4461
  %v4482 = vmul.f32 %v4480, %v134
  %v4483 = vmul.f32 %v4478, %v135
  %v4484 = vmul.f32 %v4476, %v136
  %v4485 = vmul.f32 %v4474, %v137
  %v4486 = vmul.f32 %v4481, %v134
  %v4487 = vmul.f32 %v4479, %v135
  %v4488 = vmul.f32 %v4477, %v136
  %v4489 = vmul.f32 %v4475, %v137
  %4490 = vst [vmem:[#allocation2 + $0x40] sm:$0xff] %v4482
  %4491 = vst [vmem:[#allocation2 + $0x48] sm:$0xff] %v4483
  %4492 = vst [vmem:[#allocation2 + $0x50] sm:$0xff] %v4484
  %4493 = vst [vmem:[#allocation2 + $0x58] sm:$0xff] %v4485
  %4494 = vst [vmem:[#allocation2 + $0x60] sm:$0xff] %v4486
  %4495 = vst [vmem:[#allocation2 + $0x68] sm:$0xff] %v4487
  %4496 = vst [vmem:[#allocation2 + $0x70] sm:$0xff] %v4488
  %4497 = vst [vmem:[#allocation2 + $0x78] sm:$0xff] %v4489
  %4498 = vrot.lane.b32.xlu0 %v4410, 15
  %v4499 = vpop.permute.xlu0 %4498
  %4500 = vrot.lane.b32.xlu0 %v4414, 15
  %v4501 = vpop.permute.xlu0 %4500
  %4502 = vrot.lane.b32.xlu0 %v4411, 15
  %v4503 = vpop.permute.xlu0 %4502
  %4504 = vrot.lane.b32.xlu0 %v4415, 15
  %v4505 = vpop.permute.xlu0 %4504
  %4506 = vrot.lane.b32.xlu0 %v4412, 15
  %v4507 = vpop.permute.xlu0 %4506
  %4508 = vrot.lane.b32.xlu0 %v4416, 15
  %v4509 = vpop.permute.xlu0 %4508
  %4510 = vrot.lane.b32.xlu0 %v4413, 15
  %v4511 = vpop.permute.xlu0 %4510
  %4512 = vrot.lane.b32.xlu0 %v4417, 15
  %v4513 = vpop.permute.xlu0 %4512
  %v4514 = vsel %vm174, %v4507, %v4511
  %v4515 = vsel %vm174, %v4509, %v4513
  %v4516 = vsel %vm174, %v4503, %v4507
  %v4517 = vsel %vm174, %v4505, %v4509
  %v4518 = vsel %vm174, %v4499, %v4503
  %v4519 = vsel %vm174, %v4501, %v4505
  %v4520 = vsel %vm174, %v4511, %v4499
  %v4521 = vsel %vm174, %v4513, %v4501
  %v4522 = vmul.f32 %v4520, %v184
  %v4523 = vmul.f32 %v4518, %v185
  %v4524 = vmul.f32 %v4516, %v186
  %v4525 = vmul.f32 %v4514, %v187
  %v4526 = vmul.f32 %v4521, %v184
  %v4527 = vmul.f32 %v4519, %v185
  %v4528 = vmul.f32 %v4517, %v186
  %v4529 = vmul.f32 %v4515, %v187
  %4530 = vst [vmem:[#allocation2 + $0x80] sm:$0xff] %v4522
  %4531 = vst [vmem:[#allocation2 + $0x88] sm:$0xff] %v4523
  %4532 = vst [vmem:[#allocation2 + $0x90] sm:$0xff] %v4524
  %4533 = vst [vmem:[#allocation2 + $0x98] sm:$0xff] %v4525
  %4534 = vst [vmem:[#allocation2 + $0xa0] sm:$0xff] %v4526
  %4535 = vst [vmem:[#allocation2 + $0xa8] sm:$0xff] %v4527
  %4536 = vst [vmem:[#allocation2 + $0xb0] sm:$0xff] %v4528
  %4537 = vst [vmem:[#allocation2 + $0xb8] sm:$0xff] %v4529
  %4538 = vrot.lane.b32.xlu0 %v4410, 1
  %v4539 = vpop.permute.xlu0 %4538
  %4540 = vrot.lane.b32.xlu0 %v4414, 1
  %v4541 = vpop.permute.xlu0 %4540
  %4542 = vrot.lane.b32.xlu0 %v4411, 1
  %v4543 = vpop.permute.xlu0 %4542
  %4544 = vrot.lane.b32.xlu0 %v4415, 1
  %v4545 = vpop.permute.xlu0 %4544
  %4546 = vrot.lane.b32.xlu0 %v4412, 1
  %v4547 = vpop.permute.xlu0 %4546
  %4548 = vrot.lane.b32.xlu0 %v4416, 1
  %v4549 = vpop.permute.xlu0 %4548
  %4550 = vrot.lane.b32.xlu0 %v4413, 1
  %v4551 = vpop.permute.xlu0 %4550
  %4552 = vrot.lane.b32.xlu0 %v4417, 1
  %v4553 = vpop.permute.xlu0 %4552
  %v4554 = vsel %vm224, %v4547, %v4551
  %v4555 = vsel %vm224, %v4549, %v4553
  %v4556 = vsel %vm224, %v4543, %v4547
  %v4557 = vsel %vm224, %v4545, %v4549
  %v4558 = vsel %vm224, %v4539, %v4543
  %v4559 = vsel %vm224, %v4541, %v4545
  %v4560 = vsel %vm224, %v4551, %v4539
  %v4561 = vsel %vm224, %v4553, %v4541
  %v4562 = vmul.f32 %v4560, %v234
  %v4563 = vmul.f32 %v4558, %v235
  %v4564 = vmul.f32 %v4556, %v236
  %v4565 = vmul.f32 %v4554, %v237
  %v4566 = vmul.f32 %v4561, %v234
  %v4567 = vmul.f32 %v4559, %v235
  %v4568 = vmul.f32 %v4557, %v236
  %v4569 = vmul.f32 %v4555, %v237
  %4570 = vst [vmem:[#allocation2 + $0xc0] sm:$0xff] %v4562
  %4571 = vst [vmem:[#allocation2 + $0xc8] sm:$0xff] %v4563
  %4572 = vst [vmem:[#allocation2 + $0xd0] sm:$0xff] %v4564
  %4573 = vst [vmem:[#allocation2 + $0xd8] sm:$0xff] %v4565
  %4574 = vst [vmem:[#allocation2 + $0xe0] sm:$0xff] %v4566
  %4575 = vst [vmem:[#allocation2 + $0xe8] sm:$0xff] %v4567
  %4576 = vst [vmem:[#allocation2 + $0xf0] sm:$0xff] %v4568
  %4577 = vst [vmem:[#allocation2 + $0xf8] sm:$0xff] %v4569
  %4578 = vst [vmem:[#allocation2 + $0x100] sm:$0xff] %v4410
  %4579 = vst [vmem:[#allocation2 + $0x108] sm:$0xff] %v4411
  %4580 = vst [vmem:[#allocation2 + $0x110] sm:$0xff] %v4412
  %4581 = vst [vmem:[#allocation2 + $0x118] sm:$0xff] %v4413
  %4582 = vst [vmem:[#allocation2 + $0x120] sm:$0xff] %v4414
  %4583 = vst [vmem:[#allocation2 + $0x128] sm:$0xff] %v4415
  %4584 = vst [vmem:[#allocation2 + $0x130] sm:$0xff] %v4416
  %4585 = vst [vmem:[#allocation2 + $0x138] sm:$0xff] %v4417
  %4586 = vrot.lane.b32.xlu0 %v4410, 127
  %v4587 = vpop.permute.xlu0 %4586
  %4588 = vrot.lane.b32.xlu0 %v4414, 127
  %v4589 = vpop.permute.xlu0 %4588
  %4590 = vrot.lane.b32.xlu0 %v4411, 127
  %v4591 = vpop.permute.xlu0 %4590
  %4592 = vrot.lane.b32.xlu0 %v4415, 127
  %v4593 = vpop.permute.xlu0 %4592
  %4594 = vrot.lane.b32.xlu0 %v4412, 127
  %v4595 = vpop.permute.xlu0 %4594
  %4596 = vrot.lane.b32.xlu0 %v4416, 127
  %v4597 = vpop.permute.xlu0 %4596
  %4598 = vrot.lane.b32.xlu0 %v4413, 127
  %v4599 = vpop.permute.xlu0 %4598
  %4600 = vrot.lane.b32.xlu0 %v4417, 127
  %v4601 = vpop.permute.xlu0 %4600
  %v4602 = vsel %vm282, %v4595, %v4599
  %v4603 = vsel %vm282, %v4597, %v4601
  %v4604 = vsel %vm282, %v4591, %v4595
  %v4605 = vsel %vm282, %v4593, %v4597
  %v4606 = vsel %vm282, %v4587, %v4591
  %v4607 = vsel %vm282, %v4589, %v4593
  %v4608 = vsel %vm282, %v4599, %v4587
  %v4609 = vsel %vm282, %v4601, %v4589
  %v4610 = vmul.f32 %v4606, %v292
  %v4611 = vmul.f32 %v4604, %v293
  %v4612 = vmul.f32 %v4602, %v294
  %v4613 = vmul.f32 %v4608, %v295
  %v4614 = vmul.f32 %v4607, %v292
  %v4615 = vmul.f32 %v4605, %v293
  %v4616 = vmul.f32 %v4603, %v294
  %v4617 = vmul.f32 %v4609, %v295
  %4618 = vst [vmem:[#allocation2 + $0x140] sm:$0xff] %v4610
  %4619 = vst [vmem:[#allocation2 + $0x148] sm:$0xff] %v4611
  %4620 = vst [vmem:[#allocation2 + $0x150] sm:$0xff] %v4612
  %4621 = vst [vmem:[#allocation2 + $0x158] sm:$0xff] %v4613
  %4622 = vst [vmem:[#allocation2 + $0x160] sm:$0xff] %v4614
  %4623 = vst [vmem:[#allocation2 + $0x168] sm:$0xff] %v4615
  %4624 = vst [vmem:[#allocation2 + $0x170] sm:$0xff] %v4616
  %4625 = vst [vmem:[#allocation2 + $0x178] sm:$0xff] %v4617
  %4626 = vrot.lane.b32.xlu0 %v4410, 113
  %v4627 = vpop.permute.xlu0 %4626
  %4628 = vrot.lane.b32.xlu0 %v4414, 113
  %v4629 = vpop.permute.xlu0 %4628
  %4630 = vrot.lane.b32.xlu0 %v4411, 113
  %v4631 = vpop.permute.xlu0 %4630
  %4632 = vrot.lane.b32.xlu0 %v4415, 113
  %v4633 = vpop.permute.xlu0 %4632
  %4634 = vrot.lane.b32.xlu0 %v4412, 113
  %v4635 = vpop.permute.xlu0 %4634
  %4636 = vrot.lane.b32.xlu0 %v4416, 113
  %v4637 = vpop.permute.xlu0 %4636
  %4638 = vrot.lane.b32.xlu0 %v4413, 113
  %v4639 = vpop.permute.xlu0 %4638
  %4640 = vrot.lane.b32.xlu0 %v4417, 113
  %v4641 = vpop.permute.xlu0 %4640
  %v4642 = vsel %vm332, %v4635, %v4639
  %v4643 = vsel %vm332, %v4637, %v4641
  %v4644 = vsel %vm332, %v4631, %v4635
  %v4645 = vsel %vm332, %v4633, %v4637
  %v4646 = vsel %vm332, %v4627, %v4631
  %v4647 = vsel %vm332, %v4629, %v4633
  %v4648 = vsel %vm332, %v4639, %v4627
  %v4649 = vsel %vm332, %v4641, %v4629
  %v4650 = vmul.f32 %v4646, %v342
  %v4651 = vmul.f32 %v4644, %v343
  %v4652 = vmul.f32 %v4642, %v344
  %v4653 = vmul.f32 %v4648, %v345
  %v4654 = vmul.f32 %v4647, %v342
  %v4655 = vmul.f32 %v4645, %v343
  %v4656 = vmul.f32 %v4643, %v344
  %v4657 = vmul.f32 %v4649, %v345
  %4658 = vst [vmem:[#allocation2 + $0x180] sm:$0xff] %v4650
  %4659 = vst [vmem:[#allocation2 + $0x188] sm:$0xff] %v4651
  %4660 = vst [vmem:[#allocation2 + $0x190] sm:$0xff] %v4652
  %4661 = vst [vmem:[#allocation2 + $0x198] sm:$0xff] %v4653
  %4662 = vst [vmem:[#allocation2 + $0x1a0] sm:$0xff] %v4654
  %4663 = vst [vmem:[#allocation2 + $0x1a8] sm:$0xff] %v4655
  %4664 = vst [vmem:[#allocation2 + $0x1b0] sm:$0xff] %v4656
  %4665 = vst [vmem:[#allocation2 + $0x1b8] sm:$0xff] %v4657
  %4666 = vrot.lane.b32.xlu0 %v4410, 112
  %v4667 = vpop.permute.xlu0 %4666
  %4668 = vrot.lane.b32.xlu0 %v4414, 112
  %v4669 = vpop.permute.xlu0 %4668
  %4670 = vrot.lane.b32.xlu0 %v4411, 112
  %v4671 = vpop.permute.xlu0 %4670
  %4672 = vrot.lane.b32.xlu0 %v4415, 112
  %v4673 = vpop.permute.xlu0 %4672
  %4674 = vrot.lane.b32.xlu0 %v4412, 112
  %v4675 = vpop.permute.xlu0 %4674
  %4676 = vrot.lane.b32.xlu0 %v4416, 112
  %v4677 = vpop.permute.xlu0 %4676
  %4678 = vrot.lane.b32.xlu0 %v4413, 112
  %v4679 = vpop.permute.xlu0 %4678
  %4680 = vrot.lane.b32.xlu0 %v4417, 112
  %v4681 = vpop.permute.xlu0 %4680
  %v4682 = vsel %vm382, %v4675, %v4679
  %v4683 = vsel %vm382, %v4677, %v4681
  %v4684 = vsel %vm382, %v4671, %v4675
  %v4685 = vsel %vm382, %v4673, %v4677
  %v4686 = vsel %vm382, %v4667, %v4671
  %v4687 = vsel %vm382, %v4669, %v4673
  %v4688 = vsel %vm382, %v4679, %v4667
  %v4689 = vsel %vm382, %v4681, %v4669
  %v4690 = vmul.f32 %v4686, %v392
  %v4691 = vmul.f32 %v4684, %v393
  %v4692 = vmul.f32 %v4682, %v394
  %v4693 = vmul.f32 %v4688, %v395
  %v4694 = vmul.f32 %v4687, %v392
  %v4695 = vmul.f32 %v4685, %v393
  %v4696 = vmul.f32 %v4683, %v394
  %v4697 = vmul.f32 %v4689, %v395
  %4698 = vst [vmem:[#allocation2 + $0x1c0] sm:$0xff] %v4690
  %4699 = vst [vmem:[#allocation2 + $0x1c8] sm:$0xff] %v4691
  %4700 = vst [vmem:[#allocation2 + $0x1d0] sm:$0xff] %v4692
  %4701 = vst [vmem:[#allocation2 + $0x1d8] sm:$0xff] %v4693
  %4702 = vst [vmem:[#allocation2 + $0x1e0] sm:$0xff] %v4694
  %4703 = vst [vmem:[#allocation2 + $0x1e8] sm:$0xff] %v4695
  %4704 = vst [vmem:[#allocation2 + $0x1f0] sm:$0xff] %v4696
  %4705 = vst [vmem:[#allocation2 + $0x1f8] sm:$0xff] %v4697
  %4706 = vrot.lane.b32.xlu0 %v4410, 111
  %v4707 = vpop.permute.xlu0 %4706
  %4708 = vrot.lane.b32.xlu0 %v4414, 111
  %v4709 = vpop.permute.xlu0 %4708
  %4710 = vrot.lane.b32.xlu0 %v4411, 111
  %v4711 = vpop.permute.xlu0 %4710
  %4712 = vrot.lane.b32.xlu0 %v4415, 111
  %v4713 = vpop.permute.xlu0 %4712
  %4714 = vrot.lane.b32.xlu0 %v4412, 111
  %v4715 = vpop.permute.xlu0 %4714
  %4716 = vrot.lane.b32.xlu0 %v4416, 111
  %v4717 = vpop.permute.xlu0 %4716
  %4718 = vrot.lane.b32.xlu0 %v4413, 111
  %v4719 = vpop.permute.xlu0 %4718
  %4720 = vrot.lane.b32.xlu0 %v4417, 111
  %v4721 = vpop.permute.xlu0 %4720
  %v4722 = vsel %vm432, %v4715, %v4719
  %v4723 = vsel %vm432, %v4717, %v4721
  %v4724 = vsel %vm432, %v4711, %v4715
  %v4725 = vsel %vm432, %v4713, %v4717
  %v4726 = vsel %vm432, %v4707, %v4711
  %v4727 = vsel %vm432, %v4709, %v4713
  %v4728 = vsel %vm432, %v4719, %v4707
  %v4729 = vsel %vm432, %v4721, %v4709
  %v4730 = vmul.f32 %v4726, %v442
  %v4731 = vmul.f32 %v4724, %v443
  %v4732 = vmul.f32 %v4722, %v444
  %v4733 = vmul.f32 %v4728, %v445
  %v4734 = vmul.f32 %v4727, %v442
  %v4735 = vmul.f32 %v4725, %v443
  %v4736 = vmul.f32 %v4723, %v444
  %v4737 = vmul.f32 %v4729, %v445
  %4738 = vst [vmem:[#allocation2 + $0x200] sm:$0xff] %v4730
  %4739 = vst [vmem:[#allocation2 + $0x208] sm:$0xff] %v4731
  %4740 = vst [vmem:[#allocation2 + $0x210] sm:$0xff] %v4732
  %4741 = vst [vmem:[#allocation2 + $0x218] sm:$0xff] %v4733
  %4742 = vst [vmem:[#allocation2 + $0x220] sm:$0xff] %v4734
  %4743 = vst [vmem:[#allocation2 + $0x228] sm:$0xff] %v4735
  %4744 = vst [vmem:[#allocation2 + $0x230] sm:$0xff] %v4736
  %4745 = vst [vmem:[#allocation2 + $0x238] sm:$0xff] %v4737
  %v4746 = vld [vmem:[#allocation2] sm:$0xff]
  %v4747 = vld [vmem:[#allocation2 + $0x8] sm:$0xff]
  %v4748 = vld [vmem:[#allocation2 + $0x10] sm:$0xff]
  %v4749 = vld [vmem:[#allocation2 + $0x18] sm:$0xff]
  %v4750 = vld [vmem:[#allocation2 + $0x20] sm:$0xff]
  %v4751 = vld [vmem:[#allocation2 + $0x28] sm:$0xff]
  %v4752 = vld [vmem:[#allocation2 + $0x30] sm:$0xff]
  %v4753 = vld [vmem:[#allocation2 + $0x38] sm:$0xff]
  %v4754 = vld [vmem:[#allocation2 + $0x40] sm:$0xff]
  %v4755 = vld [vmem:[#allocation2 + $0x48] sm:$0xff]
  %v4756 = vld [vmem:[#allocation2 + $0x50] sm:$0xff]
  %v4757 = vld [vmem:[#allocation2 + $0x58] sm:$0xff]
  %v4758 = vld [vmem:[#allocation2 + $0x60] sm:$0xff]
  %v4759 = vld [vmem:[#allocation2 + $0x68] sm:$0xff]
  %v4760 = vld [vmem:[#allocation2 + $0x70] sm:$0xff]
  %v4761 = vld [vmem:[#allocation2 + $0x78] sm:$0xff]
  %v4762 = vld [vmem:[#allocation2 + $0x80] sm:$0xff]
  %v4763 = vld [vmem:[#allocation2 + $0x88] sm:$0xff]
  %v4764 = vld [vmem:[#allocation2 + $0x90] sm:$0xff]
  %v4765 = vld [vmem:[#allocation2 + $0x98] sm:$0xff]
  %v4766 = vld [vmem:[#allocation2 + $0xa0] sm:$0xff]
  %v4767 = vld [vmem:[#allocation2 + $0xa8] sm:$0xff]
  %v4768 = vld [vmem:[#allocation2 + $0xb0] sm:$0xff]
  %v4769 = vld [vmem:[#allocation2 + $0xb8] sm:$0xff]
  %v4770 = vld [vmem:[#allocation2 + $0xc0] sm:$0xff]
  %v4771 = vld [vmem:[#allocation2 + $0xc8] sm:$0xff]
  %v4772 = vld [vmem:[#allocation2 + $0xd0] sm:$0xff]
  %v4773 = vld [vmem:[#allocation2 + $0xd8] sm:$0xff]
  %v4774 = vld [vmem:[#allocation2 + $0xe0] sm:$0xff]
  %v4775 = vld [vmem:[#allocation2 + $0xe8] sm:$0xff]
  %v4776 = vld [vmem:[#allocation2 + $0xf0] sm:$0xff]
  %v4777 = vld [vmem:[#allocation2 + $0xf8] sm:$0xff]
  %v4778 = vld [vmem:[#allocation2 + $0x100] sm:$0xff]
  %v4779 = vld [vmem:[#allocation2 + $0x108] sm:$0xff]
  %v4780 = vld [vmem:[#allocation2 + $0x110] sm:$0xff]
  %v4781 = vld [vmem:[#allocation2 + $0x118] sm:$0xff]
  %v4782 = vld [vmem:[#allocation2 + $0x120] sm:$0xff]
  %v4783 = vld [vmem:[#allocation2 + $0x128] sm:$0xff]
  %v4784 = vld [vmem:[#allocation2 + $0x130] sm:$0xff]
  %v4785 = vld [vmem:[#allocation2 + $0x138] sm:$0xff]
  %v4786 = vld [vmem:[#allocation2 + $0x140] sm:$0xff]
  %v4787 = vld [vmem:[#allocation2 + $0x148] sm:$0xff]
  %v4788 = vld [vmem:[#allocation2 + $0x150] sm:$0xff]
  %v4789 = vld [vmem:[#allocation2 + $0x158] sm:$0xff]
  %v4790 = vld [vmem:[#allocation2 + $0x160] sm:$0xff]
  %v4791 = vld [vmem:[#allocation2 + $0x168] sm:$0xff]
  %v4792 = vld [vmem:[#allocation2 + $0x170] sm:$0xff]
  %v4793 = vld [vmem:[#allocation2 + $0x178] sm:$0xff]
  %v4794 = vld [vmem:[#allocation2 + $0x180] sm:$0xff]
  %v4795 = vld [vmem:[#allocation2 + $0x188] sm:$0xff]
  %v4796 = vld [vmem:[#allocation2 + $0x190] sm:$0xff]
  %v4797 = vld [vmem:[#allocation2 + $0x198] sm:$0xff]
  %v4798 = vld [vmem:[#allocation2 + $0x1a0] sm:$0xff]
  %v4799 = vld [vmem:[#allocation2 + $0x1a8] sm:$0xff]
  %v4800 = vld [vmem:[#allocation2 + $0x1b0] sm:$0xff]
  %v4801 = vld [vmem:[#allocation2 + $0x1b8] sm:$0xff]
  %v4802 = vld [vmem:[#allocation2 + $0x1c0] sm:$0xff]
  %v4803 = vld [vmem:[#allocation2 + $0x1c8] sm:$0xff]
  %v4804 = vld [vmem:[#allocation2 + $0x1d0] sm:$0xff]
  %v4805 = vld [vmem:[#allocation2 + $0x1d8] sm:$0xff]
  %v4806 = vld [vmem:[#allocation2 + $0x1e0] sm:$0xff]
  %v4807 = vld [vmem:[#allocation2 + $0x1e8] sm:$0xff]
  %v4808 = vld [vmem:[#allocation2 + $0x1f0] sm:$0xff]
  %v4809 = vld [vmem:[#allocation2 + $0x1f8] sm:$0xff]
  %v4810 = vld [vmem:[#allocation2 + $0x200] sm:$0xff]
  %v4811 = vld [vmem:[#allocation2 + $0x208] sm:$0xff]
  %v4812 = vld [vmem:[#allocation2 + $0x210] sm:$0xff]
  %v4813 = vld [vmem:[#allocation2 + $0x218] sm:$0xff]
  %v4814 = vld [vmem:[#allocation2 + $0x220] sm:$0xff]
  %v4815 = vld [vmem:[#allocation2 + $0x228] sm:$0xff]
  %v4816 = vld [vmem:[#allocation2 + $0x230] sm:$0xff]
  %v4817 = vld [vmem:[#allocation2 + $0x238] sm:$0xff]
  %v4818 = vpack.c.bf16 %v4750, %v4746
  %v4819 = vpack.c.bf16 %v4751, %v4747
  %v4820 = vpack.c.bf16 %v4752, %v4748
  %v4821 = vpack.c.bf16 %v4753, %v4749
  %v4822 = vpack.c.bf16 %v4758, %v4754
  %v4823 = vpack.c.bf16 %v4759, %v4755
  %v4824 = vpack.c.bf16 %v4760, %v4756
  %v4825 = vpack.c.bf16 %v4761, %v4757
  %v4826 = vpack.c.bf16 %v4766, %v4762
  %v4827 = vpack.c.bf16 %v4767, %v4763
  %v4828 = vpack.c.bf16 %v4768, %v4764
  %v4829 = vpack.c.bf16 %v4769, %v4765
  %v4830 = vpack.c.bf16 %v4774, %v4770
  %v4831 = vpack.c.bf16 %v4775, %v4771
  %v4832 = vpack.c.bf16 %v4776, %v4772
  %v4833 = vpack.c.bf16 %v4777, %v4773
  %v4834 = vpack.c.bf16 %v4782, %v4778
  %v4835 = vpack.c.bf16 %v4783, %v4779
  %v4836 = vpack.c.bf16 %v4784, %v4780
  %v4837 = vpack.c.bf16 %v4785, %v4781
  %v4838 = vpack.c.bf16 %v4790, %v4786
  %v4839 = vpack.c.bf16 %v4791, %v4787
  %v4840 = vpack.c.bf16 %v4792, %v4788
  %v4841 = vpack.c.bf16 %v4793, %v4789
  %v4842 = vpack.c.bf16 %v4798, %v4794
  %v4843 = vpack.c.bf16 %v4799, %v4795
  %v4844 = vpack.c.bf16 %v4800, %v4796
  %v4845 = vpack.c.bf16 %v4801, %v4797
  %v4846 = vpack.c.bf16 %v4806, %v4802
  %v4847 = vpack.c.bf16 %v4807, %v4803
  %v4848 = vpack.c.bf16 %v4808, %v4804
  %v4849 = vpack.c.bf16 %v4809, %v4805
  %v4850 = vpack.c.bf16 %v4814, %v4810
  %v4851 = vpack.c.bf16 %v4815, %v4811
  %v4852 = vpack.c.bf16 %v4816, %v4812
  %v4853 = vpack.c.bf16 %v4817, %v4813
  %s4854 = scalar_lea.vmem %s2, 96
  %v4855 = vld [vmem:[%s4854] sm:$0xff]
  %v4856 = vld [vmem:[%s4854 + $0x8] sm:$0xff]
  %v4857 = vld [vmem:[%s4854 + $0x10] sm:$0xff]
  %v4858 = vld [vmem:[%s4854 + $0x18] sm:$0xff]
  %v4859 = vld [vmem:[%s4854 + $0x20] sm:$0xff]
  %v4860 = vld [vmem:[%s4854 + $0x28] sm:$0xff]
  %v4867 = vunpack.c.l.b16 %v4855
  %v4868 = vunpack.c.h.b16 %v4855
  %v4869 = vunpack.c.l.b16 %v4856
  %v4870 = vunpack.c.h.b16 %v4856
  %v4871 = vunpack.c.l.b16 %v4857
  %v4872 = vunpack.c.h.b16 %v4857
  %v4873 = vunpack.c.l.b16 %v4858
  %v4874 = vunpack.c.h.b16 %v4858
  %v4875 = vunpack.c.l.b16 %v4859
  %v4876 = vunpack.c.h.b16 %v4859
  %v4877 = vunpack.c.l.b16 %v4860
  %v4878 = vunpack.c.h.b16 %v4860
  %v4879 = vpack.c.b16 %v4869, %v4867
  %v4880 = vpack.c.b16 %v4870, %v4868
  %v4881 = vpack.c.b16 %v4873, %v4871
  %v4882 = vpack.c.b16 %v4874, %v4872
  %v4883 = vpack.c.b16 %v4877, %v4875
  %v4884 = vpack.c.b16 %v4878, %v4876
  %v4889 = vsel %vm607, %v4880, 0
  %v4892 = vsel %vm607, %v4882, 0
  %v4895 = vsel %vm607, %v4884, 0
  %4897 = vmatpush.bf16.msra.mxu0 %v4846
  %4898 = vmatpush.bf16.msra.mxu0 %v4842
  %4899 = vmatpush.bf16.msra.mxu0 %v4838
  %4900 = vmatpush.bf16.msra.mxu0 %v4834
  %4901 = vmatpush.bf16.msra.mxu0 %v4830
  %4902 = vmatpush.bf16.msra.mxu0 %v4826
  %4903 = vmatpush.bf16.msra.mxu0 %v4822
  %4904 = vmatpush.bf16.msra.mxu0 %v4818
  %4905 = vmatmul.bf16.gmra.mxu0 %v4879
  %v4906 = vpop.f32.mrf.mxu0
  %v4907 = vadd.f32 0.0, %v4906
  %v4908 = vpop.f32.mrf.mxu0
  %v4909 = vadd.f32 0.0, %v4908
  %4910 = vmatmul.bf16.gmra.mxu0 %v4881
  %v4911 = vpop.f32.mrf.mxu0
  %v4912 = vadd.f32 0.0, %v4911
  %v4913 = vpop.f32.mrf.mxu0
  %v4914 = vadd.f32 0.0, %v4913
  %4915 = vmatmul.bf16.gmra.mxu0 %v4883
  %v4916 = vpop.f32.mrf.mxu0
  %v4917 = vadd.f32 0.0, %v4916
  %v4918 = vpop.f32.mrf.mxu0
  %v4919 = vadd.f32 0.0, %v4918
  %4920 = vdwg.mxu0
  %4921 = vmatpush.bf16.msra.mxu0 0
  %4922 = vmatpush.bf16.msra.mxu0 0
  %4923 = vmatpush.bf16.msra.mxu0 0
  %4924 = vmatpush.bf16.msra.mxu0 0
  %4925 = vmatpush.bf16.msra.mxu0 0
  %4926 = vmatpush.bf16.msra.mxu0 0
  %4927 = vmatpush.bf16.msra.mxu0 0
  %4928 = vmatpush.bf16.msra.mxu0 %v4850
  %4929 = vmatmul.bf16.gmra.mxu0 %v4889
  %v4930 = vpop.f32.mrf.mxu0
  %v4931 = vadd.f32 %v4907, %v4930
  %v4932 = vpop.f32.mrf.mxu0
  %v4933 = vadd.f32 %v4909, %v4932
  %4934 = vmatmul.bf16.gmra.mxu0 %v4892
  %v4935 = vpop.f32.mrf.mxu0
  %v4936 = vadd.f32 %v4912, %v4935
  %v4937 = vpop.f32.mrf.mxu0
  %v4938 = vadd.f32 %v4914, %v4937
  %4939 = vmatmul.bf16.gmra.mxu0 %v4895
  %v4940 = vpop.f32.mrf.mxu0
  %v4941 = vadd.f32 %v4917, %v4940
  %v4942 = vpop.f32.mrf.mxu0
  %v4943 = vadd.f32 %v4919, %v4942
  %4944 = vdwg.mxu0
  %4945 = vmatpush.bf16.msra.mxu0 %v4847
  %4946 = vmatpush.bf16.msra.mxu0 %v4843
  %4947 = vmatpush.bf16.msra.mxu0 %v4839
  %4948 = vmatpush.bf16.msra.mxu0 %v4835
  %4949 = vmatpush.bf16.msra.mxu0 %v4831
  %4950 = vmatpush.bf16.msra.mxu0 %v4827
  %4951 = vmatpush.bf16.msra.mxu0 %v4823
  %4952 = vmatpush.bf16.msra.mxu0 %v4819
  %4953 = vmatmul.bf16.gmra.mxu0 %v4879
  %v4954 = vpop.f32.mrf.mxu0
  %v4955 = vadd.f32 0.0, %v4954
  %v4956 = vpop.f32.mrf.mxu0
  %v4957 = vadd.f32 0.0, %v4956
  %4958 = vmatmul.bf16.gmra.mxu0 %v4881
  %v4959 = vpop.f32.mrf.mxu0
  %v4960 = vadd.f32 0.0, %v4959
  %v4961 = vpop.f32.mrf.mxu0
  %v4962 = vadd.f32 0.0, %v4961
  %4963 = vmatmul.bf16.gmra.mxu0 %v4883
  %v4964 = vpop.f32.mrf.mxu0
  %v4965 = vadd.f32 0.0, %v4964
  %v4966 = vpop.f32.mrf.mxu0
  %v4967 = vadd.f32 0.0, %v4966
  %4968 = vdwg.mxu0
  %4969 = vmatpush.bf16.msra.mxu0 0
  %4970 = vmatpush.bf16.msra.mxu0 0
  %4971 = vmatpush.bf16.msra.mxu0 0
  %4972 = vmatpush.bf16.msra.mxu0 0
  %4973 = vmatpush.bf16.msra.mxu0 0
  %4974 = vmatpush.bf16.msra.mxu0 0
  %4975 = vmatpush.bf16.msra.mxu0 0
  %4976 = vmatpush.bf16.msra.mxu0 %v4851
  %4977 = vmatmul.bf16.gmra.mxu0 %v4889
  %v4978 = vpop.f32.mrf.mxu0
  %v4979 = vadd.f32 %v4955, %v4978
  %v4980 = vpop.f32.mrf.mxu0
  %v4981 = vadd.f32 %v4957, %v4980
  %4982 = vmatmul.bf16.gmra.mxu0 %v4892
  %v4983 = vpop.f32.mrf.mxu0
  %v4984 = vadd.f32 %v4960, %v4983
  %v4985 = vpop.f32.mrf.mxu0
  %v4986 = vadd.f32 %v4962, %v4985
  %4987 = vmatmul.bf16.gmra.mxu0 %v4895
  %v4988 = vpop.f32.mrf.mxu0
  %v4989 = vadd.f32 %v4965, %v4988
  %v4990 = vpop.f32.mrf.mxu0
  %v4991 = vadd.f32 %v4967, %v4990
  %4992 = vdwg.mxu0
  %4993 = vmatpush.bf16.msra.mxu0 %v4848
  %4994 = vmatpush.bf16.msra.mxu0 %v4844
  %4995 = vmatpush.bf16.msra.mxu0 %v4840
  %4996 = vmatpush.bf16.msra.mxu0 %v4836
  %4997 = vmatpush.bf16.msra.mxu0 %v4832
  %4998 = vmatpush.bf16.msra.mxu0 %v4828
  %4999 = vmatpush.bf16.msra.mxu0 %v4824
  %5000 = vmatpush.bf16.msra.mxu0 %v4820
  %5001 = vmatmul.bf16.gmra.mxu0 %v4879
  %v5002 = vpop.f32.mrf.mxu0
  %v5003 = vadd.f32 0.0, %v5002
  %v5004 = vpop.f32.mrf.mxu0
  %v5005 = vadd.f32 0.0, %v5004
  %5006 = vmatmul.bf16.gmra.mxu0 %v4881
  %v5007 = vpop.f32.mrf.mxu0
  %v5008 = vadd.f32 0.0, %v5007
  %v5009 = vpop.f32.mrf.mxu0
  %v5010 = vadd.f32 0.0, %v5009
  %5011 = vmatmul.bf16.gmra.mxu0 %v4883
  %v5012 = vpop.f32.mrf.mxu0
  %v5013 = vadd.f32 0.0, %v5012
  %v5014 = vpop.f32.mrf.mxu0
  %v5015 = vadd.f32 0.0, %v5014
  %5016 = vdwg.mxu0
  %5017 = vmatpush.bf16.msra.mxu0 0
  %5018 = vmatpush.bf16.msra.mxu0 0
  %5019 = vmatpush.bf16.msra.mxu0 0
  %5020 = vmatpush.bf16.msra.mxu0 0
  %5021 = vmatpush.bf16.msra.mxu0 0
  %5022 = vmatpush.bf16.msra.mxu0 0
  %5023 = vmatpush.bf16.msra.mxu0 0
  %5024 = vmatpush.bf16.msra.mxu0 %v4852
  %5025 = vmatmul.bf16.gmra.mxu0 %v4889
  %v5026 = vpop.f32.mrf.mxu0
  %v5027 = vadd.f32 %v5003, %v5026
  %v5028 = vpop.f32.mrf.mxu0
  %v5029 = vadd.f32 %v5005, %v5028
  %5030 = vmatmul.bf16.gmra.mxu0 %v4892
  %v5031 = vpop.f32.mrf.mxu0
  %v5032 = vadd.f32 %v5008, %v5031
  %v5033 = vpop.f32.mrf.mxu0
  %v5034 = vadd.f32 %v5010, %v5033
  %5035 = vmatmul.bf16.gmra.mxu0 %v4895
  %v5036 = vpop.f32.mrf.mxu0
  %v5037 = vadd.f32 %v5013, %v5036
  %v5038 = vpop.f32.mrf.mxu0
  %v5039 = vadd.f32 %v5015, %v5038
  %5040 = vdwg.mxu0
  %5041 = vmatpush.bf16.msra.mxu0 %v4849
  %5042 = vmatpush.bf16.msra.mxu0 %v4845
  %5043 = vmatpush.bf16.msra.mxu0 %v4841
  %5044 = vmatpush.bf16.msra.mxu0 %v4837
  %5045 = vmatpush.bf16.msra.mxu0 %v4833
  %5046 = vmatpush.bf16.msra.mxu0 %v4829
  %5047 = vmatpush.bf16.msra.mxu0 %v4825
  %5048 = vmatpush.bf16.msra.mxu0 %v4821
  %5049 = vmatmul.bf16.gmra.mxu0 %v4879
  %v5050 = vpop.f32.mrf.mxu0
  %v5051 = vadd.f32 0.0, %v5050
  %v5052 = vpop.f32.mrf.mxu0
  %v5053 = vadd.f32 0.0, %v5052
  %5054 = vmatmul.bf16.gmra.mxu0 %v4881
  %v5055 = vpop.f32.mrf.mxu0
  %v5056 = vadd.f32 0.0, %v5055
  %v5057 = vpop.f32.mrf.mxu0
  %v5058 = vadd.f32 0.0, %v5057
  %5059 = vmatmul.bf16.gmra.mxu0 %v4883
  %v5060 = vpop.f32.mrf.mxu0
  %v5061 = vadd.f32 0.0, %v5060
  %v5062 = vpop.f32.mrf.mxu0
  %v5063 = vadd.f32 0.0, %v5062
  %5064 = vdwg.mxu0
  %5065 = vmatpush.bf16.msra.mxu0 0
  %5066 = vmatpush.bf16.msra.mxu0 0
  %5067 = vmatpush.bf16.msra.mxu0 0
  %5068 = vmatpush.bf16.msra.mxu0 0
  %5069 = vmatpush.bf16.msra.mxu0 0
  %5070 = vmatpush.bf16.msra.mxu0 0
  %5071 = vmatpush.bf16.msra.mxu0 0
  %5072 = vmatpush.bf16.msra.mxu0 %v4853
  %5073 = vmatmul.bf16.gmra.mxu0 %v4889
  %v5074 = vpop.f32.mrf.mxu0
  %v5075 = vadd.f32 %v5051, %v5074
  %v5076 = vpop.f32.mrf.mxu0
  %v5077 = vadd.f32 %v5053, %v5076
  %5078 = vmatmul.bf16.gmra.mxu0 %v4892
  %v5079 = vpop.f32.mrf.mxu0
  %v5080 = vadd.f32 %v5056, %v5079
  %v5081 = vpop.f32.mrf.mxu0
  %v5082 = vadd.f32 %v5058, %v5081
  %5083 = vmatmul.bf16.gmra.mxu0 %v4895
  %v5084 = vpop.f32.mrf.mxu0
  %v5085 = vadd.f32 %v5061, %v5084
  %v5086 = vpop.f32.mrf.mxu0
  %v5087 = vadd.f32 %v5063, %v5086
  %5088 = vdwg.mxu0
  %s5089 = scalar_lea.vmem %s7, 64
  %v5090 = vld [vmem:[%s5089] sm:$0xff]
  %5092 = vset.pattern.permute.xlu0 0
  %5093 = vperm.xlu0 %5092, %v5090
  %v5094 = vpop.permute.xlu0 %5093
  %v5096 = vadd.f32 %v4931, %v5094
  %v5097 = vadd.f32 %v4979, %v5094
  %v5098 = vadd.f32 %v5027, %v5094
  %v5099 = vadd.f32 %v5075, %v5094
  %v5100 = vmul.f32 %v5096, 0.2
  %v5101 = vmul.f32 %v5097, 0.2
  %v5102 = vmul.f32 %v5098, 0.2
  %v5103 = vmul.f32 %v5099, 0.2
  %v5104 = vmax.f32 %v5096, %v5100
  %v5105 = vmax.f32 %v5097, %v5101
  %v5106 = vmax.f32 %v5098, %v5102
  %v5107 = vmax.f32 %v5099, %v5103
  %5108 = vrot.lane.b32.xlu0 %v5104, 17
  %v5109 = vpop.permute.xlu0 %5108
  %5110 = vrot.lane.b32.xlu0 %v5105, 17
  %v5111 = vpop.permute.xlu0 %5110
  %5112 = vrot.lane.b32.xlu0 %v5106, 17
  %v5113 = vpop.permute.xlu0 %5112
  %5114 = vrot.lane.b32.xlu0 %v5107, 17
  %v5115 = vpop.permute.xlu0 %5114
  %v5116 = vsel %vm74, %v5113, %v5115
  %v5117 = vsel %vm74, %v5111, %v5113
  %v5118 = vsel %vm74, %v5109, %v5111
  %v5119 = vsel %vm74, %v5115, %v5109
  %v5120 = vmul.f32 %v5119, %v84
  %v5121 = vmul.f32 %v5118, %v85
  %v5122 = vmul.f32 %v5117, %v86
  %v5123 = vmul.f32 %v5116, %v87
  %5124 = vst [vmem:[#allocation2] sm:$0xff] %v5120
  %5125 = vst [vmem:[#allocation2 + $0x8] sm:$0xff] %v5121
  %5126 = vst [vmem:[#allocation2 + $0x10] sm:$0xff] %v5122
  %5127 = vst [vmem:[#allocation2 + $0x18] sm:$0xff] %v5123
  %5128 = vrot.lane.b32.xlu0 %v5104, 16
  %v5129 = vpop.permute.xlu0 %5128
  %5130 = vrot.lane.b32.xlu0 %v5105, 16
  %v5131 = vpop.permute.xlu0 %5130
  %5132 = vrot.lane.b32.xlu0 %v5106, 16
  %v5133 = vpop.permute.xlu0 %5132
  %5134 = vrot.lane.b32.xlu0 %v5107, 16
  %v5135 = vpop.permute.xlu0 %5134
  %v5136 = vsel %vm124, %v5133, %v5135
  %v5137 = vsel %vm124, %v5131, %v5133
  %v5138 = vsel %vm124, %v5129, %v5131
  %v5139 = vsel %vm124, %v5135, %v5129
  %v5140 = vmul.f32 %v5139, %v134
  %v5141 = vmul.f32 %v5138, %v135
  %v5142 = vmul.f32 %v5137, %v136
  %v5143 = vmul.f32 %v5136, %v137
  %5144 = vst [vmem:[#allocation2 + $0x20] sm:$0xff] %v5140
  %5145 = vst [vmem:[#allocation2 + $0x28] sm:$0xff] %v5141
  %5146 = vst [vmem:[#allocation2 + $0x30] sm:$0xff] %v5142
  %5147 = vst [vmem:[#allocation2 + $0x38] sm:$0xff] %v5143
  %5148 = vrot.lane.b32.xlu0 %v5104, 15
  %v5149 = vpop.permute.xlu0 %5148
  %5150 = vrot.lane.b32.xlu0 %v5105, 15
  %v5151 = vpop.permute.xlu0 %5150
  %5152 = vrot.lane.b32.xlu0 %v5106, 15
  %v5153 = vpop.permute.xlu0 %5152
  %5154 = vrot.lane.b32.xlu0 %v5107, 15
  %v5155 = vpop.permute.xlu0 %5154
  %v5156 = vsel %vm174, %v5153, %v5155
  %v5157 = vsel %vm174, %v5151, %v5153
  %v5158 = vsel %vm174, %v5149, %v5151
  %v5159 = vsel %vm174, %v5155, %v5149
  %v5160 = vmul.f32 %v5159, %v184
  %v5161 = vmul.f32 %v5158, %v185
  %v5162 = vmul.f32 %v5157, %v186
  %v5163 = vmul.f32 %v5156, %v187
  %5164 = vst [vmem:[#allocation2 + $0x40] sm:$0xff] %v5160
  %5165 = vst [vmem:[#allocation2 + $0x48] sm:$0xff] %v5161
  %5166 = vst [vmem:[#allocation2 + $0x50] sm:$0xff] %v5162
  %5167 = vst [vmem:[#allocation2 + $0x58] sm:$0xff] %v5163
  %5168 = vrot.lane.b32.xlu0 %v5104, 1
  %v5169 = vpop.permute.xlu0 %5168
  %5170 = vrot.lane.b32.xlu0 %v5105, 1
  %v5171 = vpop.permute.xlu0 %5170
  %5172 = vrot.lane.b32.xlu0 %v5106, 1
  %v5173 = vpop.permute.xlu0 %5172
  %5174 = vrot.lane.b32.xlu0 %v5107, 1
  %v5175 = vpop.permute.xlu0 %5174
  %v5176 = vsel %vm224, %v5173, %v5175
  %v5177 = vsel %vm224, %v5171, %v5173
  %v5178 = vsel %vm224, %v5169, %v5171
  %v5179 = vsel %vm224, %v5175, %v5169
  %v5180 = vmul.f32 %v5179, %v234
  %v5181 = vmul.f32 %v5178, %v235
  %v5182 = vmul.f32 %v5177, %v236
  %v5183 = vmul.f32 %v5176, %v237
  %5184 = vst [vmem:[#allocation2 + $0x60] sm:$0xff] %v5180
  %5185 = vst [vmem:[#allocation2 + $0x68] sm:$0xff] %v5181
  %5186 = vst [vmem:[#allocation2 + $0x70] sm:$0xff] %v5182
  %5187 = vst [vmem:[#allocation2 + $0x78] sm:$0xff] %v5183
  %5188 = vst [vmem:[#allocation2 + $0x80] sm:$0xff] %v5104
  %5189 = vst [vmem:[#allocation2 + $0x88] sm:$0xff] %v5105
  %5190 = vst [vmem:[#allocation2 + $0x90] sm:$0xff] %v5106
  %5191 = vst [vmem:[#allocation2 + $0x98] sm:$0xff] %v5107
  %5192 = vrot.lane.b32.xlu0 %v5104, 127
  %v5193 = vpop.permute.xlu0 %5192
  %5194 = vrot.lane.b32.xlu0 %v5105, 127
  %v5195 = vpop.permute.xlu0 %5194
  %5196 = vrot.lane.b32.xlu0 %v5106, 127
  %v5197 = vpop.permute.xlu0 %5196
  %5198 = vrot.lane.b32.xlu0 %v5107, 127
  %v5199 = vpop.permute.xlu0 %5198
  %v5200 = vsel %vm282, %v5197, %v5199
  %v5201 = vsel %vm282, %v5195, %v5197
  %v5202 = vsel %vm282, %v5193, %v5195
  %v5203 = vsel %vm282, %v5199, %v5193
  %v5204 = vmul.f32 %v5202, %v292
  %v5205 = vmul.f32 %v5201, %v293
  %v5206 = vmul.f32 %v5200, %v294
  %v5207 = vmul.f32 %v5203, %v295
  %5208 = vst [vmem:[#allocation2 + $0xa0] sm:$0xff] %v5204
  %5209 = vst [vmem:[#allocation2 + $0xa8] sm:$0xff] %v5205
  %5210 = vst [vmem:[#allocation2 + $0xb0] sm:$0xff] %v5206
  %5211 = vst [vmem:[#allocation2 + $0xb8] sm:$0xff] %v5207
  %5212 = vrot.lane.b32.xlu0 %v5104, 113
  %v5213 = vpop.permute.xlu0 %5212
  %5214 = vrot.lane.b32.xlu0 %v5105, 113
  %v5215 = vpop.permute.xlu0 %5214
  %5216 = vrot.lane.b32.xlu0 %v5106, 113
  %v5217 = vpop.permute.xlu0 %5216
  %5218 = vrot.lane.b32.xlu0 %v5107, 113
  %v5219 = vpop.permute.xlu0 %5218
  %v5220 = vsel %vm332, %v5217, %v5219
  %v5221 = vsel %vm332, %v5215, %v5217
  %v5222 = vsel %vm332, %v5213, %v5215
  %v5223 = vsel %vm332, %v5219, %v5213
  %v5224 = vmul.f32 %v5222, %v342
  %v5225 = vmul.f32 %v5221, %v343
  %v5226 = vmul.f32 %v5220, %v344
  %v5227 = vmul.f32 %v5223, %v345
  %5228 = vst [vmem:[#allocation2 + $0xc0] sm:$0xff] %v5224
  %5229 = vst [vmem:[#allocation2 + $0xc8] sm:$0xff] %v5225
  %5230 = vst [vmem:[#allocation2 + $0xd0] sm:$0xff] %v5226
  %5231 = vst [vmem:[#allocation2 + $0xd8] sm:$0xff] %v5227
  %5232 = vrot.lane.b32.xlu0 %v5104, 112
  %v5233 = vpop.permute.xlu0 %5232
  %5234 = vrot.lane.b32.xlu0 %v5105, 112
  %v5235 = vpop.permute.xlu0 %5234
  %5236 = vrot.lane.b32.xlu0 %v5106, 112
  %v5237 = vpop.permute.xlu0 %5236
  %5238 = vrot.lane.b32.xlu0 %v5107, 112
  %v5239 = vpop.permute.xlu0 %5238
  %v5240 = vsel %vm382, %v5237, %v5239
  %v5241 = vsel %vm382, %v5235, %v5237
  %v5242 = vsel %vm382, %v5233, %v5235
  %v5243 = vsel %vm382, %v5239, %v5233
  %v5244 = vmul.f32 %v5242, %v392
  %v5245 = vmul.f32 %v5241, %v393
  %v5246 = vmul.f32 %v5240, %v394
  %v5247 = vmul.f32 %v5243, %v395
  %5248 = vst [vmem:[#allocation2 + $0xe0] sm:$0xff] %v5244
  %5249 = vst [vmem:[#allocation2 + $0xe8] sm:$0xff] %v5245
  %5250 = vst [vmem:[#allocation2 + $0xf0] sm:$0xff] %v5246
  %5251 = vst [vmem:[#allocation2 + $0xf8] sm:$0xff] %v5247
  %5252 = vrot.lane.b32.xlu0 %v5104, 111
  %v5253 = vpop.permute.xlu0 %5252
  %5254 = vrot.lane.b32.xlu0 %v5105, 111
  %v5255 = vpop.permute.xlu0 %5254
  %5256 = vrot.lane.b32.xlu0 %v5106, 111
  %v5257 = vpop.permute.xlu0 %5256
  %5258 = vrot.lane.b32.xlu0 %v5107, 111
  %v5259 = vpop.permute.xlu0 %5258
  %v5260 = vsel %vm432, %v5257, %v5259
  %v5261 = vsel %vm432, %v5255, %v5257
  %v5262 = vsel %vm432, %v5253, %v5255
  %v5263 = vsel %vm432, %v5259, %v5253
  %v5264 = vmul.f32 %v5262, %v442
  %v5265 = vmul.f32 %v5261, %v443
  %v5266 = vmul.f32 %v5260, %v444
  %v5267 = vmul.f32 %v5263, %v445
  %5268 = vst [vmem:[#allocation2 + $0x100] sm:$0xff] %v5264
  %5269 = vst [vmem:[#allocation2 + $0x108] sm:$0xff] %v5265
  %5270 = vst [vmem:[#allocation2 + $0x110] sm:$0xff] %v5266
  %5271 = vst [vmem:[#allocation2 + $0x118] sm:$0xff] %v5267
  %v5272 = vld [vmem:[#allocation2] sm:$0xff]
  %v5273 = vld [vmem:[#allocation2 + $0x8] sm:$0xff]
  %v5274 = vld [vmem:[#allocation2 + $0x10] sm:$0xff]
  %v5275 = vld [vmem:[#allocation2 + $0x18] sm:$0xff]
  %v5276 = vld [vmem:[#allocation2 + $0x20] sm:$0xff]
  %v5277 = vld [vmem:[#allocation2 + $0x28] sm:$0xff]
  %v5278 = vld [vmem:[#allocation2 + $0x30] sm:$0xff]
  %v5279 = vld [vmem:[#allocation2 + $0x38] sm:$0xff]
  %v5280 = vld [vmem:[#allocation2 + $0x40] sm:$0xff]
  %v5281 = vld [vmem:[#allocation2 + $0x48] sm:$0xff]
  %v5282 = vld [vmem:[#allocation2 + $0x50] sm:$0xff]
  %v5283 = vld [vmem:[#allocation2 + $0x58] sm:$0xff]
  %v5284 = vld [vmem:[#allocation2 + $0x60] sm:$0xff]
  %v5285 = vld [vmem:[#allocation2 + $0x68] sm:$0xff]
  %v5286 = vld [vmem:[#allocation2 + $0x70] sm:$0xff]
  %v5287 = vld [vmem:[#allocation2 + $0x78] sm:$0xff]
  %v5288 = vld [vmem:[#allocation2 + $0x80] sm:$0xff]
  %v5289 = vld [vmem:[#allocation2 + $0x88] sm:$0xff]
  %v5290 = vld [vmem:[#allocation2 + $0x90] sm:$0xff]
  %v5291 = vld [vmem:[#allocation2 + $0x98] sm:$0xff]
  %v5292 = vld [vmem:[#allocation2 + $0xa0] sm:$0xff]
  %v5293 = vld [vmem:[#allocation2 + $0xa8] sm:$0xff]
  %v5294 = vld [vmem:[#allocation2 + $0xb0] sm:$0xff]
  %v5295 = vld [vmem:[#allocation2 + $0xb8] sm:$0xff]
  %v5296 = vld [vmem:[#allocation2 + $0xc0] sm:$0xff]
  %v5297 = vld [vmem:[#allocation2 + $0xc8] sm:$0xff]
  %v5298 = vld [vmem:[#allocation2 + $0xd0] sm:$0xff]
  %v5299 = vld [vmem:[#allocation2 + $0xd8] sm:$0xff]
  %v5300 = vld [vmem:[#allocation2 + $0xe0] sm:$0xff]
  %v5301 = vld [vmem:[#allocation2 + $0xe8] sm:$0xff]
  %v5302 = vld [vmem:[#allocation2 + $0xf0] sm:$0xff]
  %v5303 = vld [vmem:[#allocation2 + $0xf8] sm:$0xff]
  %v5304 = vld [vmem:[#allocation2 + $0x100] sm:$0xff]
  %v5305 = vld [vmem:[#allocation2 + $0x108] sm:$0xff]
  %v5306 = vld [vmem:[#allocation2 + $0x110] sm:$0xff]
  %v5307 = vld [vmem:[#allocation2 + $0x118] sm:$0xff]
  %v5308 = vpack.c.bf16 %v5276, %v5272
  %v5309 = vpack.c.bf16 %v5277, %v5273
  %v5310 = vpack.c.bf16 %v5278, %v5274
  %v5311 = vpack.c.bf16 %v5279, %v5275
  %v5312 = vpack.c.bf16 %v5284, %v5280
  %v5313 = vpack.c.bf16 %v5285, %v5281
  %v5314 = vpack.c.bf16 %v5286, %v5282
  %v5315 = vpack.c.bf16 %v5287, %v5283
  %v5316 = vpack.c.bf16 %v5292, %v5288
  %v5317 = vpack.c.bf16 %v5293, %v5289
  %v5318 = vpack.c.bf16 %v5294, %v5290
  %v5319 = vpack.c.bf16 %v5295, %v5291
  %v5320 = vpack.c.bf16 %v5300, %v5296
  %v5321 = vpack.c.bf16 %v5301, %v5297
  %v5322 = vpack.c.bf16 %v5302, %v5298
  %v5323 = vpack.c.bf16 %v5303, %v5299
  %v5324 = vpack.c.bf16 %v5304, %v5304
  %v5325 = vpack.c.bf16 %v5305, %v5305
  %v5326 = vpack.c.bf16 %v5306, %v5306
  %v5327 = vpack.c.bf16 %v5307, %v5307
  %s5328 = scalar_lea.vmem %s3, 40
  %v5329 = vld [vmem:[%s5328] sm:$0xf]
  %v5330 = vld [vmem:[%s5328 + $0x4] sm:$0xf]
  %v5331 = vld [vmem:[%s5328 + $0x8] sm:$0xf]
  %v5332 = vld [vmem:[%s5328 + $0xc] sm:$0xf]
  %v5333 = vld [vmem:[%s5328 + $0x10] sm:$0xf]
  %v5339 = vunpack.c.l.b16 %v5329
  %v5340 = vunpack.c.l.b16 %v5330
  %v5341 = vunpack.c.l.b16 %v5331
  %v5342 = vunpack.c.l.b16 %v5332
  %v5343 = vunpack.c.l.b16 %v5333
  %v5344 = vpack.c.b16 %v5340, %v5339
  %v5345 = vpack.c.b16 %v5342, %v5341
  %v5346 = vpack.c.b16 %v5343, %v5343
  %v5348 = vsel %vm1065, %v5344, 0
  %v5351 = vsel %vm1065, %v5345, 0
  %v5354 = vsel %vm1065, %v5346, 0
  %v5357 = vsel %vm1075, %v5324, 0
  %v5360 = vsel %vm1075, %v5325, 0
  %v5363 = vsel %vm1075, %v5326, 0
  %v5366 = vsel %vm1075, %v5327, 0
  %5368 = vmatpush.bf16.msra.mxu0 0
  %5369 = vmatpush.bf16.msra.mxu0 0
  %5370 = vmatpush.bf16.msra.mxu0 0
  %5371 = vmatpush.bf16.msra.mxu0 %v5357
  %5372 = vmatpush.bf16.msra.mxu0 %v5320
  %5373 = vmatpush.bf16.msra.mxu0 %v5316
  %5374 = vmatpush.bf16.msra.mxu0 %v5312
  %5375 = vmatpush.bf16.msra.mxu0 %v5308
  %5376 = vmatmul.bf16.gmra.mxu0 %v5348
  %v5377 = vpop.f32.mrf.mxu0
  %v5378 = vadd.f32 0.0, %v5377
  %v5379 = vpop.f32.mrf.mxu0
  %v5380 = vadd.f32 0.0, %v5379
  %5381 = vmatmul.bf16.gmra.mxu0 %v5351
  %v5382 = vpop.f32.mrf.mxu0
  %v5383 = vadd.f32 0.0, %v5382
  %v5384 = vpop.f32.mrf.mxu0
  %v5385 = vadd.f32 0.0, %v5384
  %5386 = vmatmul.bf16.gmra.mxu0 %v5354
  %v5387 = vpop.f32.mrf.mxu0
  %v5388 = vadd.f32 0.0, %v5387
  %v5389 = vpop.f32.mrf.mxu0
  %5390 = vdwg.mxu0
  %5391 = vmatpush.bf16.msra.mxu0 0
  %5392 = vmatpush.bf16.msra.mxu0 0
  %5393 = vmatpush.bf16.msra.mxu0 0
  %5394 = vmatpush.bf16.msra.mxu0 %v5360
  %5395 = vmatpush.bf16.msra.mxu0 %v5321
  %5396 = vmatpush.bf16.msra.mxu0 %v5317
  %5397 = vmatpush.bf16.msra.mxu0 %v5313
  %5398 = vmatpush.bf16.msra.mxu0 %v5309
  %5399 = vmatmul.bf16.gmra.mxu0 %v5348
  %v5400 = vpop.f32.mrf.mxu0
  %v5401 = vadd.f32 0.0, %v5400
  %v5402 = vpop.f32.mrf.mxu0
  %v5403 = vadd.f32 0.0, %v5402
  %5404 = vmatmul.bf16.gmra.mxu0 %v5351
  %v5405 = vpop.f32.mrf.mxu0
  %v5406 = vadd.f32 0.0, %v5405
  %v5407 = vpop.f32.mrf.mxu0
  %v5408 = vadd.f32 0.0, %v5407
  %5409 = vmatmul.bf16.gmra.mxu0 %v5354
  %v5410 = vpop.f32.mrf.mxu0
  %v5411 = vadd.f32 0.0, %v5410
  %v5412 = vpop.f32.mrf.mxu0
  %5413 = vdwg.mxu0
  %5414 = vmatpush.bf16.msra.mxu0 0
  %5415 = vmatpush.bf16.msra.mxu0 0
  %5416 = vmatpush.bf16.msra.mxu0 0
  %5417 = vmatpush.bf16.msra.mxu0 %v5363
  %5418 = vmatpush.bf16.msra.mxu0 %v5322
  %5419 = vmatpush.bf16.msra.mxu0 %v5318
  %5420 = vmatpush.bf16.msra.mxu0 %v5314
  %5421 = vmatpush.bf16.msra.mxu0 %v5310
  %5422 = vmatmul.bf16.gmra.mxu0 %v5348
  %v5423 = vpop.f32.mrf.mxu0
  %v5424 = vadd.f32 0.0, %v5423
  %v5425 = vpop.f32.mrf.mxu0
  %v5426 = vadd.f32 0.0, %v5425
  %5427 = vmatmul.bf16.gmra.mxu0 %v5351
  %v5428 = vpop.f32.mrf.mxu0
  %v5429 = vadd.f32 0.0, %v5428
  %v5430 = vpop.f32.mrf.mxu0
  %v5431 = vadd.f32 0.0, %v5430
  %5432 = vmatmul.bf16.gmra.mxu0 %v5354
  %v5433 = vpop.f32.mrf.mxu0
  %v5434 = vadd.f32 0.0, %v5433
  %v5435 = vpop.f32.mrf.mxu0
  %5436 = vdwg.mxu0
  %5437 = vmatpush.bf16.msra.mxu0 0
  %5438 = vmatpush.bf16.msra.mxu0 0
  %5439 = vmatpush.bf16.msra.mxu0 0
  %5440 = vmatpush.bf16.msra.mxu0 %v5366
  %5441 = vmatpush.bf16.msra.mxu0 %v5323
  %5442 = vmatpush.bf16.msra.mxu0 %v5319
  %5443 = vmatpush.bf16.msra.mxu0 %v5315
  %5444 = vmatpush.bf16.msra.mxu0 %v5311
  %5445 = vmatmul.bf16.gmra.mxu0 %v5348
  %v5446 = vpop.f32.mrf.mxu0
  %v5447 = vadd.f32 0.0, %v5446
  %v5448 = vpop.f32.mrf.mxu0
  %v5449 = vadd.f32 0.0, %v5448
  %5450 = vmatmul.bf16.gmra.mxu0 %v5351
  %v5451 = vpop.f32.mrf.mxu0
  %v5452 = vadd.f32 0.0, %v5451
  %v5453 = vpop.f32.mrf.mxu0
  %v5454 = vadd.f32 0.0, %v5453
  %5455 = vmatmul.bf16.gmra.mxu0 %v5354
  %v5456 = vpop.f32.mrf.mxu0
  %v5457 = vadd.f32 0.0, %v5456
  %v5458 = vpop.f32.mrf.mxu0
  %5459 = vdwg.mxu0
  %v5460 = vadd.f32 %v4933, %v5378
  %v5461 = vadd.f32 %v4981, %v5401
  %v5462 = vadd.f32 %v5029, %v5424
  %v5463 = vadd.f32 %v5077, %v5447
  %v5464 = vadd.f32 %v4936, %v5380
  %v5465 = vadd.f32 %v4984, %v5403
  %v5466 = vadd.f32 %v5032, %v5426
  %v5467 = vadd.f32 %v5080, %v5449
  %v5468 = vadd.f32 %v4938, %v5383
  %v5469 = vadd.f32 %v4986, %v5406
  %v5470 = vadd.f32 %v5034, %v5429
  %v5471 = vadd.f32 %v5082, %v5452
  %v5472 = vadd.f32 %v4941, %v5385
  %v5473 = vadd.f32 %v4989, %v5408
  %v5474 = vadd.f32 %v5037, %v5431
  %v5475 = vadd.f32 %v5085, %v5454
  %v5476 = vadd.f32 %v4943, %v5388
  %v5477 = vadd.f32 %v4991, %v5411
  %v5478 = vadd.f32 %v5039, %v5434
  %v5479 = vadd.f32 %v5087, %v5457
  %s5480 = scalar_lea.vmem %s7, 72
  %v5481 = vld [vmem:[%s5480] sm:$0xff]
  %5483 = vset.pattern.permute.xlu0 0
  %5484 = vperm.xlu0 %5483, %v5481
  %v5485 = vpop.permute.xlu0 %5484
  %v5487 = vadd.f32 %v5460, %v5485
  %v5488 = vadd.f32 %v5461, %v5485
  %v5489 = vadd.f32 %v5462, %v5485
  %v5490 = vadd.f32 %v5463, %v5485
  %v5491 = vmul.f32 %v5487, 0.2
  %v5492 = vmul.f32 %v5488, 0.2
  %v5493 = vmul.f32 %v5489, 0.2
  %v5494 = vmul.f32 %v5490, 0.2
  %v5495 = vmax.f32 %v5487, %v5491
  %v5496 = vmax.f32 %v5488, %v5492
  %v5497 = vmax.f32 %v5489, %v5493
  %v5498 = vmax.f32 %v5490, %v5494
  %5499 = vrot.lane.b32.xlu0 %v5495, 17
  %v5500 = vpop.permute.xlu0 %5499
  %5501 = vrot.lane.b32.xlu0 %v5496, 17
  %v5502 = vpop.permute.xlu0 %5501
  %5503 = vrot.lane.b32.xlu0 %v5497, 17
  %v5504 = vpop.permute.xlu0 %5503
  %5505 = vrot.lane.b32.xlu0 %v5498, 17
  %v5506 = vpop.permute.xlu0 %5505
  %v5507 = vsel %vm74, %v5504, %v5506
  %v5508 = vsel %vm74, %v5502, %v5504
  %v5509 = vsel %vm74, %v5500, %v5502
  %v5510 = vsel %vm74, %v5506, %v5500
  %v5511 = vmul.f32 %v5510, %v84
  %v5512 = vmul.f32 %v5509, %v85
  %v5513 = vmul.f32 %v5508, %v86
  %v5514 = vmul.f32 %v5507, %v87
  %5515 = vst [vmem:[#allocation2] sm:$0xff] %v5511
  %5516 = vst [vmem:[#allocation2 + $0x8] sm:$0xff] %v5512
  %5517 = vst [vmem:[#allocation2 + $0x10] sm:$0xff] %v5513
  %5518 = vst [vmem:[#allocation2 + $0x18] sm:$0xff] %v5514
  %5519 = vrot.lane.b32.xlu0 %v5495, 16
  %v5520 = vpop.permute.xlu0 %5519
  %5521 = vrot.lane.b32.xlu0 %v5496, 16
  %v5522 = vpop.permute.xlu0 %5521
  %5523 = vrot.lane.b32.xlu0 %v5497, 16
  %v5524 = vpop.permute.xlu0 %5523
  %5525 = vrot.lane.b32.xlu0 %v5498, 16
  %v5526 = vpop.permute.xlu0 %5525
  %v5527 = vsel %vm124, %v5524, %v5526
  %v5528 = vsel %vm124, %v5522, %v5524
  %v5529 = vsel %vm124, %v5520, %v5522
  %v5530 = vsel %vm124, %v5526, %v5520
  %v5531 = vmul.f32 %v5530, %v134
  %v5532 = vmul.f32 %v5529, %v135
  %v5533 = vmul.f32 %v5528, %v136
  %v5534 = vmul.f32 %v5527, %v137
  %5535 = vst [vmem:[#allocation2 + $0x20] sm:$0xff] %v5531
  %5536 = vst [vmem:[#allocation2 + $0x28] sm:$0xff] %v5532
  %5537 = vst [vmem:[#allocation2 + $0x30] sm:$0xff] %v5533
  %5538 = vst [vmem:[#allocation2 + $0x38] sm:$0xff] %v5534
  %5539 = vrot.lane.b32.xlu0 %v5495, 15
  %v5540 = vpop.permute.xlu0 %5539
  %5541 = vrot.lane.b32.xlu0 %v5496, 15
  %v5542 = vpop.permute.xlu0 %5541
  %5543 = vrot.lane.b32.xlu0 %v5497, 15
  %v5544 = vpop.permute.xlu0 %5543
  %5545 = vrot.lane.b32.xlu0 %v5498, 15
  %v5546 = vpop.permute.xlu0 %5545
  %v5547 = vsel %vm174, %v5544, %v5546
  %v5548 = vsel %vm174, %v5542, %v5544
  %v5549 = vsel %vm174, %v5540, %v5542
  %v5550 = vsel %vm174, %v5546, %v5540
  %v5551 = vmul.f32 %v5550, %v184
  %v5552 = vmul.f32 %v5549, %v185
  %v5553 = vmul.f32 %v5548, %v186
  %v5554 = vmul.f32 %v5547, %v187
  %5555 = vst [vmem:[#allocation2 + $0x40] sm:$0xff] %v5551
  %5556 = vst [vmem:[#allocation2 + $0x48] sm:$0xff] %v5552
  %5557 = vst [vmem:[#allocation2 + $0x50] sm:$0xff] %v5553
  %5558 = vst [vmem:[#allocation2 + $0x58] sm:$0xff] %v5554
  %5559 = vrot.lane.b32.xlu0 %v5495, 1
  %v5560 = vpop.permute.xlu0 %5559
  %5561 = vrot.lane.b32.xlu0 %v5496, 1
  %v5562 = vpop.permute.xlu0 %5561
  %5563 = vrot.lane.b32.xlu0 %v5497, 1
  %v5564 = vpop.permute.xlu0 %5563
  %5565 = vrot.lane.b32.xlu0 %v5498, 1
  %v5566 = vpop.permute.xlu0 %5565
  %v5567 = vsel %vm224, %v5564, %v5566
  %v5568 = vsel %vm224, %v5562, %v5564
  %v5569 = vsel %vm224, %v5560, %v5562
  %v5570 = vsel %vm224, %v5566, %v5560
  %v5571 = vmul.f32 %v5570, %v234
  %v5572 = vmul.f32 %v5569, %v235
  %v5573 = vmul.f32 %v5568, %v236
  %v5574 = vmul.f32 %v5567, %v237
  %5575 = vst [vmem:[#allocation2 + $0x60] sm:$0xff] %v5571
  %5576 = vst [vmem:[#allocation2 + $0x68] sm:$0xff] %v5572
  %5577 = vst [vmem:[#allocation2 + $0x70] sm:$0xff] %v5573
  %5578 = vst [vmem:[#allocation2 + $0x78] sm:$0xff] %v5574
  %5579 = vst [vmem:[#allocation2 + $0x80] sm:$0xff] %v5495
  %5580 = vst [vmem:[#allocation2 + $0x88] sm:$0xff] %v5496
  %5581 = vst [vmem:[#allocation2 + $0x90] sm:$0xff] %v5497
  %5582 = vst [vmem:[#allocation2 + $0x98] sm:$0xff] %v5498
  %5583 = vrot.lane.b32.xlu0 %v5495, 127
  %v5584 = vpop.permute.xlu0 %5583
  %5585 = vrot.lane.b32.xlu0 %v5496, 127
  %v5586 = vpop.permute.xlu0 %5585
  %5587 = vrot.lane.b32.xlu0 %v5497, 127
  %v5588 = vpop.permute.xlu0 %5587
  %5589 = vrot.lane.b32.xlu0 %v5498, 127
  %v5590 = vpop.permute.xlu0 %5589
  %v5591 = vsel %vm282, %v5588, %v5590
  %v5592 = vsel %vm282, %v5586, %v5588
  %v5593 = vsel %vm282, %v5584, %v5586
  %v5594 = vsel %vm282, %v5590, %v5584
  %v5595 = vmul.f32 %v5593, %v292
  %v5596 = vmul.f32 %v5592, %v293
  %v5597 = vmul.f32 %v5591, %v294
  %v5598 = vmul.f32 %v5594, %v295
  %5599 = vst [vmem:[#allocation2 + $0xa0] sm:$0xff] %v5595
  %5600 = vst [vmem:[#allocation2 + $0xa8] sm:$0xff] %v5596
  %5601 = vst [vmem:[#allocation2 + $0xb0] sm:$0xff] %v5597
  %5602 = vst [vmem:[#allocation2 + $0xb8] sm:$0xff] %v5598
  %5603 = vrot.lane.b32.xlu0 %v5495, 113
  %v5604 = vpop.permute.xlu0 %5603
  %5605 = vrot.lane.b32.xlu0 %v5496, 113
  %v5606 = vpop.permute.xlu0 %5605
  %5607 = vrot.lane.b32.xlu0 %v5497, 113
  %v5608 = vpop.permute.xlu0 %5607
  %5609 = vrot.lane.b32.xlu0 %v5498, 113
  %v5610 = vpop.permute.xlu0 %5609
  %v5611 = vsel %vm332, %v5608, %v5610
  %v5612 = vsel %vm332, %v5606, %v5608
  %v5613 = vsel %vm332, %v5604, %v5606
  %v5614 = vsel %vm332, %v5610, %v5604
  %v5615 = vmul.f32 %v5613, %v342
  %v5616 = vmul.f32 %v5612, %v343
  %v5617 = vmul.f32 %v5611, %v344
  %v5618 = vmul.f32 %v5614, %v345
  %5619 = vst [vmem:[#allocation2 + $0xc0] sm:$0xff] %v5615
  %5620 = vst [vmem:[#allocation2 + $0xc8] sm:$0xff] %v5616
  %5621 = vst [vmem:[#allocation2 + $0xd0] sm:$0xff] %v5617
  %5622 = vst [vmem:[#allocation2 + $0xd8] sm:$0xff] %v5618
  %5623 = vrot.lane.b32.xlu0 %v5495, 112
  %v5624 = vpop.permute.xlu0 %5623
  %5625 = vrot.lane.b32.xlu0 %v5496, 112
  %v5626 = vpop.permute.xlu0 %5625
  %5627 = vrot.lane.b32.xlu0 %v5497, 112
  %v5628 = vpop.permute.xlu0 %5627
  %5629 = vrot.lane.b32.xlu0 %v5498, 112
  %v5630 = vpop.permute.xlu0 %5629
  %v5631 = vsel %vm382, %v5628, %v5630
  %v5632 = vsel %vm382, %v5626, %v5628
  %v5633 = vsel %vm382, %v5624, %v5626
  %v5634 = vsel %vm382, %v5630, %v5624
  %v5635 = vmul.f32 %v5633, %v392
  %v5636 = vmul.f32 %v5632, %v393
  %v5637 = vmul.f32 %v5631, %v394
  %v5638 = vmul.f32 %v5634, %v395
  %5639 = vst [vmem:[#allocation2 + $0xe0] sm:$0xff] %v5635
  %5640 = vst [vmem:[#allocation2 + $0xe8] sm:$0xff] %v5636
  %5641 = vst [vmem:[#allocation2 + $0xf0] sm:$0xff] %v5637
  %5642 = vst [vmem:[#allocation2 + $0xf8] sm:$0xff] %v5638
  %5643 = vrot.lane.b32.xlu0 %v5495, 111
  %v5644 = vpop.permute.xlu0 %5643
  %5645 = vrot.lane.b32.xlu0 %v5496, 111
  %v5646 = vpop.permute.xlu0 %5645
  %5647 = vrot.lane.b32.xlu0 %v5497, 111
  %v5648 = vpop.permute.xlu0 %5647
  %5649 = vrot.lane.b32.xlu0 %v5498, 111
  %v5650 = vpop.permute.xlu0 %5649
  %v5651 = vsel %vm432, %v5648, %v5650
  %v5652 = vsel %vm432, %v5646, %v5648
  %v5653 = vsel %vm432, %v5644, %v5646
  %v5654 = vsel %vm432, %v5650, %v5644
  %v5655 = vmul.f32 %v5653, %v442
  %v5656 = vmul.f32 %v5652, %v443
  %v5657 = vmul.f32 %v5651, %v444
  %v5658 = vmul.f32 %v5654, %v445
  %5659 = vst [vmem:[#allocation2 + $0x100] sm:$0xff] %v5655
  %5660 = vst [vmem:[#allocation2 + $0x108] sm:$0xff] %v5656
  %5661 = vst [vmem:[#allocation2 + $0x110] sm:$0xff] %v5657
  %5662 = vst [vmem:[#allocation2 + $0x118] sm:$0xff] %v5658
  %v5663 = vld [vmem:[#allocation2] sm:$0xff]
  %v5664 = vld [vmem:[#allocation2 + $0x8] sm:$0xff]
  %v5665 = vld [vmem:[#allocation2 + $0x10] sm:$0xff]
  %v5666 = vld [vmem:[#allocation2 + $0x18] sm:$0xff]
  %v5667 = vld [vmem:[#allocation2 + $0x20] sm:$0xff]
  %v5668 = vld [vmem:[#allocation2 + $0x28] sm:$0xff]
  %v5669 = vld [vmem:[#allocation2 + $0x30] sm:$0xff]
  %v5670 = vld [vmem:[#allocation2 + $0x38] sm:$0xff]
  %v5671 = vld [vmem:[#allocation2 + $0x40] sm:$0xff]
  %v5672 = vld [vmem:[#allocation2 + $0x48] sm:$0xff]
  %v5673 = vld [vmem:[#allocation2 + $0x50] sm:$0xff]
  %v5674 = vld [vmem:[#allocation2 + $0x58] sm:$0xff]
  %v5675 = vld [vmem:[#allocation2 + $0x60] sm:$0xff]
  %v5676 = vld [vmem:[#allocation2 + $0x68] sm:$0xff]
  %v5677 = vld [vmem:[#allocation2 + $0x70] sm:$0xff]
  %v5678 = vld [vmem:[#allocation2 + $0x78] sm:$0xff]
  %v5679 = vld [vmem:[#allocation2 + $0x80] sm:$0xff]
  %v5680 = vld [vmem:[#allocation2 + $0x88] sm:$0xff]
  %v5681 = vld [vmem:[#allocation2 + $0x90] sm:$0xff]
  %v5682 = vld [vmem:[#allocation2 + $0x98] sm:$0xff]
  %v5683 = vld [vmem:[#allocation2 + $0xa0] sm:$0xff]
  %v5684 = vld [vmem:[#allocation2 + $0xa8] sm:$0xff]
  %v5685 = vld [vmem:[#allocation2 + $0xb0] sm:$0xff]
  %v5686 = vld [vmem:[#allocation2 + $0xb8] sm:$0xff]
  %v5687 = vld [vmem:[#allocation2 + $0xc0] sm:$0xff]
  %v5688 = vld [vmem:[#allocation2 + $0xc8] sm:$0xff]
  %v5689 = vld [vmem:[#allocation2 + $0xd0] sm:$0xff]
  %v5690 = vld [vmem:[#allocation2 + $0xd8] sm:$0xff]
  %v5691 = vld [vmem:[#allocation2 + $0xe0] sm:$0xff]
  %v5692 = vld [vmem:[#allocation2 + $0xe8] sm:$0xff]
  %v5693 = vld [vmem:[#allocation2 + $0xf0] sm:$0xff]
  %v5694 = vld [vmem:[#allocation2 + $0xf8] sm:$0xff]
  %v5695 = vld [vmem:[#allocation2 + $0x100] sm:$0xff]
  %v5696 = vld [vmem:[#allocation2 + $0x108] sm:$0xff]
  %v5697 = vld [vmem:[#allocation2 + $0x110] sm:$0xff]
  %v5698 = vld [vmem:[#allocation2 + $0x118] sm:$0xff]
  %v5699 = vpack.c.bf16 %v5667, %v5663
  %v5700 = vpack.c.bf16 %v5668, %v5664
  %v5701 = vpack.c.bf16 %v5669, %v5665
  %v5702 = vpack.c.bf16 %v5670, %v5666
  %v5703 = vpack.c.bf16 %v5675, %v5671
  %v5704 = vpack.c.bf16 %v5676, %v5672
  %v5705 = vpack.c.bf16 %v5677, %v5673
  %v5706 = vpack.c.bf16 %v5678, %v5674
  %v5707 = vpack.c.bf16 %v5683, %v5679
  %v5708 = vpack.c.bf16 %v5684, %v5680
  %v5709 = vpack.c.bf16 %v5685, %v5681
  %v5710 = vpack.c.bf16 %v5686, %v5682
  %v5711 = vpack.c.bf16 %v5691, %v5687
  %v5712 = vpack.c.bf16 %v5692, %v5688
  %v5713 = vpack.c.bf16 %v5693, %v5689
  %v5714 = vpack.c.bf16 %v5694, %v5690
  %v5715 = vpack.c.bf16 %v5695, %v5695
  %v5716 = vpack.c.bf16 %v5696, %v5696
  %v5717 = vpack.c.bf16 %v5697, %v5697
  %v5718 = vpack.c.bf16 %v5698, %v5698
  %s5719 = scalar_lea.vmem %s4, 32
  %v5720 = vld [vmem:[%s5719] sm:$0xf]
  %v5721 = vld [vmem:[%s5719 + $0x4] sm:$0xf]
  %v5722 = vld [vmem:[%s5719 + $0x8] sm:$0xf]
  %v5723 = vld [vmem:[%s5719 + $0xc] sm:$0xf]
  %v5728 = vunpack.c.l.b16 %v5720
  %v5729 = vunpack.c.l.b16 %v5721
  %v5730 = vunpack.c.l.b16 %v5722
  %v5731 = vunpack.c.l.b16 %v5723
  %v5732 = vpack.c.b16 %v5729, %v5728
  %v5733 = vpack.c.b16 %v5731, %v5730
  %v5735 = vsel %vm1065, %v5732, 0
  %v5738 = vsel %vm1065, %v5733, 0
  %v5741 = vsel %vm1075, %v5715, 0
  %v5744 = vsel %vm1075, %v5716, 0
  %v5747 = vsel %vm1075, %v5717, 0
  %v5750 = vsel %vm1075, %v5718, 0
  %5752 = vmatpush.bf16.msra.mxu0 0
  %5753 = vmatpush.bf16.msra.mxu0 0
  %5754 = vmatpush.bf16.msra.mxu0 0
  %5755 = vmatpush.bf16.msra.mxu0 %v5741
  %5756 = vmatpush.bf16.msra.mxu0 %v5711
  %5757 = vmatpush.bf16.msra.mxu0 %v5707
  %5758 = vmatpush.bf16.msra.mxu0 %v5703
  %5759 = vmatpush.bf16.msra.mxu0 %v5699
  %5760 = vmatmul.bf16.gmra.mxu0 %v5735
  %v5761 = vpop.f32.mrf.mxu0
  %v5762 = vadd.f32 0.0, %v5761
  %v5763 = vpop.f32.mrf.mxu0
  %v5764 = vadd.f32 0.0, %v5763
  %5765 = vmatmul.bf16.gmra.mxu0 %v5738
  %v5766 = vpop.f32.mrf.mxu0
  %v5767 = vadd.f32 0.0, %v5766
  %v5768 = vpop.f32.mrf.mxu0
  %v5769 = vadd.f32 0.0, %v5768
  %5770 = vdwg.mxu0
  %5771 = vmatpush.bf16.msra.mxu0 0
  %5772 = vmatpush.bf16.msra.mxu0 0
  %5773 = vmatpush.bf16.msra.mxu0 0
  %5774 = vmatpush.bf16.msra.mxu0 %v5744
  %5775 = vmatpush.bf16.msra.mxu0 %v5712
  %5776 = vmatpush.bf16.msra.mxu0 %v5708
  %5777 = vmatpush.bf16.msra.mxu0 %v5704
  %5778 = vmatpush.bf16.msra.mxu0 %v5700
  %5779 = vmatmul.bf16.gmra.mxu0 %v5735
  %v5780 = vpop.f32.mrf.mxu0
  %v5781 = vadd.f32 0.0, %v5780
  %v5782 = vpop.f32.mrf.mxu0
  %v5783 = vadd.f32 0.0, %v5782
  %5784 = vmatmul.bf16.gmra.mxu0 %v5738
  %v5785 = vpop.f32.mrf.mxu0
  %v5786 = vadd.f32 0.0, %v5785
  %v5787 = vpop.f32.mrf.mxu0
  %v5788 = vadd.f32 0.0, %v5787
  %5789 = vdwg.mxu0
  %5790 = vmatpush.bf16.msra.mxu0 0
  %5791 = vmatpush.bf16.msra.mxu0 0
  %5792 = vmatpush.bf16.msra.mxu0 0
  %5793 = vmatpush.bf16.msra.mxu0 %v5747
  %5794 = vmatpush.bf16.msra.mxu0 %v5713
  %5795 = vmatpush.bf16.msra.mxu0 %v5709
  %5796 = vmatpush.bf16.msra.mxu0 %v5705
  %5797 = vmatpush.bf16.msra.mxu0 %v5701
  %5798 = vmatmul.bf16.gmra.mxu0 %v5735
  %v5799 = vpop.f32.mrf.mxu0
  %v5800 = vadd.f32 0.0, %v5799
  %v5801 = vpop.f32.mrf.mxu0
  %v5802 = vadd.f32 0.0, %v5801
  %5803 = vmatmul.bf16.gmra.mxu0 %v5738
  %v5804 = vpop.f32.mrf.mxu0
  %v5805 = vadd.f32 0.0, %v5804
  %v5806 = vpop.f32.mrf.mxu0
  %v5807 = vadd.f32 0.0, %v5806
  %5808 = vdwg.mxu0
  %5809 = vmatpush.bf16.msra.mxu0 0
  %5810 = vmatpush.bf16.msra.mxu0 0
  %5811 = vmatpush.bf16.msra.mxu0 0
  %5812 = vmatpush.bf16.msra.mxu0 %v5750
  %5813 = vmatpush.bf16.msra.mxu0 %v5714
  %5814 = vmatpush.bf16.msra.mxu0 %v5710
  %5815 = vmatpush.bf16.msra.mxu0 %v5706
  %5816 = vmatpush.bf16.msra.mxu0 %v5702
  %5817 = vmatmul.bf16.gmra.mxu0 %v5735
  %v5818 = vpop.f32.mrf.mxu0
  %v5819 = vadd.f32 0.0, %v5818
  %v5820 = vpop.f32.mrf.mxu0
  %v5821 = vadd.f32 0.0, %v5820
  %5822 = vmatmul.bf16.gmra.mxu0 %v5738
  %v5823 = vpop.f32.mrf.mxu0
  %v5824 = vadd.f32 0.0, %v5823
  %v5825 = vpop.f32.mrf.mxu0
  %v5826 = vadd.f32 0.0, %v5825
  %5827 = vdwg.mxu0
  %v5828 = vadd.f32 %v5464, %v5762
  %v5829 = vadd.f32 %v5465, %v5781
  %v5830 = vadd.f32 %v5466, %v5800
  %v5831 = vadd.f32 %v5467, %v5819
  %v5832 = vadd.f32 %v5468, %v5764
  %v5833 = vadd.f32 %v5469, %v5783
  %v5834 = vadd.f32 %v5470, %v5802
  %v5835 = vadd.f32 %v5471, %v5821
  %v5836 = vadd.f32 %v5472, %v5767
  %v5837 = vadd.f32 %v5473, %v5786
  %v5838 = vadd.f32 %v5474, %v5805
  %v5839 = vadd.f32 %v5475, %v5824
  %v5840 = vadd.f32 %v5476, %v5769
  %v5841 = vadd.f32 %v5477, %v5788
  %v5842 = vadd.f32 %v5478, %v5807
  %v5843 = vadd.f32 %v5479, %v5826
  %s5844 = scalar_lea.vmem %s7, 80
  %v5845 = vld [vmem:[%s5844] sm:$0xff]
  %5847 = vset.pattern.permute.xlu0 0
  %5848 = vperm.xlu0 %5847, %v5845
  %v5849 = vpop.permute.xlu0 %5848
  %v5851 = vadd.f32 %v5828, %v5849
  %v5852 = vadd.f32 %v5829, %v5849
  %v5853 = vadd.f32 %v5830, %v5849
  %v5854 = vadd.f32 %v5831, %v5849
  %v5855 = vmul.f32 %v5851, 0.2
  %v5856 = vmul.f32 %v5852, 0.2
  %v5857 = vmul.f32 %v5853, 0.2
  %v5858 = vmul.f32 %v5854, 0.2
  %v5859 = vmax.f32 %v5851, %v5855
  %v5860 = vmax.f32 %v5852, %v5856
  %v5861 = vmax.f32 %v5853, %v5857
  %v5862 = vmax.f32 %v5854, %v5858
  %5863 = vrot.lane.b32.xlu0 %v5859, 17
  %v5864 = vpop.permute.xlu0 %5863
  %5865 = vrot.lane.b32.xlu0 %v5860, 17
  %v5866 = vpop.permute.xlu0 %5865
  %5867 = vrot.lane.b32.xlu0 %v5861, 17
  %v5868 = vpop.permute.xlu0 %5867
  %5869 = vrot.lane.b32.xlu0 %v5862, 17
  %v5870 = vpop.permute.xlu0 %5869
  %v5871 = vsel %vm74, %v5868, %v5870
  %v5872 = vsel %vm74, %v5866, %v5868
  %v5873 = vsel %vm74, %v5864, %v5866
  %v5874 = vsel %vm74, %v5870, %v5864
  %v5875 = vmul.f32 %v5874, %v84
  %v5876 = vmul.f32 %v5873, %v85
  %v5877 = vmul.f32 %v5872, %v86
  %v5878 = vmul.f32 %v5871, %v87
  %5879 = vst [vmem:[#allocation2] sm:$0xff] %v5875
  %5880 = vst [vmem:[#allocation2 + $0x8] sm:$0xff] %v5876
  %5881 = vst [vmem:[#allocation2 + $0x10] sm:$0xff] %v5877
  %5882 = vst [vmem:[#allocation2 + $0x18] sm:$0xff] %v5878
  %5883 = vrot.lane.b32.xlu0 %v5859, 16
  %v5884 = vpop.permute.xlu0 %5883
  %5885 = vrot.lane.b32.xlu0 %v5860, 16
  %v5886 = vpop.permute.xlu0 %5885
  %5887 = vrot.lane.b32.xlu0 %v5861, 16
  %v5888 = vpop.permute.xlu0 %5887
  %5889 = vrot.lane.b32.xlu0 %v5862, 16
  %v5890 = vpop.permute.xlu0 %5889
  %v5891 = vsel %vm124, %v5888, %v5890
  %v5892 = vsel %vm124, %v5886, %v5888
  %v5893 = vsel %vm124, %v5884, %v5886
  %v5894 = vsel %vm124, %v5890, %v5884
  %v5895 = vmul.f32 %v5894, %v134
  %v5896 = vmul.f32 %v5893, %v135
  %v5897 = vmul.f32 %v5892, %v136
  %v5898 = vmul.f32 %v5891, %v137
  %5899 = vst [vmem:[#allocation2 + $0x20] sm:$0xff] %v5895
  %5900 = vst [vmem:[#allocation2 + $0x28] sm:$0xff] %v5896
  %5901 = vst [vmem:[#allocation2 + $0x30] sm:$0xff] %v5897
  %5902 = vst [vmem:[#allocation2 + $0x38] sm:$0xff] %v5898
  %5903 = vrot.lane.b32.xlu0 %v5859, 15
  %v5904 = vpop.permute.xlu0 %5903
  %5905 = vrot.lane.b32.xlu0 %v5860, 15
  %v5906 = vpop.permute.xlu0 %5905
  %5907 = vrot.lane.b32.xlu0 %v5861, 15
  %v5908 = vpop.permute.xlu0 %5907
  %5909 = vrot.lane.b32.xlu0 %v5862, 15
  %v5910 = vpop.permute.xlu0 %5909
  %v5911 = vsel %vm174, %v5908, %v5910
  %v5912 = vsel %vm174, %v5906, %v5908
  %v5913 = vsel %vm174, %v5904, %v5906
  %v5914 = vsel %vm174, %v5910, %v5904
  %v5915 = vmul.f32 %v5914, %v184
  %v5916 = vmul.f32 %v5913, %v185
  %v5917 = vmul.f32 %v5912, %v186
  %v5918 = vmul.f32 %v5911, %v187
  %5919 = vst [vmem:[#allocation2 + $0x40] sm:$0xff] %v5915
  %5920 = vst [vmem:[#allocation2 + $0x48] sm:$0xff] %v5916
  %5921 = vst [vmem:[#allocation2 + $0x50] sm:$0xff] %v5917
  %5922 = vst [vmem:[#allocation2 + $0x58] sm:$0xff] %v5918
  %5923 = vrot.lane.b32.xlu0 %v5859, 1
  %v5924 = vpop.permute.xlu0 %5923
  %5925 = vrot.lane.b32.xlu0 %v5860, 1
  %v5926 = vpop.permute.xlu0 %5925
  %5927 = vrot.lane.b32.xlu0 %v5861, 1
  %v5928 = vpop.permute.xlu0 %5927
  %5929 = vrot.lane.b32.xlu0 %v5862, 1
  %v5930 = vpop.permute.xlu0 %5929
  %v5931 = vsel %vm224, %v5928, %v5930
  %v5932 = vsel %vm224, %v5926, %v5928
  %v5933 = vsel %vm224, %v5924, %v5926
  %v5934 = vsel %vm224, %v5930, %v5924
  %v5935 = vmul.f32 %v5934, %v234
  %v5936 = vmul.f32 %v5933, %v235
  %v5937 = vmul.f32 %v5932, %v236
  %v5938 = vmul.f32 %v5931, %v237
  %5939 = vst [vmem:[#allocation2 + $0x60] sm:$0xff] %v5935
  %5940 = vst [vmem:[#allocation2 + $0x68] sm:$0xff] %v5936
  %5941 = vst [vmem:[#allocation2 + $0x70] sm:$0xff] %v5937
  %5942 = vst [vmem:[#allocation2 + $0x78] sm:$0xff] %v5938
  %5943 = vst [vmem:[#allocation2 + $0x80] sm:$0xff] %v5859
  %5944 = vst [vmem:[#allocation2 + $0x88] sm:$0xff] %v5860
  %5945 = vst [vmem:[#allocation2 + $0x90] sm:$0xff] %v5861
  %5946 = vst [vmem:[#allocation2 + $0x98] sm:$0xff] %v5862
  %5947 = vrot.lane.b32.xlu0 %v5859, 127
  %v5948 = vpop.permute.xlu0 %5947
  %5949 = vrot.lane.b32.xlu0 %v5860, 127
  %v5950 = vpop.permute.xlu0 %5949
  %5951 = vrot.lane.b32.xlu0 %v5861, 127
  %v5952 = vpop.permute.xlu0 %5951
  %5953 = vrot.lane.b32.xlu0 %v5862, 127
  %v5954 = vpop.permute.xlu0 %5953
  %v5955 = vsel %vm282, %v5952, %v5954
  %v5956 = vsel %vm282, %v5950, %v5952
  %v5957 = vsel %vm282, %v5948, %v5950
  %v5958 = vsel %vm282, %v5954, %v5948
  %v5959 = vmul.f32 %v5957, %v292
  %v5960 = vmul.f32 %v5956, %v293
  %v5961 = vmul.f32 %v5955, %v294
  %v5962 = vmul.f32 %v5958, %v295
  %5963 = vst [vmem:[#allocation2 + $0xa0] sm:$0xff] %v5959
  %5964 = vst [vmem:[#allocation2 + $0xa8] sm:$0xff] %v5960
  %5965 = vst [vmem:[#allocation2 + $0xb0] sm:$0xff] %v5961
  %5966 = vst [vmem:[#allocation2 + $0xb8] sm:$0xff] %v5962
  %5967 = vrot.lane.b32.xlu0 %v5859, 113
  %v5968 = vpop.permute.xlu0 %5967
  %5969 = vrot.lane.b32.xlu0 %v5860, 113
  %v5970 = vpop.permute.xlu0 %5969
  %5971 = vrot.lane.b32.xlu0 %v5861, 113
  %v5972 = vpop.permute.xlu0 %5971
  %5973 = vrot.lane.b32.xlu0 %v5862, 113
  %v5974 = vpop.permute.xlu0 %5973
  %v5975 = vsel %vm332, %v5972, %v5974
  %v5976 = vsel %vm332, %v5970, %v5972
  %v5977 = vsel %vm332, %v5968, %v5970
  %v5978 = vsel %vm332, %v5974, %v5968
  %v5979 = vmul.f32 %v5977, %v342
  %v5980 = vmul.f32 %v5976, %v343
  %v5981 = vmul.f32 %v5975, %v344
  %v5982 = vmul.f32 %v5978, %v345
  %5983 = vst [vmem:[#allocation2 + $0xc0] sm:$0xff] %v5979
  %5984 = vst [vmem:[#allocation2 + $0xc8] sm:$0xff] %v5980
  %5985 = vst [vmem:[#allocation2 + $0xd0] sm:$0xff] %v5981
  %5986 = vst [vmem:[#allocation2 + $0xd8] sm:$0xff] %v5982
  %5987 = vrot.lane.b32.xlu0 %v5859, 112
  %v5988 = vpop.permute.xlu0 %5987
  %5989 = vrot.lane.b32.xlu0 %v5860, 112
  %v5990 = vpop.permute.xlu0 %5989
  %5991 = vrot.lane.b32.xlu0 %v5861, 112
  %v5992 = vpop.permute.xlu0 %5991
  %5993 = vrot.lane.b32.xlu0 %v5862, 112
  %v5994 = vpop.permute.xlu0 %5993
  %v5995 = vsel %vm382, %v5992, %v5994
  %v5996 = vsel %vm382, %v5990, %v5992
  %v5997 = vsel %vm382, %v5988, %v5990
  %v5998 = vsel %vm382, %v5994, %v5988
  %v5999 = vmul.f32 %v5997, %v392
  %v6000 = vmul.f32 %v5996, %v393
  %v6001 = vmul.f32 %v5995, %v394
  %v6002 = vmul.f32 %v5998, %v395
  %6003 = vst [vmem:[#allocation2 + $0xe0] sm:$0xff] %v5999
  %6004 = vst [vmem:[#allocation2 + $0xe8] sm:$0xff] %v6000
  %6005 = vst [vmem:[#allocation2 + $0xf0] sm:$0xff] %v6001
  %6006 = vst [vmem:[#allocation2 + $0xf8] sm:$0xff] %v6002
  %6007 = vrot.lane.b32.xlu0 %v5859, 111
  %v6008 = vpop.permute.xlu0 %6007
  %6009 = vrot.lane.b32.xlu0 %v5860, 111
  %v6010 = vpop.permute.xlu0 %6009
  %6011 = vrot.lane.b32.xlu0 %v5861, 111
  %v6012 = vpop.permute.xlu0 %6011
  %6013 = vrot.lane.b32.xlu0 %v5862, 111
  %v6014 = vpop.permute.xlu0 %6013
  %v6015 = vsel %vm432, %v6012, %v6014
  %v6016 = vsel %vm432, %v6010, %v6012
  %v6017 = vsel %vm432, %v6008, %v6010
  %v6018 = vsel %vm432, %v6014, %v6008
  %v6019 = vmul.f32 %v6017, %v442
  %v6020 = vmul.f32 %v6016, %v443
  %v6021 = vmul.f32 %v6015, %v444
  %v6022 = vmul.f32 %v6018, %v445
  %6023 = vst [vmem:[#allocation2 + $0x100] sm:$0xff] %v6019
  %6024 = vst [vmem:[#allocation2 + $0x108] sm:$0xff] %v6020
  %6025 = vst [vmem:[#allocation2 + $0x110] sm:$0xff] %v6021
  %6026 = vst [vmem:[#allocation2 + $0x118] sm:$0xff] %v6022
  %v6027 = vld [vmem:[#allocation2] sm:$0xff]
  %v6028 = vld [vmem:[#allocation2 + $0x8] sm:$0xff]
  %v6029 = vld [vmem:[#allocation2 + $0x10] sm:$0xff]
  %v6030 = vld [vmem:[#allocation2 + $0x18] sm:$0xff]
  %v6031 = vld [vmem:[#allocation2 + $0x20] sm:$0xff]
  %v6032 = vld [vmem:[#allocation2 + $0x28] sm:$0xff]
  %v6033 = vld [vmem:[#allocation2 + $0x30] sm:$0xff]
  %v6034 = vld [vmem:[#allocation2 + $0x38] sm:$0xff]
  %v6035 = vld [vmem:[#allocation2 + $0x40] sm:$0xff]
  %v6036 = vld [vmem:[#allocation2 + $0x48] sm:$0xff]
  %v6037 = vld [vmem:[#allocation2 + $0x50] sm:$0xff]
  %v6038 = vld [vmem:[#allocation2 + $0x58] sm:$0xff]
  %v6039 = vld [vmem:[#allocation2 + $0x60] sm:$0xff]
  %v6040 = vld [vmem:[#allocation2 + $0x68] sm:$0xff]
  %v6041 = vld [vmem:[#allocation2 + $0x70] sm:$0xff]
  %v6042 = vld [vmem:[#allocation2 + $0x78] sm:$0xff]
  %v6043 = vld [vmem:[#allocation2 + $0x80] sm:$0xff]
  %v6044 = vld [vmem:[#allocation2 + $0x88] sm:$0xff]
  %v6045 = vld [vmem:[#allocation2 + $0x90] sm:$0xff]
  %v6046 = vld [vmem:[#allocation2 + $0x98] sm:$0xff]
  %v6047 = vld [vmem:[#allocation2 + $0xa0] sm:$0xff]
  %v6048 = vld [vmem:[#allocation2 + $0xa8] sm:$0xff]
  %v6049 = vld [vmem:[#allocation2 + $0xb0] sm:$0xff]
  %v6050 = vld [vmem:[#allocation2 + $0xb8] sm:$0xff]
  %v6051 = vld [vmem:[#allocation2 + $0xc0] sm:$0xff]
  %v6052 = vld [vmem:[#allocation2 + $0xc8] sm:$0xff]
  %v6053 = vld [vmem:[#allocation2 + $0xd0] sm:$0xff]
  %v6054 = vld [vmem:[#allocation2 + $0xd8] sm:$0xff]
  %v6055 = vld [vmem:[#allocation2 + $0xe0] sm:$0xff]
  %v6056 = vld [vmem:[#allocation2 + $0xe8] sm:$0xff]
  %v6057 = vld [vmem:[#allocation2 + $0xf0] sm:$0xff]
  %v6058 = vld [vmem:[#allocation2 + $0xf8] sm:$0xff]
  %v6059 = vld [vmem:[#allocation2 + $0x100] sm:$0xff]
  %v6060 = vld [vmem:[#allocation2 + $0x108] sm:$0xff]
  %v6061 = vld [vmem:[#allocation2 + $0x110] sm:$0xff]
  %v6062 = vld [vmem:[#allocation2 + $0x118] sm:$0xff]
  %v6063 = vpack.c.bf16 %v6031, %v6027
  %v6064 = vpack.c.bf16 %v6032, %v6028
  %v6065 = vpack.c.bf16 %v6033, %v6029
  %v6066 = vpack.c.bf16 %v6034, %v6030
  %v6067 = vpack.c.bf16 %v6039, %v6035
  %v6068 = vpack.c.bf16 %v6040, %v6036
  %v6069 = vpack.c.bf16 %v6041, %v6037
  %v6070 = vpack.c.bf16 %v6042, %v6038
  %v6071 = vpack.c.bf16 %v6047, %v6043
  %v6072 = vpack.c.bf16 %v6048, %v6044
  %v6073 = vpack.c.bf16 %v6049, %v6045
  %v6074 = vpack.c.bf16 %v6050, %v6046
  %v6075 = vpack.c.bf16 %v6055, %v6051
  %v6076 = vpack.c.bf16 %v6056, %v6052
  %v6077 = vpack.c.bf16 %v6057, %v6053
  %v6078 = vpack.c.bf16 %v6058, %v6054
  %v6079 = vpack.c.bf16 %v6059, %v6059
  %v6080 = vpack.c.bf16 %v6060, %v6060
  %v6081 = vpack.c.bf16 %v6061, %v6061
  %v6082 = vpack.c.bf16 %v6062, %v6062
  %s6083 = scalar_lea.vmem %s5, 24
  %v6084 = vld [vmem:[%s6083] sm:$0xf]
  %v6085 = vld [vmem:[%s6083 + $0x4] sm:$0xf]
  %v6086 = vld [vmem:[%s6083 + $0x8] sm:$0xf]
  %v6090 = vunpack.c.l.b16 %v6084
  %v6091 = vunpack.c.l.b16 %v6085
  %v6092 = vunpack.c.l.b16 %v6086
  %v6093 = vpack.c.b16 %v6091, %v6090
  %v6094 = vpack.c.b16 %v6092, %v6092
  %v6096 = vsel %vm1065, %v6093, 0
  %v6099 = vsel %vm1065, %v6094, 0
  %v6102 = vsel %vm1075, %v6079, 0
  %v6105 = vsel %vm1075, %v6080, 0
  %v6108 = vsel %vm1075, %v6081, 0
  %v6111 = vsel %vm1075, %v6082, 0
  %6113 = vmatpush.bf16.msra.mxu0 0
  %6114 = vmatpush.bf16.msra.mxu0 0
  %6115 = vmatpush.bf16.msra.mxu0 0
  %6116 = vmatpush.bf16.msra.mxu0 %v6102
  %6117 = vmatpush.bf16.msra.mxu0 %v6075
  %6118 = vmatpush.bf16.msra.mxu0 %v6071
  %6119 = vmatpush.bf16.msra.mxu0 %v6067
  %6120 = vmatpush.bf16.msra.mxu0 %v6063
  %6121 = vmatmul.bf16.gmra.mxu0 %v6096
  %v6122 = vpop.f32.mrf.mxu0
  %v6123 = vadd.f32 0.0, %v6122
  %v6124 = vpop.f32.mrf.mxu0
  %v6125 = vadd.f32 0.0, %v6124
  %6126 = vmatmul.bf16.gmra.mxu0 %v6099
  %v6127 = vpop.f32.mrf.mxu0
  %v6128 = vadd.f32 0.0, %v6127
  %v6129 = vpop.f32.mrf.mxu0
  %6130 = vdwg.mxu0
  %6131 = vmatpush.bf16.msra.mxu0 0
  %6132 = vmatpush.bf16.msra.mxu0 0
  %6133 = vmatpush.bf16.msra.mxu0 0
  %6134 = vmatpush.bf16.msra.mxu0 %v6105
  %6135 = vmatpush.bf16.msra.mxu0 %v6076
  %6136 = vmatpush.bf16.msra.mxu0 %v6072
  %6137 = vmatpush.bf16.msra.mxu0 %v6068
  %6138 = vmatpush.bf16.msra.mxu0 %v6064
  %6139 = vmatmul.bf16.gmra.mxu0 %v6096
  %v6140 = vpop.f32.mrf.mxu0
  %v6141 = vadd.f32 0.0, %v6140
  %v6142 = vpop.f32.mrf.mxu0
  %v6143 = vadd.f32 0.0, %v6142
  %6144 = vmatmul.bf16.gmra.mxu0 %v6099
  %v6145 = vpop.f32.mrf.mxu0
  %v6146 = vadd.f32 0.0, %v6145
  %v6147 = vpop.f32.mrf.mxu0
  %6148 = vdwg.mxu0
  %6149 = vmatpush.bf16.msra.mxu0 0
  %6150 = vmatpush.bf16.msra.mxu0 0
  %6151 = vmatpush.bf16.msra.mxu0 0
  %6152 = vmatpush.bf16.msra.mxu0 %v6108
  %6153 = vmatpush.bf16.msra.mxu0 %v6077
  %6154 = vmatpush.bf16.msra.mxu0 %v6073
  %6155 = vmatpush.bf16.msra.mxu0 %v6069
  %6156 = vmatpush.bf16.msra.mxu0 %v6065
  %6157 = vmatmul.bf16.gmra.mxu0 %v6096
  %v6158 = vpop.f32.mrf.mxu0
  %v6159 = vadd.f32 0.0, %v6158
  %v6160 = vpop.f32.mrf.mxu0
  %v6161 = vadd.f32 0.0, %v6160
  %6162 = vmatmul.bf16.gmra.mxu0 %v6099
  %v6163 = vpop.f32.mrf.mxu0
  %v6164 = vadd.f32 0.0, %v6163
  %v6165 = vpop.f32.mrf.mxu0
  %6166 = vdwg.mxu0
  %6167 = vmatpush.bf16.msra.mxu0 0
  %6168 = vmatpush.bf16.msra.mxu0 0
  %6169 = vmatpush.bf16.msra.mxu0 0
  %6170 = vmatpush.bf16.msra.mxu0 %v6111
  %6171 = vmatpush.bf16.msra.mxu0 %v6078
  %6172 = vmatpush.bf16.msra.mxu0 %v6074
  %6173 = vmatpush.bf16.msra.mxu0 %v6070
  %6174 = vmatpush.bf16.msra.mxu0 %v6066
  %6175 = vmatmul.bf16.gmra.mxu0 %v6096
  %v6176 = vpop.f32.mrf.mxu0
  %v6177 = vadd.f32 0.0, %v6176
  %v6178 = vpop.f32.mrf.mxu0
  %v6179 = vadd.f32 0.0, %v6178
  %6180 = vmatmul.bf16.gmra.mxu0 %v6099
  %v6181 = vpop.f32.mrf.mxu0
  %v6182 = vadd.f32 0.0, %v6181
  %v6183 = vpop.f32.mrf.mxu0
  %6184 = vdwg.mxu0
  %v6185 = vadd.f32 %v5832, %v6123
  %v6186 = vadd.f32 %v5833, %v6141
  %v6187 = vadd.f32 %v5834, %v6159
  %v6188 = vadd.f32 %v5835, %v6177
  %v6189 = vadd.f32 %v5836, %v6125
  %v6190 = vadd.f32 %v5837, %v6143
  %v6191 = vadd.f32 %v5838, %v6161
  %v6192 = vadd.f32 %v5839, %v6179
  %v6193 = vadd.f32 %v5840, %v6128
  %v6194 = vadd.f32 %v5841, %v6146
  %v6195 = vadd.f32 %v5842, %v6164
  %v6196 = vadd.f32 %v5843, %v6182
  %s6197 = scalar_lea.vmem %s7, 88
  %v6198 = vld [vmem:[%s6197] sm:$0xff]
  %6200 = vset.pattern.permute.xlu0 0
  %6201 = vperm.xlu0 %6200, %v6198
  %v6202 = vpop.permute.xlu0 %6201
  %v6204 = vadd.f32 %v6185, %v6202
  %v6205 = vadd.f32 %v6186, %v6202
  %v6206 = vadd.f32 %v6187, %v6202
  %v6207 = vadd.f32 %v6188, %v6202
  %v6208 = vmul.f32 %v6204, 0.2
  %v6209 = vmul.f32 %v6205, 0.2
  %v6210 = vmul.f32 %v6206, 0.2
  %v6211 = vmul.f32 %v6207, 0.2
  %v6212 = vmax.f32 %v6204, %v6208
  %v6213 = vmax.f32 %v6205, %v6209
  %v6214 = vmax.f32 %v6206, %v6210
  %v6215 = vmax.f32 %v6207, %v6211
  %6216 = vrot.lane.b32.xlu0 %v6212, 17
  %v6217 = vpop.permute.xlu0 %6216
  %6218 = vrot.lane.b32.xlu0 %v6213, 17
  %v6219 = vpop.permute.xlu0 %6218
  %6220 = vrot.lane.b32.xlu0 %v6214, 17
  %v6221 = vpop.permute.xlu0 %6220
  %6222 = vrot.lane.b32.xlu0 %v6215, 17
  %v6223 = vpop.permute.xlu0 %6222
  %v6224 = vsel %vm74, %v6221, %v6223
  %v6225 = vsel %vm74, %v6219, %v6221
  %v6226 = vsel %vm74, %v6217, %v6219
  %v6227 = vsel %vm74, %v6223, %v6217
  %v6228 = vmul.f32 %v6227, %v84
  %v6229 = vmul.f32 %v6226, %v85
  %v6230 = vmul.f32 %v6225, %v86
  %v6231 = vmul.f32 %v6224, %v87
  %6232 = vst [vmem:[#allocation2] sm:$0xff] %v6228
  %6233 = vst [vmem:[#allocation2 + $0x8] sm:$0xff] %v6229
  %6234 = vst [vmem:[#allocation2 + $0x10] sm:$0xff] %v6230
  %6235 = vst [vmem:[#allocation2 + $0x18] sm:$0xff] %v6231
  %6236 = vrot.lane.b32.xlu0 %v6212, 16
  %v6237 = vpop.permute.xlu0 %6236
  %6238 = vrot.lane.b32.xlu0 %v6213, 16
  %v6239 = vpop.permute.xlu0 %6238
  %6240 = vrot.lane.b32.xlu0 %v6214, 16
  %v6241 = vpop.permute.xlu0 %6240
  %6242 = vrot.lane.b32.xlu0 %v6215, 16
  %v6243 = vpop.permute.xlu0 %6242
  %v6244 = vsel %vm124, %v6241, %v6243
  %v6245 = vsel %vm124, %v6239, %v6241
  %v6246 = vsel %vm124, %v6237, %v6239
  %v6247 = vsel %vm124, %v6243, %v6237
  %v6248 = vmul.f32 %v6247, %v134
  %v6249 = vmul.f32 %v6246, %v135
  %v6250 = vmul.f32 %v6245, %v136
  %v6251 = vmul.f32 %v6244, %v137
  %6252 = vst [vmem:[#allocation2 + $0x20] sm:$0xff] %v6248
  %6253 = vst [vmem:[#allocation2 + $0x28] sm:$0xff] %v6249
  %6254 = vst [vmem:[#allocation2 + $0x30] sm:$0xff] %v6250
  %6255 = vst [vmem:[#allocation2 + $0x38] sm:$0xff] %v6251
  %6256 = vrot.lane.b32.xlu0 %v6212, 15
  %v6257 = vpop.permute.xlu0 %6256
  %6258 = vrot.lane.b32.xlu0 %v6213, 15
  %v6259 = vpop.permute.xlu0 %6258
  %6260 = vrot.lane.b32.xlu0 %v6214, 15
  %v6261 = vpop.permute.xlu0 %6260
  %6262 = vrot.lane.b32.xlu0 %v6215, 15
  %v6263 = vpop.permute.xlu0 %6262
  %v6264 = vsel %vm174, %v6261, %v6263
  %v6265 = vsel %vm174, %v6259, %v6261
  %v6266 = vsel %vm174, %v6257, %v6259
  %v6267 = vsel %vm174, %v6263, %v6257
  %v6268 = vmul.f32 %v6267, %v184
  %v6269 = vmul.f32 %v6266, %v185
  %v6270 = vmul.f32 %v6265, %v186
  %v6271 = vmul.f32 %v6264, %v187
  %6272 = vst [vmem:[#allocation2 + $0x40] sm:$0xff] %v6268
  %6273 = vst [vmem:[#allocation2 + $0x48] sm:$0xff] %v6269
  %6274 = vst [vmem:[#allocation2 + $0x50] sm:$0xff] %v6270
  %6275 = vst [vmem:[#allocation2 + $0x58] sm:$0xff] %v6271
  %6276 = vrot.lane.b32.xlu0 %v6212, 1
  %v6277 = vpop.permute.xlu0 %6276
  %6278 = vrot.lane.b32.xlu0 %v6213, 1
  %v6279 = vpop.permute.xlu0 %6278
  %6280 = vrot.lane.b32.xlu0 %v6214, 1
  %v6281 = vpop.permute.xlu0 %6280
  %6282 = vrot.lane.b32.xlu0 %v6215, 1
  %v6283 = vpop.permute.xlu0 %6282
  %v6284 = vsel %vm224, %v6281, %v6283
  %v6285 = vsel %vm224, %v6279, %v6281
  %v6286 = vsel %vm224, %v6277, %v6279
  %v6287 = vsel %vm224, %v6283, %v6277
  %v6288 = vmul.f32 %v6287, %v234
  %v6289 = vmul.f32 %v6286, %v235
  %v6290 = vmul.f32 %v6285, %v236
  %v6291 = vmul.f32 %v6284, %v237
  %6292 = vst [vmem:[#allocation2 + $0x60] sm:$0xff] %v6288
  %6293 = vst [vmem:[#allocation2 + $0x68] sm:$0xff] %v6289
  %6294 = vst [vmem:[#allocation2 + $0x70] sm:$0xff] %v6290
  %6295 = vst [vmem:[#allocation2 + $0x78] sm:$0xff] %v6291
  %6296 = vst [vmem:[#allocation2 + $0x80] sm:$0xff] %v6212
  %6297 = vst [vmem:[#allocation2 + $0x88] sm:$0xff] %v6213
  %6298 = vst [vmem:[#allocation2 + $0x90] sm:$0xff] %v6214
  %6299 = vst [vmem:[#allocation2 + $0x98] sm:$0xff] %v6215
  %6300 = vrot.lane.b32.xlu0 %v6212, 127
  %v6301 = vpop.permute.xlu0 %6300
  %6302 = vrot.lane.b32.xlu0 %v6213, 127
  %v6303 = vpop.permute.xlu0 %6302
  %6304 = vrot.lane.b32.xlu0 %v6214, 127
  %v6305 = vpop.permute.xlu0 %6304
  %6306 = vrot.lane.b32.xlu0 %v6215, 127
  %v6307 = vpop.permute.xlu0 %6306
  %v6308 = vsel %vm282, %v6305, %v6307
  %v6309 = vsel %vm282, %v6303, %v6305
  %v6310 = vsel %vm282, %v6301, %v6303
  %v6311 = vsel %vm282, %v6307, %v6301
  %v6312 = vmul.f32 %v6310, %v292
  %v6313 = vmul.f32 %v6309, %v293
  %v6314 = vmul.f32 %v6308, %v294
  %v6315 = vmul.f32 %v6311, %v295
  %6316 = vst [vmem:[#allocation2 + $0xa0] sm:$0xff] %v6312
  %6317 = vst [vmem:[#allocation2 + $0xa8] sm:$0xff] %v6313
  %6318 = vst [vmem:[#allocation2 + $0xb0] sm:$0xff] %v6314
  %6319 = vst [vmem:[#allocation2 + $0xb8] sm:$0xff] %v6315
  %6320 = vrot.lane.b32.xlu0 %v6212, 113
  %v6321 = vpop.permute.xlu0 %6320
  %6322 = vrot.lane.b32.xlu0 %v6213, 113
  %v6323 = vpop.permute.xlu0 %6322
  %6324 = vrot.lane.b32.xlu0 %v6214, 113
  %v6325 = vpop.permute.xlu0 %6324
  %6326 = vrot.lane.b32.xlu0 %v6215, 113
  %v6327 = vpop.permute.xlu0 %6326
  %v6328 = vsel %vm332, %v6325, %v6327
  %v6329 = vsel %vm332, %v6323, %v6325
  %v6330 = vsel %vm332, %v6321, %v6323
  %v6331 = vsel %vm332, %v6327, %v6321
  %v6332 = vmul.f32 %v6330, %v342
  %v6333 = vmul.f32 %v6329, %v343
  %v6334 = vmul.f32 %v6328, %v344
  %v6335 = vmul.f32 %v6331, %v345
  %6336 = vst [vmem:[#allocation2 + $0xc0] sm:$0xff] %v6332
  %6337 = vst [vmem:[#allocation2 + $0xc8] sm:$0xff] %v6333
  %6338 = vst [vmem:[#allocation2 + $0xd0] sm:$0xff] %v6334
  %6339 = vst [vmem:[#allocation2 + $0xd8] sm:$0xff] %v6335
  %6340 = vrot.lane.b32.xlu0 %v6212, 112
  %v6341 = vpop.permute.xlu0 %6340
  %6342 = vrot.lane.b32.xlu0 %v6213, 112
  %v6343 = vpop.permute.xlu0 %6342
  %6344 = vrot.lane.b32.xlu0 %v6214, 112
  %v6345 = vpop.permute.xlu0 %6344
  %6346 = vrot.lane.b32.xlu0 %v6215, 112
  %v6347 = vpop.permute.xlu0 %6346
  %v6348 = vsel %vm382, %v6345, %v6347
  %v6349 = vsel %vm382, %v6343, %v6345
  %v6350 = vsel %vm382, %v6341, %v6343
  %v6351 = vsel %vm382, %v6347, %v6341
  %v6352 = vmul.f32 %v6350, %v392
  %v6353 = vmul.f32 %v6349, %v393
  %v6354 = vmul.f32 %v6348, %v394
  %v6355 = vmul.f32 %v6351, %v395
  %6356 = vst [vmem:[#allocation2 + $0xe0] sm:$0xff] %v6352
  %6357 = vst [vmem:[#allocation2 + $0xe8] sm:$0xff] %v6353
  %6358 = vst [vmem:[#allocation2 + $0xf0] sm:$0xff] %v6354
  %6359 = vst [vmem:[#allocation2 + $0xf8] sm:$0xff] %v6355
  %6360 = vrot.lane.b32.xlu0 %v6212, 111
  %v6361 = vpop.permute.xlu0 %6360
  %6362 = vrot.lane.b32.xlu0 %v6213, 111
  %v6363 = vpop.permute.xlu0 %6362
  %6364 = vrot.lane.b32.xlu0 %v6214, 111
  %v6365 = vpop.permute.xlu0 %6364
  %6366 = vrot.lane.b32.xlu0 %v6215, 111
  %v6367 = vpop.permute.xlu0 %6366
  %v6368 = vsel %vm432, %v6365, %v6367
  %v6369 = vsel %vm432, %v6363, %v6365
  %v6370 = vsel %vm432, %v6361, %v6363
  %v6371 = vsel %vm432, %v6367, %v6361
  %v6372 = vmul.f32 %v6370, %v442
  %v6373 = vmul.f32 %v6369, %v443
  %v6374 = vmul.f32 %v6368, %v444
  %v6375 = vmul.f32 %v6371, %v445
  %6376 = vst [vmem:[#allocation2 + $0x100] sm:$0xff] %v6372
  %6377 = vst [vmem:[#allocation2 + $0x108] sm:$0xff] %v6373
  %6378 = vst [vmem:[#allocation2 + $0x110] sm:$0xff] %v6374
  %6379 = vst [vmem:[#allocation2 + $0x118] sm:$0xff] %v6375
  %v6380 = vld [vmem:[#allocation2] sm:$0xff]
  %v6381 = vld [vmem:[#allocation2 + $0x8] sm:$0xff]
  %v6382 = vld [vmem:[#allocation2 + $0x10] sm:$0xff]
  %v6383 = vld [vmem:[#allocation2 + $0x18] sm:$0xff]
  %v6384 = vld [vmem:[#allocation2 + $0x20] sm:$0xff]
  %v6385 = vld [vmem:[#allocation2 + $0x28] sm:$0xff]
  %v6386 = vld [vmem:[#allocation2 + $0x30] sm:$0xff]
  %v6387 = vld [vmem:[#allocation2 + $0x38] sm:$0xff]
  %v6388 = vld [vmem:[#allocation2 + $0x40] sm:$0xff]
  %v6389 = vld [vmem:[#allocation2 + $0x48] sm:$0xff]
  %v6390 = vld [vmem:[#allocation2 + $0x50] sm:$0xff]
  %v6391 = vld [vmem:[#allocation2 + $0x58] sm:$0xff]
  %v6392 = vld [vmem:[#allocation2 + $0x60] sm:$0xff]
  %v6393 = vld [vmem:[#allocation2 + $0x68] sm:$0xff]
  %v6394 = vld [vmem:[#allocation2 + $0x70] sm:$0xff]
  %v6395 = vld [vmem:[#allocation2 + $0x78] sm:$0xff]
  %v6396 = vld [vmem:[#allocation2 + $0x80] sm:$0xff]
  %v6397 = vld [vmem:[#allocation2 + $0x88] sm:$0xff]
  %v6398 = vld [vmem:[#allocation2 + $0x90] sm:$0xff]
  %v6399 = vld [vmem:[#allocation2 + $0x98] sm:$0xff]
  %v6400 = vld [vmem:[#allocation2 + $0xa0] sm:$0xff]
  %v6401 = vld [vmem:[#allocation2 + $0xa8] sm:$0xff]
  %v6402 = vld [vmem:[#allocation2 + $0xb0] sm:$0xff]
  %v6403 = vld [vmem:[#allocation2 + $0xb8] sm:$0xff]
  %v6404 = vld [vmem:[#allocation2 + $0xc0] sm:$0xff]
  %v6405 = vld [vmem:[#allocation2 + $0xc8] sm:$0xff]
  %v6406 = vld [vmem:[#allocation2 + $0xd0] sm:$0xff]
  %v6407 = vld [vmem:[#allocation2 + $0xd8] sm:$0xff]
  %v6408 = vld [vmem:[#allocation2 + $0xe0] sm:$0xff]
  %v6409 = vld [vmem:[#allocation2 + $0xe8] sm:$0xff]
  %v6410 = vld [vmem:[#allocation2 + $0xf0] sm:$0xff]
  %v6411 = vld [vmem:[#allocation2 + $0xf8] sm:$0xff]
  %v6412 = vld [vmem:[#allocation2 + $0x100] sm:$0xff]
  %v6413 = vld [vmem:[#allocation2 + $0x108] sm:$0xff]
  %v6414 = vld [vmem:[#allocation2 + $0x110] sm:$0xff]
  %v6415 = vld [vmem:[#allocation2 + $0x118] sm:$0xff]
  %v6416 = vpack.c.bf16 %v6384, %v6380
  %v6417 = vpack.c.bf16 %v6385, %v6381
  %v6418 = vpack.c.bf16 %v6386, %v6382
  %v6419 = vpack.c.bf16 %v6387, %v6383
  %v6420 = vpack.c.bf16 %v6392, %v6388
  %v6421 = vpack.c.bf16 %v6393, %v6389
  %v6422 = vpack.c.bf16 %v6394, %v6390
  %v6423 = vpack.c.bf16 %v6395, %v6391
  %v6424 = vpack.c.bf16 %v6400, %v6396
  %v6425 = vpack.c.bf16 %v6401, %v6397
  %v6426 = vpack.c.bf16 %v6402, %v6398
  %v6427 = vpack.c.bf16 %v6403, %v6399
  %v6428 = vpack.c.bf16 %v6408, %v6404
  %v6429 = vpack.c.bf16 %v6409, %v6405
  %v6430 = vpack.c.bf16 %v6410, %v6406
  %v6431 = vpack.c.bf16 %v6411, %v6407
  %v6432 = vpack.c.bf16 %v6412, %v6412
  %v6433 = vpack.c.bf16 %v6413, %v6413
  %v6434 = vpack.c.bf16 %v6414, %v6414
  %v6435 = vpack.c.bf16 %v6415, %v6415
  %s6436 = scalar_lea.vmem %s6, 16
  %v6437 = vld [vmem:[%s6436] sm:$0xf]
  %v6438 = vld [vmem:[%s6436 + $0x4] sm:$0xf]
  %v6441 = vunpack.c.l.b16 %v6437
  %v6442 = vunpack.c.l.b16 %v6438
  %v6443 = vpack.c.b16 %v6442, %v6441
  %v6445 = vsel %vm1065, %v6443, 0
  %v6448 = vsel %vm1075, %v6432, 0
  %v6451 = vsel %vm1075, %v6433, 0
  %v6454 = vsel %vm1075, %v6434, 0
  %v6457 = vsel %vm1075, %v6435, 0
  %6459 = vmatpush.bf16.msra.mxu0 0
  %6460 = vmatpush.bf16.msra.mxu0 0
  %6461 = vmatpush.bf16.msra.mxu0 0
  %6462 = vmatpush.bf16.msra.mxu0 %v6448
  %6463 = vmatpush.bf16.msra.mxu0 %v6428
  %6464 = vmatpush.bf16.msra.mxu0 %v6424
  %6465 = vmatpush.bf16.msra.mxu0 %v6420
  %6466 = vmatpush.bf16.msra.mxu0 %v6416
  %6467 = vmatmul.bf16.gmra.mxu0 %v6445
  %v6468 = vpop.f32.mrf.mxu0
  %v6469 = vadd.f32 0.0, %v6468
  %v6470 = vpop.f32.mrf.mxu0
  %v6471 = vadd.f32 0.0, %v6470
  %6472 = vdwg.mxu0
  %6473 = vmatpush.bf16.msra.mxu0 0
  %6474 = vmatpush.bf16.msra.mxu0 0
  %6475 = vmatpush.bf16.msra.mxu0 0
  %6476 = vmatpush.bf16.msra.mxu0 %v6451
  %6477 = vmatpush.bf16.msra.mxu0 %v6429
  %6478 = vmatpush.bf16.msra.mxu0 %v6425
  %6479 = vmatpush.bf16.msra.mxu0 %v6421
  %6480 = vmatpush.bf16.msra.mxu0 %v6417
  %6481 = vmatmul.bf16.gmra.mxu0 %v6445
  %v6482 = vpop.f32.mrf.mxu0
  %v6483 = vadd.f32 0.0, %v6482
  %v6484 = vpop.f32.mrf.mxu0
  %v6485 = vadd.f32 0.0, %v6484
  %6486 = vdwg.mxu0
  %6487 = vmatpush.bf16.msra.mxu0 0
  %6488 = vmatpush.bf16.msra.mxu0 0
  %6489 = vmatpush.bf16.msra.mxu0 0
  %6490 = vmatpush.bf16.msra.mxu0 %v6454
  %6491 = vmatpush.bf16.msra.mxu0 %v6430
  %6492 = vmatpush.bf16.msra.mxu0 %v6426
  %6493 = vmatpush.bf16.msra.mxu0 %v6422
  %6494 = vmatpush.bf16.msra.mxu0 %v6418
  %6495 = vmatmul.bf16.gmra.mxu0 %v6445
  %v6496 = vpop.f32.mrf.mxu0
  %v6497 = vadd.f32 0.0, %v6496
  %v6498 = vpop.f32.mrf.mxu0
  %v6499 = vadd.f32 0.0, %v6498
  %6500 = vdwg.mxu0
  %6501 = vmatpush.bf16.msra.mxu0 0
  %6502 = vmatpush.bf16.msra.mxu0 0
  %6503 = vmatpush.bf16.msra.mxu0 0
  %6504 = vmatpush.bf16.msra.mxu0 %v6457
  %6505 = vmatpush.bf16.msra.mxu0 %v6431
  %6506 = vmatpush.bf16.msra.mxu0 %v6427
  %6507 = vmatpush.bf16.msra.mxu0 %v6423
  %6508 = vmatpush.bf16.msra.mxu0 %v6419
  %6509 = vmatmul.bf16.gmra.mxu0 %v6445
  %v6510 = vpop.f32.mrf.mxu0
  %v6511 = vadd.f32 0.0, %v6510
  %v6512 = vpop.f32.mrf.mxu0
  %v6513 = vadd.f32 0.0, %v6512
  %6514 = vdwg.mxu0
  %v6515 = vadd.f32 %v6189, %v6469
  %v6516 = vadd.f32 %v6190, %v6483
  %v6517 = vadd.f32 %v6191, %v6497
  %v6518 = vadd.f32 %v6192, %v6511
  %v6519 = vadd.f32 %v6193, %v6471
  %v6520 = vadd.f32 %v6194, %v6485
  %v6521 = vadd.f32 %v6195, %v6499
  %v6522 = vadd.f32 %v6196, %v6513
  %s6523 = scalar_lea.vmem %s8, 32
  %v6524 = vld [vmem:[%s6523] sm:$0xff]
  %v6525 = vld [vmem:[%s6523 + $0x8] sm:$0xff]
  %6527 = vset.pattern.permute.xlu0 0
  %6528 = vperm.xlu0 %6527, %v6524
  %v6529 = vpop.permute.xlu0 %6528
  %6532 = vset.pattern.permute.xlu0 0
  %6533 = vperm.xlu0 %6532, %v6525
  %v6534 = vpop.permute.xlu0 %6533
  %v6536 = vadd.f32 %v6515, %v6529
  %v6537 = vadd.f32 %v6516, %v6529
  %v6538 = vadd.f32 %v6517, %v6529
  %v6539 = vadd.f32 %v6518, %v6529
  %v6540 = vadd.f32 %v6519, %v6534
  %v6541 = vadd.f32 %v6520, %v6534
  %v6542 = vadd.f32 %v6521, %v6534
  %v6543 = vadd.f32 %v6522, %v6534
  %v6544 = vmul.f32 %v6536, 0.2
  %v6545 = vmul.f32 %v6537, 0.2
  %v6546 = vmul.f32 %v6538, 0.2
  %v6547 = vmul.f32 %v6539, 0.2
  %v6548 = vmul.f32 %v6540, 0.2
  %v6549 = vmul.f32 %v6541, 0.2
  %v6550 = vmul.f32 %v6542, 0.2
  %v6551 = vmul.f32 %v6543, 0.2
  %v6552 = vadd.f32 %v6544, %v4410
  %v6553 = vadd.f32 %v6545, %v4411
  %v6554 = vadd.f32 %v6546, %v4412
  %v6555 = vadd.f32 %v6547, %v4413
  %v6556 = vadd.f32 %v6548, %v4414
  %v6557 = vadd.f32 %v6549, %v4415
  %v6558 = vadd.f32 %v6550, %v4416
  %v6559 = vadd.f32 %v6551, %v4417
  %v6560 = vmul.f32 %v6552, 0.2
  %v6561 = vmul.f32 %v6553, 0.2
  %v6562 = vmul.f32 %v6554, 0.2
  %v6563 = vmul.f32 %v6555, 0.2
  %v6564 = vmul.f32 %v6556, 0.2
  %v6565 = vmul.f32 %v6557, 0.2
  %v6566 = vmul.f32 %v6558, 0.2
  %v6567 = vmul.f32 %v6559, 0.2
  %v6568 = vadd.f32 %v6560, %v48
  %v6569 = vadd.f32 %v6561, %v49
  %v6570 = vadd.f32 %v6562, %v50
  %v6571 = vadd.f32 %v6563, %v51
  %v6572 = vadd.f32 %v6564, %v52
  %v6573 = vadd.f32 %v6565, %v53
  %v6574 = vadd.f32 %v6566, %v54
  %v6575 = vadd.f32 %v6567, %v55
  %6576 = vst [vmem:[%s9] sm:$0xff] %v6568
  %6577 = vst [vmem:[%s9 + $0x8] sm:$0xff] %v6569
  %6578 = vst [vmem:[%s9 + $0x10] sm:$0xff] %v6570
  %6579 = vst [vmem:[%s9 + $0x18] sm:$0xff] %v6571
  %6580 = vst [vmem:[%s9 + $0x20] sm:$0xff] %v6572
  %6581 = vst [vmem:[%s9 + $0x28] sm:$0xff] %v6573
  %6582 = vst [vmem:[%s9 + $0x30] sm:$0xff] %v6574
  %6583 = vst [vmem:[%s9 + $0x38] sm:$0xff] %v6575
  // Predicated region
  $region38: #{rrdb_forward.1} parent=0 // pred_check
    _
  $region39: #{rrdb_forward.1} parent=0 // pred_check_branch
    %6585 = sbr.rel (0) target = $region41
  $region40: #{rrdb_forward.1} parent=0 // pred_region
    _
  $region41: #{rrdb_forward.1} parent=0 // pred_fallthru
    _
  // Predicated region
  $region42: #{rrdb_forward.1} parent=0 // pred_check
    _
  $region43: #{rrdb_forward.1} parent=0 // pred_check_branch
    %6587 = sbr.rel (0) target = $region45
  $region44: #{rrdb_forward.1} parent=0 // pred_region
    _
  $region45: #{rrdb_forward.1} parent=0 // pred_fallthru
    _

</llo_original>
